<compile_context>
chip_gen: v7x
topology: tpu7x:2x2x1
jax: 0.10.0
libtpu: 0.0.40
codegen_flags: <defaults>
</compile_context>

<pallas_src>
import functools

import jax
import jax.numpy as jnp
from jax import lax
from jax.experimental import pallas as pl


def _tanh_newton_kernel(x_ref, wT_ref, seg_ones_ref, lane_r_ref, eye_t_ref,
                        wt_tiled_ref, oh_pack_ref, unpack_ref, rhs_mask_ref,
                        o_ref, *, tol, max_iter, n, group, ngroups, pad):
    GN = group * n               # lanes per group (== 128)
    NG = ngroups                 # number of lane groups stacked on leading dim
    S = n + pad                  # sublanes per group block (Jacobian cols + rhs + pad)
    tol2 = float(tol) * float(tol)

    x = x_ref[...]                                   # (B, n) f32 (B = NG*G)
    wT = wT_ref[...]                                 # (n, n): linear(z) == z @ wT
    seg_ones = seg_ones_ref[...]                     # (GN, GN) block-diag ones
    lane_r = lane_r_ref[...][None]                   # (1, 1, GN) int32: lane % n
    eye_t = eye_t_ref[...]                           # (n, GN): (c == r)
    wt_tiled = wt_tiled_ref[...]                     # (n, GN): [c, q*n+r] = W[r, c]
    oh_pack = oh_pack_ref[...]                       # (NG, B, GN) packing one-hots
    unpack = unpack_ref[...]                         # (GN, n): (lane % n == r)
    rhs_mask = rhs_mask_ref[...]                     # (pad, GN): row 0 ones

    def pack_rows(a):
        # (B, n) -> (NG, 1, GN) with out[g, 0, q*n + r] = a[g*G + q, r]
        tiled = jnp.concatenate([a] * group, axis=1)                     # (B, GN)
        rows = [jnp.sum(tiled * oh_pack[gi], axis=0, keepdims=True)      # (1, GN)
                for gi in range(NG)]
        return jnp.stack(rows, axis=0)                                   # (NG, 1, GN)

    def residual(z):
        z_lin = jnp.dot(z, wT, preferred_element_type=jnp.float32) + x
        t = jnp.tanh(z_lin)
        g = z - t
        return t, g, jnp.sum(g * g)                  # exact ||g||_F^2 (sqrt not needed)

    # ---- initial iterate (matches torch: z0 = tanh(x), residual checked first) ----
    z0 = jnp.tanh(x)
    t0, g0, err2_0 = residual(z0)
    carry0 = (z0, t0, g0, err2_0, jnp.array(0, jnp.int32))

    def cond_fn(carry):
        _, _, _, err2, it = carry
        return jnp.logical_and(it < max_iter, err2 >= tol2)

    def body_fn(carry):
        z, t, g, _, it = carry

        # Packed, augmented, column-major Jacobians (per lane group g):
        #   aug[g, c, q*n + r] = J[b][r, c] = (r==c) - sech2[b, r] * W[r, c]   (c < n)
        #   aug[g, n, q*n + r] = g[b, r]            (rhs column)
        #   aug[g, n+1.., :]   = 0                  (sublane padding, keeps S % 8 == 0)
        # with b = g*G + q.
        sech2 = 1.0 - t * t
        sp = pack_rows(sech2)                                            # (NG, 1, GN)
        gp = pack_rows(g)                                                # (NG, 1, GN)
        aug = jnp.concatenate(
            [eye_t[None] - sp * wt_tiled[None],                          # (NG, n,  GN)
             gp * rhs_mask[None]],                                       # (NG, pad,GN)
            axis=1)                                                      # (NG, S, GN)

        # Block-2 unpivoted Gauss-Jordan on all B systems at once, fully unrolled.
        # One MXU round trip per pair of pivots: both masked pivot rows are stacked
        # along sublanes (M = 2*NG*S) and broadcast with one (.,128)x(128,128) matmul.
        for k0 in range(0, n, 2):
            k1 = k0 + 1
            is0 = lane_r == k0                                           # (1,1,GN)
            is1 = lane_r == k1
            masked = jnp.concatenate(
                [jnp.where(is0, aug, 0.0), jnp.where(is1, aug, 0.0)],
                axis=0)                                                  # (2*NG, S, GN)
            rows = jnp.dot(masked.reshape(2 * NG * S, GN), seg_ones,
                           preferred_element_type=jnp.float32)           # (2*NG*S, GN)
            rows0 = rows[:NG * S].reshape(NG, S, GN)   # A[b][k0, c] bcast to segment
            rows1 = rows[NG * S:].reshape(NG, S, GN)   # A[b][k1, c] bcast to segment

            # 2x2 pivot block P = [[a00 a01],[a10 a11]] per batch (per-lane, bcast).
            a00 = rows0[:, k0:k0 + 1, :]
            a01 = rows0[:, k1:k1 + 1, :]
            a10 = rows1[:, k0:k0 + 1, :]
            a11 = rows1[:, k1:k1 + 1, :]
            det = a00 * a11 - a01 * a10
            inv_det = pl.reciprocal(det, approx=True)                    # EUP slot
            inv_det = inv_det * (2.0 - det * inv_det)                    # 1 NR refine (VPU)

            # New pivot rows = P^{-1} @ [row_k0; row_k1]
            nrow0 = (a11 * rows0 - a01 * rows1) * inv_det
            nrow1 = (a00 * rows1 - a10 * rows0) * inv_det

            # Rank-2 elimination of all other rows; pivot lanes zero out exactly and
            # are overwritten with the normalized pivot rows.
            f0 = aug[:, k0:k0 + 1, :]                                    # A[b][r, k0]
            f1 = aug[:, k1:k1 + 1, :]                                    # A[b][r, k1]
            new_aug = aug - f0 * nrow0 - f1 * nrow1
            new_aug = jnp.where(is0, nrow0, new_aug)
            aug = jnp.where(is1, nrow1, new_aug)

        # delta[b, r] = aug[g, n, q*n + r]  ->  unpack to (B, n) via one small matmul.
        sol = aug[:, n:n + 1, :]                                         # (NG, 1, GN)
        sel = sol[0] * oh_pack[0]
        for gi in range(1, NG):
            sel = sel + sol[gi] * oh_pack[gi]                            # (B, GN)
        delta = jnp.dot(sel, unpack, preferred_element_type=jnp.float32) # (B, n)

        z_new = z - delta
        t_new, g_new, err2_new = residual(z_new)
        return (z_new, t_new, g_new, err2_new, it + 1)

    _, t_fin, _, _, _ = lax.while_loop(cond_fn, body_fn, carry0)

    # Final output tanh(linear(z) + x) == the tanh already computed for the final z.
    o_ref[...] = t_fin.astype(o_ref.dtype)
    # TODO(synk): register_hook (solve with J^T on the incoming gradient) is
    # backward-pass autograd plumbing; it has no forward Pallas equivalent.
    # NOTE: unpivoted block-GJ assumes pivot blocks of I - diag(sech^2) W stay
    # nonsingular (true for Linear-style U(-1/sqrt(n), 1/sqrt(n)) weights).


def tanh_newton_implicit_layer(x, w, tol=1e-4, max_iter=50):
    B, n = x.shape
    assert w.shape == (n, n)
    GN = 128
    assert GN % n == 0 and n % 8 == 0, "lane-group packing assumes n | 128 and 8 | n"
    G = GN // n                       # batches per 128-lane group
    PAD = 8
    S = n + PAD

    f32 = jnp.float32
    x = jnp.asarray(x, f32)
    w = jnp.asarray(w, f32)

    # Pad batch up to a multiple of the lane-group size (zero rows are inert:
    # their residual is 0, so they never affect the global stopping criterion).
    Bp = ((B + G - 1) // G) * G
    x_in = x if Bp == B else jnp.concatenate(
        [x, jnp.zeros((Bp - B, n), f32)], axis=0)
    NG = Bp // G

    # ---- hoisted constants, built once with plain XLA (perf-review item) ----
    lane = jnp.arange(GN, dtype=jnp.int32)
    seg = lane // n                                                    # lane segment q
    r_of_lane = lane % n                                               # system row r
    lane_r = r_of_lane[None, :]                                        # (1, GN) i32
    seg_ones = (seg[:, None] == seg[None, :]).astype(f32)              # (GN, GN)
    eye_t = (jnp.arange(n, dtype=jnp.int32)[:, None]
             == r_of_lane[None, :]).astype(f32)                        # (n, GN)
    wT = w.T                                                           # (n, n)
    wt_tiled = jnp.tile(wT, (1, G))                                    # (n, GN)
    b_idx = jnp.arange(Bp, dtype=jnp.int32)
    oh_pack = ((b_idx[None, :, None] // G
                == jnp.arange(NG, dtype=jnp.int32)[:, None, None])
               & (seg[None, None, :]
                  == (b_idx % G)[None, :, None])).astype(f32)          # (NG, Bp, GN)
    unpack = (r_of_lane[:, None]
              == jnp.arange(n, dtype=jnp.int32)[None, :]).astype(f32)  # (GN, n)
    rhs_mask = jnp.zeros((PAD, GN), f32).at[0].set(1.0)                # (PAD, GN)

    kernel = functools.partial(_tanh_newton_kernel, tol=tol, max_iter=max_iter,
                               n=n, group=G, ngroups=NG, pad=PAD)

    def full_spec(shape):
        nd = len(shape)
        return pl.BlockSpec(shape, lambda i, _nd=nd: (0,) * _nd)

    # Advisory cost hint so XLA can overlap neighbouring HBM work with this
    # latency-bound call (max_iter is the worst case; actual count is data-dep).
    flops_per_iter = (2 * (n // 2) * (2 * NG * S) * GN * GN    # GJ broadcast matmuls
                      + 2 * Bp * n * n                          # residual matmul
                      + 2 * Bp * GN * n)                        # delta unpack matmul
    in_bytes = 4 * (x_in.size + wT.size + seg_ones.size + lane_r.size
                    + eye_t.size + wt_tiled.size + oh_pack.size
                    + unpack.size + rhs_mask.size)
    cost = pl.CostEstimate(
        flops=int(max_iter * flops_per_iter),
        transcendentals=int(max_iter * (Bp * n + (n // 2) * NG * GN)),
        bytes_accessed=int(in_bytes + 4 * Bp * n))

    out = pl.pallas_call(
        kernel,
        out_shape=jax.ShapeDtypeStruct((Bp, n), f32),
        grid=(1,),
        in_specs=[
            full_spec((Bp, n)),          # x
            full_spec((n, n)),           # wT
            full_spec((GN, GN)),         # seg_ones
            full_spec((1, GN)),          # lane_r
            full_spec((n, GN)),          # eye_t
            full_spec((n, GN)),          # wt_tiled
            full_spec((NG, Bp, GN)),     # oh_pack
            full_spec((GN, n)),          # unpack
            full_spec((PAD, GN)),        # rhs_mask
        ],
        out_specs=full_spec((Bp, n)),
        cost_estimate=cost,
    )(x_in, wT, seg_ones, lane_r, eye_t, wt_tiled, oh_pack, unpack, rhs_mask)

    return out[:B]


def _reference(x, w, tol=1e-4, max_iter=50):
    """Pure-JAX reference mirroring the PyTorch forward (for verification)."""
    n = x.shape[1]
    eye = jnp.eye(n, dtype=x.dtype)

    def body(_, carry):
        z, done = carry
        z_lin = z @ w.T + x
        g = z - jnp.tanh(z_lin)
        err = jnp.linalg.norm(g)
        done = jnp.logical_or(done, err < tol)
        sech2 = 1.0 / jnp.cosh(z_lin) ** 2
        J = eye[None, :, :] - sech2[:, :, None] * w[None, :, :]
        delta = jnp.linalg.solve(J, g[:, :, None])[:, :, 0]
        z = jnp.where(done, z, z - delta)
        return z, done

    z0 = jnp.tanh(x)
    z, _ = lax.fori_loop(0, max_iter, body, (z0, jnp.array(False)))
    return jnp.tanh(z @ w.T + x)


if __name__ == "__main__":
    B, out_features = 8, 32

    key = jax.random.PRNGKey(0)
    kx, kw = jax.random.split(key)
    # nn.Linear(out_features, out_features, bias=False) default init:
    # U(-1/sqrt(fan_in), 1/sqrt(fan_in)), weight shape (out, in).
    bound = 1.0 / (out_features ** 0.5)
    w = jax.random.uniform(kw, (out_features, out_features), jnp.float32,
                           minval=-bound, maxval=bound)
    x = jax.random.normal(kx, (B, out_features), jnp.float32)

    out = tanh_newton_implicit_layer(x, w, tol=1e-4, max_iter=50)
    out = jax.block_until_ready(out)

    ref = jax.block_until_ready(_reference(x, w, tol=1e-4, max_iter=50))
    max_err = float(jnp.max(jnp.abs(out - ref)))
    assert max_err < 1e-3, f"mismatch vs reference: {max_err}"

    print("KERNEL_OK")
</pallas_src>

<mosaic_0001>
module attributes {stable_mosaic.version = 11 : i64} {
  func.func @_tanh_newton_kernel(%arg0: i32, %arg1: memref<8x32xf32, #tpu.memory_space<vmem>>, %arg2: memref<32x32xf32, #tpu.memory_space<vmem>>, %arg3: memref<128x128xf32, #tpu.memory_space<vmem>>, %arg4: memref<1x128xi32, #tpu.memory_space<vmem>>, %arg5: memref<32x128xf32, #tpu.memory_space<vmem>>, %arg6: memref<32x128xf32, #tpu.memory_space<vmem>>, %arg7: memref<2x8x128xf32, #tpu.memory_space<vmem>>, %arg8: memref<128x32xf32, #tpu.memory_space<vmem>>, %arg9: memref<8x128xf32, #tpu.memory_space<vmem>>, %arg10: memref<8x32xf32, #tpu.memory_space<vmem>>) attributes {dimension_semantics = [#tpu.dimension_semantics<arbitrary>], iteration_bounds = array<i64: 1>, scalar_prefetch = 0 : i64, scratch_operands = 0 : i64, tpu.core_type = #tpu.core_type<tc>, window_params = [{pipeline_mode = #tpu.pipeline_mode<synchronous>, transform_indices = @transform_0, window_bounds = array<i64: 8, 32>}, {pipeline_mode = #tpu.pipeline_mode<synchronous>, transform_indices = @transform_1, window_bounds = array<i64: 32, 32>}, {pipeline_mode = #tpu.pipeline_mode<synchronous>, transform_indices = @transform_2, window_bounds = array<i64: 128, 128>}, {pipeline_mode = #tpu.pipeline_mode<synchronous>, transform_indices = @transform_3, window_bounds = array<i64: 1, 128>}, {pipeline_mode = #tpu.pipeline_mode<synchronous>, transform_indices = @transform_4, window_bounds = array<i64: 32, 128>}, {pipeline_mode = #tpu.pipeline_mode<synchronous>, transform_indices = @transform_5, window_bounds = array<i64: 32, 128>}, {pipeline_mode = #tpu.pipeline_mode<synchronous>, transform_indices = @transform_6, window_bounds = array<i64: 2, 8, 128>}, {pipeline_mode = #tpu.pipeline_mode<synchronous>, transform_indices = @transform_7, window_bounds = array<i64: 128, 32>}, {pipeline_mode = #tpu.pipeline_mode<synchronous>, transform_indices = @transform_8, window_bounds = array<i64: 8, 128>}, {pipeline_mode = #tpu.pipeline_mode<synchronous>, transform_indices = @transform_9, window_bounds = array<i64: 8, 32>}]} {
    %c0 = arith.constant 0 : index
    %c0_0 = arith.constant 0 : index
    %0 = vector.load %arg1[%c0, %c0_0] : memref<8x32xf32, #tpu.memory_space<vmem>>, vector<8x32xf32>
    %c0_1 = arith.constant 0 : index
    %c0_2 = arith.constant 0 : index
    %1 = vector.load %arg2[%c0_1, %c0_2] : memref<32x32xf32, #tpu.memory_space<vmem>>, vector<32x32xf32>
    %c0_3 = arith.constant 0 : index
    %c0_4 = arith.constant 0 : index
    %2 = vector.load %arg3[%c0_3, %c0_4] : memref<128x128xf32, #tpu.memory_space<vmem>>, vector<128x128xf32>
    %c0_5 = arith.constant 0 : index
    %c0_6 = arith.constant 0 : index
    %3 = vector.load %arg4[%c0_5, %c0_6] : memref<1x128xi32, #tpu.memory_space<vmem>>, vector<1x128xi32>
    %4 = vector.shape_cast %3 : vector<1x128xi32> to vector<1x1x128xi32>
    %c0_7 = arith.constant 0 : index
    %c0_8 = arith.constant 0 : index
    %5 = vector.load %arg5[%c0_7, %c0_8] : memref<32x128xf32, #tpu.memory_space<vmem>>, vector<32x128xf32>
    %c0_9 = arith.constant 0 : index
    %c0_10 = arith.constant 0 : index
    %6 = vector.load %arg6[%c0_9, %c0_10] : memref<32x128xf32, #tpu.memory_space<vmem>>, vector<32x128xf32>
    %c0_11 = arith.constant 0 : index
    %c0_12 = arith.constant 0 : index
    %c0_13 = arith.constant 0 : index
    %7 = vector.load %arg7[%c0_11, %c0_12, %c0_13] : memref<2x8x128xf32, #tpu.memory_space<vmem>>, vector<2x8x128xf32>
    %c0_14 = arith.constant 0 : index
    %c0_15 = arith.constant 0 : index
    %8 = vector.load %arg8[%c0_14, %c0_15] : memref<128x32xf32, #tpu.memory_space<vmem>>, vector<128x32xf32>
    %c0_16 = arith.constant 0 : index
    %c0_17 = arith.constant 0 : index
    %9 = vector.load %arg9[%c0_16, %c0_17] : memref<8x128xf32, #tpu.memory_space<vmem>>, vector<8x128xf32>
    %10 = math.tanh %0 : vector<8x32xf32>
    %cst = arith.constant dense<0.000000e+00> : vector<8x32xf32>
    %11 = tpu.matmul %10, %1, %cst {dimension_numbers = #tpu.dot_dimension_numbers<[1], [0], [0], [1], [0, 0, 1, 1], [], []>} : vector<8x32xf32>, vector<32x32xf32>, vector<8x32xf32> -> vector<8x32xf32>
    %12 = arith.addf %11, %0 : vector<8x32xf32>
    %13 = math.tanh %12 : vector<8x32xf32>
    %14 = arith.subf %10, %13 : vector<8x32xf32>
    %15 = arith.mulf %14, %14 : vector<8x32xf32>
    %16 = vector.shape_cast %15 : vector<8x32xf32> to vector<1x8x32xf32>
    %cst_18 = arith.constant dense<0.000000e+00> : vector<1xf32>
    %17 = vector.multi_reduction <add>, %16, %cst_18 [1, 2] : vector<1x8x32xf32> to vector<1xf32>
    %18 = vector.shape_cast %17 : vector<1xf32> to vector<1x1x1xf32>
    %19 = vector.extract %18[0, 0, 0] : f32 from vector<1x1x1xf32>
    %c0_i32 = arith.constant 0 : i32
    %20:5 = scf.while (%arg11 = %10, %arg12 = %13, %arg13 = %14, %arg14 = %19, %arg15 = %c0_i32) : (vector<8x32xf32>, vector<8x32xf32>, vector<8x32xf32>, f32, i32) -> (vector<8x32xf32>, vector<8x32xf32>, vector<8x32xf32>, f32, i32) {
      %c50_i32 = arith.constant 50 : i32
      %22 = arith.cmpi slt, %arg15, %c50_i32 : i32
      %cst_21 = arith.constant 9.99999993E-9 : f32
      %23 = arith.cmpf oge, %arg14, %cst_21 : f32
      %24 = arith.andi %22, %23 : i1
      scf.condition(%24) %arg11, %arg12, %arg13, %arg14, %arg15 : vector<8x32xf32>, vector<8x32xf32>, vector<8x32xf32>, f32, i32
    } do {
    ^bb0(%arg11: vector<8x32xf32>, %arg12: vector<8x32xf32>, %arg13: vector<8x32xf32>, %arg14: f32, %arg15: i32):
      %22 = arith.mulf %arg12, %arg12 : vector<8x32xf32>
      %cst_21 = arith.constant 1.000000e+00 : f32
      %23 = vector.broadcast %cst_21 : f32 to vector<8x32xf32>
      %24 = arith.subf %23, %22 : vector<8x32xf32>
      %25 = tpu.concatenate %24, %24, %24, %24 in 1 : vector<8x32xf32>, vector<8x32xf32>, vector<8x32xf32>, vector<8x32xf32> -> vector<8x128xf32>
      %26 = vector.extract_strided_slice %7 {offsets = [0, 0, 0], sizes = [1, 8, 128], strides = [1, 1, 1]} : vector<2x8x128xf32> to vector<1x8x128xf32>
      %27 = vector.shape_cast %26 : vector<1x8x128xf32> to vector<8x128xf32>
      %28 = arith.mulf %25, %27 : vector<8x128xf32>
      %cst_22 = arith.constant dense<0.000000e+00> : vector<128xf32>
      %29 = vector.multi_reduction <add>, %28, %cst_22 [0] : vector<8x128xf32> to vector<128xf32>
      %30 = vector.shape_cast %29 : vector<128xf32> to vector<1x128xf32>
      %31 = vector.extract_strided_slice %7 {offsets = [1, 0, 0], sizes = [1, 8, 128], strides = [1, 1, 1]} : vector<2x8x128xf32> to vector<1x8x128xf32>
      %32 = vector.shape_cast %31 : vector<1x8x128xf32> to vector<8x128xf32>
      %33 = arith.mulf %25, %32 : vector<8x128xf32>
      %cst_23 = arith.constant dense<0.000000e+00> : vector<128xf32>
      %34 = vector.multi_reduction <add>, %33, %cst_23 [0] : vector<8x128xf32> to vector<128xf32>
      %35 = vector.shape_cast %34 : vector<128xf32> to vector<1x128xf32>
      %36 = vector.shape_cast %30 : vector<1x128xf32> to vector<1x1x128xf32>
      %37 = vector.shape_cast %35 : vector<1x128xf32> to vector<1x1x128xf32>
      %38 = tpu.concatenate %36, %37 in 0 : vector<1x1x128xf32>, vector<1x1x128xf32> -> vector<2x1x128xf32>
      %39 = tpu.concatenate %arg13, %arg13, %arg13, %arg13 in 1 : vector<8x32xf32>, vector<8x32xf32>, vector<8x32xf32>, vector<8x32xf32> -> vector<8x128xf32>
      %40 = vector.extract_strided_slice %7 {offsets = [0, 0, 0], sizes = [1, 8, 128], strides = [1, 1, 1]} : vector<2x8x128xf32> to vector<1x8x128xf32>
      %41 = vector.shape_cast %40 : vector<1x8x128xf32> to vector<8x128xf32>
      %42 = arith.mulf %39, %41 : vector<8x128xf32>
      %cst_24 = arith.constant dense<0.000000e+00> : vector<128xf32>
      %43 = vector.multi_reduction <add>, %42, %cst_24 [0] : vector<8x128xf32> to vector<128xf32>
      %44 = vector.shape_cast %43 : vector<128xf32> to vector<1x128xf32>
      %45 = vector.extract_strided_slice %7 {offsets = [1, 0, 0], sizes = [1, 8, 128], strides = [1, 1, 1]} : vector<2x8x128xf32> to vector<1x8x128xf32>
      %46 = vector.shape_cast %45 : vector<1x8x128xf32> to vector<8x128xf32>
      %47 = arith.mulf %39, %46 : vector<8x128xf32>
      %cst_25 = arith.constant dense<0.000000e+00> : vector<128xf32>
      %48 = vector.multi_reduction <add>, %47, %cst_25 [0] : vector<8x128xf32> to vector<128xf32>
      %49 = vector.shape_cast %48 : vector<128xf32> to vector<1x128xf32>
      %50 = vector.shape_cast %44 : vector<1x128xf32> to vector<1x1x128xf32>
      %51 = vector.shape_cast %49 : vector<1x128xf32> to vector<1x1x128xf32>
      %52 = tpu.concatenate %50, %51 in 0 : vector<1x1x128xf32>, vector<1x1x128xf32> -> vector<2x1x128xf32>
      %53 = vector.shape_cast %5 : vector<32x128xf32> to vector<1x32x128xf32>
      %54 = vector.shape_cast %6 : vector<32x128xf32> to vector<1x32x128xf32>
      %55 = vector.broadcast %38 : vector<2x1x128xf32> to vector<2x32x128xf32>
      %56 = vector.broadcast %54 : vector<1x32x128xf32> to vector<2x32x128xf32>
      %57 = arith.mulf %55, %56 : vector<2x32x128xf32>
      %58 = vector.broadcast %53 : vector<1x32x128xf32> to vector<2x32x128xf32>
      %59 = arith.subf %58, %57 : vector<2x32x128xf32>
      %60 = vector.shape_cast %9 : vector<8x128xf32> to vector<1x8x128xf32>
      %61 = vector.broadcast %52 : vector<2x1x128xf32> to vector<2x8x128xf32>
      %62 = vector.broadcast %60 : vector<1x8x128xf32> to vector<2x8x128xf32>
      %63 = arith.mulf %61, %62 : vector<2x8x128xf32>
      %64 = tpu.concatenate %59, %63 in 1 : vector<2x32x128xf32>, vector<2x8x128xf32> -> vector<2x40x128xf32>
      %c0_i32_26 = arith.constant 0 : i32
      %65 = vector.broadcast %c0_i32_26 : i32 to vector<1x1x128xi32>
      %66 = arith.cmpi eq, %4, %65 : vector<1x1x128xi32>
      %c1_i32 = arith.constant 1 : i32
      %67 = vector.broadcast %c1_i32 : i32 to vector<1x1x128xi32>
      %68 = arith.cmpi eq, %4, %67 : vector<1x1x128xi32>
      %cst_27 = arith.constant 0.000000e+00 : f32
      %69 = vector.shape_cast %66 : vector<1x1x128xi1> to vector<1x1x128xi1>
      %70 = vector.broadcast %69 : vector<1x1x128xi1> to vector<2x40x128xi1>
      %71 = vector.broadcast %cst_27 : f32 to vector<2x40x128xf32>
      %72 = arith.select %70, %64, %71 : vector<2x40x128xi1>, vector<2x40x128xf32>
      %cst_28 = arith.constant 0.000000e+00 : f32
      %73 = vector.shape_cast %68 : vector<1x1x128xi1> to vector<1x1x128xi1>
      %74 = vector.broadcast %73 : vector<1x1x128xi1> to vector<2x40x128xi1>
      %75 = vector.broadcast %cst_28 : f32 to vector<2x40x128xf32>
      %76 = arith.select %74, %64, %75 : vector<2x40x128xi1>, vector<2x40x128xf32>
      %77 = tpu.concatenate %72, %76 in 0 : vector<2x40x128xf32>, vector<2x40x128xf32> -> vector<4x40x128xf32>
      %78 = vector.shape_cast %77 : vector<4x40x128xf32> to vector<160x128xf32>
      %cst_29 = arith.constant dense<0.000000e+00> : vector<160x128xf32>
      %79 = tpu.matmul %78, %2, %cst_29 {dimension_numbers = #tpu.dot_dimension_numbers<[1], [0], [0], [1], [0, 0, 1, 1], [], []>} : vector<160x128xf32>, vector<128x128xf32>, vector<160x128xf32> -> vector<160x128xf32>
      %80 = vector.extract_strided_slice %79 {offsets = [0, 0], sizes = [80, 128], strides = [1, 1]} : vector<160x128xf32> to vector<80x128xf32>
      %81 = vector.shape_cast %80 : vector<80x128xf32> to vector<2x40x128xf32>
      %82 = vector.extract_strided_slice %79 {offsets = [80, 0], sizes = [80, 128], strides = [1, 1]} : vector<160x128xf32> to vector<80x128xf32>
      %83 = vector.shape_cast %82 : vector<80x128xf32> to vector<2x40x128xf32>
      %84 = vector.extract_strided_slice %81 {offsets = [0, 0, 0], sizes = [2, 1, 128], strides = [1, 1, 1]} : vector<2x40x128xf32> to vector<2x1x128xf32>
      %85 = vector.extract_strided_slice %81 {offsets = [0, 1, 0], sizes = [2, 1, 128], strides = [1, 1, 1]} : vector<2x40x128xf32> to vector<2x1x128xf32>
      %86 = vector.extract_strided_slice %83 {offsets = [0, 0, 0], sizes = [2, 1, 128], strides = [1, 1, 1]} : vector<2x40x128xf32> to vector<2x1x128xf32>
      %87 = vector.extract_strided_slice %83 {offsets = [0, 1, 0], sizes = [2, 1, 128], strides = [1, 1, 1]} : vector<2x40x128xf32> to vector<2x1x128xf32>
      %88 = arith.mulf %84, %87 : vector<2x1x128xf32>
      %89 = arith.mulf %85, %86 : vector<2x1x128xf32>
      %90 = arith.subf %88, %89 : vector<2x1x128xf32>
      %91 = tpu.reciprocal %90 {approx = true} : vector<2x1x128xf32> -> vector<2x1x128xf32>
      %92 = arith.mulf %90, %91 : vector<2x1x128xf32>
      %cst_30 = arith.constant 2.000000e+00 : f32
      %93 = vector.broadcast %cst_30 : f32 to vector<2x1x128xf32>
      %94 = arith.subf %93, %92 : vector<2x1x128xf32>
      %95 = arith.mulf %91, %94 : vector<2x1x128xf32>
      %96 = vector.broadcast %87 : vector<2x1x128xf32> to vector<2x40x128xf32>
      %97 = arith.mulf %96, %81 : vector<2x40x128xf32>
      %98 = vector.broadcast %85 : vector<2x1x128xf32> to vector<2x40x128xf32>
      %99 = arith.mulf %98, %83 : vector<2x40x128xf32>
      %100 = arith.subf %97, %99 : vector<2x40x128xf32>
      %101 = vector.broadcast %95 : vector<2x1x128xf32> to vector<2x40x128xf32>
      %102 = arith.mulf %100, %101 : vector<2x40x128xf32>
      %103 = vector.broadcast %84 : vector<2x1x128xf32> to vector<2x40x128xf32>
      %104 = arith.mulf %103, %83 : vector<2x40x128xf32>
      %105 = vector.broadcast %86 : vector<2x1x128xf32> to vector<2x40x128xf32>
      %106 = arith.mulf %105, %81 : vector<2x40x128xf32>
      %107 = arith.subf %104, %106 : vector<2x40x128xf32>
      %108 = vector.broadcast %95 : vector<2x1x128xf32> to vector<2x40x128xf32>
      %109 = arith.mulf %107, %108 : vector<2x40x128xf32>
      %110 = vector.extract_strided_slice %64 {offsets = [0, 0, 0], sizes = [2, 1, 128], strides = [1, 1, 1]} : vector<2x40x128xf32> to vector<2x1x128xf32>
      %111 = vector.extract_strided_slice %64 {offsets = [0, 1, 0], sizes = [2, 1, 128], strides = [1, 1, 1]} : vector<2x40x128xf32> to vector<2x1x128xf32>
      %112 = vector.broadcast %110 : vector<2x1x128xf32> to vector<2x40x128xf32>
      %113 = arith.mulf %112, %102 : vector<2x40x128xf32>
      %114 = arith.subf %64, %113 : vector<2x40x128xf32>
      %115 = vector.broadcast %111 : vector<2x1x128xf32> to vector<2x40x128xf32>
      %116 = arith.mulf %115, %109 : vector<2x40x128xf32>
      %117 = arith.subf %114, %116 : vector<2x40x128xf32>
      %118 = vector.shape_cast %66 : vector<1x1x128xi1> to vector<1x1x128xi1>
      %119 = vector.broadcast %118 : vector<1x1x128xi1> to vector<2x40x128xi1>
      %120 = arith.select %119, %102, %117 : vector<2x40x128xi1>, vector<2x40x128xf32>
      %121 = vector.shape_cast %68 : vector<1x1x128xi1> to vector<1x1x128xi1>
      %122 = vector.broadcast %121 : vector<1x1x128xi1> to vector<2x40x128xi1>
      %123 = arith.select %122, %109, %120 : vector<2x40x128xi1>, vector<2x40x128xf32>
      %c2_i32 = arith.constant 2 : i32
      %124 = vector.broadcast %c2_i32 : i32 to vector<1x1x128xi32>
      %125 = arith.cmpi eq, %4, %124 : vector<1x1x128xi32>
      %c3_i32 = arith.constant 3 : i32
      %126 = vector.broadcast %c3_i32 : i32 to vector<1x1x128xi32>
      %127 = arith.cmpi eq, %4, %126 : vector<1x1x128xi32>
      %cst_31 = arith.constant 0.000000e+00 : f32
      %128 = vector.shape_cast %125 : vector<1x1x128xi1> to vector<1x1x128xi1>
      %129 = vector.broadcast %128 : vector<1x1x128xi1> to vector<2x40x128xi1>
      %130 = vector.broadcast %cst_31 : f32 to vector<2x40x128xf32>
      %131 = arith.select %129, %123, %130 : vector<2x40x128xi1>, vector<2x40x128xf32>
      %cst_32 = arith.constant 0.000000e+00 : f32
      %132 = vector.shape_cast %127 : vector<1x1x128xi1> to vector<1x1x128xi1>
      %133 = vector.broadcast %132 : vector<1x1x128xi1> to vector<2x40x128xi1>
      %134 = vector.broadcast %cst_32 : f32 to vector<2x40x128xf32>
      %135 = arith.select %133, %123, %134 : vector<2x40x128xi1>, vector<2x40x128xf32>
      %136 = tpu.concatenate %131, %135 in 0 : vector<2x40x128xf32>, vector<2x40x128xf32> -> vector<4x40x128xf32>
      %137 = vector.shape_cast %136 : vector<4x40x128xf32> to vector<160x128xf32>
      %cst_33 = arith.constant dense<0.000000e+00> : vector<160x128xf32>
      %138 = tpu.matmul %137, %2, %cst_33 {dimension_numbers = #tpu.dot_dimension_numbers<[1], [0], [0], [1], [0, 0, 1, 1], [], []>} : vector<160x128xf32>, vector<128x128xf32>, vector<160x128xf32> -> vector<160x128xf32>
      %139 = vector.extract_strided_slice %138 {offsets = [0, 0], sizes = [80, 128], strides = [1, 1]} : vector<160x128xf32> to vector<80x128xf32>
      %140 = vector.shape_cast %139 : vector<80x128xf32> to vector<2x40x128xf32>
      %141 = vector.extract_strided_slice %138 {offsets = [80, 0], sizes = [80, 128], strides = [1, 1]} : vector<160x128xf32> to vector<80x128xf32>
      %142 = vector.shape_cast %141 : vector<80x128xf32> to vector<2x40x128xf32>
      %143 = vector.extract_strided_slice %140 {offsets = [0, 2, 0], sizes = [2, 1, 128], strides = [1, 1, 1]} : vector<2x40x128xf32> to vector<2x1x128xf32>
      %144 = vector.extract_strided_slice %140 {offsets = [0, 3, 0], sizes = [2, 1, 128], strides = [1, 1, 1]} : vector<2x40x128xf32> to vector<2x1x128xf32>
      %145 = vector.extract_strided_slice %142 {offsets = [0, 2, 0], sizes = [2, 1, 128], strides = [1, 1, 1]} : vector<2x40x128xf32> to vector<2x1x128xf32>
      %146 = vector.extract_strided_slice %142 {offsets = [0, 3, 0], sizes = [2, 1, 128], strides = [1, 1, 1]} : vector<2x40x128xf32> to vector<2x1x128xf32>
      %147 = arith.mulf %143, %146 : vector<2x1x128xf32>
      %148 = arith.mulf %144, %145 : vector<2x1x128xf32>
      %149 = arith.subf %147, %148 : vector<2x1x128xf32>
      %150 = tpu.reciprocal %149 {approx = true} : vector<2x1x128xf32> -> vector<2x1x128xf32>
      %151 = arith.mulf %149, %150 : vector<2x1x128xf32>
      %cst_34 = arith.constant 2.000000e+00 : f32
      %152 = vector.broadcast %cst_34 : f32 to vector<2x1x128xf32>
      %153 = arith.subf %152, %151 : vector<2x1x128xf32>
      %154 = arith.mulf %150, %153 : vector<2x1x128xf32>
      %155 = vector.broadcast %146 : vector<2x1x128xf32> to vector<2x40x128xf32>
      %156 = arith.mulf %155, %140 : vector<2x40x128xf32>
      %157 = vector.broadcast %144 : vector<2x1x128xf32> to vector<2x40x128xf32>
      %158 = arith.mulf %157, %142 : vector<2x40x128xf32>
      %159 = arith.subf %156, %158 : vector<2x40x128xf32>
      %160 = vector.broadcast %154 : vector<2x1x128xf32> to vector<2x40x128xf32>
      %161 = arith.mulf %159, %160 : vector<2x40x128xf32>
      %162 = vector.broadcast %143 : vector<2x1x128xf32> to vector<2x40x128xf32>
      %163 = arith.mulf %162, %142 : vector<2x40x128xf32>
      %164 = vector.broadcast %145 : vector<2x1x128xf32> to vector<2x40x128xf32>
      %165 = arith.mulf %164, %140 : vector<2x40x128xf32>
      %166 = arith.subf %163, %165 : vector<2x40x128xf32>
      %167 = vector.broadcast %154 : vector<2x1x128xf32> to vector<2x40x128xf32>
      %168 = arith.mulf %166, %167 : vector<2x40x128xf32>
      %169 = vector.extract_strided_slice %123 {offsets = [0, 2, 0], sizes = [2, 1, 128], strides = [1, 1, 1]} : vector<2x40x128xf32> to vector<2x1x128xf32>
      %170 = vector.extract_strided_slice %123 {offsets = [0, 3, 0], sizes = [2, 1, 128], strides = [1, 1, 1]} : vector<2x40x128xf32> to vector<2x1x128xf32>
      %171 = vector.broadcast %169 : vector<2x1x128xf32> to vector<2x40x128xf32>
      %172 = arith.mulf %171, %161 : vector<2x40x128xf32>
      %173 = arith.subf %123, %172 : vector<2x40x128xf32>
      %174 = vector.broadcast %170 : vector<2x1x128xf32> to vector<2x40x128xf32>
      %175 = arith.mulf %174, %168 : vector<2x40x128xf32>
      %176 = arith.subf %173, %175 : vector<2x40x128xf32>
      %177 = vector.shape_cast %125 : vector<1x1x128xi1> to vector<1x1x128xi1>
      %178 = vector.broadcast %177 : vector<1x1x128xi1> to vector<2x40x128xi1>
      %179 = arith.select %178, %161, %176 : vector<2x40x128xi1>, vector<2x40x128xf32>
      %180 = vector.shape_cast %127 : vector<1x1x128xi1> to vector<1x1x128xi1>
      %181 = vector.broadcast %180 : vector<1x1x128xi1> to vector<2x40x128xi1>
      %182 = arith.select %181, %168, %179 : vector<2x40x128xi1>, vector<2x40x128xf32>
      %c4_i32 = arith.constant 4 : i32
      %183 = vector.broadcast %c4_i32 : i32 to vector<1x1x128xi32>
      %184 = arith.cmpi eq, %4, %183 : vector<1x1x128xi32>
      %c5_i32 = arith.constant 5 : i32
      %185 = vector.broadcast %c5_i32 : i32 to vector<1x1x128xi32>
      %186 = arith.cmpi eq, %4, %185 : vector<1x1x128xi32>
      %cst_35 = arith.constant 0.000000e+00 : f32
      %187 = vector.shape_cast %184 : vector<1x1x128xi1> to vector<1x1x128xi1>
      %188 = vector.broadcast %187 : vector<1x1x128xi1> to vector<2x40x128xi1>
      %189 = vector.broadcast %cst_35 : f32 to vector<2x40x128xf32>
      %190 = arith.select %188, %182, %189 : vector<2x40x128xi1>, vector<2x40x128xf32>
      %cst_36 = arith.constant 0.000000e+00 : f32
      %191 = vector.shape_cast %186 : vector<1x1x128xi1> to vector<1x1x128xi1>
      %192 = vector.broadcast %191 : vector<1x1x128xi1> to vector<2x40x128xi1>
      %193 = vector.broadcast %cst_36 : f32 to vector<2x40x128xf32>
      %194 = arith.select %192, %182, %193 : vector<2x40x128xi1>, vector<2x40x128xf32>
      %195 = tpu.concatenate %190, %194 in 0 : vector<2x40x128xf32>, vector<2x40x128xf32> -> vector<4x40x128xf32>
      %196 = vector.shape_cast %195 : vector<4x40x128xf32> to vector<160x128xf32>
      %cst_37 = arith.constant dense<0.000000e+00> : vector<160x128xf32>
      %197 = tpu.matmul %196, %2, %cst_37 {dimension_numbers = #tpu.dot_dimension_numbers<[1], [0], [0], [1], [0, 0, 1, 1], [], []>} : vector<160x128xf32>, vector<128x128xf32>, vector<160x128xf32> -> vector<160x128xf32>
      %198 = vector.extract_strided_slice %197 {offsets = [0, 0], sizes = [80, 128], strides = [1, 1]} : vector<160x128xf32> to vector<80x128xf32>
      %199 = vector.shape_cast %198 : vector<80x128xf32> to vector<2x40x128xf32>
      %200 = vector.extract_strided_slice %197 {offsets = [80, 0], sizes = [80, 128], strides = [1, 1]} : vector<160x128xf32> to vector<80x128xf32>
      %201 = vector.shape_cast %200 : vector<80x128xf32> to vector<2x40x128xf32>
      %202 = vector.extract_strided_slice %199 {offsets = [0, 4, 0], sizes = [2, 1, 128], strides = [1, 1, 1]} : vector<2x40x128xf32> to vector<2x1x128xf32>
      %203 = vector.extract_strided_slice %199 {offsets = [0, 5, 0], sizes = [2, 1, 128], strides = [1, 1, 1]} : vector<2x40x128xf32> to vector<2x1x128xf32>
      %204 = vector.extract_strided_slice %201 {offsets = [0, 4, 0], sizes = [2, 1, 128], strides = [1, 1, 1]} : vector<2x40x128xf32> to vector<2x1x128xf32>
      %205 = vector.extract_strided_slice %201 {offsets = [0, 5, 0], sizes = [2, 1, 128], strides = [1, 1, 1]} : vector<2x40x128xf32> to vector<2x1x128xf32>
      %206 = arith.mulf %202, %205 : vector<2x1x128xf32>
      %207 = arith.mulf %203, %204 : vector<2x1x128xf32>
      %208 = arith.subf %206, %207 : vector<2x1x128xf32>
      %209 = tpu.reciprocal %208 {approx = true} : vector<2x1x128xf32> -> vector<2x1x128xf32>
      %210 = arith.mulf %208, %209 : vector<2x1x128xf32>
      %cst_38 = arith.constant 2.000000e+00 : f32
      %211 = vector.broadcast %cst_38 : f32 to vector<2x1x128xf32>
      %212 = arith.subf %211, %210 : vector<2x1x128xf32>
      %213 = arith.mulf %209, %212 : vector<2x1x128xf32>
      %214 = vector.broadcast %205 : vector<2x1x128xf32> to vector<2x40x128xf32>
      %215 = arith.mulf %214, %199 : vector<2x40x128xf32>
      %216 = vector.broadcast %203 : vector<2x1x128xf32> to vector<2x40x128xf32>
      %217 = arith.mulf %216, %201 : vector<2x40x128xf32>
      %218 = arith.subf %215, %217 : vector<2x40x128xf32>
      %219 = vector.broadcast %213 : vector<2x1x128xf32> to vector<2x40x128xf32>
      %220 = arith.mulf %218, %219 : vector<2x40x128xf32>
      %221 = vector.broadcast %202 : vector<2x1x128xf32> to vector<2x40x128xf32>
      %222 = arith.mulf %221, %201 : vector<2x40x128xf32>
      %223 = vector.broadcast %204 : vector<2x1x128xf32> to vector<2x40x128xf32>
      %224 = arith.mulf %223, %199 : vector<2x40x128xf32>
      %225 = arith.subf %222, %224 : vector<2x40x128xf32>
      %226 = vector.broadcast %213 : vector<2x1x128xf32> to vector<2x40x128xf32>
      %227 = arith.mulf %225, %226 : vector<2x40x128xf32>
      %228 = vector.extract_strided_slice %182 {offsets = [0, 4, 0], sizes = [2, 1, 128], strides = [1, 1, 1]} : vector<2x40x128xf32> to vector<2x1x128xf32>
      %229 = vector.extract_strided_slice %182 {offsets = [0, 5, 0], sizes = [2, 1, 128], strides = [1, 1, 1]} : vector<2x40x128xf32> to vector<2x1x128xf32>
      %230 = vector.broadcast %228 : vector<2x1x128xf32> to vector<2x40x128xf32>
      %231 = arith.mulf %230, %220 : vector<2x40x128xf32>
      %232 = arith.subf %182, %231 : vector<2x40x128xf32>
      %233 = vector.broadcast %229 : vector<2x1x128xf32> to vector<2x40x128xf32>
      %234 = arith.mulf %233, %227 : vector<2x40x128xf32>
      %235 = arith.subf %232, %234 : vector<2x40x128xf32>
      %236 = vector.shape_cast %184 : vector<1x1x128xi1> to vector<1x1x128xi1>
      %237 = vector.broadcast %236 : vector<1x1x128xi1> to vector<2x40x128xi1>
      %238 = arith.select %237, %220, %235 : vector<2x40x128xi1>, vector<2x40x128xf32>
      %239 = vector.shape_cast %186 : vector<1x1x128xi1> to vector<1x1x128xi1>
      %240 = vector.broadcast %239 : vector<1x1x128xi1> to vector<2x40x128xi1>
      %241 = arith.select %240, %227, %238 : vector<2x40x128xi1>, vector<2x40x128xf32>
      %c6_i32 = arith.constant 6 : i32
      %242 = vector.broadcast %c6_i32 : i32 to vector<1x1x128xi32>
      %243 = arith.cmpi eq, %4, %242 : vector<1x1x128xi32>
      %c7_i32 = arith.constant 7 : i32
      %244 = vector.broadcast %c7_i32 : i32 to vector<1x1x128xi32>
      %245 = arith.cmpi eq, %4, %244 : vector<1x1x128xi32>
      %cst_39 = arith.constant 0.000000e+00 : f32
      %246 = vector.shape_cast %243 : vector<1x1x128xi1> to vector<1x1x128xi1>
      %247 = vector.broadcast %246 : vector<1x1x128xi1> to vector<2x40x128xi1>
      %248 = vector.broadcast %cst_39 : f32 to vector<2x40x128xf32>
      %249 = arith.select %247, %241, %248 : vector<2x40x128xi1>, vector<2x40x128xf32>
      %cst_40 = arith.constant 0.000000e+00 : f32
      %250 = vector.shape_cast %245 : vector<1x1x128xi1> to vector<1x1x128xi1>
      %251 = vector.broadcast %250 : vector<1x1x128xi1> to vector<2x40x128xi1>
      %252 = vector.broadcast %cst_40 : f32 to vector<2x40x128xf32>
      %253 = arith.select %251, %241, %252 : vector<2x40x128xi1>, vector<2x40x128xf32>
      %254 = tpu.concatenate %249, %253 in 0 : vector<2x40x128xf32>, vector<2x40x128xf32> -> vector<4x40x128xf32>
      %255 = vector.shape_cast %254 : vector<4x40x128xf32> to vector<160x128xf32>
      %cst_41 = arith.constant dense<0.000000e+00> : vector<160x128xf32>
      %256 = tpu.matmul %255, %2, %cst_41 {dimension_numbers = #tpu.dot_dimension_numbers<[1], [0], [0], [1], [0, 0, 1, 1], [], []>} : vector<160x128xf32>, vector<128x128xf32>, vector<160x128xf32> -> vector<160x128xf32>
      %257 = vector.extract_strided_slice %256 {offsets = [0, 0], sizes = [80, 128], strides = [1, 1]} : vector<160x128xf32> to vector<80x128xf32>
      %258 = vector.shape_cast %257 : vector<80x128xf32> to vector<2x40x128xf32>
      %259 = vector.extract_strided_slice %256 {offsets = [80, 0], sizes = [80, 128], strides = [1, 1]} : vector<160x128xf32> to vector<80x128xf32>
      %260 = vector.shape_cast %259 : vector<80x128xf32> to vector<2x40x128xf32>
      %261 = vector.extract_strided_slice %258 {offsets = [0, 6, 0], sizes = [2, 1, 128], strides = [1, 1, 1]} : vector<2x40x128xf32> to vector<2x1x128xf32>
      %262 = vector.extract_strided_slice %258 {offsets = [0, 7, 0], sizes = [2, 1, 128], strides = [1, 1, 1]} : vector<2x40x128xf32> to vector<2x1x128xf32>
      %263 = vector.extract_strided_slice %260 {offsets = [0, 6, 0], sizes = [2, 1, 128], strides = [1, 1, 1]} : vector<2x40x128xf32> to vector<2x1x128xf32>
      %264 = vector.extract_strided_slice %260 {offsets = [0, 7, 0], sizes = [2, 1, 128], strides = [1, 1, 1]} : vector<2x40x128xf32> to vector<2x1x128xf32>
      %265 = arith.mulf %261, %264 : vector<2x1x128xf32>
      %266 = arith.mulf %262, %263 : vector<2x1x128xf32>
      %267 = arith.subf %265, %266 : vector<2x1x128xf32>
      %268 = tpu.reciprocal %267 {approx = true} : vector<2x1x128xf32> -> vector<2x1x128xf32>
      %269 = arith.mulf %267, %268 : vector<2x1x128xf32>
      %cst_42 = arith.constant 2.000000e+00 : f32
      %270 = vector.broadcast %cst_42 : f32 to vector<2x1x128xf32>
      %271 = arith.subf %270, %269 : vector<2x1x128xf32>
      %272 = arith.mulf %268, %271 : vector<2x1x128xf32>
      %273 = vector.broadcast %264 : vector<2x1x128xf32> to vector<2x40x128xf32>
      %274 = arith.mulf %273, %258 : vector<2x40x128xf32>
      %275 = vector.broadcast %262 : vector<2x1x128xf32> to vector<2x40x128xf32>
      %276 = arith.mulf %275, %260 : vector<2x40x128xf32>
      %277 = arith.subf %274, %276 : vector<2x40x128xf32>
      %278 = vector.broadcast %272 : vector<2x1x128xf32> to vector<2x40x128xf32>
      %279 = arith.mulf %277, %278 : vector<2x40x128xf32>
      %280 = vector.broadcast %261 : vector<2x1x128xf32> to vector<2x40x128xf32>
      %281 = arith.mulf %280, %260 : vector<2x40x128xf32>
      %282 = vector.broadcast %263 : vector<2x1x128xf32> to vector<2x40x128xf32>
      %283 = arith.mulf %282, %258 : vector<2x40x128xf32>
      %284 = arith.subf %281, %283 : vector<2x40x128xf32>
      %285 = vector.broadcast %272 : vector<2x1x128xf32> to vector<2x40x128xf32>
      %286 = arith.mulf %284, %285 : vector<2x40x128xf32>
      %287 = vector.extract_strided_slice %241 {offsets = [0, 6, 0], sizes = [2, 1, 128], strides = [1, 1, 1]} : vector<2x40x128xf32> to vector<2x1x128xf32>
      %288 = vector.extract_strided_slice %241 {offsets = [0, 7, 0], sizes = [2, 1, 128], strides = [1, 1, 1]} : vector<2x40x128xf32> to vector<2x1x128xf32>
      %289 = vector.broadcast %287 : vector<2x1x128xf32> to vector<2x40x128xf32>
      %290 = arith.mulf %289, %279 : vector<2x40x128xf32>
      %291 = arith.subf %241, %290 : vector<2x40x128xf32>
      %292 = vector.broadcast %288 : vector<2x1x128xf32> to vector<2x40x128xf32>
      %293 = arith.mulf %292, %286 : vector<2x40x128xf32>
      %294 = arith.subf %291, %293 : vector<2x40x128xf32>
      %295 = vector.shape_cast %243 : vector<1x1x128xi1> to vector<1x1x128xi1>
      %296 = vector.broadcast %295 : vector<1x1x128xi1> to vector<2x40x128xi1>
      %297 = arith.select %296, %279, %294 : vector<2x40x128xi1>, vector<2x40x128xf32>
      %298 = vector.shape_cast %245 : vector<1x1x128xi1> to vector<1x1x128xi1>
      %299 = vector.broadcast %298 : vector<1x1x128xi1> to vector<2x40x128xi1>
      %300 = arith.select %299, %286, %297 : vector<2x40x128xi1>, vector<2x40x128xf32>
      %c8_i32 = arith.constant 8 : i32
      %301 = vector.broadcast %c8_i32 : i32 to vector<1x1x128xi32>
      %302 = arith.cmpi eq, %4, %301 : vector<1x1x128xi32>
      %c9_i32 = arith.constant 9 : i32
      %303 = vector.broadcast %c9_i32 : i32 to vector<1x1x128xi32>
      %304 = arith.cmpi eq, %4, %303 : vector<1x1x128xi32>
      %cst_43 = arith.constant 0.000000e+00 : f32
      %305 = vector.shape_cast %302 : vector<1x1x128xi1> to vector<1x1x128xi1>
      %306 = vector.broadcast %305 : vector<1x1x128xi1> to vector<2x40x128xi1>
      %307 = vector.broadcast %cst_43 : f32 to vector<2x40x128xf32>
      %308 = arith.select %306, %300, %307 : vector<2x40x128xi1>, vector<2x40x128xf32>
      %cst_44 = arith.constant 0.000000e+00 : f32
      %309 = vector.shape_cast %304 : vector<1x1x128xi1> to vector<1x1x128xi1>
      %310 = vector.broadcast %309 : vector<1x1x128xi1> to vector<2x40x128xi1>
      %311 = vector.broadcast %cst_44 : f32 to vector<2x40x128xf32>
      %312 = arith.select %310, %300, %311 : vector<2x40x128xi1>, vector<2x40x128xf32>
      %313 = tpu.concatenate %308, %312 in 0 : vector<2x40x128xf32>, vector<2x40x128xf32> -> vector<4x40x128xf32>
      %314 = vector.shape_cast %313 : vector<4x40x128xf32> to vector<160x128xf32>
      %cst_45 = arith.constant dense<0.000000e+00> : vector<160x128xf32>
      %315 = tpu.matmul %314, %2, %cst_45 {dimension_numbers = #tpu.dot_dimension_numbers<[1], [0], [0], [1], [0, 0, 1, 1], [], []>} : vector<160x128xf32>, vector<128x128xf32>, vector<160x128xf32> -> vector<160x128xf32>
      %316 = vector.extract_strided_slice %315 {offsets = [0, 0], sizes = [80, 128], strides = [1, 1]} : vector<160x128xf32> to vector<80x128xf32>
      %317 = vector.shape_cast %316 : vector<80x128xf32> to vector<2x40x128xf32>
      %318 = vector.extract_strided_slice %315 {offsets = [80, 0], sizes = [80, 128], strides = [1, 1]} : vector<160x128xf32> to vector<80x128xf32>
      %319 = vector.shape_cast %318 : vector<80x128xf32> to vector<2x40x128xf32>
      %320 = vector.extract_strided_slice %317 {offsets = [0, 8, 0], sizes = [2, 1, 128], strides = [1, 1, 1]} : vector<2x40x128xf32> to vector<2x1x128xf32>
      %321 = vector.extract_strided_slice %317 {offsets = [0, 9, 0], sizes = [2, 1, 128], strides = [1, 1, 1]} : vector<2x40x128xf32> to vector<2x1x128xf32>
      %322 = vector.extract_strided_slice %319 {offsets = [0, 8, 0], sizes = [2, 1, 128], strides = [1, 1, 1]} : vector<2x40x128xf32> to vector<2x1x128xf32>
      %323 = vector.extract_strided_slice %319 {offsets = [0, 9, 0], sizes = [2, 1, 128], strides = [1, 1, 1]} : vector<2x40x128xf32> to vector<2x1x128xf32>
      %324 = arith.mulf %320, %323 : vector<2x1x128xf32>
      %325 = arith.mulf %321, %322 : vector<2x1x128xf32>
      %326 = arith.subf %324, %325 : vector<2x1x128xf32>
      %327 = tpu.reciprocal %326 {approx = true} : vector<2x1x128xf32> -> vector<2x1x128xf32>
      %328 = arith.mulf %326, %327 : vector<2x1x128xf32>
      %cst_46 = arith.constant 2.000000e+00 : f32
      %329 = vector.broadcast %cst_46 : f32 to vector<2x1x128xf32>
      %330 = arith.subf %329, %328 : vector<2x1x128xf32>
      %331 = arith.mulf %327, %330 : vector<2x1x128xf32>
      %332 = vector.broadcast %323 : vector<2x1x128xf32> to vector<2x40x128xf32>
      %333 = arith.mulf %332, %317 : vector<2x40x128xf32>
      %334 = vector.broadcast %321 : vector<2x1x128xf32> to vector<2x40x128xf32>
      %335 = arith.mulf %334, %319 : vector<2x40x128xf32>
      %336 = arith.subf %333, %335 : vector<2x40x128xf32>
      %337 = vector.broadcast %331 : vector<2x1x128xf32> to vector<2x40x128xf32>
      %338 = arith.mulf %336, %337 : vector<2x40x128xf32>
      %339 = vector.broadcast %320 : vector<2x1x128xf32> to vector<2x40x128xf32>
      %340 = arith.mulf %339, %319 : vector<2x40x128xf32>
      %341 = vector.broadcast %322 : vector<2x1x128xf32> to vector<2x40x128xf32>
      %342 = arith.mulf %341, %317 : vector<2x40x128xf32>
      %343 = arith.subf %340, %342 : vector<2x40x128xf32>
      %344 = vector.broadcast %331 : vector<2x1x128xf32> to vector<2x40x128xf32>
      %345 = arith.mulf %343, %344 : vector<2x40x128xf32>
      %346 = vector.extract_strided_slice %300 {offsets = [0, 8, 0], sizes = [2, 1, 128], strides = [1, 1, 1]} : vector<2x40x128xf32> to vector<2x1x128xf32>
      %347 = vector.extract_strided_slice %300 {offsets = [0, 9, 0], sizes = [2, 1, 128], strides = [1, 1, 1]} : vector<2x40x128xf32> to vector<2x1x128xf32>
      %348 = vector.broadcast %346 : vector<2x1x128xf32> to vector<2x40x128xf32>
      %349 = arith.mulf %348, %338 : vector<2x40x128xf32>
      %350 = arith.subf %300, %349 : vector<2x40x128xf32>
      %351 = vector.broadcast %347 : vector<2x1x128xf32> to vector<2x40x128xf32>
      %352 = arith.mulf %351, %345 : vector<2x40x128xf32>
      %353 = arith.subf %350, %352 : vector<2x40x128xf32>
      %354 = vector.shape_cast %302 : vector<1x1x128xi1> to vector<1x1x128xi1>
      %355 = vector.broadcast %354 : vector<1x1x128xi1> to vector<2x40x128xi1>
      %356 = arith.select %355, %338, %353 : vector<2x40x128xi1>, vector<2x40x128xf32>
      %357 = vector.shape_cast %304 : vector<1x1x128xi1> to vector<1x1x128xi1>
      %358 = vector.broadcast %357 : vector<1x1x128xi1> to vector<2x40x128xi1>
      %359 = arith.select %358, %345, %356 : vector<2x40x128xi1>, vector<2x40x128xf32>
      %c10_i32 = arith.constant 10 : i32
      %360 = vector.broadcast %c10_i32 : i32 to vector<1x1x128xi32>
      %361 = arith.cmpi eq, %4, %360 : vector<1x1x128xi32>
      %c11_i32 = arith.constant 11 : i32
      %362 = vector.broadcast %c11_i32 : i32 to vector<1x1x128xi32>
      %363 = arith.cmpi eq, %4, %362 : vector<1x1x128xi32>
      %cst_47 = arith.constant 0.000000e+00 : f32
      %364 = vector.shape_cast %361 : vector<1x1x128xi1> to vector<1x1x128xi1>
      %365 = vector.broadcast %364 : vector<1x1x128xi1> to vector<2x40x128xi1>
      %366 = vector.broadcast %cst_47 : f32 to vector<2x40x128xf32>
      %367 = arith.select %365, %359, %366 : vector<2x40x128xi1>, vector<2x40x128xf32>
      %cst_48 = arith.constant 0.000000e+00 : f32
      %368 = vector.shape_cast %363 : vector<1x1x128xi1> to vector<1x1x128xi1>
      %369 = vector.broadcast %368 : vector<1x1x128xi1> to vector<2x40x128xi1>
      %370 = vector.broadcast %cst_48 : f32 to vector<2x40x128xf32>
      %371 = arith.select %369, %359, %370 : vector<2x40x128xi1>, vector<2x40x128xf32>
      %372 = tpu.concatenate %367, %371 in 0 : vector<2x40x128xf32>, vector<2x40x128xf32> -> vector<4x40x128xf32>
      %373 = vector.shape_cast %372 : vector<4x40x128xf32> to vector<160x128xf32>
      %cst_49 = arith.constant dense<0.000000e+00> : vector<160x128xf32>
      %374 = tpu.matmul %373, %2, %cst_49 {dimension_numbers = #tpu.dot_dimension_numbers<[1], [0], [0], [1], [0, 0, 1, 1], [], []>} : vector<160x128xf32>, vector<128x128xf32>, vector<160x128xf32> -> vector<160x128xf32>
      %375 = vector.extract_strided_slice %374 {offsets = [0, 0], sizes = [80, 128], strides = [1, 1]} : vector<160x128xf32> to vector<80x128xf32>
      %376 = vector.shape_cast %375 : vector<80x128xf32> to vector<2x40x128xf32>
      %377 = vector.extract_strided_slice %374 {offsets = [80, 0], sizes = [80, 128], strides = [1, 1]} : vector<160x128xf32> to vector<80x128xf32>
      %378 = vector.shape_cast %377 : vector<80x128xf32> to vector<2x40x128xf32>
      %379 = vector.extract_strided_slice %376 {offsets = [0, 10, 0], sizes = [2, 1, 128], strides = [1, 1, 1]} : vector<2x40x128xf32> to vector<2x1x128xf32>
      %380 = vector.extract_strided_slice %376 {offsets = [0, 11, 0], sizes = [2, 1, 128], strides = [1, 1, 1]} : vector<2x40x128xf32> to vector<2x1x128xf32>
      %381 = vector.extract_strided_slice %378 {offsets = [0, 10, 0], sizes = [2, 1, 128], strides = [1, 1, 1]} : vector<2x40x128xf32> to vector<2x1x128xf32>
      %382 = vector.extract_strided_slice %378 {offsets = [0, 11, 0], sizes = [2, 1, 128], strides = [1, 1, 1]} : vector<2x40x128xf32> to vector<2x1x128xf32>
      %383 = arith.mulf %379, %382 : vector<2x1x128xf32>
      %384 = arith.mulf %380, %381 : vector<2x1x128xf32>
      %385 = arith.subf %383, %384 : vector<2x1x128xf32>
      %386 = tpu.reciprocal %385 {approx = true} : vector<2x1x128xf32> -> vector<2x1x128xf32>
      %387 = arith.mulf %385, %386 : vector<2x1x128xf32>
      %cst_50 = arith.constant 2.000000e+00 : f32
      %388 = vector.broadcast %cst_50 : f32 to vector<2x1x128xf32>
      %389 = arith.subf %388, %387 : vector<2x1x128xf32>
      %390 = arith.mulf %386, %389 : vector<2x1x128xf32>
      %391 = vector.broadcast %382 : vector<2x1x128xf32> to vector<2x40x128xf32>
      %392 = arith.mulf %391, %376 : vector<2x40x128xf32>
      %393 = vector.broadcast %380 : vector<2x1x128xf32> to vector<2x40x128xf32>
      %394 = arith.mulf %393, %378 : vector<2x40x128xf32>
      %395 = arith.subf %392, %394 : vector<2x40x128xf32>
      %396 = vector.broadcast %390 : vector<2x1x128xf32> to vector<2x40x128xf32>
      %397 = arith.mulf %395, %396 : vector<2x40x128xf32>
      %398 = vector.broadcast %379 : vector<2x1x128xf32> to vector<2x40x128xf32>
      %399 = arith.mulf %398, %378 : vector<2x40x128xf32>
      %400 = vector.broadcast %381 : vector<2x1x128xf32> to vector<2x40x128xf32>
      %401 = arith.mulf %400, %376 : vector<2x40x128xf32>
      %402 = arith.subf %399, %401 : vector<2x40x128xf32>
      %403 = vector.broadcast %390 : vector<2x1x128xf32> to vector<2x40x128xf32>
      %404 = arith.mulf %402, %403 : vector<2x40x128xf32>
      %405 = vector.extract_strided_slice %359 {offsets = [0, 10, 0], sizes = [2, 1, 128], strides = [1, 1, 1]} : vector<2x40x128xf32> to vector<2x1x128xf32>
      %406 = vector.extract_strided_slice %359 {offsets = [0, 11, 0], sizes = [2, 1, 128], strides = [1, 1, 1]} : vector<2x40x128xf32> to vector<2x1x128xf32>
      %407 = vector.broadcast %405 : vector<2x1x128xf32> to vector<2x40x128xf32>
      %408 = arith.mulf %407, %397 : vector<2x40x128xf32>
      %409 = arith.subf %359, %408 : vector<2x40x128xf32>
      %410 = vector.broadcast %406 : vector<2x1x128xf32> to vector<2x40x128xf32>
      %411 = arith.mulf %410, %404 : vector<2x40x128xf32>
      %412 = arith.subf %409, %411 : vector<2x40x128xf32>
      %413 = vector.shape_cast %361 : vector<1x1x128xi1> to vector<1x1x128xi1>
      %414 = vector.broadcast %413 : vector<1x1x128xi1> to vector<2x40x128xi1>
      %415 = arith.select %414, %397, %412 : vector<2x40x128xi1>, vector<2x40x128xf32>
      %416 = vector.shape_cast %363 : vector<1x1x128xi1> to vector<1x1x128xi1>
      %417 = vector.broadcast %416 : vector<1x1x128xi1> to vector<2x40x128xi1>
      %418 = arith.select %417, %404, %415 : vector<2x40x128xi1>, vector<2x40x128xf32>
      %c12_i32 = arith.constant 12 : i32
      %419 = vector.broadcast %c12_i32 : i32 to vector<1x1x128xi32>
      %420 = arith.cmpi eq, %4, %419 : vector<1x1x128xi32>
      %c13_i32 = arith.constant 13 : i32
      %421 = vector.broadcast %c13_i32 : i32 to vector<1x1x128xi32>
      %422 = arith.cmpi eq, %4, %421 : vector<1x1x128xi32>
      %cst_51 = arith.constant 0.000000e+00 : f32
      %423 = vector.shape_cast %420 : vector<1x1x128xi1> to vector<1x1x128xi1>
      %424 = vector.broadcast %423 : vector<1x1x128xi1> to vector<2x40x128xi1>
      %425 = vector.broadcast %cst_51 : f32 to vector<2x40x128xf32>
      %426 = arith.select %424, %418, %425 : vector<2x40x128xi1>, vector<2x40x128xf32>
      %cst_52 = arith.constant 0.000000e+00 : f32
      %427 = vector.shape_cast %422 : vector<1x1x128xi1> to vector<1x1x128xi1>
      %428 = vector.broadcast %427 : vector<1x1x128xi1> to vector<2x40x128xi1>
      %429 = vector.broadcast %cst_52 : f32 to vector<2x40x128xf32>
      %430 = arith.select %428, %418, %429 : vector<2x40x128xi1>, vector<2x40x128xf32>
      %431 = tpu.concatenate %426, %430 in 0 : vector<2x40x128xf32>, vector<2x40x128xf32> -> vector<4x40x128xf32>
      %432 = vector.shape_cast %431 : vector<4x40x128xf32> to vector<160x128xf32>
      %cst_53 = arith.constant dense<0.000000e+00> : vector<160x128xf32>
      %433 = tpu.matmul %432, %2, %cst_53 {dimension_numbers = #tpu.dot_dimension_numbers<[1], [0], [0], [1], [0, 0, 1, 1], [], []>} : vector<160x128xf32>, vector<128x128xf32>, vector<160x128xf32> -> vector<160x128xf32>
      %434 = vector.extract_strided_slice %433 {offsets = [0, 0], sizes = [80, 128], strides = [1, 1]} : vector<160x128xf32> to vector<80x128xf32>
      %435 = vector.shape_cast %434 : vector<80x128xf32> to vector<2x40x128xf32>
      %436 = vector.extract_strided_slice %433 {offsets = [80, 0], sizes = [80, 128], strides = [1, 1]} : vector<160x128xf32> to vector<80x128xf32>
      %437 = vector.shape_cast %436 : vector<80x128xf32> to vector<2x40x128xf32>
      %438 = vector.extract_strided_slice %435 {offsets = [0, 12, 0], sizes = [2, 1, 128], strides = [1, 1, 1]} : vector<2x40x128xf32> to vector<2x1x128xf32>
      %439 = vector.extract_strided_slice %435 {offsets = [0, 13, 0], sizes = [2, 1, 128], strides = [1, 1, 1]} : vector<2x40x128xf32> to vector<2x1x128xf32>
      %440 = vector.extract_strided_slice %437 {offsets = [0, 12, 0], sizes = [2, 1, 128], strides = [1, 1, 1]} : vector<2x40x128xf32> to vector<2x1x128xf32>
      %441 = vector.extract_strided_slice %437 {offsets = [0, 13, 0], sizes = [2, 1, 128], strides = [1, 1, 1]} : vector<2x40x128xf32> to vector<2x1x128xf32>
      %442 = arith.mulf %438, %441 : vector<2x1x128xf32>
      %443 = arith.mulf %439, %440 : vector<2x1x128xf32>
      %444 = arith.subf %442, %443 : vector<2x1x128xf32>
      %445 = tpu.reciprocal %444 {approx = true} : vector<2x1x128xf32> -> vector<2x1x128xf32>
      %446 = arith.mulf %444, %445 : vector<2x1x128xf32>
      %cst_54 = arith.constant 2.000000e+00 : f32
      %447 = vector.broadcast %cst_54 : f32 to vector<2x1x128xf32>
      %448 = arith.subf %447, %446 : vector<2x1x128xf32>
      %449 = arith.mulf %445, %448 : vector<2x1x128xf32>
      %450 = vector.broadcast %441 : vector<2x1x128xf32> to vector<2x40x128xf32>
      %451 = arith.mulf %450, %435 : vector<2x40x128xf32>
      %452 = vector.broadcast %439 : vector<2x1x128xf32> to vector<2x40x128xf32>
      %453 = arith.mulf %452, %437 : vector<2x40x128xf32>
      %454 = arith.subf %451, %453 : vector<2x40x128xf32>
      %455 = vector.broadcast %449 : vector<2x1x128xf32> to vector<2x40x128xf32>
      %456 = arith.mulf %454, %455 : vector<2x40x128xf32>
      %457 = vector.broadcast %438 : vector<2x1x128xf32> to vector<2x40x128xf32>
      %458 = arith.mulf %457, %437 : vector<2x40x128xf32>
      %459 = vector.broadcast %440 : vector<2x1x128xf32> to vector<2x40x128xf32>
      %460 = arith.mulf %459, %435 : vector<2x40x128xf32>
      %461 = arith.subf %458, %460 : vector<2x40x128xf32>
      %462 = vector.broadcast %449 : vector<2x1x128xf32> to vector<2x40x128xf32>
      %463 = arith.mulf %461, %462 : vector<2x40x128xf32>
      %464 = vector.extract_strided_slice %418 {offsets = [0, 12, 0], sizes = [2, 1, 128], strides = [1, 1, 1]} : vector<2x40x128xf32> to vector<2x1x128xf32>
      %465 = vector.extract_strided_slice %418 {offsets = [0, 13, 0], sizes = [2, 1, 128], strides = [1, 1, 1]} : vector<2x40x128xf32> to vector<2x1x128xf32>
      %466 = vector.broadcast %464 : vector<2x1x128xf32> to vector<2x40x128xf32>
      %467 = arith.mulf %466, %456 : vector<2x40x128xf32>
      %468 = arith.subf %418, %467 : vector<2x40x128xf32>
      %469 = vector.broadcast %465 : vector<2x1x128xf32> to vector<2x40x128xf32>
      %470 = arith.mulf %469, %463 : vector<2x40x128xf32>
      %471 = arith.subf %468, %470 : vector<2x40x128xf32>
      %472 = vector.shape_cast %420 : vector<1x1x128xi1> to vector<1x1x128xi1>
      %473 = vector.broadcast %472 : vector<1x1x128xi1> to vector<2x40x128xi1>
      %474 = arith.select %473, %456, %471 : vector<2x40x128xi1>, vector<2x40x128xf32>
      %475 = vector.shape_cast %422 : vector<1x1x128xi1> to vector<1x1x128xi1>
      %476 = vector.broadcast %475 : vector<1x1x128xi1> to vector<2x40x128xi1>
      %477 = arith.select %476, %463, %474 : vector<2x40x128xi1>, vector<2x40x128xf32>
      %c14_i32 = arith.constant 14 : i32
      %478 = vector.broadcast %c14_i32 : i32 to vector<1x1x128xi32>
      %479 = arith.cmpi eq, %4, %478 : vector<1x1x128xi32>
      %c15_i32 = arith.constant 15 : i32
      %480 = vector.broadcast %c15_i32 : i32 to vector<1x1x128xi32>
      %481 = arith.cmpi eq, %4, %480 : vector<1x1x128xi32>
      %cst_55 = arith.constant 0.000000e+00 : f32
      %482 = vector.shape_cast %479 : vector<1x1x128xi1> to vector<1x1x128xi1>
      %483 = vector.broadcast %482 : vector<1x1x128xi1> to vector<2x40x128xi1>
      %484 = vector.broadcast %cst_55 : f32 to vector<2x40x128xf32>
      %485 = arith.select %483, %477, %484 : vector<2x40x128xi1>, vector<2x40x128xf32>
      %cst_56 = arith.constant 0.000000e+00 : f32
      %486 = vector.shape_cast %481 : vector<1x1x128xi1> to vector<1x1x128xi1>
      %487 = vector.broadcast %486 : vector<1x1x128xi1> to vector<2x40x128xi1>
      %488 = vector.broadcast %cst_56 : f32 to vector<2x40x128xf32>
      %489 = arith.select %487, %477, %488 : vector<2x40x128xi1>, vector<2x40x128xf32>
      %490 = tpu.concatenate %485, %489 in 0 : vector<2x40x128xf32>, vector<2x40x128xf32> -> vector<4x40x128xf32>
      %491 = vector.shape_cast %490 : vector<4x40x128xf32> to vector<160x128xf32>
      %cst_57 = arith.constant dense<0.000000e+00> : vector<160x128xf32>
      %492 = tpu.matmul %491, %2, %cst_57 {dimension_numbers = #tpu.dot_dimension_numbers<[1], [0], [0], [1], [0, 0, 1, 1], [], []>} : vector<160x128xf32>, vector<128x128xf32>, vector<160x128xf32> -> vector<160x128xf32>
      %493 = vector.extract_strided_slice %492 {offsets = [0, 0], sizes = [80, 128], strides = [1, 1]} : vector<160x128xf32> to vector<80x128xf32>
      %494 = vector.shape_cast %493 : vector<80x128xf32> to vector<2x40x128xf32>
      %495 = vector.extract_strided_slice %492 {offsets = [80, 0], sizes = [80, 128], strides = [1, 1]} : vector<160x128xf32> to vector<80x128xf32>
      %496 = vector.shape_cast %495 : vector<80x128xf32> to vector<2x40x128xf32>
      %497 = vector.extract_strided_slice %494 {offsets = [0, 14, 0], sizes = [2, 1, 128], strides = [1, 1, 1]} : vector<2x40x128xf32> to vector<2x1x128xf32>
      %498 = vector.extract_strided_slice %494 {offsets = [0, 15, 0], sizes = [2, 1, 128], strides = [1, 1, 1]} : vector<2x40x128xf32> to vector<2x1x128xf32>
      %499 = vector.extract_strided_slice %496 {offsets = [0, 14, 0], sizes = [2, 1, 128], strides = [1, 1, 1]} : vector<2x40x128xf32> to vector<2x1x128xf32>
      %500 = vector.extract_strided_slice %496 {offsets = [0, 15, 0], sizes = [2, 1, 128], strides = [1, 1, 1]} : vector<2x40x128xf32> to vector<2x1x128xf32>
      %501 = arith.mulf %497, %500 : vector<2x1x128xf32>
      %502 = arith.mulf %498, %499 : vector<2x1x128xf32>
      %503 = arith.subf %501, %502 : vector<2x1x128xf32>
      %504 = tpu.reciprocal %503 {approx = true} : vector<2x1x128xf32> -> vector<2x1x128xf32>
      %505 = arith.mulf %503, %504 : vector<2x1x128xf32>
      %cst_58 = arith.constant 2.000000e+00 : f32
      %506 = vector.broadcast %cst_58 : f32 to vector<2x1x128xf32>
      %507 = arith.subf %506, %505 : vector<2x1x128xf32>
      %508 = arith.mulf %504, %507 : vector<2x1x128xf32>
      %509 = vector.broadcast %500 : vector<2x1x128xf32> to vector<2x40x128xf32>
      %510 = arith.mulf %509, %494 : vector<2x40x128xf32>
      %511 = vector.broadcast %498 : vector<2x1x128xf32> to vector<2x40x128xf32>
      %512 = arith.mulf %511, %496 : vector<2x40x128xf32>
      %513 = arith.subf %510, %512 : vector<2x40x128xf32>
      %514 = vector.broadcast %508 : vector<2x1x128xf32> to vector<2x40x128xf32>
      %515 = arith.mulf %513, %514 : vector<2x40x128xf32>
      %516 = vector.broadcast %497 : vector<2x1x128xf32> to vector<2x40x128xf32>
      %517 = arith.mulf %516, %496 : vector<2x40x128xf32>
      %518 = vector.broadcast %499 : vector<2x1x128xf32> to vector<2x40x128xf32>
      %519 = arith.mulf %518, %494 : vector<2x40x128xf32>
      %520 = arith.subf %517, %519 : vector<2x40x128xf32>
      %521 = vector.broadcast %508 : vector<2x1x128xf32> to vector<2x40x128xf32>
      %522 = arith.mulf %520, %521 : vector<2x40x128xf32>
      %523 = vector.extract_strided_slice %477 {offsets = [0, 14, 0], sizes = [2, 1, 128], strides = [1, 1, 1]} : vector<2x40x128xf32> to vector<2x1x128xf32>
      %524 = vector.extract_strided_slice %477 {offsets = [0, 15, 0], sizes = [2, 1, 128], strides = [1, 1, 1]} : vector<2x40x128xf32> to vector<2x1x128xf32>
      %525 = vector.broadcast %523 : vector<2x1x128xf32> to vector<2x40x128xf32>
      %526 = arith.mulf %525, %515 : vector<2x40x128xf32>
      %527 = arith.subf %477, %526 : vector<2x40x128xf32>
      %528 = vector.broadcast %524 : vector<2x1x128xf32> to vector<2x40x128xf32>
      %529 = arith.mulf %528, %522 : vector<2x40x128xf32>
      %530 = arith.subf %527, %529 : vector<2x40x128xf32>
      %531 = vector.shape_cast %479 : vector<1x1x128xi1> to vector<1x1x128xi1>
      %532 = vector.broadcast %531 : vector<1x1x128xi1> to vector<2x40x128xi1>
      %533 = arith.select %532, %515, %530 : vector<2x40x128xi1>, vector<2x40x128xf32>
      %534 = vector.shape_cast %481 : vector<1x1x128xi1> to vector<1x1x128xi1>
      %535 = vector.broadcast %534 : vector<1x1x128xi1> to vector<2x40x128xi1>
      %536 = arith.select %535, %522, %533 : vector<2x40x128xi1>, vector<2x40x128xf32>
      %c16_i32 = arith.constant 16 : i32
      %537 = vector.broadcast %c16_i32 : i32 to vector<1x1x128xi32>
      %538 = arith.cmpi eq, %4, %537 : vector<1x1x128xi32>
      %c17_i32 = arith.constant 17 : i32
      %539 = vector.broadcast %c17_i32 : i32 to vector<1x1x128xi32>
      %540 = arith.cmpi eq, %4, %539 : vector<1x1x128xi32>
      %cst_59 = arith.constant 0.000000e+00 : f32
      %541 = vector.shape_cast %538 : vector<1x1x128xi1> to vector<1x1x128xi1>
      %542 = vector.broadcast %541 : vector<1x1x128xi1> to vector<2x40x128xi1>
      %543 = vector.broadcast %cst_59 : f32 to vector<2x40x128xf32>
      %544 = arith.select %542, %536, %543 : vector<2x40x128xi1>, vector<2x40x128xf32>
      %cst_60 = arith.constant 0.000000e+00 : f32
      %545 = vector.shape_cast %540 : vector<1x1x128xi1> to vector<1x1x128xi1>
      %546 = vector.broadcast %545 : vector<1x1x128xi1> to vector<2x40x128xi1>
      %547 = vector.broadcast %cst_60 : f32 to vector<2x40x128xf32>
      %548 = arith.select %546, %536, %547 : vector<2x40x128xi1>, vector<2x40x128xf32>
      %549 = tpu.concatenate %544, %548 in 0 : vector<2x40x128xf32>, vector<2x40x128xf32> -> vector<4x40x128xf32>
      %550 = vector.shape_cast %549 : vector<4x40x128xf32> to vector<160x128xf32>
      %cst_61 = arith.constant dense<0.000000e+00> : vector<160x128xf32>
      %551 = tpu.matmul %550, %2, %cst_61 {dimension_numbers = #tpu.dot_dimension_numbers<[1], [0], [0], [1], [0, 0, 1, 1], [], []>} : vector<160x128xf32>, vector<128x128xf32>, vector<160x128xf32> -> vector<160x128xf32>
      %552 = vector.extract_strided_slice %551 {offsets = [0, 0], sizes = [80, 128], strides = [1, 1]} : vector<160x128xf32> to vector<80x128xf32>
      %553 = vector.shape_cast %552 : vector<80x128xf32> to vector<2x40x128xf32>
      %554 = vector.extract_strided_slice %551 {offsets = [80, 0], sizes = [80, 128], strides = [1, 1]} : vector<160x128xf32> to vector<80x128xf32>
      %555 = vector.shape_cast %554 : vector<80x128xf32> to vector<2x40x128xf32>
      %556 = vector.extract_strided_slice %553 {offsets = [0, 16, 0], sizes = [2, 1, 128], strides = [1, 1, 1]} : vector<2x40x128xf32> to vector<2x1x128xf32>
      %557 = vector.extract_strided_slice %553 {offsets = [0, 17, 0], sizes = [2, 1, 128], strides = [1, 1, 1]} : vector<2x40x128xf32> to vector<2x1x128xf32>
      %558 = vector.extract_strided_slice %555 {offsets = [0, 16, 0], sizes = [2, 1, 128], strides = [1, 1, 1]} : vector<2x40x128xf32> to vector<2x1x128xf32>
      %559 = vector.extract_strided_slice %555 {offsets = [0, 17, 0], sizes = [2, 1, 128], strides = [1, 1, 1]} : vector<2x40x128xf32> to vector<2x1x128xf32>
      %560 = arith.mulf %556, %559 : vector<2x1x128xf32>
      %561 = arith.mulf %557, %558 : vector<2x1x128xf32>
      %562 = arith.subf %560, %561 : vector<2x1x128xf32>
      %563 = tpu.reciprocal %562 {approx = true} : vector<2x1x128xf32> -> vector<2x1x128xf32>
      %564 = arith.mulf %562, %563 : vector<2x1x128xf32>
      %cst_62 = arith.constant 2.000000e+00 : f32
      %565 = vector.broadcast %cst_62 : f32 to vector<2x1x128xf32>
      %566 = arith.subf %565, %564 : vector<2x1x128xf32>
      %567 = arith.mulf %563, %566 : vector<2x1x128xf32>
      %568 = vector.broadcast %559 : vector<2x1x128xf32> to vector<2x40x128xf32>
      %569 = arith.mulf %568, %553 : vector<2x40x128xf32>
      %570 = vector.broadcast %557 : vector<2x1x128xf32> to vector<2x40x128xf32>
      %571 = arith.mulf %570, %555 : vector<2x40x128xf32>
      %572 = arith.subf %569, %571 : vector<2x40x128xf32>
      %573 = vector.broadcast %567 : vector<2x1x128xf32> to vector<2x40x128xf32>
      %574 = arith.mulf %572, %573 : vector<2x40x128xf32>
      %575 = vector.broadcast %556 : vector<2x1x128xf32> to vector<2x40x128xf32>
      %576 = arith.mulf %575, %555 : vector<2x40x128xf32>
      %577 = vector.broadcast %558 : vector<2x1x128xf32> to vector<2x40x128xf32>
      %578 = arith.mulf %577, %553 : vector<2x40x128xf32>
      %579 = arith.subf %576, %578 : vector<2x40x128xf32>
      %580 = vector.broadcast %567 : vector<2x1x128xf32> to vector<2x40x128xf32>
      %581 = arith.mulf %579, %580 : vector<2x40x128xf32>
      %582 = vector.extract_strided_slice %536 {offsets = [0, 16, 0], sizes = [2, 1, 128], strides = [1, 1, 1]} : vector<2x40x128xf32> to vector<2x1x128xf32>
      %583 = vector.extract_strided_slice %536 {offsets = [0, 17, 0], sizes = [2, 1, 128], strides = [1, 1, 1]} : vector<2x40x128xf32> to vector<2x1x128xf32>
      %584 = vector.broadcast %582 : vector<2x1x128xf32> to vector<2x40x128xf32>
      %585 = arith.mulf %584, %574 : vector<2x40x128xf32>
      %586 = arith.subf %536, %585 : vector<2x40x128xf32>
      %587 = vector.broadcast %583 : vector<2x1x128xf32> to vector<2x40x128xf32>
      %588 = arith.mulf %587, %581 : vector<2x40x128xf32>
      %589 = arith.subf %586, %588 : vector<2x40x128xf32>
      %590 = vector.shape_cast %538 : vector<1x1x128xi1> to vector<1x1x128xi1>
      %591 = vector.broadcast %590 : vector<1x1x128xi1> to vector<2x40x128xi1>
      %592 = arith.select %591, %574, %589 : vector<2x40x128xi1>, vector<2x40x128xf32>
      %593 = vector.shape_cast %540 : vector<1x1x128xi1> to vector<1x1x128xi1>
      %594 = vector.broadcast %593 : vector<1x1x128xi1> to vector<2x40x128xi1>
      %595 = arith.select %594, %581, %592 : vector<2x40x128xi1>, vector<2x40x128xf32>
      %c18_i32 = arith.constant 18 : i32
      %596 = vector.broadcast %c18_i32 : i32 to vector<1x1x128xi32>
      %597 = arith.cmpi eq, %4, %596 : vector<1x1x128xi32>
      %c19_i32 = arith.constant 19 : i32
      %598 = vector.broadcast %c19_i32 : i32 to vector<1x1x128xi32>
      %599 = arith.cmpi eq, %4, %598 : vector<1x1x128xi32>
      %cst_63 = arith.constant 0.000000e+00 : f32
      %600 = vector.shape_cast %597 : vector<1x1x128xi1> to vector<1x1x128xi1>
      %601 = vector.broadcast %600 : vector<1x1x128xi1> to vector<2x40x128xi1>
      %602 = vector.broadcast %cst_63 : f32 to vector<2x40x128xf32>
      %603 = arith.select %601, %595, %602 : vector<2x40x128xi1>, vector<2x40x128xf32>
      %cst_64 = arith.constant 0.000000e+00 : f32
      %604 = vector.shape_cast %599 : vector<1x1x128xi1> to vector<1x1x128xi1>
      %605 = vector.broadcast %604 : vector<1x1x128xi1> to vector<2x40x128xi1>
      %606 = vector.broadcast %cst_64 : f32 to vector<2x40x128xf32>
      %607 = arith.select %605, %595, %606 : vector<2x40x128xi1>, vector<2x40x128xf32>
      %608 = tpu.concatenate %603, %607 in 0 : vector<2x40x128xf32>, vector<2x40x128xf32> -> vector<4x40x128xf32>
      %609 = vector.shape_cast %608 : vector<4x40x128xf32> to vector<160x128xf32>
      %cst_65 = arith.constant dense<0.000000e+00> : vector<160x128xf32>
      %610 = tpu.matmul %609, %2, %cst_65 {dimension_numbers = #tpu.dot_dimension_numbers<[1], [0], [0], [1], [0, 0, 1, 1], [], []>} : vector<160x128xf32>, vector<128x128xf32>, vector<160x128xf32> -> vector<160x128xf32>
      %611 = vector.extract_strided_slice %610 {offsets = [0, 0], sizes = [80, 128], strides = [1, 1]} : vector<160x128xf32> to vector<80x128xf32>
      %612 = vector.shape_cast %611 : vector<80x128xf32> to vector<2x40x128xf32>
      %613 = vector.extract_strided_slice %610 {offsets = [80, 0], sizes = [80, 128], strides = [1, 1]} : vector<160x128xf32> to vector<80x128xf32>
      %614 = vector.shape_cast %613 : vector<80x128xf32> to vector<2x40x128xf32>
      %615 = vector.extract_strided_slice %612 {offsets = [0, 18, 0], sizes = [2, 1, 128], strides = [1, 1, 1]} : vector<2x40x128xf32> to vector<2x1x128xf32>
      %616 = vector.extract_strided_slice %612 {offsets = [0, 19, 0], sizes = [2, 1, 128], strides = [1, 1, 1]} : vector<2x40x128xf32> to vector<2x1x128xf32>
      %617 = vector.extract_strided_slice %614 {offsets = [0, 18, 0], sizes = [2, 1, 128], strides = [1, 1, 1]} : vector<2x40x128xf32> to vector<2x1x128xf32>
      %618 = vector.extract_strided_slice %614 {offsets = [0, 19, 0], sizes = [2, 1, 128], strides = [1, 1, 1]} : vector<2x40x128xf32> to vector<2x1x128xf32>
      %619 = arith.mulf %615, %618 : vector<2x1x128xf32>
      %620 = arith.mulf %616, %617 : vector<2x1x128xf32>
      %621 = arith.subf %619, %620 : vector<2x1x128xf32>
      %622 = tpu.reciprocal %621 {approx = true} : vector<2x1x128xf32> -> vector<2x1x128xf32>
      %623 = arith.mulf %621, %622 : vector<2x1x128xf32>
      %cst_66 = arith.constant 2.000000e+00 : f32
      %624 = vector.broadcast %cst_66 : f32 to vector<2x1x128xf32>
      %625 = arith.subf %624, %623 : vector<2x1x128xf32>
      %626 = arith.mulf %622, %625 : vector<2x1x128xf32>
      %627 = vector.broadcast %618 : vector<2x1x128xf32> to vector<2x40x128xf32>
      %628 = arith.mulf %627, %612 : vector<2x40x128xf32>
      %629 = vector.broadcast %616 : vector<2x1x128xf32> to vector<2x40x128xf32>
      %630 = arith.mulf %629, %614 : vector<2x40x128xf32>
      %631 = arith.subf %628, %630 : vector<2x40x128xf32>
      %632 = vector.broadcast %626 : vector<2x1x128xf32> to vector<2x40x128xf32>
      %633 = arith.mulf %631, %632 : vector<2x40x128xf32>
      %634 = vector.broadcast %615 : vector<2x1x128xf32> to vector<2x40x128xf32>
      %635 = arith.mulf %634, %614 : vector<2x40x128xf32>
      %636 = vector.broadcast %617 : vector<2x1x128xf32> to vector<2x40x128xf32>
      %637 = arith.mulf %636, %612 : vector<2x40x128xf32>
      %638 = arith.subf %635, %637 : vector<2x40x128xf32>
      %639 = vector.broadcast %626 : vector<2x1x128xf32> to vector<2x40x128xf32>
      %640 = arith.mulf %638, %639 : vector<2x40x128xf32>
      %641 = vector.extract_strided_slice %595 {offsets = [0, 18, 0], sizes = [2, 1, 128], strides = [1, 1, 1]} : vector<2x40x128xf32> to vector<2x1x128xf32>
      %642 = vector.extract_strided_slice %595 {offsets = [0, 19, 0], sizes = [2, 1, 128], strides = [1, 1, 1]} : vector<2x40x128xf32> to vector<2x1x128xf32>
      %643 = vector.broadcast %641 : vector<2x1x128xf32> to vector<2x40x128xf32>
      %644 = arith.mulf %643, %633 : vector<2x40x128xf32>
      %645 = arith.subf %595, %644 : vector<2x40x128xf32>
      %646 = vector.broadcast %642 : vector<2x1x128xf32> to vector<2x40x128xf32>
      %647 = arith.mulf %646, %640 : vector<2x40x128xf32>
      %648 = arith.subf %645, %647 : vector<2x40x128xf32>
      %649 = vector.shape_cast %597 : vector<1x1x128xi1> to vector<1x1x128xi1>
      %650 = vector.broadcast %649 : vector<1x1x128xi1> to vector<2x40x128xi1>
      %651 = arith.select %650, %633, %648 : vector<2x40x128xi1>, vector<2x40x128xf32>
      %652 = vector.shape_cast %599 : vector<1x1x128xi1> to vector<1x1x128xi1>
      %653 = vector.broadcast %652 : vector<1x1x128xi1> to vector<2x40x128xi1>
      %654 = arith.select %653, %640, %651 : vector<2x40x128xi1>, vector<2x40x128xf32>
      %c20_i32 = arith.constant 20 : i32
      %655 = vector.broadcast %c20_i32 : i32 to vector<1x1x128xi32>
      %656 = arith.cmpi eq, %4, %655 : vector<1x1x128xi32>
      %c21_i32 = arith.constant 21 : i32
      %657 = vector.broadcast %c21_i32 : i32 to vector<1x1x128xi32>
      %658 = arith.cmpi eq, %4, %657 : vector<1x1x128xi32>
      %cst_67 = arith.constant 0.000000e+00 : f32
      %659 = vector.shape_cast %656 : vector<1x1x128xi1> to vector<1x1x128xi1>
      %660 = vector.broadcast %659 : vector<1x1x128xi1> to vector<2x40x128xi1>
      %661 = vector.broadcast %cst_67 : f32 to vector<2x40x128xf32>
      %662 = arith.select %660, %654, %661 : vector<2x40x128xi1>, vector<2x40x128xf32>
      %cst_68 = arith.constant 0.000000e+00 : f32
      %663 = vector.shape_cast %658 : vector<1x1x128xi1> to vector<1x1x128xi1>
      %664 = vector.broadcast %663 : vector<1x1x128xi1> to vector<2x40x128xi1>
      %665 = vector.broadcast %cst_68 : f32 to vector<2x40x128xf32>
      %666 = arith.select %664, %654, %665 : vector<2x40x128xi1>, vector<2x40x128xf32>
      %667 = tpu.concatenate %662, %666 in 0 : vector<2x40x128xf32>, vector<2x40x128xf32> -> vector<4x40x128xf32>
      %668 = vector.shape_cast %667 : vector<4x40x128xf32> to vector<160x128xf32>
      %cst_69 = arith.constant dense<0.000000e+00> : vector<160x128xf32>
      %669 = tpu.matmul %668, %2, %cst_69 {dimension_numbers = #tpu.dot_dimension_numbers<[1], [0], [0], [1], [0, 0, 1, 1], [], []>} : vector<160x128xf32>, vector<128x128xf32>, vector<160x128xf32> -> vector<160x128xf32>
      %670 = vector.extract_strided_slice %669 {offsets = [0, 0], sizes = [80, 128], strides = [1, 1]} : vector<160x128xf32> to vector<80x128xf32>
      %671 = vector.shape_cast %670 : vector<80x128xf32> to vector<2x40x128xf32>
      %672 = vector.extract_strided_slice %669 {offsets = [80, 0], sizes = [80, 128], strides = [1, 1]} : vector<160x128xf32> to vector<80x128xf32>
      %673 = vector.shape_cast %672 : vector<80x128xf32> to vector<2x40x128xf32>
      %674 = vector.extract_strided_slice %671 {offsets = [0, 20, 0], sizes = [2, 1, 128], strides = [1, 1, 1]} : vector<2x40x128xf32> to vector<2x1x128xf32>
      %675 = vector.extract_strided_slice %671 {offsets = [0, 21, 0], sizes = [2, 1, 128], strides = [1, 1, 1]} : vector<2x40x128xf32> to vector<2x1x128xf32>
      %676 = vector.extract_strided_slice %673 {offsets = [0, 20, 0], sizes = [2, 1, 128], strides = [1, 1, 1]} : vector<2x40x128xf32> to vector<2x1x128xf32>
      %677 = vector.extract_strided_slice %673 {offsets = [0, 21, 0], sizes = [2, 1, 128], strides = [1, 1, 1]} : vector<2x40x128xf32> to vector<2x1x128xf32>
      %678 = arith.mulf %674, %677 : vector<2x1x128xf32>
      %679 = arith.mulf %675, %676 : vector<2x1x128xf32>
      %680 = arith.subf %678, %679 : vector<2x1x128xf32>
      %681 = tpu.reciprocal %680 {approx = true} : vector<2x1x128xf32> -> vector<2x1x128xf32>
      %682 = arith.mulf %680, %681 : vector<2x1x128xf32>
      %cst_70 = arith.constant 2.000000e+00 : f32
      %683 = vector.broadcast %cst_70 : f32 to vector<2x1x128xf32>
      %684 = arith.subf %683, %682 : vector<2x1x128xf32>
      %685 = arith.mulf %681, %684 : vector<2x1x128xf32>
      %686 = vector.broadcast %677 : vector<2x1x128xf32> to vector<2x40x128xf32>
      %687 = arith.mulf %686, %671 : vector<2x40x128xf32>
      %688 = vector.broadcast %675 : vector<2x1x128xf32> to vector<2x40x128xf32>
      %689 = arith.mulf %688, %673 : vector<2x40x128xf32>
      %690 = arith.subf %687, %689 : vector<2x40x128xf32>
      %691 = vector.broadcast %685 : vector<2x1x128xf32> to vector<2x40x128xf32>
      %692 = arith.mulf %690, %691 : vector<2x40x128xf32>
      %693 = vector.broadcast %674 : vector<2x1x128xf32> to vector<2x40x128xf32>
      %694 = arith.mulf %693, %673 : vector<2x40x128xf32>
      %695 = vector.broadcast %676 : vector<2x1x128xf32> to vector<2x40x128xf32>
      %696 = arith.mulf %695, %671 : vector<2x40x128xf32>
      %697 = arith.subf %694, %696 : vector<2x40x128xf32>
      %698 = vector.broadcast %685 : vector<2x1x128xf32> to vector<2x40x128xf32>
      %699 = arith.mulf %697, %698 : vector<2x40x128xf32>
      %700 = vector.extract_strided_slice %654 {offsets = [0, 20, 0], sizes = [2, 1, 128], strides = [1, 1, 1]} : vector<2x40x128xf32> to vector<2x1x128xf32>
      %701 = vector.extract_strided_slice %654 {offsets = [0, 21, 0], sizes = [2, 1, 128], strides = [1, 1, 1]} : vector<2x40x128xf32> to vector<2x1x128xf32>
      %702 = vector.broadcast %700 : vector<2x1x128xf32> to vector<2x40x128xf32>
      %703 = arith.mulf %702, %692 : vector<2x40x128xf32>
      %704 = arith.subf %654, %703 : vector<2x40x128xf32>
      %705 = vector.broadcast %701 : vector<2x1x128xf32> to vector<2x40x128xf32>
      %706 = arith.mulf %705, %699 : vector<2x40x128xf32>
      %707 = arith.subf %704, %706 : vector<2x40x128xf32>
      %708 = vector.shape_cast %656 : vector<1x1x128xi1> to vector<1x1x128xi1>
      %709 = vector.broadcast %708 : vector<1x1x128xi1> to vector<2x40x128xi1>
      %710 = arith.select %709, %692, %707 : vector<2x40x128xi1>, vector<2x40x128xf32>
      %711 = vector.shape_cast %658 : vector<1x1x128xi1> to vector<1x1x128xi1>
      %712 = vector.broadcast %711 : vector<1x1x128xi1> to vector<2x40x128xi1>
      %713 = arith.select %712, %699, %710 : vector<2x40x128xi1>, vector<2x40x128xf32>
      %c22_i32 = arith.constant 22 : i32
      %714 = vector.broadcast %c22_i32 : i32 to vector<1x1x128xi32>
      %715 = arith.cmpi eq, %4, %714 : vector<1x1x128xi32>
      %c23_i32 = arith.constant 23 : i32
      %716 = vector.broadcast %c23_i32 : i32 to vector<1x1x128xi32>
      %717 = arith.cmpi eq, %4, %716 : vector<1x1x128xi32>
      %cst_71 = arith.constant 0.000000e+00 : f32
      %718 = vector.shape_cast %715 : vector<1x1x128xi1> to vector<1x1x128xi1>
      %719 = vector.broadcast %718 : vector<1x1x128xi1> to vector<2x40x128xi1>
      %720 = vector.broadcast %cst_71 : f32 to vector<2x40x128xf32>
      %721 = arith.select %719, %713, %720 : vector<2x40x128xi1>, vector<2x40x128xf32>
      %cst_72 = arith.constant 0.000000e+00 : f32
      %722 = vector.shape_cast %717 : vector<1x1x128xi1> to vector<1x1x128xi1>
      %723 = vector.broadcast %722 : vector<1x1x128xi1> to vector<2x40x128xi1>
      %724 = vector.broadcast %cst_72 : f32 to vector<2x40x128xf32>
      %725 = arith.select %723, %713, %724 : vector<2x40x128xi1>, vector<2x40x128xf32>
      %726 = tpu.concatenate %721, %725 in 0 : vector<2x40x128xf32>, vector<2x40x128xf32> -> vector<4x40x128xf32>
      %727 = vector.shape_cast %726 : vector<4x40x128xf32> to vector<160x128xf32>
      %cst_73 = arith.constant dense<0.000000e+00> : vector<160x128xf32>
      %728 = tpu.matmul %727, %2, %cst_73 {dimension_numbers = #tpu.dot_dimension_numbers<[1], [0], [0], [1], [0, 0, 1, 1], [], []>} : vector<160x128xf32>, vector<128x128xf32>, vector<160x128xf32> -> vector<160x128xf32>
      %729 = vector.extract_strided_slice %728 {offsets = [0, 0], sizes = [80, 128], strides = [1, 1]} : vector<160x128xf32> to vector<80x128xf32>
      %730 = vector.shape_cast %729 : vector<80x128xf32> to vector<2x40x128xf32>
      %731 = vector.extract_strided_slice %728 {offsets = [80, 0], sizes = [80, 128], strides = [1, 1]} : vector<160x128xf32> to vector<80x128xf32>
      %732 = vector.shape_cast %731 : vector<80x128xf32> to vector<2x40x128xf32>
      %733 = vector.extract_strided_slice %730 {offsets = [0, 22, 0], sizes = [2, 1, 128], strides = [1, 1, 1]} : vector<2x40x128xf32> to vector<2x1x128xf32>
      %734 = vector.extract_strided_slice %730 {offsets = [0, 23, 0], sizes = [2, 1, 128], strides = [1, 1, 1]} : vector<2x40x128xf32> to vector<2x1x128xf32>
      %735 = vector.extract_strided_slice %732 {offsets = [0, 22, 0], sizes = [2, 1, 128], strides = [1, 1, 1]} : vector<2x40x128xf32> to vector<2x1x128xf32>
      %736 = vector.extract_strided_slice %732 {offsets = [0, 23, 0], sizes = [2, 1, 128], strides = [1, 1, 1]} : vector<2x40x128xf32> to vector<2x1x128xf32>
      %737 = arith.mulf %733, %736 : vector<2x1x128xf32>
      %738 = arith.mulf %734, %735 : vector<2x1x128xf32>
      %739 = arith.subf %737, %738 : vector<2x1x128xf32>
      %740 = tpu.reciprocal %739 {approx = true} : vector<2x1x128xf32> -> vector<2x1x128xf32>
      %741 = arith.mulf %739, %740 : vector<2x1x128xf32>
      %cst_74 = arith.constant 2.000000e+00 : f32
      %742 = vector.broadcast %cst_74 : f32 to vector<2x1x128xf32>
      %743 = arith.subf %742, %741 : vector<2x1x128xf32>
      %744 = arith.mulf %740, %743 : vector<2x1x128xf32>
      %745 = vector.broadcast %736 : vector<2x1x128xf32> to vector<2x40x128xf32>
      %746 = arith.mulf %745, %730 : vector<2x40x128xf32>
      %747 = vector.broadcast %734 : vector<2x1x128xf32> to vector<2x40x128xf32>
      %748 = arith.mulf %747, %732 : vector<2x40x128xf32>
      %749 = arith.subf %746, %748 : vector<2x40x128xf32>
      %750 = vector.broadcast %744 : vector<2x1x128xf32> to vector<2x40x128xf32>
      %751 = arith.mulf %749, %750 : vector<2x40x128xf32>
      %752 = vector.broadcast %733 : vector<2x1x128xf32> to vector<2x40x128xf32>
      %753 = arith.mulf %752, %732 : vector<2x40x128xf32>
      %754 = vector.broadcast %735 : vector<2x1x128xf32> to vector<2x40x128xf32>
      %755 = arith.mulf %754, %730 : vector<2x40x128xf32>
      %756 = arith.subf %753, %755 : vector<2x40x128xf32>
      %757 = vector.broadcast %744 : vector<2x1x128xf32> to vector<2x40x128xf32>
      %758 = arith.mulf %756, %757 : vector<2x40x128xf32>
      %759 = vector.extract_strided_slice %713 {offsets = [0, 22, 0], sizes = [2, 1, 128], strides = [1, 1, 1]} : vector<2x40x128xf32> to vector<2x1x128xf32>
      %760 = vector.extract_strided_slice %713 {offsets = [0, 23, 0], sizes = [2, 1, 128], strides = [1, 1, 1]} : vector<2x40x128xf32> to vector<2x1x128xf32>
      %761 = vector.broadcast %759 : vector<2x1x128xf32> to vector<2x40x128xf32>
      %762 = arith.mulf %761, %751 : vector<2x40x128xf32>
      %763 = arith.subf %713, %762 : vector<2x40x128xf32>
      %764 = vector.broadcast %760 : vector<2x1x128xf32> to vector<2x40x128xf32>
      %765 = arith.mulf %764, %758 : vector<2x40x128xf32>
      %766 = arith.subf %763, %765 : vector<2x40x128xf32>
      %767 = vector.shape_cast %715 : vector<1x1x128xi1> to vector<1x1x128xi1>
      %768 = vector.broadcast %767 : vector<1x1x128xi1> to vector<2x40x128xi1>
      %769 = arith.select %768, %751, %766 : vector<2x40x128xi1>, vector<2x40x128xf32>
      %770 = vector.shape_cast %717 : vector<1x1x128xi1> to vector<1x1x128xi1>
      %771 = vector.broadcast %770 : vector<1x1x128xi1> to vector<2x40x128xi1>
      %772 = arith.select %771, %758, %769 : vector<2x40x128xi1>, vector<2x40x128xf32>
      %c24_i32 = arith.constant 24 : i32
      %773 = vector.broadcast %c24_i32 : i32 to vector<1x1x128xi32>
      %774 = arith.cmpi eq, %4, %773 : vector<1x1x128xi32>
      %c25_i32 = arith.constant 25 : i32
      %775 = vector.broadcast %c25_i32 : i32 to vector<1x1x128xi32>
      %776 = arith.cmpi eq, %4, %775 : vector<1x1x128xi32>
      %cst_75 = arith.constant 0.000000e+00 : f32
      %777 = vector.shape_cast %774 : vector<1x1x128xi1> to vector<1x1x128xi1>
      %778 = vector.broadcast %777 : vector<1x1x128xi1> to vector<2x40x128xi1>
      %779 = vector.broadcast %cst_75 : f32 to vector<2x40x128xf32>
      %780 = arith.select %778, %772, %779 : vector<2x40x128xi1>, vector<2x40x128xf32>
      %cst_76 = arith.constant 0.000000e+00 : f32
      %781 = vector.shape_cast %776 : vector<1x1x128xi1> to vector<1x1x128xi1>
      %782 = vector.broadcast %781 : vector<1x1x128xi1> to vector<2x40x128xi1>
      %783 = vector.broadcast %cst_76 : f32 to vector<2x40x128xf32>
      %784 = arith.select %782, %772, %783 : vector<2x40x128xi1>, vector<2x40x128xf32>
      %785 = tpu.concatenate %780, %784 in 0 : vector<2x40x128xf32>, vector<2x40x128xf32> -> vector<4x40x128xf32>
      %786 = vector.shape_cast %785 : vector<4x40x128xf32> to vector<160x128xf32>
      %cst_77 = arith.constant dense<0.000000e+00> : vector<160x128xf32>
      %787 = tpu.matmul %786, %2, %cst_77 {dimension_numbers = #tpu.dot_dimension_numbers<[1], [0], [0], [1], [0, 0, 1, 1], [], []>} : vector<160x128xf32>, vector<128x128xf32>, vector<160x128xf32> -> vector<160x128xf32>
      %788 = vector.extract_strided_slice %787 {offsets = [0, 0], sizes = [80, 128], strides = [1, 1]} : vector<160x128xf32> to vector<80x128xf32>
      %789 = vector.shape_cast %788 : vector<80x128xf32> to vector<2x40x128xf32>
      %790 = vector.extract_strided_slice %787 {offsets = [80, 0], sizes = [80, 128], strides = [1, 1]} : vector<160x128xf32> to vector<80x128xf32>
      %791 = vector.shape_cast %790 : vector<80x128xf32> to vector<2x40x128xf32>
      %792 = vector.extract_strided_slice %789 {offsets = [0, 24, 0], sizes = [2, 1, 128], strides = [1, 1, 1]} : vector<2x40x128xf32> to vector<2x1x128xf32>
      %793 = vector.extract_strided_slice %789 {offsets = [0, 25, 0], sizes = [2, 1, 128], strides = [1, 1, 1]} : vector<2x40x128xf32> to vector<2x1x128xf32>
      %794 = vector.extract_strided_slice %791 {offsets = [0, 24, 0], sizes = [2, 1, 128], strides = [1, 1, 1]} : vector<2x40x128xf32> to vector<2x1x128xf32>
      %795 = vector.extract_strided_slice %791 {offsets = [0, 25, 0], sizes = [2, 1, 128], strides = [1, 1, 1]} : vector<2x40x128xf32> to vector<2x1x128xf32>
      %796 = arith.mulf %792, %795 : vector<2x1x128xf32>
      %797 = arith.mulf %793, %794 : vector<2x1x128xf32>
      %798 = arith.subf %796, %797 : vector<2x1x128xf32>
      %799 = tpu.reciprocal %798 {approx = true} : vector<2x1x128xf32> -> vector<2x1x128xf32>
      %800 = arith.mulf %798, %799 : vector<2x1x128xf32>
      %cst_78 = arith.constant 2.000000e+00 : f32
      %801 = vector.broadcast %cst_78 : f32 to vector<2x1x128xf32>
      %802 = arith.subf %801, %800 : vector<2x1x128xf32>
      %803 = arith.mulf %799, %802 : vector<2x1x128xf32>
      %804 = vector.broadcast %795 : vector<2x1x128xf32> to vector<2x40x128xf32>
      %805 = arith.mulf %804, %789 : vector<2x40x128xf32>
      %806 = vector.broadcast %793 : vector<2x1x128xf32> to vector<2x40x128xf32>
      %807 = arith.mulf %806, %791 : vector<2x40x128xf32>
      %808 = arith.subf %805, %807 : vector<2x40x128xf32>
      %809 = vector.broadcast %803 : vector<2x1x128xf32> to vector<2x40x128xf32>
      %810 = arith.mulf %808, %809 : vector<2x40x128xf32>
      %811 = vector.broadcast %792 : vector<2x1x128xf32> to vector<2x40x128xf32>
      %812 = arith.mulf %811, %791 : vector<2x40x128xf32>
      %813 = vector.broadcast %794 : vector<2x1x128xf32> to vector<2x40x128xf32>
      %814 = arith.mulf %813, %789 : vector<2x40x128xf32>
      %815 = arith.subf %812, %814 : vector<2x40x128xf32>
      %816 = vector.broadcast %803 : vector<2x1x128xf32> to vector<2x40x128xf32>
      %817 = arith.mulf %815, %816 : vector<2x40x128xf32>
      %818 = vector.extract_strided_slice %772 {offsets = [0, 24, 0], sizes = [2, 1, 128], strides = [1, 1, 1]} : vector<2x40x128xf32> to vector<2x1x128xf32>
      %819 = vector.extract_strided_slice %772 {offsets = [0, 25, 0], sizes = [2, 1, 128], strides = [1, 1, 1]} : vector<2x40x128xf32> to vector<2x1x128xf32>
      %820 = vector.broadcast %818 : vector<2x1x128xf32> to vector<2x40x128xf32>
      %821 = arith.mulf %820, %810 : vector<2x40x128xf32>
      %822 = arith.subf %772, %821 : vector<2x40x128xf32>
      %823 = vector.broadcast %819 : vector<2x1x128xf32> to vector<2x40x128xf32>
      %824 = arith.mulf %823, %817 : vector<2x40x128xf32>
      %825 = arith.subf %822, %824 : vector<2x40x128xf32>
      %826 = vector.shape_cast %774 : vector<1x1x128xi1> to vector<1x1x128xi1>
      %827 = vector.broadcast %826 : vector<1x1x128xi1> to vector<2x40x128xi1>
      %828 = arith.select %827, %810, %825 : vector<2x40x128xi1>, vector<2x40x128xf32>
      %829 = vector.shape_cast %776 : vector<1x1x128xi1> to vector<1x1x128xi1>
      %830 = vector.broadcast %829 : vector<1x1x128xi1> to vector<2x40x128xi1>
      %831 = arith.select %830, %817, %828 : vector<2x40x128xi1>, vector<2x40x128xf32>
      %c26_i32 = arith.constant 26 : i32
      %832 = vector.broadcast %c26_i32 : i32 to vector<1x1x128xi32>
      %833 = arith.cmpi eq, %4, %832 : vector<1x1x128xi32>
      %c27_i32 = arith.constant 27 : i32
      %834 = vector.broadcast %c27_i32 : i32 to vector<1x1x128xi32>
      %835 = arith.cmpi eq, %4, %834 : vector<1x1x128xi32>
      %cst_79 = arith.constant 0.000000e+00 : f32
      %836 = vector.shape_cast %833 : vector<1x1x128xi1> to vector<1x1x128xi1>
      %837 = vector.broadcast %836 : vector<1x1x128xi1> to vector<2x40x128xi1>
      %838 = vector.broadcast %cst_79 : f32 to vector<2x40x128xf32>
      %839 = arith.select %837, %831, %838 : vector<2x40x128xi1>, vector<2x40x128xf32>
      %cst_80 = arith.constant 0.000000e+00 : f32
      %840 = vector.shape_cast %835 : vector<1x1x128xi1> to vector<1x1x128xi1>
      %841 = vector.broadcast %840 : vector<1x1x128xi1> to vector<2x40x128xi1>
      %842 = vector.broadcast %cst_80 : f32 to vector<2x40x128xf32>
      %843 = arith.select %841, %831, %842 : vector<2x40x128xi1>, vector<2x40x128xf32>
      %844 = tpu.concatenate %839, %843 in 0 : vector<2x40x128xf32>, vector<2x40x128xf32> -> vector<4x40x128xf32>
      %845 = vector.shape_cast %844 : vector<4x40x128xf32> to vector<160x128xf32>
      %cst_81 = arith.constant dense<0.000000e+00> : vector<160x128xf32>
      %846 = tpu.matmul %845, %2, %cst_81 {dimension_numbers = #tpu.dot_dimension_numbers<[1], [0], [0], [1], [0, 0, 1, 1], [], []>} : vector<160x128xf32>, vector<128x128xf32>, vector<160x128xf32> -> vector<160x128xf32>
      %847 = vector.extract_strided_slice %846 {offsets = [0, 0], sizes = [80, 128], strides = [1, 1]} : vector<160x128xf32> to vector<80x128xf32>
      %848 = vector.shape_cast %847 : vector<80x128xf32> to vector<2x40x128xf32>
      %849 = vector.extract_strided_slice %846 {offsets = [80, 0], sizes = [80, 128], strides = [1, 1]} : vector<160x128xf32> to vector<80x128xf32>
      %850 = vector.shape_cast %849 : vector<80x128xf32> to vector<2x40x128xf32>
      %851 = vector.extract_strided_slice %848 {offsets = [0, 26, 0], sizes = [2, 1, 128], strides = [1, 1, 1]} : vector<2x40x128xf32> to vector<2x1x128xf32>
      %852 = vector.extract_strided_slice %848 {offsets = [0, 27, 0], sizes = [2, 1, 128], strides = [1, 1, 1]} : vector<2x40x128xf32> to vector<2x1x128xf32>
      %853 = vector.extract_strided_slice %850 {offsets = [0, 26, 0], sizes = [2, 1, 128], strides = [1, 1, 1]} : vector<2x40x128xf32> to vector<2x1x128xf32>
      %854 = vector.extract_strided_slice %850 {offsets = [0, 27, 0], sizes = [2, 1, 128], strides = [1, 1, 1]} : vector<2x40x128xf32> to vector<2x1x128xf32>
      %855 = arith.mulf %851, %854 : vector<2x1x128xf32>
      %856 = arith.mulf %852, %853 : vector<2x1x128xf32>
      %857 = arith.subf %855, %856 : vector<2x1x128xf32>
      %858 = tpu.reciprocal %857 {approx = true} : vector<2x1x128xf32> -> vector<2x1x128xf32>
      %859 = arith.mulf %857, %858 : vector<2x1x128xf32>
      %cst_82 = arith.constant 2.000000e+00 : f32
      %860 = vector.broadcast %cst_82 : f32 to vector<2x1x128xf32>
      %861 = arith.subf %860, %859 : vector<2x1x128xf32>
      %862 = arith.mulf %858, %861 : vector<2x1x128xf32>
      %863 = vector.broadcast %854 : vector<2x1x128xf32> to vector<2x40x128xf32>
      %864 = arith.mulf %863, %848 : vector<2x40x128xf32>
      %865 = vector.broadcast %852 : vector<2x1x128xf32> to vector<2x40x128xf32>
      %866 = arith.mulf %865, %850 : vector<2x40x128xf32>
      %867 = arith.subf %864, %866 : vector<2x40x128xf32>
      %868 = vector.broadcast %862 : vector<2x1x128xf32> to vector<2x40x128xf32>
      %869 = arith.mulf %867, %868 : vector<2x40x128xf32>
      %870 = vector.broadcast %851 : vector<2x1x128xf32> to vector<2x40x128xf32>
      %871 = arith.mulf %870, %850 : vector<2x40x128xf32>
      %872 = vector.broadcast %853 : vector<2x1x128xf32> to vector<2x40x128xf32>
      %873 = arith.mulf %872, %848 : vector<2x40x128xf32>
      %874 = arith.subf %871, %873 : vector<2x40x128xf32>
      %875 = vector.broadcast %862 : vector<2x1x128xf32> to vector<2x40x128xf32>
      %876 = arith.mulf %874, %875 : vector<2x40x128xf32>
      %877 = vector.extract_strided_slice %831 {offsets = [0, 26, 0], sizes = [2, 1, 128], strides = [1, 1, 1]} : vector<2x40x128xf32> to vector<2x1x128xf32>
      %878 = vector.extract_strided_slice %831 {offsets = [0, 27, 0], sizes = [2, 1, 128], strides = [1, 1, 1]} : vector<2x40x128xf32> to vector<2x1x128xf32>
      %879 = vector.broadcast %877 : vector<2x1x128xf32> to vector<2x40x128xf32>
      %880 = arith.mulf %879, %869 : vector<2x40x128xf32>
      %881 = arith.subf %831, %880 : vector<2x40x128xf32>
      %882 = vector.broadcast %878 : vector<2x1x128xf32> to vector<2x40x128xf32>
      %883 = arith.mulf %882, %876 : vector<2x40x128xf32>
      %884 = arith.subf %881, %883 : vector<2x40x128xf32>
      %885 = vector.shape_cast %833 : vector<1x1x128xi1> to vector<1x1x128xi1>
      %886 = vector.broadcast %885 : vector<1x1x128xi1> to vector<2x40x128xi1>
      %887 = arith.select %886, %869, %884 : vector<2x40x128xi1>, vector<2x40x128xf32>
      %888 = vector.shape_cast %835 : vector<1x1x128xi1> to vector<1x1x128xi1>
      %889 = vector.broadcast %888 : vector<1x1x128xi1> to vector<2x40x128xi1>
      %890 = arith.select %889, %876, %887 : vector<2x40x128xi1>, vector<2x40x128xf32>
      %c28_i32 = arith.constant 28 : i32
      %891 = vector.broadcast %c28_i32 : i32 to vector<1x1x128xi32>
      %892 = arith.cmpi eq, %4, %891 : vector<1x1x128xi32>
      %c29_i32 = arith.constant 29 : i32
      %893 = vector.broadcast %c29_i32 : i32 to vector<1x1x128xi32>
      %894 = arith.cmpi eq, %4, %893 : vector<1x1x128xi32>
      %cst_83 = arith.constant 0.000000e+00 : f32
      %895 = vector.shape_cast %892 : vector<1x1x128xi1> to vector<1x1x128xi1>
      %896 = vector.broadcast %895 : vector<1x1x128xi1> to vector<2x40x128xi1>
      %897 = vector.broadcast %cst_83 : f32 to vector<2x40x128xf32>
      %898 = arith.select %896, %890, %897 : vector<2x40x128xi1>, vector<2x40x128xf32>
      %cst_84 = arith.constant 0.000000e+00 : f32
      %899 = vector.shape_cast %894 : vector<1x1x128xi1> to vector<1x1x128xi1>
      %900 = vector.broadcast %899 : vector<1x1x128xi1> to vector<2x40x128xi1>
      %901 = vector.broadcast %cst_84 : f32 to vector<2x40x128xf32>
      %902 = arith.select %900, %890, %901 : vector<2x40x128xi1>, vector<2x40x128xf32>
      %903 = tpu.concatenate %898, %902 in 0 : vector<2x40x128xf32>, vector<2x40x128xf32> -> vector<4x40x128xf32>
      %904 = vector.shape_cast %903 : vector<4x40x128xf32> to vector<160x128xf32>
      %cst_85 = arith.constant dense<0.000000e+00> : vector<160x128xf32>
      %905 = tpu.matmul %904, %2, %cst_85 {dimension_numbers = #tpu.dot_dimension_numbers<[1], [0], [0], [1], [0, 0, 1, 1], [], []>} : vector<160x128xf32>, vector<128x128xf32>, vector<160x128xf32> -> vector<160x128xf32>
      %906 = vector.extract_strided_slice %905 {offsets = [0, 0], sizes = [80, 128], strides = [1, 1]} : vector<160x128xf32> to vector<80x128xf32>
      %907 = vector.shape_cast %906 : vector<80x128xf32> to vector<2x40x128xf32>
      %908 = vector.extract_strided_slice %905 {offsets = [80, 0], sizes = [80, 128], strides = [1, 1]} : vector<160x128xf32> to vector<80x128xf32>
      %909 = vector.shape_cast %908 : vector<80x128xf32> to vector<2x40x128xf32>
      %910 = vector.extract_strided_slice %907 {offsets = [0, 28, 0], sizes = [2, 1, 128], strides = [1, 1, 1]} : vector<2x40x128xf32> to vector<2x1x128xf32>
      %911 = vector.extract_strided_slice %907 {offsets = [0, 29, 0], sizes = [2, 1, 128], strides = [1, 1, 1]} : vector<2x40x128xf32> to vector<2x1x128xf32>
      %912 = vector.extract_strided_slice %909 {offsets = [0, 28, 0], sizes = [2, 1, 128], strides = [1, 1, 1]} : vector<2x40x128xf32> to vector<2x1x128xf32>
      %913 = vector.extract_strided_slice %909 {offsets = [0, 29, 0], sizes = [2, 1, 128], strides = [1, 1, 1]} : vector<2x40x128xf32> to vector<2x1x128xf32>
      %914 = arith.mulf %910, %913 : vector<2x1x128xf32>
      %915 = arith.mulf %911, %912 : vector<2x1x128xf32>
      %916 = arith.subf %914, %915 : vector<2x1x128xf32>
      %917 = tpu.reciprocal %916 {approx = true} : vector<2x1x128xf32> -> vector<2x1x128xf32>
      %918 = arith.mulf %916, %917 : vector<2x1x128xf32>
      %cst_86 = arith.constant 2.000000e+00 : f32
      %919 = vector.broadcast %cst_86 : f32 to vector<2x1x128xf32>
      %920 = arith.subf %919, %918 : vector<2x1x128xf32>
      %921 = arith.mulf %917, %920 : vector<2x1x128xf32>
      %922 = vector.broadcast %913 : vector<2x1x128xf32> to vector<2x40x128xf32>
      %923 = arith.mulf %922, %907 : vector<2x40x128xf32>
      %924 = vector.broadcast %911 : vector<2x1x128xf32> to vector<2x40x128xf32>
      %925 = arith.mulf %924, %909 : vector<2x40x128xf32>
      %926 = arith.subf %923, %925 : vector<2x40x128xf32>
      %927 = vector.broadcast %921 : vector<2x1x128xf32> to vector<2x40x128xf32>
      %928 = arith.mulf %926, %927 : vector<2x40x128xf32>
      %929 = vector.broadcast %910 : vector<2x1x128xf32> to vector<2x40x128xf32>
      %930 = arith.mulf %929, %909 : vector<2x40x128xf32>
      %931 = vector.broadcast %912 : vector<2x1x128xf32> to vector<2x40x128xf32>
      %932 = arith.mulf %931, %907 : vector<2x40x128xf32>
      %933 = arith.subf %930, %932 : vector<2x40x128xf32>
      %934 = vector.broadcast %921 : vector<2x1x128xf32> to vector<2x40x128xf32>
      %935 = arith.mulf %933, %934 : vector<2x40x128xf32>
      %936 = vector.extract_strided_slice %890 {offsets = [0, 28, 0], sizes = [2, 1, 128], strides = [1, 1, 1]} : vector<2x40x128xf32> to vector<2x1x128xf32>
      %937 = vector.extract_strided_slice %890 {offsets = [0, 29, 0], sizes = [2, 1, 128], strides = [1, 1, 1]} : vector<2x40x128xf32> to vector<2x1x128xf32>
      %938 = vector.broadcast %936 : vector<2x1x128xf32> to vector<2x40x128xf32>
      %939 = arith.mulf %938, %928 : vector<2x40x128xf32>
      %940 = arith.subf %890, %939 : vector<2x40x128xf32>
      %941 = vector.broadcast %937 : vector<2x1x128xf32> to vector<2x40x128xf32>
      %942 = arith.mulf %941, %935 : vector<2x40x128xf32>
      %943 = arith.subf %940, %942 : vector<2x40x128xf32>
      %944 = vector.shape_cast %892 : vector<1x1x128xi1> to vector<1x1x128xi1>
      %945 = vector.broadcast %944 : vector<1x1x128xi1> to vector<2x40x128xi1>
      %946 = arith.select %945, %928, %943 : vector<2x40x128xi1>, vector<2x40x128xf32>
      %947 = vector.shape_cast %894 : vector<1x1x128xi1> to vector<1x1x128xi1>
      %948 = vector.broadcast %947 : vector<1x1x128xi1> to vector<2x40x128xi1>
      %949 = arith.select %948, %935, %946 : vector<2x40x128xi1>, vector<2x40x128xf32>
      %c30_i32 = arith.constant 30 : i32
      %950 = vector.broadcast %c30_i32 : i32 to vector<1x1x128xi32>
      %951 = arith.cmpi eq, %4, %950 : vector<1x1x128xi32>
      %c31_i32 = arith.constant 31 : i32
      %952 = vector.broadcast %c31_i32 : i32 to vector<1x1x128xi32>
      %953 = arith.cmpi eq, %4, %952 : vector<1x1x128xi32>
      %cst_87 = arith.constant 0.000000e+00 : f32
      %954 = vector.shape_cast %951 : vector<1x1x128xi1> to vector<1x1x128xi1>
      %955 = vector.broadcast %954 : vector<1x1x128xi1> to vector<2x40x128xi1>
      %956 = vector.broadcast %cst_87 : f32 to vector<2x40x128xf32>
      %957 = arith.select %955, %949, %956 : vector<2x40x128xi1>, vector<2x40x128xf32>
      %cst_88 = arith.constant 0.000000e+00 : f32
      %958 = vector.shape_cast %953 : vector<1x1x128xi1> to vector<1x1x128xi1>
      %959 = vector.broadcast %958 : vector<1x1x128xi1> to vector<2x40x128xi1>
      %960 = vector.broadcast %cst_88 : f32 to vector<2x40x128xf32>
      %961 = arith.select %959, %949, %960 : vector<2x40x128xi1>, vector<2x40x128xf32>
      %962 = tpu.concatenate %957, %961 in 0 : vector<2x40x128xf32>, vector<2x40x128xf32> -> vector<4x40x128xf32>
      %963 = vector.shape_cast %962 : vector<4x40x128xf32> to vector<160x128xf32>
      %cst_89 = arith.constant dense<0.000000e+00> : vector<160x128xf32>
      %964 = tpu.matmul %963, %2, %cst_89 {dimension_numbers = #tpu.dot_dimension_numbers<[1], [0], [0], [1], [0, 0, 1, 1], [], []>} : vector<160x128xf32>, vector<128x128xf32>, vector<160x128xf32> -> vector<160x128xf32>
      %965 = vector.extract_strided_slice %964 {offsets = [0, 0], sizes = [80, 128], strides = [1, 1]} : vector<160x128xf32> to vector<80x128xf32>
      %966 = vector.shape_cast %965 : vector<80x128xf32> to vector<2x40x128xf32>
      %967 = vector.extract_strided_slice %964 {offsets = [80, 0], sizes = [80, 128], strides = [1, 1]} : vector<160x128xf32> to vector<80x128xf32>
      %968 = vector.shape_cast %967 : vector<80x128xf32> to vector<2x40x128xf32>
      %969 = vector.extract_strided_slice %966 {offsets = [0, 30, 0], sizes = [2, 1, 128], strides = [1, 1, 1]} : vector<2x40x128xf32> to vector<2x1x128xf32>
      %970 = vector.extract_strided_slice %966 {offsets = [0, 31, 0], sizes = [2, 1, 128], strides = [1, 1, 1]} : vector<2x40x128xf32> to vector<2x1x128xf32>
      %971 = vector.extract_strided_slice %968 {offsets = [0, 30, 0], sizes = [2, 1, 128], strides = [1, 1, 1]} : vector<2x40x128xf32> to vector<2x1x128xf32>
      %972 = vector.extract_strided_slice %968 {offsets = [0, 31, 0], sizes = [2, 1, 128], strides = [1, 1, 1]} : vector<2x40x128xf32> to vector<2x1x128xf32>
      %973 = arith.mulf %969, %972 : vector<2x1x128xf32>
      %974 = arith.mulf %970, %971 : vector<2x1x128xf32>
      %975 = arith.subf %973, %974 : vector<2x1x128xf32>
      %976 = tpu.reciprocal %975 {approx = true} : vector<2x1x128xf32> -> vector<2x1x128xf32>
      %977 = arith.mulf %975, %976 : vector<2x1x128xf32>
      %cst_90 = arith.constant 2.000000e+00 : f32
      %978 = vector.broadcast %cst_90 : f32 to vector<2x1x128xf32>
      %979 = arith.subf %978, %977 : vector<2x1x128xf32>
      %980 = arith.mulf %976, %979 : vector<2x1x128xf32>
      %981 = vector.broadcast %972 : vector<2x1x128xf32> to vector<2x40x128xf32>
      %982 = arith.mulf %981, %966 : vector<2x40x128xf32>
      %983 = vector.broadcast %970 : vector<2x1x128xf32> to vector<2x40x128xf32>
      %984 = arith.mulf %983, %968 : vector<2x40x128xf32>
      %985 = arith.subf %982, %984 : vector<2x40x128xf32>
      %986 = vector.broadcast %980 : vector<2x1x128xf32> to vector<2x40x128xf32>
      %987 = arith.mulf %985, %986 : vector<2x40x128xf32>
      %988 = vector.broadcast %969 : vector<2x1x128xf32> to vector<2x40x128xf32>
      %989 = arith.mulf %988, %968 : vector<2x40x128xf32>
      %990 = vector.broadcast %971 : vector<2x1x128xf32> to vector<2x40x128xf32>
      %991 = arith.mulf %990, %966 : vector<2x40x128xf32>
      %992 = arith.subf %989, %991 : vector<2x40x128xf32>
      %993 = vector.broadcast %980 : vector<2x1x128xf32> to vector<2x40x128xf32>
      %994 = arith.mulf %992, %993 : vector<2x40x128xf32>
      %995 = vector.extract_strided_slice %949 {offsets = [0, 30, 0], sizes = [2, 1, 128], strides = [1, 1, 1]} : vector<2x40x128xf32> to vector<2x1x128xf32>
      %996 = vector.extract_strided_slice %949 {offsets = [0, 31, 0], sizes = [2, 1, 128], strides = [1, 1, 1]} : vector<2x40x128xf32> to vector<2x1x128xf32>
      %997 = vector.broadcast %995 : vector<2x1x128xf32> to vector<2x40x128xf32>
      %998 = arith.mulf %997, %987 : vector<2x40x128xf32>
      %999 = arith.subf %949, %998 : vector<2x40x128xf32>
      %1000 = vector.broadcast %996 : vector<2x1x128xf32> to vector<2x40x128xf32>
      %1001 = arith.mulf %1000, %994 : vector<2x40x128xf32>
      %1002 = arith.subf %999, %1001 : vector<2x40x128xf32>
      %1003 = vector.shape_cast %951 : vector<1x1x128xi1> to vector<1x1x128xi1>
      %1004 = vector.broadcast %1003 : vector<1x1x128xi1> to vector<2x40x128xi1>
      %1005 = arith.select %1004, %987, %1002 : vector<2x40x128xi1>, vector<2x40x128xf32>
      %1006 = vector.shape_cast %953 : vector<1x1x128xi1> to vector<1x1x128xi1>
      %1007 = vector.broadcast %1006 : vector<1x1x128xi1> to vector<2x40x128xi1>
      %1008 = arith.select %1007, %994, %1005 : vector<2x40x128xi1>, vector<2x40x128xf32>
      %1009 = vector.extract_strided_slice %1008 {offsets = [0, 32, 0], sizes = [2, 1, 128], strides = [1, 1, 1]} : vector<2x40x128xf32> to vector<2x1x128xf32>
      %1010 = vector.extract_strided_slice %1009 {offsets = [0, 0, 0], sizes = [1, 1, 128], strides = [1, 1, 1]} : vector<2x1x128xf32> to vector<1x1x128xf32>
      %1011 = vector.shape_cast %1010 : vector<1x1x128xf32> to vector<1x128xf32>
      %1012 = vector.extract_strided_slice %7 {offsets = [0, 0, 0], sizes = [1, 8, 128], strides = [1, 1, 1]} : vector<2x8x128xf32> to vector<1x8x128xf32>
      %1013 = vector.shape_cast %1012 : vector<1x8x128xf32> to vector<8x128xf32>
      %1014 = vector.broadcast %1011 : vector<1x128xf32> to vector<8x128xf32>
      %1015 = arith.mulf %1014, %1013 : vector<8x128xf32>
      %1016 = vector.extract_strided_slice %1009 {offsets = [1, 0, 0], sizes = [1, 1, 128], strides = [1, 1, 1]} : vector<2x1x128xf32> to vector<1x1x128xf32>
      %1017 = vector.shape_cast %1016 : vector<1x1x128xf32> to vector<1x128xf32>
      %1018 = vector.extract_strided_slice %7 {offsets = [1, 0, 0], sizes = [1, 8, 128], strides = [1, 1, 1]} : vector<2x8x128xf32> to vector<1x8x128xf32>
      %1019 = vector.shape_cast %1018 : vector<1x8x128xf32> to vector<8x128xf32>
      %1020 = vector.broadcast %1017 : vector<1x128xf32> to vector<8x128xf32>
      %1021 = arith.mulf %1020, %1019 : vector<8x128xf32>
      %1022 = arith.addf %1015, %1021 : vector<8x128xf32>
      %cst_91 = arith.constant dense<0.000000e+00> : vector<8x32xf32>
      %1023 = tpu.matmul %1022, %8, %cst_91 {dimension_numbers = #tpu.dot_dimension_numbers<[1], [0], [0], [1], [0, 0, 1, 1], [], []>} : vector<8x128xf32>, vector<128x32xf32>, vector<8x32xf32> -> vector<8x32xf32>
      %1024 = arith.subf %arg11, %1023 : vector<8x32xf32>
      %cst_92 = arith.constant dense<0.000000e+00> : vector<8x32xf32>
      %1025 = tpu.matmul %1024, %1, %cst_92 {dimension_numbers = #tpu.dot_dimension_numbers<[1], [0], [0], [1], [0, 0, 1, 1], [], []>} : vector<8x32xf32>, vector<32x32xf32>, vector<8x32xf32> -> vector<8x32xf32>
      %1026 = arith.addf %1025, %0 : vector<8x32xf32>
      %1027 = math.tanh %1026 : vector<8x32xf32>
      %1028 = arith.subf %1024, %1027 : vector<8x32xf32>
      %1029 = arith.mulf %1028, %1028 : vector<8x32xf32>
      %1030 = vector.shape_cast %1029 : vector<8x32xf32> to vector<1x8x32xf32>
      %cst_93 = arith.constant dense<0.000000e+00> : vector<1xf32>
      %1031 = vector.multi_reduction <add>, %1030, %cst_93 [1, 2] : vector<1x8x32xf32> to vector<1xf32>
      %1032 = vector.shape_cast %1031 : vector<1xf32> to vector<1x1x1xf32>
      %1033 = vector.extract %1032[0, 0, 0] : f32 from vector<1x1x1xf32>
      %c1_i32_94 = arith.constant 1 : i32
      %1034 = arith.addi %arg15, %c1_i32_94 : i32
      scf.yield %1024, %1027, %1028, %1033, %1034 : vector<8x32xf32>, vector<8x32xf32>, vector<8x32xf32>, f32, i32
    }
    %c0_19 = arith.constant 0 : index
    %c0_20 = arith.constant 0 : index
    %21 = vector.load %arg10[%c0_19, %c0_20] : memref<8x32xf32, #tpu.memory_space<vmem>>, vector<8x32xf32>
    tpu.vector_store %arg10[%c0_19, %c0_20], %20#1 {strides = array<i32>} : memref<8x32xf32, #tpu.memory_space<vmem>>, vector<8x32xf32>,
    return
  }
  func.func @transform_0(%arg0: i32) -> (i32, i32) {
    %c0_i32 = arith.constant 0 : i32
    %c0_i32_0 = arith.constant 0 : i32
    %c0_i32_1 = arith.constant 0 : i32
    return %c0_i32, %c0_i32_0 : i32, i32
  }
  func.func @transform_1(%arg0: i32) -> (i32, i32) {
    %c0_i32 = arith.constant 0 : i32
    %c0_i32_0 = arith.constant 0 : i32
    %c0_i32_1 = arith.constant 0 : i32
    return %c0_i32, %c0_i32_0 : i32, i32
  }
  func.func @transform_2(%arg0: i32) -> (i32, i32) {
    %c0_i32 = arith.constant 0 : i32
    %c0_i32_0 = arith.constant 0 : i32
    %c0_i32_1 = arith.constant 0 : i32
    return %c0_i32, %c0_i32_0 : i32, i32
  }
  func.func @transform_3(%arg0: i32) -> (i32, i32) {
    %c0_i32 = arith.constant 0 : i32
    %c0_i32_0 = arith.constant 0 : i32
    %c0_i32_1 = arith.constant 0 : i32
    return %c0_i32, %c0_i32_0 : i32, i32
  }
  func.func @transform_4(%arg0: i32) -> (i32, i32) {
    %c0_i32 = arith.constant 0 : i32
    %c0_i32_0 = arith.constant 0 : i32
    %c0_i32_1 = arith.constant 0 : i32
    return %c0_i32, %c0_i32_0 : i32, i32
  }
  func.func @transform_5(%arg0: i32) -> (i32, i32) {
    %c0_i32 = arith.constant 0 : i32
    %c0_i32_0 = arith.constant 0 : i32
    %c0_i32_1 = arith.constant 0 : i32
    return %c0_i32, %c0_i32_0 : i32, i32
  }
  func.func @transform_6(%arg0: i32) -> (i32, i32, i32) {
    %c0_i32 = arith.constant 0 : i32
    %c0_i32_0 = arith.constant 0 : i32
    %c0_i32_1 = arith.constant 0 : i32
    %c0_i32_2 = arith.constant 0 : i32
    return %c0_i32, %c0_i32_0, %c0_i32_1 : i32, i32, i32
  }
  func.func @transform_7(%arg0: i32) -> (i32, i32) {
    %c0_i32 = arith.constant 0 : i32
    %c0_i32_0 = arith.constant 0 : i32
    %c0_i32_1 = arith.constant 0 : i32
    return %c0_i32, %c0_i32_0 : i32, i32
  }
  func.func @transform_8(%arg0: i32) -> (i32, i32) {
    %c0_i32 = arith.constant 0 : i32
    %c0_i32_0 = arith.constant 0 : i32
    %c0_i32_1 = arith.constant 0 : i32
    return %c0_i32, %c0_i32_0 : i32, i32
  }
  func.func @transform_9(%arg0: i32) -> (i32, i32) {
    %c0_i32 = arith.constant 0 : i32
    %c0_i32_0 = arith.constant 0 : i32
    %c0_i32_1 = arith.constant 0 : i32
    return %c0_i32, %c0_i32_0 : i32, i32
  }
}

</mosaic_0001>

<llo_original>
// kernel: tpu_custom_call.1
$region0: #{tpu_custom_call.1}
  #allocation0 [shape = 'u32[]', space=smem, size = 0x4, offset = 0x4, fixed_abs, tag = 'smem constant byte address 0x4 - core index']
  #allocation1 [shape = 'u32[144,128]{1,0:T(1,128)}', space=vmem, size = 0x12000, scoped, tag = 'internal scratch']
  %s0 = inlined_call_operand.hbm [shape: f32[8,32], index: 0, kind: input, shape index: {}]
  %s1 = inlined_call_operand.vmem [shape: f32[32,32], index: 1, kind: input, shape index: {}]
  %s2 = inlined_call_operand.vmem [shape: f32[128,128], index: 2, kind: input, shape index: {}]
  %s3 = inlined_call_operand.vmem [shape: s32[1,128], index: 3, kind: input, shape index: {}]
  %s4 = inlined_call_operand.hbm [shape: f32[32,128], index: 4, kind: input, shape index: {}]
  %s5 = inlined_call_operand.hbm [shape: f32[32,128], index: 5, kind: input, shape index: {}]
  %s6 = inlined_call_operand.vmem [shape: f32[2,8,128], index: 6, kind: input, shape index: {}]
  %s7 = inlined_call_operand.vmem [shape: f32[128,32], index: 7, kind: input, shape index: {}]
  %s8 = inlined_call_operand.vmem [shape: f32[8,128], index: 8, kind: input, shape index: {}]
  %s9 = inlined_call_operand.hbm [shape: f32[8,32], index: 9, kind: output, shape index: {}]
  %s10 = sld [smem:[#allocation0]]
  $region65: #{tpu_custom_call.1} parent=0
    _
  %s12 = ssub.s32 1, %s10
  %s13 = scalar_select 0, %s12, %s10
  $region1: #{tpu_custom_call.1} parent=0
    #allocation2 [shape = 'u8[4096]{0}', space=vmem, size = 0x1000, scoped, tag = 'input window, operand 0, single buffered']
    #allocation3 [shape = 's32[1]{0}', space=sflag, size = 0x4, scoped, tag = 'scoped memory for tpu_custom_call.1']
    #allocation4 [shape = 's32[1]{0}', space=sflag, size = 0x4, scoped, tag = 'scoped memory for tpu_custom_call.1']
    #allocation5 [shape = 'u8[16384]{0}', space=vmem, size = 0x4000, scoped, tag = 'input window, operand 4, single buffered']
    #allocation6 [shape = 's32[1]{0}', space=sflag, size = 0x4, scoped, tag = 'scoped memory for tpu_custom_call.1']
    #allocation7 [shape = 'u8[16384]{0}', space=vmem, size = 0x4000, scoped, tag = 'input window, operand 5, single buffered']
    #allocation8 [shape = 'u8[4096]{0}', space=vmem, size = 0x1000, scoped, tag = 'output window, operand 0, single buffered']
    %14 = vsyncpa [#allocation3], 0
    %15 = vsyncpa [#allocation6], 0
    %16 = vsyncpa [#allocation4], 0
    // Predicated region
    $region2: #{tpu_custom_call.1} parent=1 // pred_check
      _
    $region3: #{tpu_custom_call.1} parent=1 // pred_check_branch
      %18 = sbr.rel (0) target = $region5
    $region4: #{tpu_custom_call.1} parent=1 // pred_region
      %s20 = ssub.s32 128, 128
      %21 = vsyncadd [#allocation3], %s20
      %s23 = sshll.u32 [#allocation2], 4
      %s24 = int_to_ptr.vmem [resolvable:$true] %s23
      %26 = dma.hbm_to_vmem [thread:$0]  %s0, 128, %s24, [#allocation3]
    $region5: #{tpu_custom_call.1} parent=1 // pred_fallthru
      _
    // Predicated region
    $region6: #{tpu_custom_call.1} parent=1 // pred_check
      _
    $region7: #{tpu_custom_call.1} parent=1 // pred_check_branch
      %28 = sbr.rel (0) target = $region9
    $region8: #{tpu_custom_call.1} parent=1 // pred_region
      _
    $region9: #{tpu_custom_call.1} parent=1 // pred_fallthru
      _
    // Predicated region
    $region10: #{tpu_custom_call.1} parent=1 // pred_check
      _
    $region11: #{tpu_custom_call.1} parent=1 // pred_check_branch
      %30 = sbr.rel (0) target = $region13
    $region12: #{tpu_custom_call.1} parent=1 // pred_region
      _
    $region13: #{tpu_custom_call.1} parent=1 // pred_fallthru
      _
    // Predicated region
    $region14: #{tpu_custom_call.1} parent=1 // pred_check
      _
    $region15: #{tpu_custom_call.1} parent=1 // pred_check_branch
      %32 = sbr.rel (0) target = $region17
    $region16: #{tpu_custom_call.1} parent=1 // pred_region
      _
    $region17: #{tpu_custom_call.1} parent=1 // pred_fallthru
      _
    // Predicated region
    $region18: #{tpu_custom_call.1} parent=1 // pred_check
      _
    $region19: #{tpu_custom_call.1} parent=1 // pred_check_branch
      %34 = sbr.rel (0) target = $region21
    $region20: #{tpu_custom_call.1} parent=1 // pred_region
      %s36 = ssub.s32 512, 512
      %37 = vsyncadd [#allocation6], %s36
      %s38 = sshll.u32 [#allocation5], 4
      %s39 = int_to_ptr.vmem [resolvable:$true] %s38
      %44 = dma.hbm_to_vmem [thread:$0]  %s4, 512, %s39, [#allocation6], 128, 128, 8
    $region21: #{tpu_custom_call.1} parent=1 // pred_fallthru
      _
    // Predicated region
    $region22: #{tpu_custom_call.1} parent=1 // pred_check
      _
    $region23: #{tpu_custom_call.1} parent=1 // pred_check_branch
      %46 = sbr.rel (0) target = $region25
    $region24: #{tpu_custom_call.1} parent=1 // pred_region
      %s48 = ssub.s32 512, 512
      %49 = vsyncadd [#allocation6], %s48
      %s50 = sshll.u32 [#allocation7], 4
      %s51 = int_to_ptr.vmem [resolvable:$true] %s50
      %56 = dma.hbm_to_vmem [thread:$0]  %s5, 512, %s51, [#allocation6], 128, 128, 8
    $region25: #{tpu_custom_call.1} parent=1 // pred_fallthru
      _
    // Predicated region
    $region26: #{tpu_custom_call.1} parent=1 // pred_check
      _
    $region27: #{tpu_custom_call.1} parent=1 // pred_check_branch
      %58 = sbr.rel (0) target = $region29
    $region28: #{tpu_custom_call.1} parent=1 // pred_region
      _
    $region29: #{tpu_custom_call.1} parent=1 // pred_fallthru
      _
    // Predicated region
    $region30: #{tpu_custom_call.1} parent=1 // pred_check
      _
    $region31: #{tpu_custom_call.1} parent=1 // pred_check_branch
      %60 = sbr.rel (0) target = $region33
    $region32: #{tpu_custom_call.1} parent=1 // pred_region
      _
    $region33: #{tpu_custom_call.1} parent=1 // pred_fallthru
      _
    // Predicated region
    $region34: #{tpu_custom_call.1} parent=1 // pred_check
      _
    $region35: #{tpu_custom_call.1} parent=1 // pred_check_branch
      %62 = sbr.rel (0) target = $region37
    $region36: #{tpu_custom_call.1} parent=1 // pred_region
      _
    $region37: #{tpu_custom_call.1} parent=1 // pred_fallthru
      _
    // Predicated region
    $region38: #{tpu_custom_call.1} parent=1 // pred_check
      _
    $region39: #{tpu_custom_call.1} parent=1 // pred_check_branch
      %64 = sbr.rel (0) target = $region41
    $region40: #{tpu_custom_call.1} parent=1 // pred_region
      %65 = dma.done [#allocation3], 128
    $region41: #{tpu_custom_call.1} parent=1 // pred_fallthru
      _
    // Predicated region
    $region42: #{tpu_custom_call.1} parent=1 // pred_check
      _
    $region43: #{tpu_custom_call.1} parent=1 // pred_check_branch
      %67 = sbr.rel (0) target = $region45
    $region44: #{tpu_custom_call.1} parent=1 // pred_region
      %68 = dma.done [#allocation6], 512
    $region45: #{tpu_custom_call.1} parent=1 // pred_fallthru
      _
    // Predicated region
    $region46: #{tpu_custom_call.1} parent=1 // pred_check
      _
    $region47: #{tpu_custom_call.1} parent=1 // pred_check_branch
      %70 = sbr.rel (0) target = $region49
    $region48: #{tpu_custom_call.1} parent=1 // pred_region
      %71 = dma.done [#allocation6], 512
    $region49: #{tpu_custom_call.1} parent=1 // pred_fallthru
      _
    %v72 = vld [vmem:[#allocation2] sm:$0xff]
    %v73 = vld [vmem:[%s1] sm:$0xff]
    %v74 = vld [vmem:[%s1 + $0x8] sm:$0xff]
    %v75 = vld [vmem:[%s1 + $0x10] sm:$0xff]
    %v76 = vld [vmem:[%s1 + $0x18] sm:$0xff]
    %v77 = vld [vmem:[%s2] sm:$0xff]
    %v78 = vld [vmem:[%s2 + $0x8] sm:$0xff]
    %v79 = vld [vmem:[%s2 + $0x10] sm:$0xff]
    %v80 = vld [vmem:[%s2 + $0x18] sm:$0xff]
    %v81 = vld [vmem:[%s2 + $0x20] sm:$0xff]
    %v82 = vld [vmem:[%s2 + $0x28] sm:$0xff]
    %v83 = vld [vmem:[%s2 + $0x30] sm:$0xff]
    %v84 = vld [vmem:[%s2 + $0x38] sm:$0xff]
    %v85 = vld [vmem:[%s2 + $0x40] sm:$0xff]
    %v86 = vld [vmem:[%s2 + $0x48] sm:$0xff]
    %v87 = vld [vmem:[%s2 + $0x50] sm:$0xff]
    %v88 = vld [vmem:[%s2 + $0x58] sm:$0xff]
    %v89 = vld [vmem:[%s2 + $0x60] sm:$0xff]
    %v90 = vld [vmem:[%s2 + $0x68] sm:$0xff]
    %v91 = vld [vmem:[%s2 + $0x70] sm:$0xff]
    %v92 = vld [vmem:[%s2 + $0x78] sm:$0xff]
    %v93 = vld [vmem:[%s3] sm:$0x1]
    %v94 = vld [vmem:[#allocation5] sm:$0xff]
    %v95 = vld [vmem:[#allocation5 + $0x8] sm:$0xff]
    %v96 = vld [vmem:[#allocation5 + $0x10] sm:$0xff]
    %v97 = vld [vmem:[#allocation5 + $0x18] sm:$0xff]
    %v98 = vld [vmem:[#allocation7] sm:$0xff]
    %v99 = vld [vmem:[#allocation7 + $0x8] sm:$0xff]
    %v100 = vld [vmem:[#allocation7 + $0x10] sm:$0xff]
    %v101 = vld [vmem:[#allocation7 + $0x18] sm:$0xff]
    %v102 = vld [vmem:[%s6] sm:$0xff]
    %v103 = vld [vmem:[%s6 + $0x8] sm:$0xff]
    %v104 = vld [vmem:[%s7] sm:$0xff]
    %v105 = vld [vmem:[%s7 + $0x8] sm:$0xff]
    %v106 = vld [vmem:[%s7 + $0x10] sm:$0xff]
    %v107 = vld [vmem:[%s7 + $0x18] sm:$0xff]
    %v108 = vld [vmem:[%s7 + $0x20] sm:$0xff]
    %v109 = vld [vmem:[%s7 + $0x28] sm:$0xff]
    %v110 = vld [vmem:[%s7 + $0x30] sm:$0xff]
    %v111 = vld [vmem:[%s7 + $0x38] sm:$0xff]
    %v112 = vld [vmem:[%s7 + $0x40] sm:$0xff]
    %v113 = vld [vmem:[%s7 + $0x48] sm:$0xff]
    %v114 = vld [vmem:[%s7 + $0x50] sm:$0xff]
    %v115 = vld [vmem:[%s7 + $0x58] sm:$0xff]
    %v116 = vld [vmem:[%s7 + $0x60] sm:$0xff]
    %v117 = vld [vmem:[%s7 + $0x68] sm:$0xff]
    %v118 = vld [vmem:[%s7 + $0x70] sm:$0xff]
    %v119 = vld [vmem:[%s7 + $0x78] sm:$0xff]
    %v120 = vld [vmem:[%s8] sm:$0xff]
    %v121 = vtanh.pop %v72
    %vm122 = vcmask 261120
    %v124 = vsel %vm122, %v121, 0
    %126 = vmatprep.subr.mxu0 0.0
    %127 = vmatpush1.msra.mxu0 %v73
    %128 = vmatprep.subr.mxu0 0.0
    %129 = vmatpush1.msra.mxu0 %v74
    %130 = vmatprep.subr.mxu0 0.0
    %131 = vmatpush1.msra.mxu0 %v75
    %132 = vmatprep.subr.mxu0 0.0
    %133 = vmatpush1.msra.mxu0 %v76
    %134 = vmatprep.subr.mxu0 0.0
    %135 = vmatpush1.msra.mxu0 0.0
    %136 = vmatprep.subr.mxu0 0.0
    %137 = vmatpush1.msra.mxu0 0.0
    %138 = vmatprep.subr.mxu0 0.0
    %139 = vmatpush1.msra.mxu0 0.0
    %140 = vmatprep.subr.mxu0 0.0
    %141 = vmatpush1.msra.mxu0 0.0
    %142 = vmatprep.subr.mxu0 0.0
    %143 = vmatpush1.msra.mxu0 0.0
    %144 = vmatprep.subr.mxu0 0.0
    %145 = vmatpush1.msra.mxu0 0.0
    %146 = vmatprep.subr.mxu0 0.0
    %147 = vmatpush1.msra.mxu0 0.0
    %148 = vmatprep.subr.mxu0 0.0
    %149 = vmatpush1.msra.mxu0 0.0
    %150 = vmatprep.subr.mxu0 0.0
    %151 = vmatpush1.msra.mxu0 0.0
    %152 = vmatprep.subr.mxu0 0.0
    %153 = vmatpush1.msra.mxu0 0.0
    %154 = vmatprep.subr.mxu0 0.0
    %155 = vmatpush1.msra.mxu0 0.0
    %156 = vmatprep.subr.mxu0 0.0
    %157 = vmatpush1.msra.mxu0 0.0
    %158 = vmatprep.subr.mxu0 0.0
    %159 = vmatpush1.msra.mxu0 0.0
    %160 = vmatprep.subr.mxu0 0.0
    %161 = vmatpush1.msra.mxu0 0.0
    %162 = vmatprep.subr.mxu0 0.0
    %163 = vmatpush1.msra.mxu0 0.0
    %164 = vmatprep.subr.mxu0 0.0
    %165 = vmatpush1.msra.mxu0 0.0
    %166 = vmatprep.subr.mxu0 0.0
    %167 = vmatpush1.msra.mxu0 0.0
    %168 = vmatprep.subr.mxu0 0.0
    %169 = vmatpush1.msra.mxu0 0.0
    %170 = vmatprep.subr.mxu0 0.0
    %171 = vmatpush1.msra.mxu0 0.0
    %172 = vmatprep.subr.mxu0 0.0
    %173 = vmatpush1.msra.mxu0 0.0
    %174 = vmatprep.subr.mxu0 0.0
    %175 = vmatpush1.msra.mxu0 0.0
    %176 = vmatprep.subr.mxu0 0.0
    %177 = vmatpush1.msra.mxu0 0.0
    %178 = vmatprep.subr.mxu0 0.0
    %179 = vmatpush1.msra.mxu0 0.0
    %180 = vmatprep.subr.mxu0 0.0
    %181 = vmatpush1.msra.mxu0 0.0
    %182 = vmatprep.subr.mxu0 0.0
    %183 = vmatpush1.msra.mxu0 0.0
    %184 = vmatprep.subr.mxu0 0.0
    %185 = vmatpush1.msra.mxu0 0.0
    %186 = vmatprep.subr.mxu0 0.0
    %187 = vmatpush1.msra.mxu0 0.0
    %188 = vmatprep.subr.mxu0 0.0
    %189 = vmatpush1.msra.mxu0 0.0
    %190 = vmatprep.mubr.f32.mxu0 0.0
    %191 = vmatmul.mubr.f32.gmra.mrb[0].mxu0 %v124
    %v192 = vpop.f32.mrb[0].mxu0
    %v193 = vadd.f32 %v72, %v192
    %v194 = vpop.f32.mrb[0].mxu0
    %195 = vdwg.mxu0
    %v196 = vtanh.pop %v193
    %v197 = vsub.f32 %v121, %v196
    %v198 = vmul.f32 %v197, %v197
    %v199 = vsel %vm122, %v198, 0.0
    %200 = vadd.xlane.f32.xlu0 %v199
    %v201 = vpop.xlane.xlu0 %200
    %v202 = vrot.slane %v201, 4
    %v203 = vadd.f32 %v201, %v202
    %v204 = vrot.slane %v203, 2
    %v205 = vadd.f32 %v203, %v204
    %v206 = vrot.slane %v205, 1
    %v207 = vadd.f32 %v205, %v206
    %s208 = vtos %v207
    // While loop
    $region50: #{tpu_custom_call.1} parent=1 // loop_pre_header
      _
    $region51: #{tpu_custom_call.1} parent=1 // loop_header
      %v210 = vphi %v121, %v7070
      %v211 = vphi %v196, %v7144
      %v212 = vphi %v197, %v7145
      %s213 = sphi %s208, %s7156
      %s214 = sphi 0, %s7157
      %p215 = scmp.lt.s32.totalorder %s214, 50
      %p216 = scmp.ge.f32.partialorder %s213, 1e-08
      %p217 = pnand %p215, %p216
      %p218 = pneg %p217
    $region52: #{tpu_custom_call.1} parent=1 // loop_header_branch
      %220 = sbr.rel (%p217) target = $region56
    $region53: #{tpu_custom_call.1} parent=1 // loop_body
      %v221 = vmul.f32 %v211, %v211
      %v222 = vsub.f32 1.0, %v221
      %224 = vrot.lane.b32.xlu0 %v222, 32
      %v225 = vpop.permute.xlu0 %224
      %227 = vrot.lane.b32.xlu0 %v222, 64
      %v228 = vpop.permute.xlu0 %227
      %230 = vrot.lane.b32.xlu0 %v222, 96
      %v231 = vpop.permute.xlu0 %230
      %v233 = vsel %vm122, %v222, %v225
      %vm234 = vcmask 523264
      %v235 = vsel %vm234, %v233, %v228
      %vm236 = vcmask 785408
      %v237 = vsel %vm236, %v235, %v231
      %v238 = vmul.f32 %v237, %v102
      %v239 = vrot.slane %v238, 4
      %v240 = vadd.f32 %v238, %v239
      %v241 = vrot.slane %v240, 2
      %v242 = vadd.f32 %v240, %v241
      %v243 = vrot.slane %v242, 1
      %v244 = vadd.f32 %v242, %v243
      %v245 = vmul.f32 %v237, %v103
      %v246 = vrot.slane %v245, 4
      %v247 = vadd.f32 %v245, %v246
      %v248 = vrot.slane %v247, 2
      %v249 = vadd.f32 %v247, %v248
      %v250 = vrot.slane %v249, 1
      %v251 = vadd.f32 %v249, %v250
      %253 = vrot.lane.b32.xlu0 %v212, 32
      %v254 = vpop.permute.xlu0 %253
      %256 = vrot.lane.b32.xlu0 %v212, 64
      %v257 = vpop.permute.xlu0 %256
      %259 = vrot.lane.b32.xlu0 %v212, 96
      %v260 = vpop.permute.xlu0 %259
      %v262 = vsel %vm122, %v212, %v254
      %v263 = vsel %vm234, %v262, %v257
      %v264 = vsel %vm236, %v263, %v260
      %v265 = vmul.f32 %v264, %v102
      %v266 = vrot.slane %v265, 4
      %v267 = vadd.f32 %v265, %v266
      %v268 = vrot.slane %v267, 2
      %v269 = vadd.f32 %v267, %v268
      %v270 = vrot.slane %v269, 1
      %v271 = vadd.f32 %v269, %v270
      %v272 = vmul.f32 %v264, %v103
      %v273 = vrot.slane %v272, 4
      %v274 = vadd.f32 %v272, %v273
      %v275 = vrot.slane %v274, 2
      %v276 = vadd.f32 %v274, %v275
      %v277 = vrot.slane %v276, 1
      %v278 = vadd.f32 %v276, %v277
      %v279 = vlaneseq
      %v280 = vshrl.u32 %v279, 7
      %v281 = vsub.s32 0, %v280
      %v282 = vrot.slane %v244, %v281
      %v283 = vlaneseq
      %v284 = vshrl.u32 %v283, 7
      %v285 = vsub.s32 0, %v284
      %v286 = vrot.slane %v251, %v285
      %v287 = vmul.f32 %v282, %v98
      %v288 = vmul.f32 %v282, %v99
      %v289 = vmul.f32 %v282, %v100
      %v290 = vmul.f32 %v282, %v101
      %v291 = vmul.f32 %v286, %v98
      %v292 = vmul.f32 %v286, %v99
      %v293 = vmul.f32 %v286, %v100
      %v294 = vmul.f32 %v286, %v101
      %v295 = vsub.f32 %v94, %v287
      %v296 = vsub.f32 %v95, %v288
      %v297 = vsub.f32 %v96, %v289
      %v298 = vsub.f32 %v97, %v290
      %v299 = vsub.f32 %v94, %v291
      %v300 = vsub.f32 %v95, %v292
      %v301 = vsub.f32 %v96, %v293
      %v302 = vsub.f32 %v97, %v294
      %v303 = vlaneseq
      %v304 = vshrl.u32 %v303, 7
      %v305 = vsub.s32 0, %v304
      %v306 = vrot.slane %v271, %v305
      %v307 = vlaneseq
      %v308 = vshrl.u32 %v307, 7
      %v309 = vsub.s32 0, %v308
      %v310 = vrot.slane %v278, %v309
      %v311 = vmul.f32 %v306, %v120
      %v312 = vmul.f32 %v310, %v120
      %vm313 = vcmp.eq.s32.totalorder %v93, 0
      %vm314 = vcmp.eq.s32.totalorder %v93, 1
      %v315 = vsel %vm313, 1, 0
      %v316 = vlaneseq
      %v317 = vshrl.u32 %v316, 7
      %v318 = vsub.s32 0, %v317
      %v319 = vrot.slane %v315, %v318
      %vm320 = vcmp.eq.s32.totalorder %v319, 1
      %v321 = vsel %vm320, %v295, 0.0
      %v322 = vsel %vm320, %v296, 0.0
      %v323 = vsel %vm320, %v297, 0.0
      %v324 = vsel %vm320, %v298, 0.0
      %v325 = vsel %vm320, %v311, 0.0
      %v326 = vsel %vm320, %v299, 0.0
      %v327 = vsel %vm320, %v300, 0.0
      %v328 = vsel %vm320, %v301, 0.0
      %v329 = vsel %vm320, %v302, 0.0
      %v330 = vsel %vm320, %v312, 0.0
      %v331 = vsel %vm314, 1, 0
      %v332 = vlaneseq
      %v333 = vshrl.u32 %v332, 7
      %v334 = vsub.s32 0, %v333
      %v335 = vrot.slane %v331, %v334
      %vm336 = vcmp.eq.s32.totalorder %v335, 1
      %v337 = vsel %vm336, %v295, 0.0
      %v338 = vsel %vm336, %v296, 0.0
      %v339 = vsel %vm336, %v297, 0.0
      %v340 = vsel %vm336, %v298, 0.0
      %v341 = vsel %vm336, %v311, 0.0
      %v342 = vsel %vm336, %v299, 0.0
      %v343 = vsel %vm336, %v300, 0.0
      %v344 = vsel %vm336, %v301, 0.0
      %v345 = vsel %vm336, %v302, 0.0
      %v346 = vsel %vm336, %v312, 0.0
      %347 = vmatprep.subr.mxu0 0.0
      %348 = vmatpush1.msra.mxu0 %v77
      %349 = vmatprep.subr.mxu0 0.0
      %350 = vmatpush1.msra.mxu0 %v78
      %351 = vmatprep.subr.mxu0 0.0
      %352 = vmatpush1.msra.mxu0 %v79
      %353 = vmatprep.subr.mxu0 0.0
      %354 = vmatpush1.msra.mxu0 %v80
      %355 = vmatprep.subr.mxu0 0.0
      %356 = vmatpush1.msra.mxu0 %v81
      %357 = vmatprep.subr.mxu0 0.0
      %358 = vmatpush1.msra.mxu0 %v82
      %359 = vmatprep.subr.mxu0 0.0
      %360 = vmatpush1.msra.mxu0 %v83
      %361 = vmatprep.subr.mxu0 0.0
      %362 = vmatpush1.msra.mxu0 %v84
      %363 = vmatprep.subr.mxu0 0.0
      %364 = vmatpush1.msra.mxu0 %v85
      %365 = vmatprep.subr.mxu0 0.0
      %366 = vmatpush1.msra.mxu0 %v86
      %367 = vmatprep.subr.mxu0 0.0
      %368 = vmatpush1.msra.mxu0 %v87
      %369 = vmatprep.subr.mxu0 0.0
      %370 = vmatpush1.msra.mxu0 %v88
      %371 = vmatprep.subr.mxu0 0.0
      %372 = vmatpush1.msra.mxu0 %v89
      %373 = vmatprep.subr.mxu0 0.0
      %374 = vmatpush1.msra.mxu0 %v90
      %375 = vmatprep.subr.mxu0 0.0
      %376 = vmatpush1.msra.mxu0 %v91
      %377 = vmatprep.subr.mxu0 0.0
      %378 = vmatpush1.msra.mxu0 %v92
      %379 = vmatprep.subr.mxu0 0.0
      %380 = vmatpush1.msra.mxu0 0.0
      %381 = vmatprep.subr.mxu0 0.0
      %382 = vmatpush1.msra.mxu0 0.0
      %383 = vmatprep.subr.mxu0 0.0
      %384 = vmatpush1.msra.mxu0 0.0
      %385 = vmatprep.subr.mxu0 0.0
      %386 = vmatpush1.msra.mxu0 0.0
      %387 = vmatprep.subr.mxu0 0.0
      %388 = vmatpush1.msra.mxu0 0.0
      %389 = vmatprep.subr.mxu0 0.0
      %390 = vmatpush1.msra.mxu0 0.0
      %391 = vmatprep.subr.mxu0 0.0
      %392 = vmatpush1.msra.mxu0 0.0
      %393 = vmatprep.subr.mxu0 0.0
      %394 = vmatpush1.msra.mxu0 0.0
      %395 = vmatprep.subr.mxu0 0.0
      %396 = vmatpush1.msra.mxu0 0.0
      %397 = vmatprep.subr.mxu0 0.0
      %398 = vmatpush1.msra.mxu0 0.0
      %399 = vmatprep.subr.mxu0 0.0
      %400 = vmatpush1.msra.mxu0 0.0
      %401 = vmatprep.subr.mxu0 0.0
      %402 = vmatpush1.msra.mxu0 0.0
      %403 = vmatprep.subr.mxu0 0.0
      %404 = vmatpush1.msra.mxu0 0.0
      %405 = vmatprep.subr.mxu0 0.0
      %406 = vmatpush1.msra.mxu0 0.0
      %407 = vmatprep.subr.mxu0 0.0
      %408 = vmatpush1.msra.mxu0 0.0
      %409 = vmatprep.subr.mxu0 0.0
      %410 = vmatpush1.msra.mxu0 0.0
      %411 = vmatprep.mubr.f32.mxu0 0.0
      %412 = vmatmul.mubr.f32.gmra.mrb[0].mxu0 %v321
      %v413 = vpop.f32.mrb[0].mxu0
      %v414 = vadd.f32 0.0, %v413
      %v415 = vpop.f32.mrb[0].mxu0
      %416 = vmatprep.mubr.f32.mxu0 0.0
      %417 = vmatmul.mubr.f32.gmra.mrb[0].mxu0 %v322
      %v418 = vpop.f32.mrb[0].mxu0
      %v419 = vadd.f32 0.0, %v418
      %v420 = vpop.f32.mrb[0].mxu0
      %421 = vmatprep.mubr.f32.mxu0 0.0
      %422 = vmatmul.mubr.f32.gmra.mrb[0].mxu0 %v323
      %v423 = vpop.f32.mrb[0].mxu0
      %v424 = vadd.f32 0.0, %v423
      %v425 = vpop.f32.mrb[0].mxu0
      %426 = vmatprep.mubr.f32.mxu0 0.0
      %427 = vmatmul.mubr.f32.gmra.mrb[0].mxu0 %v324
      %v428 = vpop.f32.mrb[0].mxu0
      %v429 = vadd.f32 0.0, %v428
      %v430 = vpop.f32.mrb[0].mxu0
      %431 = vmatprep.mubr.f32.mxu0 0.0
      %432 = vmatmul.mubr.f32.gmra.mrb[0].mxu0 %v325
      %v433 = vpop.f32.mrb[0].mxu0
      %v434 = vadd.f32 0.0, %v433
      %v435 = vpop.f32.mrb[0].mxu0
      %436 = vmatprep.mubr.f32.mxu0 0.0
      %437 = vmatmul.mubr.f32.gmra.mrb[0].mxu0 %v326
      %v438 = vpop.f32.mrb[0].mxu0
      %v439 = vadd.f32 0.0, %v438
      %v440 = vpop.f32.mrb[0].mxu0
      %441 = vmatprep.mubr.f32.mxu0 0.0
      %442 = vmatmul.mubr.f32.gmra.mrb[0].mxu0 %v327
      %v443 = vpop.f32.mrb[0].mxu0
      %v444 = vadd.f32 0.0, %v443
      %v445 = vpop.f32.mrb[0].mxu0
      %446 = vmatprep.mubr.f32.mxu0 0.0
      %447 = vmatmul.mubr.f32.gmra.mrb[0].mxu0 %v328
      %v448 = vpop.f32.mrb[0].mxu0
      %v449 = vadd.f32 0.0, %v448
      %v450 = vpop.f32.mrb[0].mxu0
      %451 = vmatprep.mubr.f32.mxu0 0.0
      %452 = vmatmul.mubr.f32.gmra.mrb[0].mxu0 %v329
      %v453 = vpop.f32.mrb[0].mxu0
      %v454 = vadd.f32 0.0, %v453
      %v455 = vpop.f32.mrb[0].mxu0
      %456 = vmatprep.mubr.f32.mxu0 0.0
      %457 = vmatmul.mubr.f32.gmra.mrb[0].mxu0 %v330
      %v458 = vpop.f32.mrb[0].mxu0
      %v459 = vadd.f32 0.0, %v458
      %v460 = vpop.f32.mrb[0].mxu0
      %461 = vmatprep.mubr.f32.mxu0 0.0
      %462 = vmatmul.mubr.f32.gmra.mrb[0].mxu0 %v337
      %v463 = vpop.f32.mrb[0].mxu0
      %v464 = vadd.f32 0.0, %v463
      %v465 = vpop.f32.mrb[0].mxu0
      %466 = vmatprep.mubr.f32.mxu0 0.0
      %467 = vmatmul.mubr.f32.gmra.mrb[0].mxu0 %v338
      %v468 = vpop.f32.mrb[0].mxu0
      %v469 = vadd.f32 0.0, %v468
      %v470 = vpop.f32.mrb[0].mxu0
      %471 = vmatprep.mubr.f32.mxu0 0.0
      %472 = vmatmul.mubr.f32.gmra.mrb[0].mxu0 %v339
      %v473 = vpop.f32.mrb[0].mxu0
      %v474 = vadd.f32 0.0, %v473
      %v475 = vpop.f32.mrb[0].mxu0
      %476 = vmatprep.mubr.f32.mxu0 0.0
      %477 = vmatmul.mubr.f32.gmra.mrb[0].mxu0 %v340
      %v478 = vpop.f32.mrb[0].mxu0
      %v479 = vadd.f32 0.0, %v478
      %v480 = vpop.f32.mrb[0].mxu0
      %481 = vmatprep.mubr.f32.mxu0 0.0
      %482 = vmatmul.mubr.f32.gmra.mrb[0].mxu0 %v341
      %v483 = vpop.f32.mrb[0].mxu0
      %v484 = vadd.f32 0.0, %v483
      %v485 = vpop.f32.mrb[0].mxu0
      %486 = vmatprep.mubr.f32.mxu0 0.0
      %487 = vmatmul.mubr.f32.gmra.mrb[0].mxu0 %v342
      %v488 = vpop.f32.mrb[0].mxu0
      %v489 = vadd.f32 0.0, %v488
      %v490 = vpop.f32.mrb[0].mxu0
      %491 = vmatprep.mubr.f32.mxu0 0.0
      %492 = vmatmul.mubr.f32.gmra.mrb[0].mxu0 %v343
      %v493 = vpop.f32.mrb[0].mxu0
      %v494 = vadd.f32 0.0, %v493
      %v495 = vpop.f32.mrb[0].mxu0
      %496 = vmatprep.mubr.f32.mxu0 0.0
      %497 = vmatmul.mubr.f32.gmra.mrb[0].mxu0 %v344
      %v498 = vpop.f32.mrb[0].mxu0
      %v499 = vadd.f32 0.0, %v498
      %v500 = vpop.f32.mrb[0].mxu0
      %501 = vmatprep.mubr.f32.mxu0 0.0
      %502 = vmatmul.mubr.f32.gmra.mrb[0].mxu0 %v345
      %v503 = vpop.f32.mrb[0].mxu0
      %v504 = vadd.f32 0.0, %v503
      %v505 = vpop.f32.mrb[0].mxu0
      %506 = vmatprep.mubr.f32.mxu0 0.0
      %507 = vmatmul.mubr.f32.gmra.mrb[0].mxu0 %v346
      %v508 = vpop.f32.mrb[0].mxu0
      %v509 = vadd.f32 0.0, %v508
      %v510 = vpop.f32.mrb[0].mxu0
      %511 = vdwg.mxu0
      %v514 = vrot.slane %v464, 1
      %v515 = vrot.slane %v489, 1
      %v518 = vmul.f32 %v414, %v514
      %v519 = vmul.f32 %v439, %v515
      %v520 = vrot.slane %v464, 7
      %v521 = vrot.slane %v489, 7
      %v524 = vmul.f32 %v414, %v520
      %v525 = vmul.f32 %v439, %v521
      %v528 = vrot.slane %v524, 1
      %v529 = vrot.slane %v525, 1
      %v532 = vsub.f32 %v518, %v528
      %v533 = vsub.f32 %v519, %v529
      %v534 = vrcp.pop %v532
      %v535 = vrcp.pop %v533
      %v536 = vmul.f32 %v532, %v534
      %v537 = vmul.f32 %v533, %v535
      %v538 = vsub.f32 2.0, %v536
      %v539 = vsub.f32 2.0, %v537
      %v540 = vmul.f32 %v534, %v538
      %v541 = vmul.f32 %v535, %v539
      %v542 = vlaneseq
      %v543 = vshrl.u32 %v542, 7
      %v544 = vsub.s32 1, %v543
      %v545 = vrot.slane %v464, %v544
      %v546 = vlaneseq
      %v547 = vshrl.u32 %v546, 7
      %v548 = vsub.s32 1, %v547
      %v549 = vrot.slane %v489, %v548
      %v550 = vmul.f32 %v545, %v414
      %v551 = vmul.f32 %v545, %v419
      %v552 = vmul.f32 %v545, %v424
      %v553 = vmul.f32 %v545, %v429
      %v554 = vmul.f32 %v545, %v434
      %v555 = vmul.f32 %v549, %v439
      %v556 = vmul.f32 %v549, %v444
      %v557 = vmul.f32 %v549, %v449
      %v558 = vmul.f32 %v549, %v454
      %v559 = vmul.f32 %v549, %v459
      %v560 = vlaneseq
      %v561 = vshrl.u32 %v560, 7
      %v562 = vsub.s32 1, %v561
      %v563 = vrot.slane %v414, %v562
      %v564 = vlaneseq
      %v565 = vshrl.u32 %v564, 7
      %v566 = vsub.s32 1, %v565
      %v567 = vrot.slane %v439, %v566
      %v568 = vmul.f32 %v563, %v464
      %v569 = vmul.f32 %v563, %v469
      %v570 = vmul.f32 %v563, %v474
      %v571 = vmul.f32 %v563, %v479
      %v572 = vmul.f32 %v563, %v484
      %v573 = vmul.f32 %v567, %v489
      %v574 = vmul.f32 %v567, %v494
      %v575 = vmul.f32 %v567, %v499
      %v576 = vmul.f32 %v567, %v504
      %v577 = vmul.f32 %v567, %v509
      %v578 = vsub.f32 %v550, %v568
      %v579 = vsub.f32 %v551, %v569
      %v580 = vsub.f32 %v552, %v570
      %v581 = vsub.f32 %v553, %v571
      %v582 = vsub.f32 %v554, %v572
      %v583 = vsub.f32 %v555, %v573
      %v584 = vsub.f32 %v556, %v574
      %v585 = vsub.f32 %v557, %v575
      %v586 = vsub.f32 %v558, %v576
      %v587 = vsub.f32 %v559, %v577
      %v588 = vlaneseq
      %v589 = vshrl.u32 %v588, 7
      %v590 = vsub.s32 0, %v589
      %v591 = vrot.slane %v540, %v590
      %v592 = vlaneseq
      %v593 = vshrl.u32 %v592, 7
      %v594 = vsub.s32 0, %v593
      %v595 = vrot.slane %v541, %v594
      %v596 = vmul.f32 %v578, %v591
      %v597 = vmul.f32 %v579, %v591
      %v598 = vmul.f32 %v580, %v591
      %v599 = vmul.f32 %v581, %v591
      %v600 = vmul.f32 %v582, %v591
      %v601 = vmul.f32 %v583, %v595
      %v602 = vmul.f32 %v584, %v595
      %v603 = vmul.f32 %v585, %v595
      %v604 = vmul.f32 %v586, %v595
      %v605 = vmul.f32 %v587, %v595
      %v606 = vlaneseq
      %v607 = vshrl.u32 %v606, 7
      %v608 = vsub.s32 0, %v607
      %v609 = vrot.slane %v414, %v608
      %v610 = vlaneseq
      %v611 = vshrl.u32 %v610, 7
      %v612 = vsub.s32 0, %v611
      %v613 = vrot.slane %v439, %v612
      %v614 = vmul.f32 %v609, %v464
      %v615 = vmul.f32 %v609, %v469
      %v616 = vmul.f32 %v609, %v474
      %v617 = vmul.f32 %v609, %v479
      %v618 = vmul.f32 %v609, %v484
      %v619 = vmul.f32 %v613, %v489
      %v620 = vmul.f32 %v613, %v494
      %v621 = vmul.f32 %v613, %v499
      %v622 = vmul.f32 %v613, %v504
      %v623 = vmul.f32 %v613, %v509
      %v624 = vlaneseq
      %v625 = vshrl.u32 %v624, 7
      %v626 = vsub.s32 0, %v625
      %v627 = vrot.slane %v464, %v626
      %v628 = vlaneseq
      %v629 = vshrl.u32 %v628, 7
      %v630 = vsub.s32 0, %v629
      %v631 = vrot.slane %v489, %v630
      %v632 = vmul.f32 %v627, %v414
      %v633 = vmul.f32 %v627, %v419
      %v634 = vmul.f32 %v627, %v424
      %v635 = vmul.f32 %v627, %v429
      %v636 = vmul.f32 %v627, %v434
      %v637 = vmul.f32 %v631, %v439
      %v638 = vmul.f32 %v631, %v444
      %v639 = vmul.f32 %v631, %v449
      %v640 = vmul.f32 %v631, %v454
      %v641 = vmul.f32 %v631, %v459
      %v642 = vsub.f32 %v614, %v632
      %v643 = vsub.f32 %v615, %v633
      %v644 = vsub.f32 %v616, %v634
      %v645 = vsub.f32 %v617, %v635
      %v646 = vsub.f32 %v618, %v636
      %v647 = vsub.f32 %v619, %v637
      %v648 = vsub.f32 %v620, %v638
      %v649 = vsub.f32 %v621, %v639
      %v650 = vsub.f32 %v622, %v640
      %v651 = vsub.f32 %v623, %v641
      %v652 = vmul.f32 %v642, %v591
      %v653 = vmul.f32 %v643, %v591
      %v654 = vmul.f32 %v644, %v591
      %v655 = vmul.f32 %v645, %v591
      %v656 = vmul.f32 %v646, %v591
      %v657 = vmul.f32 %v647, %v595
      %v658 = vmul.f32 %v648, %v595
      %v659 = vmul.f32 %v649, %v595
      %v660 = vmul.f32 %v650, %v595
      %v661 = vmul.f32 %v651, %v595
      %v662 = vlaneseq
      %v663 = vshrl.u32 %v662, 7
      %v664 = vsub.s32 0, %v663
      %v665 = vrot.slane %v295, %v664
      %v666 = vlaneseq
      %v667 = vshrl.u32 %v666, 7
      %v668 = vsub.s32 0, %v667
      %v669 = vrot.slane %v299, %v668
      %v670 = vmul.f32 %v665, %v596
      %v671 = vmul.f32 %v665, %v597
      %v672 = vmul.f32 %v665, %v598
      %v673 = vmul.f32 %v665, %v599
      %v674 = vmul.f32 %v665, %v600
      %v675 = vmul.f32 %v669, %v601
      %v676 = vmul.f32 %v669, %v602
      %v677 = vmul.f32 %v669, %v603
      %v678 = vmul.f32 %v669, %v604
      %v679 = vmul.f32 %v669, %v605
      %v680 = vsub.f32 %v295, %v670
      %v681 = vsub.f32 %v296, %v671
      %v682 = vsub.f32 %v297, %v672
      %v683 = vsub.f32 %v298, %v673
      %v684 = vsub.f32 %v311, %v674
      %v685 = vsub.f32 %v299, %v675
      %v686 = vsub.f32 %v300, %v676
      %v687 = vsub.f32 %v301, %v677
      %v688 = vsub.f32 %v302, %v678
      %v689 = vsub.f32 %v312, %v679
      %v690 = vlaneseq
      %v691 = vshrl.u32 %v690, 7
      %v692 = vsub.s32 1, %v691
      %v693 = vrot.slane %v295, %v692
      %v694 = vlaneseq
      %v695 = vshrl.u32 %v694, 7
      %v696 = vsub.s32 1, %v695
      %v697 = vrot.slane %v299, %v696
      %v698 = vmul.f32 %v693, %v652
      %v699 = vmul.f32 %v693, %v653
      %v700 = vmul.f32 %v693, %v654
      %v701 = vmul.f32 %v693, %v655
      %v702 = vmul.f32 %v693, %v656
      %v703 = vmul.f32 %v697, %v657
      %v704 = vmul.f32 %v697, %v658
      %v705 = vmul.f32 %v697, %v659
      %v706 = vmul.f32 %v697, %v660
      %v707 = vmul.f32 %v697, %v661
      %v708 = vsub.f32 %v680, %v698
      %v709 = vsub.f32 %v681, %v699
      %v710 = vsub.f32 %v682, %v700
      %v711 = vsub.f32 %v683, %v701
      %v712 = vsub.f32 %v684, %v702
      %v713 = vsub.f32 %v685, %v703
      %v714 = vsub.f32 %v686, %v704
      %v715 = vsub.f32 %v687, %v705
      %v716 = vsub.f32 %v688, %v706
      %v717 = vsub.f32 %v689, %v707
      %v718 = vsel %vm320, %v596, %v708
      %v719 = vsel %vm320, %v597, %v709
      %v720 = vsel %vm320, %v598, %v710
      %v721 = vsel %vm320, %v599, %v711
      %v722 = vsel %vm320, %v600, %v712
      %v723 = vsel %vm320, %v601, %v713
      %v724 = vsel %vm320, %v602, %v714
      %v725 = vsel %vm320, %v603, %v715
      %v726 = vsel %vm320, %v604, %v716
      %v727 = vsel %vm320, %v605, %v717
      %v728 = vsel %vm336, %v652, %v718
      %v729 = vsel %vm336, %v653, %v719
      %v730 = vsel %vm336, %v654, %v720
      %v731 = vsel %vm336, %v655, %v721
      %v732 = vsel %vm336, %v656, %v722
      %v733 = vsel %vm336, %v657, %v723
      %v734 = vsel %vm336, %v658, %v724
      %v735 = vsel %vm336, %v659, %v725
      %v736 = vsel %vm336, %v660, %v726
      %v737 = vsel %vm336, %v661, %v727
      %vm738 = vcmp.eq.s32.totalorder %v93, 2
      %vm739 = vcmp.eq.s32.totalorder %v93, 3
      %v740 = vsel %vm738, 1, 0
      %v741 = vlaneseq
      %v742 = vshrl.u32 %v741, 7
      %v743 = vsub.s32 0, %v742
      %v744 = vrot.slane %v740, %v743
      %vm745 = vcmp.eq.s32.totalorder %v744, 1
      %v746 = vsel %vm745, %v728, 0.0
      %v747 = vsel %vm745, %v729, 0.0
      %v748 = vsel %vm745, %v730, 0.0
      %v749 = vsel %vm745, %v731, 0.0
      %v750 = vsel %vm745, %v732, 0.0
      %v751 = vsel %vm745, %v733, 0.0
      %v752 = vsel %vm745, %v734, 0.0
      %v753 = vsel %vm745, %v735, 0.0
      %v754 = vsel %vm745, %v736, 0.0
      %v755 = vsel %vm745, %v737, 0.0
      %v756 = vsel %vm739, 1, 0
      %v757 = vlaneseq
      %v758 = vshrl.u32 %v757, 7
      %v759 = vsub.s32 0, %v758
      %v760 = vrot.slane %v756, %v759
      %vm761 = vcmp.eq.s32.totalorder %v760, 1
      %v762 = vsel %vm761, %v728, 0.0
      %v763 = vsel %vm761, %v729, 0.0
      %v764 = vsel %vm761, %v730, 0.0
      %v765 = vsel %vm761, %v731, 0.0
      %v766 = vsel %vm761, %v732, 0.0
      %v767 = vsel %vm761, %v733, 0.0
      %v768 = vsel %vm761, %v734, 0.0
      %v769 = vsel %vm761, %v735, 0.0
      %v770 = vsel %vm761, %v736, 0.0
      %v771 = vsel %vm761, %v737, 0.0
      %772 = vmatprep.subr.mxu0 0.0
      %773 = vmatpush1.msra.mxu0 %v77
      %774 = vmatprep.subr.mxu0 0.0
      %775 = vmatpush1.msra.mxu0 %v78
      %776 = vmatprep.subr.mxu0 0.0
      %777 = vmatpush1.msra.mxu0 %v79
      %778 = vmatprep.subr.mxu0 0.0
      %779 = vmatpush1.msra.mxu0 %v80
      %780 = vmatprep.subr.mxu0 0.0
      %781 = vmatpush1.msra.mxu0 %v81
      %782 = vmatprep.subr.mxu0 0.0
      %783 = vmatpush1.msra.mxu0 %v82
      %784 = vmatprep.subr.mxu0 0.0
      %785 = vmatpush1.msra.mxu0 %v83
      %786 = vmatprep.subr.mxu0 0.0
      %787 = vmatpush1.msra.mxu0 %v84
      %788 = vmatprep.subr.mxu0 0.0
      %789 = vmatpush1.msra.mxu0 %v85
      %790 = vmatprep.subr.mxu0 0.0
      %791 = vmatpush1.msra.mxu0 %v86
      %792 = vmatprep.subr.mxu0 0.0
      %793 = vmatpush1.msra.mxu0 %v87
      %794 = vmatprep.subr.mxu0 0.0
      %795 = vmatpush1.msra.mxu0 %v88
      %796 = vmatprep.subr.mxu0 0.0
      %797 = vmatpush1.msra.mxu0 %v89
      %798 = vmatprep.subr.mxu0 0.0
      %799 = vmatpush1.msra.mxu0 %v90
      %800 = vmatprep.subr.mxu0 0.0
      %801 = vmatpush1.msra.mxu0 %v91
      %802 = vmatprep.subr.mxu0 0.0
      %803 = vmatpush1.msra.mxu0 %v92
      %804 = vmatprep.subr.mxu0 0.0
      %805 = vmatpush1.msra.mxu0 0.0
      %806 = vmatprep.subr.mxu0 0.0
      %807 = vmatpush1.msra.mxu0 0.0
      %808 = vmatprep.subr.mxu0 0.0
      %809 = vmatpush1.msra.mxu0 0.0
      %810 = vmatprep.subr.mxu0 0.0
      %811 = vmatpush1.msra.mxu0 0.0
      %812 = vmatprep.subr.mxu0 0.0
      %813 = vmatpush1.msra.mxu0 0.0
      %814 = vmatprep.subr.mxu0 0.0
      %815 = vmatpush1.msra.mxu0 0.0
      %816 = vmatprep.subr.mxu0 0.0
      %817 = vmatpush1.msra.mxu0 0.0
      %818 = vmatprep.subr.mxu0 0.0
      %819 = vmatpush1.msra.mxu0 0.0
      %820 = vmatprep.subr.mxu0 0.0
      %821 = vmatpush1.msra.mxu0 0.0
      %822 = vmatprep.subr.mxu0 0.0
      %823 = vmatpush1.msra.mxu0 0.0
      %824 = vmatprep.subr.mxu0 0.0
      %825 = vmatpush1.msra.mxu0 0.0
      %826 = vmatprep.subr.mxu0 0.0
      %827 = vmatpush1.msra.mxu0 0.0
      %828 = vmatprep.subr.mxu0 0.0
      %829 = vmatpush1.msra.mxu0 0.0
      %830 = vmatprep.subr.mxu0 0.0
      %831 = vmatpush1.msra.mxu0 0.0
      %832 = vmatprep.subr.mxu0 0.0
      %833 = vmatpush1.msra.mxu0 0.0
      %834 = vmatprep.subr.mxu0 0.0
      %835 = vmatpush1.msra.mxu0 0.0
      %836 = vmatprep.mubr.f32.mxu0 0.0
      %837 = vmatmul.mubr.f32.gmra.mrb[0].mxu0 %v746
      %v838 = vpop.f32.mrb[0].mxu0
      %v839 = vadd.f32 0.0, %v838
      %v840 = vpop.f32.mrb[0].mxu0
      %841 = vmatprep.mubr.f32.mxu0 0.0
      %842 = vmatmul.mubr.f32.gmra.mrb[0].mxu0 %v747
      %v843 = vpop.f32.mrb[0].mxu0
      %v844 = vadd.f32 0.0, %v843
      %v845 = vpop.f32.mrb[0].mxu0
      %846 = vmatprep.mubr.f32.mxu0 0.0
      %847 = vmatmul.mubr.f32.gmra.mrb[0].mxu0 %v748
      %v848 = vpop.f32.mrb[0].mxu0
      %v849 = vadd.f32 0.0, %v848
      %v850 = vpop.f32.mrb[0].mxu0
      %851 = vmatprep.mubr.f32.mxu0 0.0
      %852 = vmatmul.mubr.f32.gmra.mrb[0].mxu0 %v749
      %v853 = vpop.f32.mrb[0].mxu0
      %v854 = vadd.f32 0.0, %v853
      %v855 = vpop.f32.mrb[0].mxu0
      %856 = vmatprep.mubr.f32.mxu0 0.0
      %857 = vmatmul.mubr.f32.gmra.mrb[0].mxu0 %v750
      %v858 = vpop.f32.mrb[0].mxu0
      %v859 = vadd.f32 0.0, %v858
      %v860 = vpop.f32.mrb[0].mxu0
      %861 = vmatprep.mubr.f32.mxu0 0.0
      %862 = vmatmul.mubr.f32.gmra.mrb[0].mxu0 %v751
      %v863 = vpop.f32.mrb[0].mxu0
      %v864 = vadd.f32 0.0, %v863
      %v865 = vpop.f32.mrb[0].mxu0
      %866 = vmatprep.mubr.f32.mxu0 0.0
      %867 = vmatmul.mubr.f32.gmra.mrb[0].mxu0 %v752
      %v868 = vpop.f32.mrb[0].mxu0
      %v869 = vadd.f32 0.0, %v868
      %v870 = vpop.f32.mrb[0].mxu0
      %871 = vmatprep.mubr.f32.mxu0 0.0
      %872 = vmatmul.mubr.f32.gmra.mrb[0].mxu0 %v753
      %v873 = vpop.f32.mrb[0].mxu0
      %v874 = vadd.f32 0.0, %v873
      %v875 = vpop.f32.mrb[0].mxu0
      %876 = vmatprep.mubr.f32.mxu0 0.0
      %877 = vmatmul.mubr.f32.gmra.mrb[0].mxu0 %v754
      %v878 = vpop.f32.mrb[0].mxu0
      %v879 = vadd.f32 0.0, %v878
      %v880 = vpop.f32.mrb[0].mxu0
      %881 = vmatprep.mubr.f32.mxu0 0.0
      %882 = vmatmul.mubr.f32.gmra.mrb[0].mxu0 %v755
      %v883 = vpop.f32.mrb[0].mxu0
      %v884 = vadd.f32 0.0, %v883
      %v885 = vpop.f32.mrb[0].mxu0
      %886 = vmatprep.mubr.f32.mxu0 0.0
      %887 = vmatmul.mubr.f32.gmra.mrb[0].mxu0 %v762
      %v888 = vpop.f32.mrb[0].mxu0
      %v889 = vadd.f32 0.0, %v888
      %v890 = vpop.f32.mrb[0].mxu0
      %891 = vmatprep.mubr.f32.mxu0 0.0
      %892 = vmatmul.mubr.f32.gmra.mrb[0].mxu0 %v763
      %v893 = vpop.f32.mrb[0].mxu0
      %v894 = vadd.f32 0.0, %v893
      %v895 = vpop.f32.mrb[0].mxu0
      %896 = vmatprep.mubr.f32.mxu0 0.0
      %897 = vmatmul.mubr.f32.gmra.mrb[0].mxu0 %v764
      %v898 = vpop.f32.mrb[0].mxu0
      %v899 = vadd.f32 0.0, %v898
      %v900 = vpop.f32.mrb[0].mxu0
      %901 = vmatprep.mubr.f32.mxu0 0.0
      %902 = vmatmul.mubr.f32.gmra.mrb[0].mxu0 %v765
      %v903 = vpop.f32.mrb[0].mxu0
      %v904 = vadd.f32 0.0, %v903
      %v905 = vpop.f32.mrb[0].mxu0
      %906 = vmatprep.mubr.f32.mxu0 0.0
      %907 = vmatmul.mubr.f32.gmra.mrb[0].mxu0 %v766
      %v908 = vpop.f32.mrb[0].mxu0
      %v909 = vadd.f32 0.0, %v908
      %v910 = vpop.f32.mrb[0].mxu0
      %911 = vmatprep.mubr.f32.mxu0 0.0
      %912 = vmatmul.mubr.f32.gmra.mrb[0].mxu0 %v767
      %v913 = vpop.f32.mrb[0].mxu0
      %v914 = vadd.f32 0.0, %v913
      %v915 = vpop.f32.mrb[0].mxu0
      %916 = vmatprep.mubr.f32.mxu0 0.0
      %917 = vmatmul.mubr.f32.gmra.mrb[0].mxu0 %v768
      %v918 = vpop.f32.mrb[0].mxu0
      %v919 = vadd.f32 0.0, %v918
      %v920 = vpop.f32.mrb[0].mxu0
      %921 = vmatprep.mubr.f32.mxu0 0.0
      %922 = vmatmul.mubr.f32.gmra.mrb[0].mxu0 %v769
      %v923 = vpop.f32.mrb[0].mxu0
      %v924 = vadd.f32 0.0, %v923
      %v925 = vpop.f32.mrb[0].mxu0
      %926 = vmatprep.mubr.f32.mxu0 0.0
      %927 = vmatmul.mubr.f32.gmra.mrb[0].mxu0 %v770
      %v928 = vpop.f32.mrb[0].mxu0
      %v929 = vadd.f32 0.0, %v928
      %v930 = vpop.f32.mrb[0].mxu0
      %931 = vmatprep.mubr.f32.mxu0 0.0
      %932 = vmatmul.mubr.f32.gmra.mrb[0].mxu0 %v771
      %v933 = vpop.f32.mrb[0].mxu0
      %v934 = vadd.f32 0.0, %v933
      %v935 = vpop.f32.mrb[0].mxu0
      %936 = vdwg.mxu0
      %v939 = vrot.slane %v889, 1
      %v940 = vrot.slane %v914, 1
      %v943 = vmul.f32 %v839, %v939
      %v944 = vmul.f32 %v864, %v940
      %v945 = vrot.slane %v889, 7
      %v946 = vrot.slane %v914, 7
      %v949 = vmul.f32 %v839, %v945
      %v950 = vmul.f32 %v864, %v946
      %v953 = vrot.slane %v949, 1
      %v954 = vrot.slane %v950, 1
      %v957 = vsub.f32 %v943, %v953
      %v958 = vsub.f32 %v944, %v954
      %v959 = vrcp.pop %v957
      %v960 = vrcp.pop %v958
      %v961 = vmul.f32 %v957, %v959
      %v962 = vmul.f32 %v958, %v960
      %v963 = vsub.f32 2.0, %v961
      %v964 = vsub.f32 2.0, %v962
      %v965 = vmul.f32 %v959, %v963
      %v966 = vmul.f32 %v960, %v964
      %v967 = vlaneseq
      %v968 = vshrl.u32 %v967, 7
      %v969 = vsub.s32 3, %v968
      %v970 = vrot.slane %v889, %v969
      %v971 = vlaneseq
      %v972 = vshrl.u32 %v971, 7
      %v973 = vsub.s32 3, %v972
      %v974 = vrot.slane %v914, %v973
      %v975 = vmul.f32 %v970, %v839
      %v976 = vmul.f32 %v970, %v844
      %v977 = vmul.f32 %v970, %v849
      %v978 = vmul.f32 %v970, %v854
      %v979 = vmul.f32 %v970, %v859
      %v980 = vmul.f32 %v974, %v864
      %v981 = vmul.f32 %v974, %v869
      %v982 = vmul.f32 %v974, %v874
      %v983 = vmul.f32 %v974, %v879
      %v984 = vmul.f32 %v974, %v884
      %v985 = vlaneseq
      %v986 = vshrl.u32 %v985, 7
      %v987 = vsub.s32 3, %v986
      %v988 = vrot.slane %v839, %v987
      %v989 = vlaneseq
      %v990 = vshrl.u32 %v989, 7
      %v991 = vsub.s32 3, %v990
      %v992 = vrot.slane %v864, %v991
      %v993 = vmul.f32 %v988, %v889
      %v994 = vmul.f32 %v988, %v894
      %v995 = vmul.f32 %v988, %v899
      %v996 = vmul.f32 %v988, %v904
      %v997 = vmul.f32 %v988, %v909
      %v998 = vmul.f32 %v992, %v914
      %v999 = vmul.f32 %v992, %v919
      %v1000 = vmul.f32 %v992, %v924
      %v1001 = vmul.f32 %v992, %v929
      %v1002 = vmul.f32 %v992, %v934
      %v1003 = vsub.f32 %v975, %v993
      %v1004 = vsub.f32 %v976, %v994
      %v1005 = vsub.f32 %v977, %v995
      %v1006 = vsub.f32 %v978, %v996
      %v1007 = vsub.f32 %v979, %v997
      %v1008 = vsub.f32 %v980, %v998
      %v1009 = vsub.f32 %v981, %v999
      %v1010 = vsub.f32 %v982, %v1000
      %v1011 = vsub.f32 %v983, %v1001
      %v1012 = vsub.f32 %v984, %v1002
      %v1013 = vlaneseq
      %v1014 = vshrl.u32 %v1013, 7
      %v1015 = vsub.s32 2, %v1014
      %v1016 = vrot.slane %v965, %v1015
      %v1017 = vlaneseq
      %v1018 = vshrl.u32 %v1017, 7
      %v1019 = vsub.s32 2, %v1018
      %v1020 = vrot.slane %v966, %v1019
      %v1021 = vmul.f32 %v1003, %v1016
      %v1022 = vmul.f32 %v1004, %v1016
      %v1023 = vmul.f32 %v1005, %v1016
      %v1024 = vmul.f32 %v1006, %v1016
      %v1025 = vmul.f32 %v1007, %v1016
      %v1026 = vmul.f32 %v1008, %v1020
      %v1027 = vmul.f32 %v1009, %v1020
      %v1028 = vmul.f32 %v1010, %v1020
      %v1029 = vmul.f32 %v1011, %v1020
      %v1030 = vmul.f32 %v1012, %v1020
      %v1031 = vlaneseq
      %v1032 = vshrl.u32 %v1031, 7
      %v1033 = vsub.s32 2, %v1032
      %v1034 = vrot.slane %v839, %v1033
      %v1035 = vlaneseq
      %v1036 = vshrl.u32 %v1035, 7
      %v1037 = vsub.s32 2, %v1036
      %v1038 = vrot.slane %v864, %v1037
      %v1039 = vmul.f32 %v1034, %v889
      %v1040 = vmul.f32 %v1034, %v894
      %v1041 = vmul.f32 %v1034, %v899
      %v1042 = vmul.f32 %v1034, %v904
      %v1043 = vmul.f32 %v1034, %v909
      %v1044 = vmul.f32 %v1038, %v914
      %v1045 = vmul.f32 %v1038, %v919
      %v1046 = vmul.f32 %v1038, %v924
      %v1047 = vmul.f32 %v1038, %v929
      %v1048 = vmul.f32 %v1038, %v934
      %v1049 = vlaneseq
      %v1050 = vshrl.u32 %v1049, 7
      %v1051 = vsub.s32 2, %v1050
      %v1052 = vrot.slane %v889, %v1051
      %v1053 = vlaneseq
      %v1054 = vshrl.u32 %v1053, 7
      %v1055 = vsub.s32 2, %v1054
      %v1056 = vrot.slane %v914, %v1055
      %v1057 = vmul.f32 %v1052, %v839
      %v1058 = vmul.f32 %v1052, %v844
      %v1059 = vmul.f32 %v1052, %v849
      %v1060 = vmul.f32 %v1052, %v854
      %v1061 = vmul.f32 %v1052, %v859
      %v1062 = vmul.f32 %v1056, %v864
      %v1063 = vmul.f32 %v1056, %v869
      %v1064 = vmul.f32 %v1056, %v874
      %v1065 = vmul.f32 %v1056, %v879
      %v1066 = vmul.f32 %v1056, %v884
      %v1067 = vsub.f32 %v1039, %v1057
      %v1068 = vsub.f32 %v1040, %v1058
      %v1069 = vsub.f32 %v1041, %v1059
      %v1070 = vsub.f32 %v1042, %v1060
      %v1071 = vsub.f32 %v1043, %v1061
      %v1072 = vsub.f32 %v1044, %v1062
      %v1073 = vsub.f32 %v1045, %v1063
      %v1074 = vsub.f32 %v1046, %v1064
      %v1075 = vsub.f32 %v1047, %v1065
      %v1076 = vsub.f32 %v1048, %v1066
      %v1077 = vmul.f32 %v1067, %v1016
      %v1078 = vmul.f32 %v1068, %v1016
      %v1079 = vmul.f32 %v1069, %v1016
      %v1080 = vmul.f32 %v1070, %v1016
      %v1081 = vmul.f32 %v1071, %v1016
      %v1082 = vmul.f32 %v1072, %v1020
      %v1083 = vmul.f32 %v1073, %v1020
      %v1084 = vmul.f32 %v1074, %v1020
      %v1085 = vmul.f32 %v1075, %v1020
      %v1086 = vmul.f32 %v1076, %v1020
      %v1087 = vlaneseq
      %v1088 = vshrl.u32 %v1087, 7
      %v1089 = vsub.s32 2, %v1088
      %v1090 = vrot.slane %v728, %v1089
      %v1091 = vlaneseq
      %v1092 = vshrl.u32 %v1091, 7
      %v1093 = vsub.s32 2, %v1092
      %v1094 = vrot.slane %v733, %v1093
      %v1095 = vmul.f32 %v1090, %v1021
      %v1096 = vmul.f32 %v1090, %v1022
      %v1097 = vmul.f32 %v1090, %v1023
      %v1098 = vmul.f32 %v1090, %v1024
      %v1099 = vmul.f32 %v1090, %v1025
      %v1100 = vmul.f32 %v1094, %v1026
      %v1101 = vmul.f32 %v1094, %v1027
      %v1102 = vmul.f32 %v1094, %v1028
      %v1103 = vmul.f32 %v1094, %v1029
      %v1104 = vmul.f32 %v1094, %v1030
      %v1105 = vsub.f32 %v728, %v1095
      %v1106 = vsub.f32 %v729, %v1096
      %v1107 = vsub.f32 %v730, %v1097
      %v1108 = vsub.f32 %v731, %v1098
      %v1109 = vsub.f32 %v732, %v1099
      %v1110 = vsub.f32 %v733, %v1100
      %v1111 = vsub.f32 %v734, %v1101
      %v1112 = vsub.f32 %v735, %v1102
      %v1113 = vsub.f32 %v736, %v1103
      %v1114 = vsub.f32 %v737, %v1104
      %v1115 = vlaneseq
      %v1116 = vshrl.u32 %v1115, 7
      %v1117 = vsub.s32 3, %v1116
      %v1118 = vrot.slane %v728, %v1117
      %v1119 = vlaneseq
      %v1120 = vshrl.u32 %v1119, 7
      %v1121 = vsub.s32 3, %v1120
      %v1122 = vrot.slane %v733, %v1121
      %v1123 = vmul.f32 %v1118, %v1077
      %v1124 = vmul.f32 %v1118, %v1078
      %v1125 = vmul.f32 %v1118, %v1079
      %v1126 = vmul.f32 %v1118, %v1080
      %v1127 = vmul.f32 %v1118, %v1081
      %v1128 = vmul.f32 %v1122, %v1082
      %v1129 = vmul.f32 %v1122, %v1083
      %v1130 = vmul.f32 %v1122, %v1084
      %v1131 = vmul.f32 %v1122, %v1085
      %v1132 = vmul.f32 %v1122, %v1086
      %v1133 = vsub.f32 %v1105, %v1123
      %v1134 = vsub.f32 %v1106, %v1124
      %v1135 = vsub.f32 %v1107, %v1125
      %v1136 = vsub.f32 %v1108, %v1126
      %v1137 = vsub.f32 %v1109, %v1127
      %v1138 = vsub.f32 %v1110, %v1128
      %v1139 = vsub.f32 %v1111, %v1129
      %v1140 = vsub.f32 %v1112, %v1130
      %v1141 = vsub.f32 %v1113, %v1131
      %v1142 = vsub.f32 %v1114, %v1132
      %v1143 = vsel %vm745, %v1021, %v1133
      %v1144 = vsel %vm745, %v1022, %v1134
      %v1145 = vsel %vm745, %v1023, %v1135
      %v1146 = vsel %vm745, %v1024, %v1136
      %v1147 = vsel %vm745, %v1025, %v1137
      %v1148 = vsel %vm745, %v1026, %v1138
      %v1149 = vsel %vm745, %v1027, %v1139
      %v1150 = vsel %vm745, %v1028, %v1140
      %v1151 = vsel %vm745, %v1029, %v1141
      %v1152 = vsel %vm745, %v1030, %v1142
      %v1153 = vsel %vm761, %v1077, %v1143
      %v1154 = vsel %vm761, %v1078, %v1144
      %v1155 = vsel %vm761, %v1079, %v1145
      %v1156 = vsel %vm761, %v1080, %v1146
      %v1157 = vsel %vm761, %v1081, %v1147
      %v1158 = vsel %vm761, %v1082, %v1148
      %v1159 = vsel %vm761, %v1083, %v1149
      %v1160 = vsel %vm761, %v1084, %v1150
      %v1161 = vsel %vm761, %v1085, %v1151
      %v1162 = vsel %vm761, %v1086, %v1152
      %vm1163 = vcmp.eq.s32.totalorder %v93, 4
      %vm1164 = vcmp.eq.s32.totalorder %v93, 5
      %v1165 = vsel %vm1163, 1, 0
      %v1166 = vlaneseq
      %v1167 = vshrl.u32 %v1166, 7
      %v1168 = vsub.s32 0, %v1167
      %v1169 = vrot.slane %v1165, %v1168
      %vm1170 = vcmp.eq.s32.totalorder %v1169, 1
      %v1171 = vsel %vm1170, %v1153, 0.0
      %v1172 = vsel %vm1170, %v1154, 0.0
      %v1173 = vsel %vm1170, %v1155, 0.0
      %v1174 = vsel %vm1170, %v1156, 0.0
      %v1175 = vsel %vm1170, %v1157, 0.0
      %v1176 = vsel %vm1170, %v1158, 0.0
      %v1177 = vsel %vm1170, %v1159, 0.0
      %v1178 = vsel %vm1170, %v1160, 0.0
      %v1179 = vsel %vm1170, %v1161, 0.0
      %v1180 = vsel %vm1170, %v1162, 0.0
      %v1181 = vsel %vm1164, 1, 0
      %v1182 = vlaneseq
      %v1183 = vshrl.u32 %v1182, 7
      %v1184 = vsub.s32 0, %v1183
      %v1185 = vrot.slane %v1181, %v1184
      %vm1186 = vcmp.eq.s32.totalorder %v1185, 1
      %v1187 = vsel %vm1186, %v1153, 0.0
      %v1188 = vsel %vm1186, %v1154, 0.0
      %v1189 = vsel %vm1186, %v1155, 0.0
      %v1190 = vsel %vm1186, %v1156, 0.0
      %v1191 = vsel %vm1186, %v1157, 0.0
      %v1192 = vsel %vm1186, %v1158, 0.0
      %v1193 = vsel %vm1186, %v1159, 0.0
      %v1194 = vsel %vm1186, %v1160, 0.0
      %v1195 = vsel %vm1186, %v1161, 0.0
      %v1196 = vsel %vm1186, %v1162, 0.0
      %1197 = vmatprep.subr.mxu0 0.0
      %1198 = vmatpush1.msra.mxu0 %v77
      %1199 = vmatprep.subr.mxu0 0.0
      %1200 = vmatpush1.msra.mxu0 %v78
      %1201 = vmatprep.subr.mxu0 0.0
      %1202 = vmatpush1.msra.mxu0 %v79
      %1203 = vmatprep.subr.mxu0 0.0
      %1204 = vmatpush1.msra.mxu0 %v80
      %1205 = vmatprep.subr.mxu0 0.0
      %1206 = vmatpush1.msra.mxu0 %v81
      %1207 = vmatprep.subr.mxu0 0.0
      %1208 = vmatpush1.msra.mxu0 %v82
      %1209 = vmatprep.subr.mxu0 0.0
      %1210 = vmatpush1.msra.mxu0 %v83
      %1211 = vmatprep.subr.mxu0 0.0
      %1212 = vmatpush1.msra.mxu0 %v84
      %1213 = vmatprep.subr.mxu0 0.0
      %1214 = vmatpush1.msra.mxu0 %v85
      %1215 = vmatprep.subr.mxu0 0.0
      %1216 = vmatpush1.msra.mxu0 %v86
      %1217 = vmatprep.subr.mxu0 0.0
      %1218 = vmatpush1.msra.mxu0 %v87
      %1219 = vmatprep.subr.mxu0 0.0
      %1220 = vmatpush1.msra.mxu0 %v88
      %1221 = vmatprep.subr.mxu0 0.0
      %1222 = vmatpush1.msra.mxu0 %v89
      %1223 = vmatprep.subr.mxu0 0.0
      %1224 = vmatpush1.msra.mxu0 %v90
      %1225 = vmatprep.subr.mxu0 0.0
      %1226 = vmatpush1.msra.mxu0 %v91
      %1227 = vmatprep.subr.mxu0 0.0
      %1228 = vmatpush1.msra.mxu0 %v92
      %1229 = vmatprep.subr.mxu0 0.0
      %1230 = vmatpush1.msra.mxu0 0.0
      %1231 = vmatprep.subr.mxu0 0.0
      %1232 = vmatpush1.msra.mxu0 0.0
      %1233 = vmatprep.subr.mxu0 0.0
      %1234 = vmatpush1.msra.mxu0 0.0
      %1235 = vmatprep.subr.mxu0 0.0
      %1236 = vmatpush1.msra.mxu0 0.0
      %1237 = vmatprep.subr.mxu0 0.0
      %1238 = vmatpush1.msra.mxu0 0.0
      %1239 = vmatprep.subr.mxu0 0.0
      %1240 = vmatpush1.msra.mxu0 0.0
      %1241 = vmatprep.subr.mxu0 0.0
      %1242 = vmatpush1.msra.mxu0 0.0
      %1243 = vmatprep.subr.mxu0 0.0
      %1244 = vmatpush1.msra.mxu0 0.0
      %1245 = vmatprep.subr.mxu0 0.0
      %1246 = vmatpush1.msra.mxu0 0.0
      %1247 = vmatprep.subr.mxu0 0.0
      %1248 = vmatpush1.msra.mxu0 0.0
      %1249 = vmatprep.subr.mxu0 0.0
      %1250 = vmatpush1.msra.mxu0 0.0
      %1251 = vmatprep.subr.mxu0 0.0
      %1252 = vmatpush1.msra.mxu0 0.0
      %1253 = vmatprep.subr.mxu0 0.0
      %1254 = vmatpush1.msra.mxu0 0.0
      %1255 = vmatprep.subr.mxu0 0.0
      %1256 = vmatpush1.msra.mxu0 0.0
      %1257 = vmatprep.subr.mxu0 0.0
      %1258 = vmatpush1.msra.mxu0 0.0
      %1259 = vmatprep.subr.mxu0 0.0
      %1260 = vmatpush1.msra.mxu0 0.0
      %1261 = vmatprep.mubr.f32.mxu0 0.0
      %1262 = vmatmul.mubr.f32.gmra.mrb[0].mxu0 %v1171
      %v1263 = vpop.f32.mrb[0].mxu0
      %v1264 = vadd.f32 0.0, %v1263
      %v1265 = vpop.f32.mrb[0].mxu0
      %1266 = vmatprep.mubr.f32.mxu0 0.0
      %1267 = vmatmul.mubr.f32.gmra.mrb[0].mxu0 %v1172
      %v1268 = vpop.f32.mrb[0].mxu0
      %v1269 = vadd.f32 0.0, %v1268
      %v1270 = vpop.f32.mrb[0].mxu0
      %1271 = vmatprep.mubr.f32.mxu0 0.0
      %1272 = vmatmul.mubr.f32.gmra.mrb[0].mxu0 %v1173
      %v1273 = vpop.f32.mrb[0].mxu0
      %v1274 = vadd.f32 0.0, %v1273
      %v1275 = vpop.f32.mrb[0].mxu0
      %1276 = vmatprep.mubr.f32.mxu0 0.0
      %1277 = vmatmul.mubr.f32.gmra.mrb[0].mxu0 %v1174
      %v1278 = vpop.f32.mrb[0].mxu0
      %v1279 = vadd.f32 0.0, %v1278
      %v1280 = vpop.f32.mrb[0].mxu0
      %1281 = vmatprep.mubr.f32.mxu0 0.0
      %1282 = vmatmul.mubr.f32.gmra.mrb[0].mxu0 %v1175
      %v1283 = vpop.f32.mrb[0].mxu0
      %v1284 = vadd.f32 0.0, %v1283
      %v1285 = vpop.f32.mrb[0].mxu0
      %1286 = vmatprep.mubr.f32.mxu0 0.0
      %1287 = vmatmul.mubr.f32.gmra.mrb[0].mxu0 %v1176
      %v1288 = vpop.f32.mrb[0].mxu0
      %v1289 = vadd.f32 0.0, %v1288
      %v1290 = vpop.f32.mrb[0].mxu0
      %1291 = vmatprep.mubr.f32.mxu0 0.0
      %1292 = vmatmul.mubr.f32.gmra.mrb[0].mxu0 %v1177
      %v1293 = vpop.f32.mrb[0].mxu0
      %v1294 = vadd.f32 0.0, %v1293
      %v1295 = vpop.f32.mrb[0].mxu0
      %1296 = vmatprep.mubr.f32.mxu0 0.0
      %1297 = vmatmul.mubr.f32.gmra.mrb[0].mxu0 %v1178
      %v1298 = vpop.f32.mrb[0].mxu0
      %v1299 = vadd.f32 0.0, %v1298
      %v1300 = vpop.f32.mrb[0].mxu0
      %1301 = vmatprep.mubr.f32.mxu0 0.0
      %1302 = vmatmul.mubr.f32.gmra.mrb[0].mxu0 %v1179
      %v1303 = vpop.f32.mrb[0].mxu0
      %v1304 = vadd.f32 0.0, %v1303
      %v1305 = vpop.f32.mrb[0].mxu0
      %1306 = vmatprep.mubr.f32.mxu0 0.0
      %1307 = vmatmul.mubr.f32.gmra.mrb[0].mxu0 %v1180
      %v1308 = vpop.f32.mrb[0].mxu0
      %v1309 = vadd.f32 0.0, %v1308
      %v1310 = vpop.f32.mrb[0].mxu0
      %1311 = vmatprep.mubr.f32.mxu0 0.0
      %1312 = vmatmul.mubr.f32.gmra.mrb[0].mxu0 %v1187
      %v1313 = vpop.f32.mrb[0].mxu0
      %v1314 = vadd.f32 0.0, %v1313
      %v1315 = vpop.f32.mrb[0].mxu0
      %1316 = vmatprep.mubr.f32.mxu0 0.0
      %1317 = vmatmul.mubr.f32.gmra.mrb[0].mxu0 %v1188
      %v1318 = vpop.f32.mrb[0].mxu0
      %v1319 = vadd.f32 0.0, %v1318
      %v1320 = vpop.f32.mrb[0].mxu0
      %1321 = vmatprep.mubr.f32.mxu0 0.0
      %1322 = vmatmul.mubr.f32.gmra.mrb[0].mxu0 %v1189
      %v1323 = vpop.f32.mrb[0].mxu0
      %v1324 = vadd.f32 0.0, %v1323
      %v1325 = vpop.f32.mrb[0].mxu0
      %1326 = vmatprep.mubr.f32.mxu0 0.0
      %1327 = vmatmul.mubr.f32.gmra.mrb[0].mxu0 %v1190
      %v1328 = vpop.f32.mrb[0].mxu0
      %v1329 = vadd.f32 0.0, %v1328
      %v1330 = vpop.f32.mrb[0].mxu0
      %1331 = vmatprep.mubr.f32.mxu0 0.0
      %1332 = vmatmul.mubr.f32.gmra.mrb[0].mxu0 %v1191
      %v1333 = vpop.f32.mrb[0].mxu0
      %v1334 = vadd.f32 0.0, %v1333
      %v1335 = vpop.f32.mrb[0].mxu0
      %1336 = vmatprep.mubr.f32.mxu0 0.0
      %1337 = vmatmul.mubr.f32.gmra.mrb[0].mxu0 %v1192
      %v1338 = vpop.f32.mrb[0].mxu0
      %v1339 = vadd.f32 0.0, %v1338
      %v1340 = vpop.f32.mrb[0].mxu0
      %1341 = vmatprep.mubr.f32.mxu0 0.0
      %1342 = vmatmul.mubr.f32.gmra.mrb[0].mxu0 %v1193
      %v1343 = vpop.f32.mrb[0].mxu0
      %v1344 = vadd.f32 0.0, %v1343
      %v1345 = vpop.f32.mrb[0].mxu0
      %1346 = vmatprep.mubr.f32.mxu0 0.0
      %1347 = vmatmul.mubr.f32.gmra.mrb[0].mxu0 %v1194
      %v1348 = vpop.f32.mrb[0].mxu0
      %v1349 = vadd.f32 0.0, %v1348
      %v1350 = vpop.f32.mrb[0].mxu0
      %1351 = vmatprep.mubr.f32.mxu0 0.0
      %1352 = vmatmul.mubr.f32.gmra.mrb[0].mxu0 %v1195
      %v1353 = vpop.f32.mrb[0].mxu0
      %v1354 = vadd.f32 0.0, %v1353
      %v1355 = vpop.f32.mrb[0].mxu0
      %1356 = vmatprep.mubr.f32.mxu0 0.0
      %1357 = vmatmul.mubr.f32.gmra.mrb[0].mxu0 %v1196
      %v1358 = vpop.f32.mrb[0].mxu0
      %v1359 = vadd.f32 0.0, %v1358
      %v1360 = vpop.f32.mrb[0].mxu0
      %1361 = vdwg.mxu0
      %v1364 = vrot.slane %v1314, 1
      %v1365 = vrot.slane %v1339, 1
      %v1368 = vmul.f32 %v1264, %v1364
      %v1369 = vmul.f32 %v1289, %v1365
      %v1370 = vrot.slane %v1314, 7
      %v1371 = vrot.slane %v1339, 7
      %v1374 = vmul.f32 %v1264, %v1370
      %v1375 = vmul.f32 %v1289, %v1371
      %v1378 = vrot.slane %v1374, 1
      %v1379 = vrot.slane %v1375, 1
      %v1382 = vsub.f32 %v1368, %v1378
      %v1383 = vsub.f32 %v1369, %v1379
      %v1384 = vrcp.pop %v1382
      %v1385 = vrcp.pop %v1383
      %v1386 = vmul.f32 %v1382, %v1384
      %v1387 = vmul.f32 %v1383, %v1385
      %v1388 = vsub.f32 2.0, %v1386
      %v1389 = vsub.f32 2.0, %v1387
      %v1390 = vmul.f32 %v1384, %v1388
      %v1391 = vmul.f32 %v1385, %v1389
      %v1392 = vlaneseq
      %v1393 = vshrl.u32 %v1392, 7
      %v1394 = vsub.s32 5, %v1393
      %v1395 = vrot.slane %v1314, %v1394
      %v1396 = vlaneseq
      %v1397 = vshrl.u32 %v1396, 7
      %v1398 = vsub.s32 5, %v1397
      %v1399 = vrot.slane %v1339, %v1398
      %v1400 = vmul.f32 %v1395, %v1264
      %v1401 = vmul.f32 %v1395, %v1269
      %v1402 = vmul.f32 %v1395, %v1274
      %v1403 = vmul.f32 %v1395, %v1279
      %v1404 = vmul.f32 %v1395, %v1284
      %v1405 = vmul.f32 %v1399, %v1289
      %v1406 = vmul.f32 %v1399, %v1294
      %v1407 = vmul.f32 %v1399, %v1299
      %v1408 = vmul.f32 %v1399, %v1304
      %v1409 = vmul.f32 %v1399, %v1309
      %v1410 = vlaneseq
      %v1411 = vshrl.u32 %v1410, 7
      %v1412 = vsub.s32 5, %v1411
      %v1413 = vrot.slane %v1264, %v1412
      %v1414 = vlaneseq
      %v1415 = vshrl.u32 %v1414, 7
      %v1416 = vsub.s32 5, %v1415
      %v1417 = vrot.slane %v1289, %v1416
      %v1418 = vmul.f32 %v1413, %v1314
      %v1419 = vmul.f32 %v1413, %v1319
      %v1420 = vmul.f32 %v1413, %v1324
      %v1421 = vmul.f32 %v1413, %v1329
      %v1422 = vmul.f32 %v1413, %v1334
      %v1423 = vmul.f32 %v1417, %v1339
      %v1424 = vmul.f32 %v1417, %v1344
      %v1425 = vmul.f32 %v1417, %v1349
      %v1426 = vmul.f32 %v1417, %v1354
      %v1427 = vmul.f32 %v1417, %v1359
      %v1428 = vsub.f32 %v1400, %v1418
      %v1429 = vsub.f32 %v1401, %v1419
      %v1430 = vsub.f32 %v1402, %v1420
      %v1431 = vsub.f32 %v1403, %v1421
      %v1432 = vsub.f32 %v1404, %v1422
      %v1433 = vsub.f32 %v1405, %v1423
      %v1434 = vsub.f32 %v1406, %v1424
      %v1435 = vsub.f32 %v1407, %v1425
      %v1436 = vsub.f32 %v1408, %v1426
      %v1437 = vsub.f32 %v1409, %v1427
      %v1438 = vlaneseq
      %v1439 = vshrl.u32 %v1438, 7
      %v1440 = vsub.s32 4, %v1439
      %v1441 = vrot.slane %v1390, %v1440
      %v1442 = vlaneseq
      %v1443 = vshrl.u32 %v1442, 7
      %v1444 = vsub.s32 4, %v1443
      %v1445 = vrot.slane %v1391, %v1444
      %v1446 = vmul.f32 %v1428, %v1441
      %v1447 = vmul.f32 %v1429, %v1441
      %v1448 = vmul.f32 %v1430, %v1441
      %v1449 = vmul.f32 %v1431, %v1441
      %v1450 = vmul.f32 %v1432, %v1441
      %v1451 = vmul.f32 %v1433, %v1445
      %v1452 = vmul.f32 %v1434, %v1445
      %v1453 = vmul.f32 %v1435, %v1445
      %v1454 = vmul.f32 %v1436, %v1445
      %v1455 = vmul.f32 %v1437, %v1445
      %v1456 = vlaneseq
      %v1457 = vshrl.u32 %v1456, 7
      %v1458 = vsub.s32 4, %v1457
      %v1459 = vrot.slane %v1264, %v1458
      %v1460 = vlaneseq
      %v1461 = vshrl.u32 %v1460, 7
      %v1462 = vsub.s32 4, %v1461
      %v1463 = vrot.slane %v1289, %v1462
      %v1464 = vmul.f32 %v1459, %v1314
      %v1465 = vmul.f32 %v1459, %v1319
      %v1466 = vmul.f32 %v1459, %v1324
      %v1467 = vmul.f32 %v1459, %v1329
      %v1468 = vmul.f32 %v1459, %v1334
      %v1469 = vmul.f32 %v1463, %v1339
      %v1470 = vmul.f32 %v1463, %v1344
      %v1471 = vmul.f32 %v1463, %v1349
      %v1472 = vmul.f32 %v1463, %v1354
      %v1473 = vmul.f32 %v1463, %v1359
      %v1474 = vlaneseq
      %v1475 = vshrl.u32 %v1474, 7
      %v1476 = vsub.s32 4, %v1475
      %v1477 = vrot.slane %v1314, %v1476
      %v1478 = vlaneseq
      %v1479 = vshrl.u32 %v1478, 7
      %v1480 = vsub.s32 4, %v1479
      %v1481 = vrot.slane %v1339, %v1480
      %v1482 = vmul.f32 %v1477, %v1264
      %v1483 = vmul.f32 %v1477, %v1269
      %v1484 = vmul.f32 %v1477, %v1274
      %v1485 = vmul.f32 %v1477, %v1279
      %v1486 = vmul.f32 %v1477, %v1284
      %v1487 = vmul.f32 %v1481, %v1289
      %v1488 = vmul.f32 %v1481, %v1294
      %v1489 = vmul.f32 %v1481, %v1299
      %v1490 = vmul.f32 %v1481, %v1304
      %v1491 = vmul.f32 %v1481, %v1309
      %v1492 = vsub.f32 %v1464, %v1482
      %v1493 = vsub.f32 %v1465, %v1483
      %v1494 = vsub.f32 %v1466, %v1484
      %v1495 = vsub.f32 %v1467, %v1485
      %v1496 = vsub.f32 %v1468, %v1486
      %v1497 = vsub.f32 %v1469, %v1487
      %v1498 = vsub.f32 %v1470, %v1488
      %v1499 = vsub.f32 %v1471, %v1489
      %v1500 = vsub.f32 %v1472, %v1490
      %v1501 = vsub.f32 %v1473, %v1491
      %v1502 = vmul.f32 %v1492, %v1441
      %v1503 = vmul.f32 %v1493, %v1441
      %v1504 = vmul.f32 %v1494, %v1441
      %v1505 = vmul.f32 %v1495, %v1441
      %v1506 = vmul.f32 %v1496, %v1441
      %v1507 = vmul.f32 %v1497, %v1445
      %v1508 = vmul.f32 %v1498, %v1445
      %v1509 = vmul.f32 %v1499, %v1445
      %v1510 = vmul.f32 %v1500, %v1445
      %v1511 = vmul.f32 %v1501, %v1445
      %v1512 = vlaneseq
      %v1513 = vshrl.u32 %v1512, 7
      %v1514 = vsub.s32 4, %v1513
      %v1515 = vrot.slane %v1153, %v1514
      %v1516 = vlaneseq
      %v1517 = vshrl.u32 %v1516, 7
      %v1518 = vsub.s32 4, %v1517
      %v1519 = vrot.slane %v1158, %v1518
      %v1520 = vmul.f32 %v1515, %v1446
      %v1521 = vmul.f32 %v1515, %v1447
      %v1522 = vmul.f32 %v1515, %v1448
      %v1523 = vmul.f32 %v1515, %v1449
      %v1524 = vmul.f32 %v1515, %v1450
      %v1525 = vmul.f32 %v1519, %v1451
      %v1526 = vmul.f32 %v1519, %v1452
      %v1527 = vmul.f32 %v1519, %v1453
      %v1528 = vmul.f32 %v1519, %v1454
      %v1529 = vmul.f32 %v1519, %v1455
      %v1530 = vsub.f32 %v1153, %v1520
      %v1531 = vsub.f32 %v1154, %v1521
      %v1532 = vsub.f32 %v1155, %v1522
      %v1533 = vsub.f32 %v1156, %v1523
      %v1534 = vsub.f32 %v1157, %v1524
      %v1535 = vsub.f32 %v1158, %v1525
      %v1536 = vsub.f32 %v1159, %v1526
      %v1537 = vsub.f32 %v1160, %v1527
      %v1538 = vsub.f32 %v1161, %v1528
      %v1539 = vsub.f32 %v1162, %v1529
      %v1540 = vlaneseq
      %v1541 = vshrl.u32 %v1540, 7
      %v1542 = vsub.s32 5, %v1541
      %v1543 = vrot.slane %v1153, %v1542
      %v1544 = vlaneseq
      %v1545 = vshrl.u32 %v1544, 7
      %v1546 = vsub.s32 5, %v1545
      %v1547 = vrot.slane %v1158, %v1546
      %v1548 = vmul.f32 %v1543, %v1502
      %v1549 = vmul.f32 %v1543, %v1503
      %v1550 = vmul.f32 %v1543, %v1504
      %v1551 = vmul.f32 %v1543, %v1505
      %v1552 = vmul.f32 %v1543, %v1506
      %v1553 = vmul.f32 %v1547, %v1507
      %v1554 = vmul.f32 %v1547, %v1508
      %v1555 = vmul.f32 %v1547, %v1509
      %v1556 = vmul.f32 %v1547, %v1510
      %v1557 = vmul.f32 %v1547, %v1511
      %v1558 = vsub.f32 %v1530, %v1548
      %v1559 = vsub.f32 %v1531, %v1549
      %v1560 = vsub.f32 %v1532, %v1550
      %v1561 = vsub.f32 %v1533, %v1551
      %v1562 = vsub.f32 %v1534, %v1552
      %v1563 = vsub.f32 %v1535, %v1553
      %v1564 = vsub.f32 %v1536, %v1554
      %v1565 = vsub.f32 %v1537, %v1555
      %v1566 = vsub.f32 %v1538, %v1556
      %v1567 = vsub.f32 %v1539, %v1557
      %v1568 = vsel %vm1170, %v1446, %v1558
      %v1569 = vsel %vm1170, %v1447, %v1559
      %v1570 = vsel %vm1170, %v1448, %v1560
      %v1571 = vsel %vm1170, %v1449, %v1561
      %v1572 = vsel %vm1170, %v1450, %v1562
      %v1573 = vsel %vm1170, %v1451, %v1563
      %v1574 = vsel %vm1170, %v1452, %v1564
      %v1575 = vsel %vm1170, %v1453, %v1565
      %v1576 = vsel %vm1170, %v1454, %v1566
      %v1577 = vsel %vm1170, %v1455, %v1567
      %v1578 = vsel %vm1186, %v1502, %v1568
      %v1579 = vsel %vm1186, %v1503, %v1569
      %v1580 = vsel %vm1186, %v1504, %v1570
      %v1581 = vsel %vm1186, %v1505, %v1571
      %v1582 = vsel %vm1186, %v1506, %v1572
      %v1583 = vsel %vm1186, %v1507, %v1573
      %v1584 = vsel %vm1186, %v1508, %v1574
      %v1585 = vsel %vm1186, %v1509, %v1575
      %v1586 = vsel %vm1186, %v1510, %v1576
      %v1587 = vsel %vm1186, %v1511, %v1577
      %vm1588 = vcmp.eq.s32.totalorder %v93, 6
      %vm1589 = vcmp.eq.s32.totalorder %v93, 7
      %v1590 = vsel %vm1588, 1, 0
      %v1591 = vlaneseq
      %v1592 = vshrl.u32 %v1591, 7
      %v1593 = vsub.s32 0, %v1592
      %v1594 = vrot.slane %v1590, %v1593
      %vm1595 = vcmp.eq.s32.totalorder %v1594, 1
      %v1596 = vsel %vm1595, %v1578, 0.0
      %v1597 = vsel %vm1595, %v1579, 0.0
      %v1598 = vsel %vm1595, %v1580, 0.0
      %v1599 = vsel %vm1595, %v1581, 0.0
      %v1600 = vsel %vm1595, %v1582, 0.0
      %v1601 = vsel %vm1595, %v1583, 0.0
      %v1602 = vsel %vm1595, %v1584, 0.0
      %v1603 = vsel %vm1595, %v1585, 0.0
      %v1604 = vsel %vm1595, %v1586, 0.0
      %v1605 = vsel %vm1595, %v1587, 0.0
      %v1606 = vsel %vm1589, 1, 0
      %v1607 = vlaneseq
      %v1608 = vshrl.u32 %v1607, 7
      %v1609 = vsub.s32 0, %v1608
      %v1610 = vrot.slane %v1606, %v1609
      %vm1611 = vcmp.eq.s32.totalorder %v1610, 1
      %v1612 = vsel %vm1611, %v1578, 0.0
      %v1613 = vsel %vm1611, %v1579, 0.0
      %v1614 = vsel %vm1611, %v1580, 0.0
      %v1615 = vsel %vm1611, %v1581, 0.0
      %v1616 = vsel %vm1611, %v1582, 0.0
      %v1617 = vsel %vm1611, %v1583, 0.0
      %v1618 = vsel %vm1611, %v1584, 0.0
      %v1619 = vsel %vm1611, %v1585, 0.0
      %v1620 = vsel %vm1611, %v1586, 0.0
      %v1621 = vsel %vm1611, %v1587, 0.0
      %1622 = vmatprep.subr.mxu0 0.0
      %1623 = vmatpush1.msra.mxu0 %v77
      %1624 = vmatprep.subr.mxu0 0.0
      %1625 = vmatpush1.msra.mxu0 %v78
      %1626 = vmatprep.subr.mxu0 0.0
      %1627 = vmatpush1.msra.mxu0 %v79
      %1628 = vmatprep.subr.mxu0 0.0
      %1629 = vmatpush1.msra.mxu0 %v80
      %1630 = vmatprep.subr.mxu0 0.0
      %1631 = vmatpush1.msra.mxu0 %v81
      %1632 = vmatprep.subr.mxu0 0.0
      %1633 = vmatpush1.msra.mxu0 %v82
      %1634 = vmatprep.subr.mxu0 0.0
      %1635 = vmatpush1.msra.mxu0 %v83
      %1636 = vmatprep.subr.mxu0 0.0
      %1637 = vmatpush1.msra.mxu0 %v84
      %1638 = vmatprep.subr.mxu0 0.0
      %1639 = vmatpush1.msra.mxu0 %v85
      %1640 = vmatprep.subr.mxu0 0.0
      %1641 = vmatpush1.msra.mxu0 %v86
      %1642 = vmatprep.subr.mxu0 0.0
      %1643 = vmatpush1.msra.mxu0 %v87
      %1644 = vmatprep.subr.mxu0 0.0
      %1645 = vmatpush1.msra.mxu0 %v88
      %1646 = vmatprep.subr.mxu0 0.0
      %1647 = vmatpush1.msra.mxu0 %v89
      %1648 = vmatprep.subr.mxu0 0.0
      %1649 = vmatpush1.msra.mxu0 %v90
      %1650 = vmatprep.subr.mxu0 0.0
      %1651 = vmatpush1.msra.mxu0 %v91
      %1652 = vmatprep.subr.mxu0 0.0
      %1653 = vmatpush1.msra.mxu0 %v92
      %1654 = vmatprep.subr.mxu0 0.0
      %1655 = vmatpush1.msra.mxu0 0.0
      %1656 = vmatprep.subr.mxu0 0.0
      %1657 = vmatpush1.msra.mxu0 0.0
      %1658 = vmatprep.subr.mxu0 0.0
      %1659 = vmatpush1.msra.mxu0 0.0
      %1660 = vmatprep.subr.mxu0 0.0
      %1661 = vmatpush1.msra.mxu0 0.0
      %1662 = vmatprep.subr.mxu0 0.0
      %1663 = vmatpush1.msra.mxu0 0.0
      %1664 = vmatprep.subr.mxu0 0.0
      %1665 = vmatpush1.msra.mxu0 0.0
      %1666 = vmatprep.subr.mxu0 0.0
      %1667 = vmatpush1.msra.mxu0 0.0
      %1668 = vmatprep.subr.mxu0 0.0
      %1669 = vmatpush1.msra.mxu0 0.0
      %1670 = vmatprep.subr.mxu0 0.0
      %1671 = vmatpush1.msra.mxu0 0.0
      %1672 = vmatprep.subr.mxu0 0.0
      %1673 = vmatpush1.msra.mxu0 0.0
      %1674 = vmatprep.subr.mxu0 0.0
      %1675 = vmatpush1.msra.mxu0 0.0
      %1676 = vmatprep.subr.mxu0 0.0
      %1677 = vmatpush1.msra.mxu0 0.0
      %1678 = vmatprep.subr.mxu0 0.0
      %1679 = vmatpush1.msra.mxu0 0.0
      %1680 = vmatprep.subr.mxu0 0.0
      %1681 = vmatpush1.msra.mxu0 0.0
      %1682 = vmatprep.subr.mxu0 0.0
      %1683 = vmatpush1.msra.mxu0 0.0
      %1684 = vmatprep.subr.mxu0 0.0
      %1685 = vmatpush1.msra.mxu0 0.0
      %1686 = vmatprep.mubr.f32.mxu0 0.0
      %1687 = vmatmul.mubr.f32.gmra.mrb[0].mxu0 %v1596
      %v1688 = vpop.f32.mrb[0].mxu0
      %v1689 = vadd.f32 0.0, %v1688
      %v1690 = vpop.f32.mrb[0].mxu0
      %1691 = vmatprep.mubr.f32.mxu0 0.0
      %1692 = vmatmul.mubr.f32.gmra.mrb[0].mxu0 %v1597
      %v1693 = vpop.f32.mrb[0].mxu0
      %v1694 = vadd.f32 0.0, %v1693
      %v1695 = vpop.f32.mrb[0].mxu0
      %1696 = vmatprep.mubr.f32.mxu0 0.0
      %1697 = vmatmul.mubr.f32.gmra.mrb[0].mxu0 %v1598
      %v1698 = vpop.f32.mrb[0].mxu0
      %v1699 = vadd.f32 0.0, %v1698
      %v1700 = vpop.f32.mrb[0].mxu0
      %1701 = vmatprep.mubr.f32.mxu0 0.0
      %1702 = vmatmul.mubr.f32.gmra.mrb[0].mxu0 %v1599
      %v1703 = vpop.f32.mrb[0].mxu0
      %v1704 = vadd.f32 0.0, %v1703
      %v1705 = vpop.f32.mrb[0].mxu0
      %1706 = vmatprep.mubr.f32.mxu0 0.0
      %1707 = vmatmul.mubr.f32.gmra.mrb[0].mxu0 %v1600
      %v1708 = vpop.f32.mrb[0].mxu0
      %v1709 = vadd.f32 0.0, %v1708
      %v1710 = vpop.f32.mrb[0].mxu0
      %1711 = vmatprep.mubr.f32.mxu0 0.0
      %1712 = vmatmul.mubr.f32.gmra.mrb[0].mxu0 %v1601
      %v1713 = vpop.f32.mrb[0].mxu0
      %v1714 = vadd.f32 0.0, %v1713
      %v1715 = vpop.f32.mrb[0].mxu0
      %1716 = vmatprep.mubr.f32.mxu0 0.0
      %1717 = vmatmul.mubr.f32.gmra.mrb[0].mxu0 %v1602
      %v1718 = vpop.f32.mrb[0].mxu0
      %v1719 = vadd.f32 0.0, %v1718
      %v1720 = vpop.f32.mrb[0].mxu0
      %1721 = vmatprep.mubr.f32.mxu0 0.0
      %1722 = vmatmul.mubr.f32.gmra.mrb[0].mxu0 %v1603
      %v1723 = vpop.f32.mrb[0].mxu0
      %v1724 = vadd.f32 0.0, %v1723
      %v1725 = vpop.f32.mrb[0].mxu0
      %1726 = vmatprep.mubr.f32.mxu0 0.0
      %1727 = vmatmul.mubr.f32.gmra.mrb[0].mxu0 %v1604
      %v1728 = vpop.f32.mrb[0].mxu0
      %v1729 = vadd.f32 0.0, %v1728
      %v1730 = vpop.f32.mrb[0].mxu0
      %1731 = vmatprep.mubr.f32.mxu0 0.0
      %1732 = vmatmul.mubr.f32.gmra.mrb[0].mxu0 %v1605
      %v1733 = vpop.f32.mrb[0].mxu0
      %v1734 = vadd.f32 0.0, %v1733
      %v1735 = vpop.f32.mrb[0].mxu0
      %1736 = vmatprep.mubr.f32.mxu0 0.0
      %1737 = vmatmul.mubr.f32.gmra.mrb[0].mxu0 %v1612
      %v1738 = vpop.f32.mrb[0].mxu0
      %v1739 = vadd.f32 0.0, %v1738
      %v1740 = vpop.f32.mrb[0].mxu0
      %1741 = vmatprep.mubr.f32.mxu0 0.0
      %1742 = vmatmul.mubr.f32.gmra.mrb[0].mxu0 %v1613
      %v1743 = vpop.f32.mrb[0].mxu0
      %v1744 = vadd.f32 0.0, %v1743
      %v1745 = vpop.f32.mrb[0].mxu0
      %1746 = vmatprep.mubr.f32.mxu0 0.0
      %1747 = vmatmul.mubr.f32.gmra.mrb[0].mxu0 %v1614
      %v1748 = vpop.f32.mrb[0].mxu0
      %v1749 = vadd.f32 0.0, %v1748
      %v1750 = vpop.f32.mrb[0].mxu0
      %1751 = vmatprep.mubr.f32.mxu0 0.0
      %1752 = vmatmul.mubr.f32.gmra.mrb[0].mxu0 %v1615
      %v1753 = vpop.f32.mrb[0].mxu0
      %v1754 = vadd.f32 0.0, %v1753
      %v1755 = vpop.f32.mrb[0].mxu0
      %1756 = vmatprep.mubr.f32.mxu0 0.0
      %1757 = vmatmul.mubr.f32.gmra.mrb[0].mxu0 %v1616
      %v1758 = vpop.f32.mrb[0].mxu0
      %v1759 = vadd.f32 0.0, %v1758
      %v1760 = vpop.f32.mrb[0].mxu0
      %1761 = vmatprep.mubr.f32.mxu0 0.0
      %1762 = vmatmul.mubr.f32.gmra.mrb[0].mxu0 %v1617
      %v1763 = vpop.f32.mrb[0].mxu0
      %v1764 = vadd.f32 0.0, %v1763
      %v1765 = vpop.f32.mrb[0].mxu0
      %1766 = vmatprep.mubr.f32.mxu0 0.0
      %1767 = vmatmul.mubr.f32.gmra.mrb[0].mxu0 %v1618
      %v1768 = vpop.f32.mrb[0].mxu0
      %v1769 = vadd.f32 0.0, %v1768
      %v1770 = vpop.f32.mrb[0].mxu0
      %1771 = vmatprep.mubr.f32.mxu0 0.0
      %1772 = vmatmul.mubr.f32.gmra.mrb[0].mxu0 %v1619
      %v1773 = vpop.f32.mrb[0].mxu0
      %v1774 = vadd.f32 0.0, %v1773
      %v1775 = vpop.f32.mrb[0].mxu0
      %1776 = vmatprep.mubr.f32.mxu0 0.0
      %1777 = vmatmul.mubr.f32.gmra.mrb[0].mxu0 %v1620
      %v1778 = vpop.f32.mrb[0].mxu0
      %v1779 = vadd.f32 0.0, %v1778
      %v1780 = vpop.f32.mrb[0].mxu0
      %1781 = vmatprep.mubr.f32.mxu0 0.0
      %1782 = vmatmul.mubr.f32.gmra.mrb[0].mxu0 %v1621
      %v1783 = vpop.f32.mrb[0].mxu0
      %v1784 = vadd.f32 0.0, %v1783
      %v1785 = vpop.f32.mrb[0].mxu0
      %1786 = vdwg.mxu0
      %v1789 = vrot.slane %v1739, 1
      %v1790 = vrot.slane %v1764, 1
      %v1793 = vmul.f32 %v1689, %v1789
      %v1794 = vmul.f32 %v1714, %v1790
      %v1795 = vrot.slane %v1739, 7
      %v1796 = vrot.slane %v1764, 7
      %v1799 = vmul.f32 %v1689, %v1795
      %v1800 = vmul.f32 %v1714, %v1796
      %v1803 = vrot.slane %v1799, 1
      %v1804 = vrot.slane %v1800, 1
      %v1807 = vsub.f32 %v1793, %v1803
      %v1808 = vsub.f32 %v1794, %v1804
      %v1809 = vrcp.pop %v1807
      %v1810 = vrcp.pop %v1808
      %v1811 = vmul.f32 %v1807, %v1809
      %v1812 = vmul.f32 %v1808, %v1810
      %v1813 = vsub.f32 2.0, %v1811
      %v1814 = vsub.f32 2.0, %v1812
      %v1815 = vmul.f32 %v1809, %v1813
      %v1816 = vmul.f32 %v1810, %v1814
      %v1817 = vlaneseq
      %v1818 = vshrl.u32 %v1817, 7
      %v1819 = vsub.s32 7, %v1818
      %v1820 = vrot.slane %v1739, %v1819
      %v1821 = vlaneseq
      %v1822 = vshrl.u32 %v1821, 7
      %v1823 = vsub.s32 7, %v1822
      %v1824 = vrot.slane %v1764, %v1823
      %v1825 = vmul.f32 %v1820, %v1689
      %v1826 = vmul.f32 %v1820, %v1694
      %v1827 = vmul.f32 %v1820, %v1699
      %v1828 = vmul.f32 %v1820, %v1704
      %v1829 = vmul.f32 %v1820, %v1709
      %v1830 = vmul.f32 %v1824, %v1714
      %v1831 = vmul.f32 %v1824, %v1719
      %v1832 = vmul.f32 %v1824, %v1724
      %v1833 = vmul.f32 %v1824, %v1729
      %v1834 = vmul.f32 %v1824, %v1734
      %v1835 = vlaneseq
      %v1836 = vshrl.u32 %v1835, 7
      %v1837 = vsub.s32 7, %v1836
      %v1838 = vrot.slane %v1689, %v1837
      %v1839 = vlaneseq
      %v1840 = vshrl.u32 %v1839, 7
      %v1841 = vsub.s32 7, %v1840
      %v1842 = vrot.slane %v1714, %v1841
      %v1843 = vmul.f32 %v1838, %v1739
      %v1844 = vmul.f32 %v1838, %v1744
      %v1845 = vmul.f32 %v1838, %v1749
      %v1846 = vmul.f32 %v1838, %v1754
      %v1847 = vmul.f32 %v1838, %v1759
      %v1848 = vmul.f32 %v1842, %v1764
      %v1849 = vmul.f32 %v1842, %v1769
      %v1850 = vmul.f32 %v1842, %v1774
      %v1851 = vmul.f32 %v1842, %v1779
      %v1852 = vmul.f32 %v1842, %v1784
      %v1853 = vsub.f32 %v1825, %v1843
      %v1854 = vsub.f32 %v1826, %v1844
      %v1855 = vsub.f32 %v1827, %v1845
      %v1856 = vsub.f32 %v1828, %v1846
      %v1857 = vsub.f32 %v1829, %v1847
      %v1858 = vsub.f32 %v1830, %v1848
      %v1859 = vsub.f32 %v1831, %v1849
      %v1860 = vsub.f32 %v1832, %v1850
      %v1861 = vsub.f32 %v1833, %v1851
      %v1862 = vsub.f32 %v1834, %v1852
      %v1863 = vlaneseq
      %v1864 = vshrl.u32 %v1863, 7
      %v1865 = vsub.s32 6, %v1864
      %v1866 = vrot.slane %v1815, %v1865
      %v1867 = vlaneseq
      %v1868 = vshrl.u32 %v1867, 7
      %v1869 = vsub.s32 6, %v1868
      %v1870 = vrot.slane %v1816, %v1869
      %v1871 = vmul.f32 %v1853, %v1866
      %v1872 = vmul.f32 %v1854, %v1866
      %v1873 = vmul.f32 %v1855, %v1866
      %v1874 = vmul.f32 %v1856, %v1866
      %v1875 = vmul.f32 %v1857, %v1866
      %v1876 = vmul.f32 %v1858, %v1870
      %v1877 = vmul.f32 %v1859, %v1870
      %v1878 = vmul.f32 %v1860, %v1870
      %v1879 = vmul.f32 %v1861, %v1870
      %v1880 = vmul.f32 %v1862, %v1870
      %v1881 = vlaneseq
      %v1882 = vshrl.u32 %v1881, 7
      %v1883 = vsub.s32 6, %v1882
      %v1884 = vrot.slane %v1689, %v1883
      %v1885 = vlaneseq
      %v1886 = vshrl.u32 %v1885, 7
      %v1887 = vsub.s32 6, %v1886
      %v1888 = vrot.slane %v1714, %v1887
      %v1889 = vmul.f32 %v1884, %v1739
      %v1890 = vmul.f32 %v1884, %v1744
      %v1891 = vmul.f32 %v1884, %v1749
      %v1892 = vmul.f32 %v1884, %v1754
      %v1893 = vmul.f32 %v1884, %v1759
      %v1894 = vmul.f32 %v1888, %v1764
      %v1895 = vmul.f32 %v1888, %v1769
      %v1896 = vmul.f32 %v1888, %v1774
      %v1897 = vmul.f32 %v1888, %v1779
      %v1898 = vmul.f32 %v1888, %v1784
      %v1899 = vlaneseq
      %v1900 = vshrl.u32 %v1899, 7
      %v1901 = vsub.s32 6, %v1900
      %v1902 = vrot.slane %v1739, %v1901
      %v1903 = vlaneseq
      %v1904 = vshrl.u32 %v1903, 7
      %v1905 = vsub.s32 6, %v1904
      %v1906 = vrot.slane %v1764, %v1905
      %v1907 = vmul.f32 %v1902, %v1689
      %v1908 = vmul.f32 %v1902, %v1694
      %v1909 = vmul.f32 %v1902, %v1699
      %v1910 = vmul.f32 %v1902, %v1704
      %v1911 = vmul.f32 %v1902, %v1709
      %v1912 = vmul.f32 %v1906, %v1714
      %v1913 = vmul.f32 %v1906, %v1719
      %v1914 = vmul.f32 %v1906, %v1724
      %v1915 = vmul.f32 %v1906, %v1729
      %v1916 = vmul.f32 %v1906, %v1734
      %v1917 = vsub.f32 %v1889, %v1907
      %v1918 = vsub.f32 %v1890, %v1908
      %v1919 = vsub.f32 %v1891, %v1909
      %v1920 = vsub.f32 %v1892, %v1910
      %v1921 = vsub.f32 %v1893, %v1911
      %v1922 = vsub.f32 %v1894, %v1912
      %v1923 = vsub.f32 %v1895, %v1913
      %v1924 = vsub.f32 %v1896, %v1914
      %v1925 = vsub.f32 %v1897, %v1915
      %v1926 = vsub.f32 %v1898, %v1916
      %v1927 = vmul.f32 %v1917, %v1866
      %v1928 = vmul.f32 %v1918, %v1866
      %v1929 = vmul.f32 %v1919, %v1866
      %v1930 = vmul.f32 %v1920, %v1866
      %v1931 = vmul.f32 %v1921, %v1866
      %v1932 = vmul.f32 %v1922, %v1870
      %v1933 = vmul.f32 %v1923, %v1870
      %v1934 = vmul.f32 %v1924, %v1870
      %v1935 = vmul.f32 %v1925, %v1870
      %v1936 = vmul.f32 %v1926, %v1870
      %v1937 = vlaneseq
      %v1938 = vshrl.u32 %v1937, 7
      %v1939 = vsub.s32 6, %v1938
      %v1940 = vrot.slane %v1578, %v1939
      %v1941 = vlaneseq
      %v1942 = vshrl.u32 %v1941, 7
      %v1943 = vsub.s32 6, %v1942
      %v1944 = vrot.slane %v1583, %v1943
      %v1945 = vmul.f32 %v1940, %v1871
      %v1946 = vmul.f32 %v1940, %v1872
      %v1947 = vmul.f32 %v1940, %v1873
      %v1948 = vmul.f32 %v1940, %v1874
      %v1949 = vmul.f32 %v1940, %v1875
      %v1950 = vmul.f32 %v1944, %v1876
      %v1951 = vmul.f32 %v1944, %v1877
      %v1952 = vmul.f32 %v1944, %v1878
      %v1953 = vmul.f32 %v1944, %v1879
      %v1954 = vmul.f32 %v1944, %v1880
      %v1955 = vsub.f32 %v1578, %v1945
      %v1956 = vsub.f32 %v1579, %v1946
      %v1957 = vsub.f32 %v1580, %v1947
      %v1958 = vsub.f32 %v1581, %v1948
      %v1959 = vsub.f32 %v1582, %v1949
      %v1960 = vsub.f32 %v1583, %v1950
      %v1961 = vsub.f32 %v1584, %v1951
      %v1962 = vsub.f32 %v1585, %v1952
      %v1963 = vsub.f32 %v1586, %v1953
      %v1964 = vsub.f32 %v1587, %v1954
      %v1965 = vlaneseq
      %v1966 = vshrl.u32 %v1965, 7
      %v1967 = vsub.s32 7, %v1966
      %v1968 = vrot.slane %v1578, %v1967
      %v1969 = vlaneseq
      %v1970 = vshrl.u32 %v1969, 7
      %v1971 = vsub.s32 7, %v1970
      %v1972 = vrot.slane %v1583, %v1971
      %v1973 = vmul.f32 %v1968, %v1927
      %v1974 = vmul.f32 %v1968, %v1928
      %v1975 = vmul.f32 %v1968, %v1929
      %v1976 = vmul.f32 %v1968, %v1930
      %v1977 = vmul.f32 %v1968, %v1931
      %v1978 = vmul.f32 %v1972, %v1932
      %v1979 = vmul.f32 %v1972, %v1933
      %v1980 = vmul.f32 %v1972, %v1934
      %v1981 = vmul.f32 %v1972, %v1935
      %v1982 = vmul.f32 %v1972, %v1936
      %v1983 = vsub.f32 %v1955, %v1973
      %v1984 = vsub.f32 %v1956, %v1974
      %v1985 = vsub.f32 %v1957, %v1975
      %v1986 = vsub.f32 %v1958, %v1976
      %v1987 = vsub.f32 %v1959, %v1977
      %v1988 = vsub.f32 %v1960, %v1978
      %v1989 = vsub.f32 %v1961, %v1979
      %v1990 = vsub.f32 %v1962, %v1980
      %v1991 = vsub.f32 %v1963, %v1981
      %v1992 = vsub.f32 %v1964, %v1982
      %v1993 = vsel %vm1595, %v1871, %v1983
      %v1994 = vsel %vm1595, %v1872, %v1984
      %v1995 = vsel %vm1595, %v1873, %v1985
      %v1996 = vsel %vm1595, %v1874, %v1986
      %v1997 = vsel %vm1595, %v1875, %v1987
      %v1998 = vsel %vm1595, %v1876, %v1988
      %v1999 = vsel %vm1595, %v1877, %v1989
      %v2000 = vsel %vm1595, %v1878, %v1990
      %v2001 = vsel %vm1595, %v1879, %v1991
      %v2002 = vsel %vm1595, %v1880, %v1992
      %v2003 = vsel %vm1611, %v1927, %v1993
      %v2004 = vsel %vm1611, %v1928, %v1994
      %v2005 = vsel %vm1611, %v1929, %v1995
      %v2006 = vsel %vm1611, %v1930, %v1996
      %v2007 = vsel %vm1611, %v1931, %v1997
      %v2008 = vsel %vm1611, %v1932, %v1998
      %v2009 = vsel %vm1611, %v1933, %v1999
      %v2010 = vsel %vm1611, %v1934, %v2000
      %v2011 = vsel %vm1611, %v1935, %v2001
      %v2012 = vsel %vm1611, %v1936, %v2002
      %vm2013 = vcmp.eq.s32.totalorder %v93, 8
      %vm2014 = vcmp.eq.s32.totalorder %v93, 9
      %v2015 = vsel %vm2013, 1, 0
      %v2016 = vlaneseq
      %v2017 = vshrl.u32 %v2016, 7
      %v2018 = vsub.s32 0, %v2017
      %v2019 = vrot.slane %v2015, %v2018
      %vm2020 = vcmp.eq.s32.totalorder %v2019, 1
      %v2021 = vsel %vm2020, %v2003, 0.0
      %v2022 = vsel %vm2020, %v2004, 0.0
      %v2023 = vsel %vm2020, %v2005, 0.0
      %v2024 = vsel %vm2020, %v2006, 0.0
      %v2025 = vsel %vm2020, %v2007, 0.0
      %v2026 = vsel %vm2020, %v2008, 0.0
      %v2027 = vsel %vm2020, %v2009, 0.0
      %v2028 = vsel %vm2020, %v2010, 0.0
      %v2029 = vsel %vm2020, %v2011, 0.0
      %v2030 = vsel %vm2020, %v2012, 0.0
      %v2031 = vsel %vm2014, 1, 0
      %v2032 = vlaneseq
      %v2033 = vshrl.u32 %v2032, 7
      %v2034 = vsub.s32 0, %v2033
      %v2035 = vrot.slane %v2031, %v2034
      %vm2036 = vcmp.eq.s32.totalorder %v2035, 1
      %v2037 = vsel %vm2036, %v2003, 0.0
      %v2038 = vsel %vm2036, %v2004, 0.0
      %v2039 = vsel %vm2036, %v2005, 0.0
      %v2040 = vsel %vm2036, %v2006, 0.0
      %v2041 = vsel %vm2036, %v2007, 0.0
      %v2042 = vsel %vm2036, %v2008, 0.0
      %v2043 = vsel %vm2036, %v2009, 0.0
      %v2044 = vsel %vm2036, %v2010, 0.0
      %v2045 = vsel %vm2036, %v2011, 0.0
      %v2046 = vsel %vm2036, %v2012, 0.0
      %2047 = vmatprep.subr.mxu0 0.0
      %2048 = vmatpush1.msra.mxu0 %v77
      %2049 = vmatprep.subr.mxu0 0.0
      %2050 = vmatpush1.msra.mxu0 %v78
      %2051 = vmatprep.subr.mxu0 0.0
      %2052 = vmatpush1.msra.mxu0 %v79
      %2053 = vmatprep.subr.mxu0 0.0
      %2054 = vmatpush1.msra.mxu0 %v80
      %2055 = vmatprep.subr.mxu0 0.0
      %2056 = vmatpush1.msra.mxu0 %v81
      %2057 = vmatprep.subr.mxu0 0.0
      %2058 = vmatpush1.msra.mxu0 %v82
      %2059 = vmatprep.subr.mxu0 0.0
      %2060 = vmatpush1.msra.mxu0 %v83
      %2061 = vmatprep.subr.mxu0 0.0
      %2062 = vmatpush1.msra.mxu0 %v84
      %2063 = vmatprep.subr.mxu0 0.0
      %2064 = vmatpush1.msra.mxu0 %v85
      %2065 = vmatprep.subr.mxu0 0.0
      %2066 = vmatpush1.msra.mxu0 %v86
      %2067 = vmatprep.subr.mxu0 0.0
      %2068 = vmatpush1.msra.mxu0 %v87
      %2069 = vmatprep.subr.mxu0 0.0
      %2070 = vmatpush1.msra.mxu0 %v88
      %2071 = vmatprep.subr.mxu0 0.0
      %2072 = vmatpush1.msra.mxu0 %v89
      %2073 = vmatprep.subr.mxu0 0.0
      %2074 = vmatpush1.msra.mxu0 %v90
      %2075 = vmatprep.subr.mxu0 0.0
      %2076 = vmatpush1.msra.mxu0 %v91
      %2077 = vmatprep.subr.mxu0 0.0
      %2078 = vmatpush1.msra.mxu0 %v92
      %2079 = vmatprep.subr.mxu0 0.0
      %2080 = vmatpush1.msra.mxu0 0.0
      %2081 = vmatprep.subr.mxu0 0.0
      %2082 = vmatpush1.msra.mxu0 0.0
      %2083 = vmatprep.subr.mxu0 0.0
      %2084 = vmatpush1.msra.mxu0 0.0
      %2085 = vmatprep.subr.mxu0 0.0
      %2086 = vmatpush1.msra.mxu0 0.0
      %2087 = vmatprep.subr.mxu0 0.0
      %2088 = vmatpush1.msra.mxu0 0.0
      %2089 = vmatprep.subr.mxu0 0.0
      %2090 = vmatpush1.msra.mxu0 0.0
      %2091 = vmatprep.subr.mxu0 0.0
      %2092 = vmatpush1.msra.mxu0 0.0
      %2093 = vmatprep.subr.mxu0 0.0
      %2094 = vmatpush1.msra.mxu0 0.0
      %2095 = vmatprep.subr.mxu0 0.0
      %2096 = vmatpush1.msra.mxu0 0.0
      %2097 = vmatprep.subr.mxu0 0.0
      %2098 = vmatpush1.msra.mxu0 0.0
      %2099 = vmatprep.subr.mxu0 0.0
      %2100 = vmatpush1.msra.mxu0 0.0
      %2101 = vmatprep.subr.mxu0 0.0
      %2102 = vmatpush1.msra.mxu0 0.0
      %2103 = vmatprep.subr.mxu0 0.0
      %2104 = vmatpush1.msra.mxu0 0.0
      %2105 = vmatprep.subr.mxu0 0.0
      %2106 = vmatpush1.msra.mxu0 0.0
      %2107 = vmatprep.subr.mxu0 0.0
      %2108 = vmatpush1.msra.mxu0 0.0
      %2109 = vmatprep.subr.mxu0 0.0
      %2110 = vmatpush1.msra.mxu0 0.0
      %2111 = vmatprep.mubr.f32.mxu0 0.0
      %2112 = vmatmul.mubr.f32.gmra.mrb[0].mxu0 %v2021
      %v2113 = vpop.f32.mrb[0].mxu0
      %v2114 = vadd.f32 0.0, %v2113
      %v2115 = vpop.f32.mrb[0].mxu0
      %2116 = vmatprep.mubr.f32.mxu0 0.0
      %2117 = vmatmul.mubr.f32.gmra.mrb[0].mxu0 %v2022
      %v2118 = vpop.f32.mrb[0].mxu0
      %v2119 = vadd.f32 0.0, %v2118
      %v2120 = vpop.f32.mrb[0].mxu0
      %2121 = vmatprep.mubr.f32.mxu0 0.0
      %2122 = vmatmul.mubr.f32.gmra.mrb[0].mxu0 %v2023
      %v2123 = vpop.f32.mrb[0].mxu0
      %v2124 = vadd.f32 0.0, %v2123
      %v2125 = vpop.f32.mrb[0].mxu0
      %2126 = vmatprep.mubr.f32.mxu0 0.0
      %2127 = vmatmul.mubr.f32.gmra.mrb[0].mxu0 %v2024
      %v2128 = vpop.f32.mrb[0].mxu0
      %v2129 = vadd.f32 0.0, %v2128
      %v2130 = vpop.f32.mrb[0].mxu0
      %2131 = vmatprep.mubr.f32.mxu0 0.0
      %2132 = vmatmul.mubr.f32.gmra.mrb[0].mxu0 %v2025
      %v2133 = vpop.f32.mrb[0].mxu0
      %v2134 = vadd.f32 0.0, %v2133
      %v2135 = vpop.f32.mrb[0].mxu0
      %2136 = vmatprep.mubr.f32.mxu0 0.0
      %2137 = vmatmul.mubr.f32.gmra.mrb[0].mxu0 %v2026
      %v2138 = vpop.f32.mrb[0].mxu0
      %v2139 = vadd.f32 0.0, %v2138
      %v2140 = vpop.f32.mrb[0].mxu0
      %2141 = vmatprep.mubr.f32.mxu0 0.0
      %2142 = vmatmul.mubr.f32.gmra.mrb[0].mxu0 %v2027
      %v2143 = vpop.f32.mrb[0].mxu0
      %v2144 = vadd.f32 0.0, %v2143
      %v2145 = vpop.f32.mrb[0].mxu0
      %2146 = vmatprep.mubr.f32.mxu0 0.0
      %2147 = vmatmul.mubr.f32.gmra.mrb[0].mxu0 %v2028
      %v2148 = vpop.f32.mrb[0].mxu0
      %v2149 = vadd.f32 0.0, %v2148
      %v2150 = vpop.f32.mrb[0].mxu0
      %2151 = vmatprep.mubr.f32.mxu0 0.0
      %2152 = vmatmul.mubr.f32.gmra.mrb[0].mxu0 %v2029
      %v2153 = vpop.f32.mrb[0].mxu0
      %v2154 = vadd.f32 0.0, %v2153
      %v2155 = vpop.f32.mrb[0].mxu0
      %2156 = vmatprep.mubr.f32.mxu0 0.0
      %2157 = vmatmul.mubr.f32.gmra.mrb[0].mxu0 %v2030
      %v2158 = vpop.f32.mrb[0].mxu0
      %v2159 = vadd.f32 0.0, %v2158
      %v2160 = vpop.f32.mrb[0].mxu0
      %2161 = vmatprep.mubr.f32.mxu0 0.0
      %2162 = vmatmul.mubr.f32.gmra.mrb[0].mxu0 %v2037
      %v2163 = vpop.f32.mrb[0].mxu0
      %v2164 = vadd.f32 0.0, %v2163
      %v2165 = vpop.f32.mrb[0].mxu0
      %2166 = vmatprep.mubr.f32.mxu0 0.0
      %2167 = vmatmul.mubr.f32.gmra.mrb[0].mxu0 %v2038
      %v2168 = vpop.f32.mrb[0].mxu0
      %v2169 = vadd.f32 0.0, %v2168
      %v2170 = vpop.f32.mrb[0].mxu0
      %2171 = vmatprep.mubr.f32.mxu0 0.0
      %2172 = vmatmul.mubr.f32.gmra.mrb[0].mxu0 %v2039
      %v2173 = vpop.f32.mrb[0].mxu0
      %v2174 = vadd.f32 0.0, %v2173
      %v2175 = vpop.f32.mrb[0].mxu0
      %2176 = vmatprep.mubr.f32.mxu0 0.0
      %2177 = vmatmul.mubr.f32.gmra.mrb[0].mxu0 %v2040
      %v2178 = vpop.f32.mrb[0].mxu0
      %v2179 = vadd.f32 0.0, %v2178
      %v2180 = vpop.f32.mrb[0].mxu0
      %2181 = vmatprep.mubr.f32.mxu0 0.0
      %2182 = vmatmul.mubr.f32.gmra.mrb[0].mxu0 %v2041
      %v2183 = vpop.f32.mrb[0].mxu0
      %v2184 = vadd.f32 0.0, %v2183
      %v2185 = vpop.f32.mrb[0].mxu0
      %2186 = vmatprep.mubr.f32.mxu0 0.0
      %2187 = vmatmul.mubr.f32.gmra.mrb[0].mxu0 %v2042
      %v2188 = vpop.f32.mrb[0].mxu0
      %v2189 = vadd.f32 0.0, %v2188
      %v2190 = vpop.f32.mrb[0].mxu0
      %2191 = vmatprep.mubr.f32.mxu0 0.0
      %2192 = vmatmul.mubr.f32.gmra.mrb[0].mxu0 %v2043
      %v2193 = vpop.f32.mrb[0].mxu0
      %v2194 = vadd.f32 0.0, %v2193
      %v2195 = vpop.f32.mrb[0].mxu0
      %2196 = vmatprep.mubr.f32.mxu0 0.0
      %2197 = vmatmul.mubr.f32.gmra.mrb[0].mxu0 %v2044
      %v2198 = vpop.f32.mrb[0].mxu0
      %v2199 = vadd.f32 0.0, %v2198
      %v2200 = vpop.f32.mrb[0].mxu0
      %2201 = vmatprep.mubr.f32.mxu0 0.0
      %2202 = vmatmul.mubr.f32.gmra.mrb[0].mxu0 %v2045
      %v2203 = vpop.f32.mrb[0].mxu0
      %v2204 = vadd.f32 0.0, %v2203
      %v2205 = vpop.f32.mrb[0].mxu0
      %2206 = vmatprep.mubr.f32.mxu0 0.0
      %2207 = vmatmul.mubr.f32.gmra.mrb[0].mxu0 %v2046
      %v2208 = vpop.f32.mrb[0].mxu0
      %v2209 = vadd.f32 0.0, %v2208
      %v2210 = vpop.f32.mrb[0].mxu0
      %2211 = vdwg.mxu0
      %v2214 = vrot.slane %v2169, 1
      %v2215 = vrot.slane %v2194, 1
      %v2218 = vmul.f32 %v2119, %v2214
      %v2219 = vmul.f32 %v2144, %v2215
      %v2220 = vrot.slane %v2169, 7
      %v2221 = vrot.slane %v2194, 7
      %v2224 = vmul.f32 %v2119, %v2220
      %v2225 = vmul.f32 %v2144, %v2221
      %v2228 = vrot.slane %v2224, 1
      %v2229 = vrot.slane %v2225, 1
      %v2232 = vsub.f32 %v2218, %v2228
      %v2233 = vsub.f32 %v2219, %v2229
      %v2234 = vrcp.pop %v2232
      %v2235 = vrcp.pop %v2233
      %v2236 = vmul.f32 %v2232, %v2234
      %v2237 = vmul.f32 %v2233, %v2235
      %v2238 = vsub.f32 2.0, %v2236
      %v2239 = vsub.f32 2.0, %v2237
      %v2240 = vmul.f32 %v2234, %v2238
      %v2241 = vmul.f32 %v2235, %v2239
      %v2242 = vlaneseq
      %v2243 = vshrl.u32 %v2242, 7
      %v2244 = vsub.s32 1, %v2243
      %v2245 = vrot.slane %v2169, %v2244
      %v2246 = vlaneseq
      %v2247 = vshrl.u32 %v2246, 7
      %v2248 = vsub.s32 1, %v2247
      %v2249 = vrot.slane %v2194, %v2248
      %v2250 = vmul.f32 %v2245, %v2114
      %v2251 = vmul.f32 %v2245, %v2119
      %v2252 = vmul.f32 %v2245, %v2124
      %v2253 = vmul.f32 %v2245, %v2129
      %v2254 = vmul.f32 %v2245, %v2134
      %v2255 = vmul.f32 %v2249, %v2139
      %v2256 = vmul.f32 %v2249, %v2144
      %v2257 = vmul.f32 %v2249, %v2149
      %v2258 = vmul.f32 %v2249, %v2154
      %v2259 = vmul.f32 %v2249, %v2159
      %v2260 = vlaneseq
      %v2261 = vshrl.u32 %v2260, 7
      %v2262 = vsub.s32 1, %v2261
      %v2263 = vrot.slane %v2119, %v2262
      %v2264 = vlaneseq
      %v2265 = vshrl.u32 %v2264, 7
      %v2266 = vsub.s32 1, %v2265
      %v2267 = vrot.slane %v2144, %v2266
      %v2268 = vmul.f32 %v2263, %v2164
      %v2269 = vmul.f32 %v2263, %v2169
      %v2270 = vmul.f32 %v2263, %v2174
      %v2271 = vmul.f32 %v2263, %v2179
      %v2272 = vmul.f32 %v2263, %v2184
      %v2273 = vmul.f32 %v2267, %v2189
      %v2274 = vmul.f32 %v2267, %v2194
      %v2275 = vmul.f32 %v2267, %v2199
      %v2276 = vmul.f32 %v2267, %v2204
      %v2277 = vmul.f32 %v2267, %v2209
      %v2278 = vsub.f32 %v2250, %v2268
      %v2279 = vsub.f32 %v2251, %v2269
      %v2280 = vsub.f32 %v2252, %v2270
      %v2281 = vsub.f32 %v2253, %v2271
      %v2282 = vsub.f32 %v2254, %v2272
      %v2283 = vsub.f32 %v2255, %v2273
      %v2284 = vsub.f32 %v2256, %v2274
      %v2285 = vsub.f32 %v2257, %v2275
      %v2286 = vsub.f32 %v2258, %v2276
      %v2287 = vsub.f32 %v2259, %v2277
      %v2288 = vlaneseq
      %v2289 = vshrl.u32 %v2288, 7
      %v2290 = vsub.s32 0, %v2289
      %v2291 = vrot.slane %v2240, %v2290
      %v2292 = vlaneseq
      %v2293 = vshrl.u32 %v2292, 7
      %v2294 = vsub.s32 0, %v2293
      %v2295 = vrot.slane %v2241, %v2294
      %v2296 = vmul.f32 %v2278, %v2291
      %v2297 = vmul.f32 %v2279, %v2291
      %v2298 = vmul.f32 %v2280, %v2291
      %v2299 = vmul.f32 %v2281, %v2291
      %v2300 = vmul.f32 %v2282, %v2291
      %v2301 = vmul.f32 %v2283, %v2295
      %v2302 = vmul.f32 %v2284, %v2295
      %v2303 = vmul.f32 %v2285, %v2295
      %v2304 = vmul.f32 %v2286, %v2295
      %v2305 = vmul.f32 %v2287, %v2295
      %v2306 = vlaneseq
      %v2307 = vshrl.u32 %v2306, 7
      %v2308 = vsub.s32 0, %v2307
      %v2309 = vrot.slane %v2119, %v2308
      %v2310 = vlaneseq
      %v2311 = vshrl.u32 %v2310, 7
      %v2312 = vsub.s32 0, %v2311
      %v2313 = vrot.slane %v2144, %v2312
      %v2314 = vmul.f32 %v2309, %v2164
      %v2315 = vmul.f32 %v2309, %v2169
      %v2316 = vmul.f32 %v2309, %v2174
      %v2317 = vmul.f32 %v2309, %v2179
      %v2318 = vmul.f32 %v2309, %v2184
      %v2319 = vmul.f32 %v2313, %v2189
      %v2320 = vmul.f32 %v2313, %v2194
      %v2321 = vmul.f32 %v2313, %v2199
      %v2322 = vmul.f32 %v2313, %v2204
      %v2323 = vmul.f32 %v2313, %v2209
      %v2324 = vlaneseq
      %v2325 = vshrl.u32 %v2324, 7
      %v2326 = vsub.s32 0, %v2325
      %v2327 = vrot.slane %v2169, %v2326
      %v2328 = vlaneseq
      %v2329 = vshrl.u32 %v2328, 7
      %v2330 = vsub.s32 0, %v2329
      %v2331 = vrot.slane %v2194, %v2330
      %v2332 = vmul.f32 %v2327, %v2114
      %v2333 = vmul.f32 %v2327, %v2119
      %v2334 = vmul.f32 %v2327, %v2124
      %v2335 = vmul.f32 %v2327, %v2129
      %v2336 = vmul.f32 %v2327, %v2134
      %v2337 = vmul.f32 %v2331, %v2139
      %v2338 = vmul.f32 %v2331, %v2144
      %v2339 = vmul.f32 %v2331, %v2149
      %v2340 = vmul.f32 %v2331, %v2154
      %v2341 = vmul.f32 %v2331, %v2159
      %v2342 = vsub.f32 %v2314, %v2332
      %v2343 = vsub.f32 %v2315, %v2333
      %v2344 = vsub.f32 %v2316, %v2334
      %v2345 = vsub.f32 %v2317, %v2335
      %v2346 = vsub.f32 %v2318, %v2336
      %v2347 = vsub.f32 %v2319, %v2337
      %v2348 = vsub.f32 %v2320, %v2338
      %v2349 = vsub.f32 %v2321, %v2339
      %v2350 = vsub.f32 %v2322, %v2340
      %v2351 = vsub.f32 %v2323, %v2341
      %v2352 = vmul.f32 %v2342, %v2291
      %v2353 = vmul.f32 %v2343, %v2291
      %v2354 = vmul.f32 %v2344, %v2291
      %v2355 = vmul.f32 %v2345, %v2291
      %v2356 = vmul.f32 %v2346, %v2291
      %v2357 = vmul.f32 %v2347, %v2295
      %v2358 = vmul.f32 %v2348, %v2295
      %v2359 = vmul.f32 %v2349, %v2295
      %v2360 = vmul.f32 %v2350, %v2295
      %v2361 = vmul.f32 %v2351, %v2295
      %v2362 = vlaneseq
      %v2363 = vshrl.u32 %v2362, 7
      %v2364 = vsub.s32 0, %v2363
      %v2365 = vrot.slane %v2004, %v2364
      %v2366 = vlaneseq
      %v2367 = vshrl.u32 %v2366, 7
      %v2368 = vsub.s32 0, %v2367
      %v2369 = vrot.slane %v2009, %v2368
      %v2370 = vmul.f32 %v2365, %v2296
      %v2371 = vmul.f32 %v2365, %v2297
      %v2372 = vmul.f32 %v2365, %v2298
      %v2373 = vmul.f32 %v2365, %v2299
      %v2374 = vmul.f32 %v2365, %v2300
      %v2375 = vmul.f32 %v2369, %v2301
      %v2376 = vmul.f32 %v2369, %v2302
      %v2377 = vmul.f32 %v2369, %v2303
      %v2378 = vmul.f32 %v2369, %v2304
      %v2379 = vmul.f32 %v2369, %v2305
      %v2380 = vsub.f32 %v2003, %v2370
      %v2381 = vsub.f32 %v2004, %v2371
      %v2382 = vsub.f32 %v2005, %v2372
      %v2383 = vsub.f32 %v2006, %v2373
      %v2384 = vsub.f32 %v2007, %v2374
      %v2385 = vsub.f32 %v2008, %v2375
      %v2386 = vsub.f32 %v2009, %v2376
      %v2387 = vsub.f32 %v2010, %v2377
      %v2388 = vsub.f32 %v2011, %v2378
      %v2389 = vsub.f32 %v2012, %v2379
      %v2390 = vlaneseq
      %v2391 = vshrl.u32 %v2390, 7
      %v2392 = vsub.s32 1, %v2391
      %v2393 = vrot.slane %v2004, %v2392
      %v2394 = vlaneseq
      %v2395 = vshrl.u32 %v2394, 7
      %v2396 = vsub.s32 1, %v2395
      %v2397 = vrot.slane %v2009, %v2396
      %v2398 = vmul.f32 %v2393, %v2352
      %v2399 = vmul.f32 %v2393, %v2353
      %v2400 = vmul.f32 %v2393, %v2354
      %v2401 = vmul.f32 %v2393, %v2355
      %v2402 = vmul.f32 %v2393, %v2356
      %v2403 = vmul.f32 %v2397, %v2357
      %v2404 = vmul.f32 %v2397, %v2358
      %v2405 = vmul.f32 %v2397, %v2359
      %v2406 = vmul.f32 %v2397, %v2360
      %v2407 = vmul.f32 %v2397, %v2361
      %v2408 = vsub.f32 %v2380, %v2398
      %v2409 = vsub.f32 %v2381, %v2399
      %v2410 = vsub.f32 %v2382, %v2400
      %v2411 = vsub.f32 %v2383, %v2401
      %v2412 = vsub.f32 %v2384, %v2402
      %v2413 = vsub.f32 %v2385, %v2403
      %v2414 = vsub.f32 %v2386, %v2404
      %v2415 = vsub.f32 %v2387, %v2405
      %v2416 = vsub.f32 %v2388, %v2406
      %v2417 = vsub.f32 %v2389, %v2407
      %v2418 = vsel %vm2020, %v2296, %v2408
      %v2419 = vsel %vm2020, %v2297, %v2409
      %v2420 = vsel %vm2020, %v2298, %v2410
      %v2421 = vsel %vm2020, %v2299, %v2411
      %v2422 = vsel %vm2020, %v2300, %v2412
      %v2423 = vsel %vm2020, %v2301, %v2413
      %v2424 = vsel %vm2020, %v2302, %v2414
      %v2425 = vsel %vm2020, %v2303, %v2415
      %v2426 = vsel %vm2020, %v2304, %v2416
      %v2427 = vsel %vm2020, %v2305, %v2417
      %v2428 = vsel %vm2036, %v2352, %v2418
      %v2429 = vsel %vm2036, %v2353, %v2419
      %v2430 = vsel %vm2036, %v2354, %v2420
      %v2431 = vsel %vm2036, %v2355, %v2421
      %v2432 = vsel %vm2036, %v2356, %v2422
      %v2433 = vsel %vm2036, %v2357, %v2423
      %v2434 = vsel %vm2036, %v2358, %v2424
      %v2435 = vsel %vm2036, %v2359, %v2425
      %v2436 = vsel %vm2036, %v2360, %v2426
      %v2437 = vsel %vm2036, %v2361, %v2427
      %vm2438 = vcmp.eq.s32.totalorder %v93, 10
      %vm2439 = vcmp.eq.s32.totalorder %v93, 11
      %v2440 = vsel %vm2438, 1, 0
      %v2441 = vlaneseq
      %v2442 = vshrl.u32 %v2441, 7
      %v2443 = vsub.s32 0, %v2442
      %v2444 = vrot.slane %v2440, %v2443
      %vm2445 = vcmp.eq.s32.totalorder %v2444, 1
      %v2446 = vsel %vm2445, %v2428, 0.0
      %v2447 = vsel %vm2445, %v2429, 0.0
      %v2448 = vsel %vm2445, %v2430, 0.0
      %v2449 = vsel %vm2445, %v2431, 0.0
      %v2450 = vsel %vm2445, %v2432, 0.0
      %v2451 = vsel %vm2445, %v2433, 0.0
      %v2452 = vsel %vm2445, %v2434, 0.0
      %v2453 = vsel %vm2445, %v2435, 0.0
      %v2454 = vsel %vm2445, %v2436, 0.0
      %v2455 = vsel %vm2445, %v2437, 0.0
      %v2456 = vsel %vm2439, 1, 0
      %v2457 = vlaneseq
      %v2458 = vshrl.u32 %v2457, 7
      %v2459 = vsub.s32 0, %v2458
      %v2460 = vrot.slane %v2456, %v2459
      %vm2461 = vcmp.eq.s32.totalorder %v2460, 1
      %v2462 = vsel %vm2461, %v2428, 0.0
      %v2463 = vsel %vm2461, %v2429, 0.0
      %v2464 = vsel %vm2461, %v2430, 0.0
      %v2465 = vsel %vm2461, %v2431, 0.0
      %v2466 = vsel %vm2461, %v2432, 0.0
      %v2467 = vsel %vm2461, %v2433, 0.0
      %v2468 = vsel %vm2461, %v2434, 0.0
      %v2469 = vsel %vm2461, %v2435, 0.0
      %v2470 = vsel %vm2461, %v2436, 0.0
      %v2471 = vsel %vm2461, %v2437, 0.0
      %2472 = vmatprep.subr.mxu0 0.0
      %2473 = vmatpush1.msra.mxu0 %v77
      %2474 = vmatprep.subr.mxu0 0.0
      %2475 = vmatpush1.msra.mxu0 %v78
      %2476 = vmatprep.subr.mxu0 0.0
      %2477 = vmatpush1.msra.mxu0 %v79
      %2478 = vmatprep.subr.mxu0 0.0
      %2479 = vmatpush1.msra.mxu0 %v80
      %2480 = vmatprep.subr.mxu0 0.0
      %2481 = vmatpush1.msra.mxu0 %v81
      %2482 = vmatprep.subr.mxu0 0.0
      %2483 = vmatpush1.msra.mxu0 %v82
      %2484 = vmatprep.subr.mxu0 0.0
      %2485 = vmatpush1.msra.mxu0 %v83
      %2486 = vmatprep.subr.mxu0 0.0
      %2487 = vmatpush1.msra.mxu0 %v84
      %2488 = vmatprep.subr.mxu0 0.0
      %2489 = vmatpush1.msra.mxu0 %v85
      %2490 = vmatprep.subr.mxu0 0.0
      %2491 = vmatpush1.msra.mxu0 %v86
      %2492 = vmatprep.subr.mxu0 0.0
      %2493 = vmatpush1.msra.mxu0 %v87
      %2494 = vmatprep.subr.mxu0 0.0
      %2495 = vmatpush1.msra.mxu0 %v88
      %2496 = vmatprep.subr.mxu0 0.0
      %2497 = vmatpush1.msra.mxu0 %v89
      %2498 = vmatprep.subr.mxu0 0.0
      %2499 = vmatpush1.msra.mxu0 %v90
      %2500 = vmatprep.subr.mxu0 0.0
      %2501 = vmatpush1.msra.mxu0 %v91
      %2502 = vmatprep.subr.mxu0 0.0
      %2503 = vmatpush1.msra.mxu0 %v92
      %2504 = vmatprep.subr.mxu0 0.0
      %2505 = vmatpush1.msra.mxu0 0.0
      %2506 = vmatprep.subr.mxu0 0.0
      %2507 = vmatpush1.msra.mxu0 0.0
      %2508 = vmatprep.subr.mxu0 0.0
      %2509 = vmatpush1.msra.mxu0 0.0
      %2510 = vmatprep.subr.mxu0 0.0
      %2511 = vmatpush1.msra.mxu0 0.0
      %2512 = vmatprep.subr.mxu0 0.0
      %2513 = vmatpush1.msra.mxu0 0.0
      %2514 = vmatprep.subr.mxu0 0.0
      %2515 = vmatpush1.msra.mxu0 0.0
      %2516 = vmatprep.subr.mxu0 0.0
      %2517 = vmatpush1.msra.mxu0 0.0
      %2518 = vmatprep.subr.mxu0 0.0
      %2519 = vmatpush1.msra.mxu0 0.0
      %2520 = vmatprep.subr.mxu0 0.0
      %2521 = vmatpush1.msra.mxu0 0.0
      %2522 = vmatprep.subr.mxu0 0.0
      %2523 = vmatpush1.msra.mxu0 0.0
      %2524 = vmatprep.subr.mxu0 0.0
      %2525 = vmatpush1.msra.mxu0 0.0
      %2526 = vmatprep.subr.mxu0 0.0
      %2527 = vmatpush1.msra.mxu0 0.0
      %2528 = vmatprep.subr.mxu0 0.0
      %2529 = vmatpush1.msra.mxu0 0.0
      %2530 = vmatprep.subr.mxu0 0.0
      %2531 = vmatpush1.msra.mxu0 0.0
      %2532 = vmatprep.subr.mxu0 0.0
      %2533 = vmatpush1.msra.mxu0 0.0
      %2534 = vmatprep.subr.mxu0 0.0
      %2535 = vmatpush1.msra.mxu0 0.0
      %2536 = vmatprep.mubr.f32.mxu0 0.0
      %2537 = vmatmul.mubr.f32.gmra.mrb[0].mxu0 %v2446
      %v2538 = vpop.f32.mrb[0].mxu0
      %v2539 = vadd.f32 0.0, %v2538
      %v2540 = vpop.f32.mrb[0].mxu0
      %2541 = vmatprep.mubr.f32.mxu0 0.0
      %2542 = vmatmul.mubr.f32.gmra.mrb[0].mxu0 %v2447
      %v2543 = vpop.f32.mrb[0].mxu0
      %v2544 = vadd.f32 0.0, %v2543
      %v2545 = vpop.f32.mrb[0].mxu0
      %2546 = vmatprep.mubr.f32.mxu0 0.0
      %2547 = vmatmul.mubr.f32.gmra.mrb[0].mxu0 %v2448
      %v2548 = vpop.f32.mrb[0].mxu0
      %v2549 = vadd.f32 0.0, %v2548
      %v2550 = vpop.f32.mrb[0].mxu0
      %2551 = vmatprep.mubr.f32.mxu0 0.0
      %2552 = vmatmul.mubr.f32.gmra.mrb[0].mxu0 %v2449
      %v2553 = vpop.f32.mrb[0].mxu0
      %v2554 = vadd.f32 0.0, %v2553
      %v2555 = vpop.f32.mrb[0].mxu0
      %2556 = vmatprep.mubr.f32.mxu0 0.0
      %2557 = vmatmul.mubr.f32.gmra.mrb[0].mxu0 %v2450
      %v2558 = vpop.f32.mrb[0].mxu0
      %v2559 = vadd.f32 0.0, %v2558
      %v2560 = vpop.f32.mrb[0].mxu0
      %2561 = vmatprep.mubr.f32.mxu0 0.0
      %2562 = vmatmul.mubr.f32.gmra.mrb[0].mxu0 %v2451
      %v2563 = vpop.f32.mrb[0].mxu0
      %v2564 = vadd.f32 0.0, %v2563
      %v2565 = vpop.f32.mrb[0].mxu0
      %2566 = vmatprep.mubr.f32.mxu0 0.0
      %2567 = vmatmul.mubr.f32.gmra.mrb[0].mxu0 %v2452
      %v2568 = vpop.f32.mrb[0].mxu0
      %v2569 = vadd.f32 0.0, %v2568
      %v2570 = vpop.f32.mrb[0].mxu0
      %2571 = vmatprep.mubr.f32.mxu0 0.0
      %2572 = vmatmul.mubr.f32.gmra.mrb[0].mxu0 %v2453
      %v2573 = vpop.f32.mrb[0].mxu0
      %v2574 = vadd.f32 0.0, %v2573
      %v2575 = vpop.f32.mrb[0].mxu0
      %2576 = vmatprep.mubr.f32.mxu0 0.0
      %2577 = vmatmul.mubr.f32.gmra.mrb[0].mxu0 %v2454
      %v2578 = vpop.f32.mrb[0].mxu0
      %v2579 = vadd.f32 0.0, %v2578
      %v2580 = vpop.f32.mrb[0].mxu0
      %2581 = vmatprep.mubr.f32.mxu0 0.0
      %2582 = vmatmul.mubr.f32.gmra.mrb[0].mxu0 %v2455
      %v2583 = vpop.f32.mrb[0].mxu0
      %v2584 = vadd.f32 0.0, %v2583
      %v2585 = vpop.f32.mrb[0].mxu0
      %2586 = vmatprep.mubr.f32.mxu0 0.0
      %2587 = vmatmul.mubr.f32.gmra.mrb[0].mxu0 %v2462
      %v2588 = vpop.f32.mrb[0].mxu0
      %v2589 = vadd.f32 0.0, %v2588
      %v2590 = vpop.f32.mrb[0].mxu0
      %2591 = vmatprep.mubr.f32.mxu0 0.0
      %2592 = vmatmul.mubr.f32.gmra.mrb[0].mxu0 %v2463
      %v2593 = vpop.f32.mrb[0].mxu0
      %v2594 = vadd.f32 0.0, %v2593
      %v2595 = vpop.f32.mrb[0].mxu0
      %2596 = vmatprep.mubr.f32.mxu0 0.0
      %2597 = vmatmul.mubr.f32.gmra.mrb[0].mxu0 %v2464
      %v2598 = vpop.f32.mrb[0].mxu0
      %v2599 = vadd.f32 0.0, %v2598
      %v2600 = vpop.f32.mrb[0].mxu0
      %2601 = vmatprep.mubr.f32.mxu0 0.0
      %2602 = vmatmul.mubr.f32.gmra.mrb[0].mxu0 %v2465
      %v2603 = vpop.f32.mrb[0].mxu0
      %v2604 = vadd.f32 0.0, %v2603
      %v2605 = vpop.f32.mrb[0].mxu0
      %2606 = vmatprep.mubr.f32.mxu0 0.0
      %2607 = vmatmul.mubr.f32.gmra.mrb[0].mxu0 %v2466
      %v2608 = vpop.f32.mrb[0].mxu0
      %v2609 = vadd.f32 0.0, %v2608
      %v2610 = vpop.f32.mrb[0].mxu0
      %2611 = vmatprep.mubr.f32.mxu0 0.0
      %2612 = vmatmul.mubr.f32.gmra.mrb[0].mxu0 %v2467
      %v2613 = vpop.f32.mrb[0].mxu0
      %v2614 = vadd.f32 0.0, %v2613
      %v2615 = vpop.f32.mrb[0].mxu0
      %2616 = vmatprep.mubr.f32.mxu0 0.0
      %2617 = vmatmul.mubr.f32.gmra.mrb[0].mxu0 %v2468
      %v2618 = vpop.f32.mrb[0].mxu0
      %v2619 = vadd.f32 0.0, %v2618
      %v2620 = vpop.f32.mrb[0].mxu0
      %2621 = vmatprep.mubr.f32.mxu0 0.0
      %2622 = vmatmul.mubr.f32.gmra.mrb[0].mxu0 %v2469
      %v2623 = vpop.f32.mrb[0].mxu0
      %v2624 = vadd.f32 0.0, %v2623
      %v2625 = vpop.f32.mrb[0].mxu0
      %2626 = vmatprep.mubr.f32.mxu0 0.0
      %2627 = vmatmul.mubr.f32.gmra.mrb[0].mxu0 %v2470
      %v2628 = vpop.f32.mrb[0].mxu0
      %v2629 = vadd.f32 0.0, %v2628
      %v2630 = vpop.f32.mrb[0].mxu0
      %2631 = vmatprep.mubr.f32.mxu0 0.0
      %2632 = vmatmul.mubr.f32.gmra.mrb[0].mxu0 %v2471
      %v2633 = vpop.f32.mrb[0].mxu0
      %v2634 = vadd.f32 0.0, %v2633
      %v2635 = vpop.f32.mrb[0].mxu0
      %2636 = vdwg.mxu0
      %v2639 = vrot.slane %v2594, 1
      %v2640 = vrot.slane %v2619, 1
      %v2643 = vmul.f32 %v2544, %v2639
      %v2644 = vmul.f32 %v2569, %v2640
      %v2645 = vrot.slane %v2594, 7
      %v2646 = vrot.slane %v2619, 7
      %v2649 = vmul.f32 %v2544, %v2645
      %v2650 = vmul.f32 %v2569, %v2646
      %v2653 = vrot.slane %v2649, 1
      %v2654 = vrot.slane %v2650, 1
      %v2657 = vsub.f32 %v2643, %v2653
      %v2658 = vsub.f32 %v2644, %v2654
      %v2659 = vrcp.pop %v2657
      %v2660 = vrcp.pop %v2658
      %v2661 = vmul.f32 %v2657, %v2659
      %v2662 = vmul.f32 %v2658, %v2660
      %v2663 = vsub.f32 2.0, %v2661
      %v2664 = vsub.f32 2.0, %v2662
      %v2665 = vmul.f32 %v2659, %v2663
      %v2666 = vmul.f32 %v2660, %v2664
      %v2667 = vlaneseq
      %v2668 = vshrl.u32 %v2667, 7
      %v2669 = vsub.s32 3, %v2668
      %v2670 = vrot.slane %v2594, %v2669
      %v2671 = vlaneseq
      %v2672 = vshrl.u32 %v2671, 7
      %v2673 = vsub.s32 3, %v2672
      %v2674 = vrot.slane %v2619, %v2673
      %v2675 = vmul.f32 %v2670, %v2539
      %v2676 = vmul.f32 %v2670, %v2544
      %v2677 = vmul.f32 %v2670, %v2549
      %v2678 = vmul.f32 %v2670, %v2554
      %v2679 = vmul.f32 %v2670, %v2559
      %v2680 = vmul.f32 %v2674, %v2564
      %v2681 = vmul.f32 %v2674, %v2569
      %v2682 = vmul.f32 %v2674, %v2574
      %v2683 = vmul.f32 %v2674, %v2579
      %v2684 = vmul.f32 %v2674, %v2584
      %v2685 = vlaneseq
      %v2686 = vshrl.u32 %v2685, 7
      %v2687 = vsub.s32 3, %v2686
      %v2688 = vrot.slane %v2544, %v2687
      %v2689 = vlaneseq
      %v2690 = vshrl.u32 %v2689, 7
      %v2691 = vsub.s32 3, %v2690
      %v2692 = vrot.slane %v2569, %v2691
      %v2693 = vmul.f32 %v2688, %v2589
      %v2694 = vmul.f32 %v2688, %v2594
      %v2695 = vmul.f32 %v2688, %v2599
      %v2696 = vmul.f32 %v2688, %v2604
      %v2697 = vmul.f32 %v2688, %v2609
      %v2698 = vmul.f32 %v2692, %v2614
      %v2699 = vmul.f32 %v2692, %v2619
      %v2700 = vmul.f32 %v2692, %v2624
      %v2701 = vmul.f32 %v2692, %v2629
      %v2702 = vmul.f32 %v2692, %v2634
      %v2703 = vsub.f32 %v2675, %v2693
      %v2704 = vsub.f32 %v2676, %v2694
      %v2705 = vsub.f32 %v2677, %v2695
      %v2706 = vsub.f32 %v2678, %v2696
      %v2707 = vsub.f32 %v2679, %v2697
      %v2708 = vsub.f32 %v2680, %v2698
      %v2709 = vsub.f32 %v2681, %v2699
      %v2710 = vsub.f32 %v2682, %v2700
      %v2711 = vsub.f32 %v2683, %v2701
      %v2712 = vsub.f32 %v2684, %v2702
      %v2713 = vlaneseq
      %v2714 = vshrl.u32 %v2713, 7
      %v2715 = vsub.s32 2, %v2714
      %v2716 = vrot.slane %v2665, %v2715
      %v2717 = vlaneseq
      %v2718 = vshrl.u32 %v2717, 7
      %v2719 = vsub.s32 2, %v2718
      %v2720 = vrot.slane %v2666, %v2719
      %v2721 = vmul.f32 %v2703, %v2716
      %v2722 = vmul.f32 %v2704, %v2716
      %v2723 = vmul.f32 %v2705, %v2716
      %v2724 = vmul.f32 %v2706, %v2716
      %v2725 = vmul.f32 %v2707, %v2716
      %v2726 = vmul.f32 %v2708, %v2720
      %v2727 = vmul.f32 %v2709, %v2720
      %v2728 = vmul.f32 %v2710, %v2720
      %v2729 = vmul.f32 %v2711, %v2720
      %v2730 = vmul.f32 %v2712, %v2720
      %v2731 = vlaneseq
      %v2732 = vshrl.u32 %v2731, 7
      %v2733 = vsub.s32 2, %v2732
      %v2734 = vrot.slane %v2544, %v2733
      %v2735 = vlaneseq
      %v2736 = vshrl.u32 %v2735, 7
      %v2737 = vsub.s32 2, %v2736
      %v2738 = vrot.slane %v2569, %v2737
      %v2739 = vmul.f32 %v2734, %v2589
      %v2740 = vmul.f32 %v2734, %v2594
      %v2741 = vmul.f32 %v2734, %v2599
      %v2742 = vmul.f32 %v2734, %v2604
      %v2743 = vmul.f32 %v2734, %v2609
      %v2744 = vmul.f32 %v2738, %v2614
      %v2745 = vmul.f32 %v2738, %v2619
      %v2746 = vmul.f32 %v2738, %v2624
      %v2747 = vmul.f32 %v2738, %v2629
      %v2748 = vmul.f32 %v2738, %v2634
      %v2749 = vlaneseq
      %v2750 = vshrl.u32 %v2749, 7
      %v2751 = vsub.s32 2, %v2750
      %v2752 = vrot.slane %v2594, %v2751
      %v2753 = vlaneseq
      %v2754 = vshrl.u32 %v2753, 7
      %v2755 = vsub.s32 2, %v2754
      %v2756 = vrot.slane %v2619, %v2755
      %v2757 = vmul.f32 %v2752, %v2539
      %v2758 = vmul.f32 %v2752, %v2544
      %v2759 = vmul.f32 %v2752, %v2549
      %v2760 = vmul.f32 %v2752, %v2554
      %v2761 = vmul.f32 %v2752, %v2559
      %v2762 = vmul.f32 %v2756, %v2564
      %v2763 = vmul.f32 %v2756, %v2569
      %v2764 = vmul.f32 %v2756, %v2574
      %v2765 = vmul.f32 %v2756, %v2579
      %v2766 = vmul.f32 %v2756, %v2584
      %v2767 = vsub.f32 %v2739, %v2757
      %v2768 = vsub.f32 %v2740, %v2758
      %v2769 = vsub.f32 %v2741, %v2759
      %v2770 = vsub.f32 %v2742, %v2760
      %v2771 = vsub.f32 %v2743, %v2761
      %v2772 = vsub.f32 %v2744, %v2762
      %v2773 = vsub.f32 %v2745, %v2763
      %v2774 = vsub.f32 %v2746, %v2764
      %v2775 = vsub.f32 %v2747, %v2765
      %v2776 = vsub.f32 %v2748, %v2766
      %v2777 = vmul.f32 %v2767, %v2716
      %v2778 = vmul.f32 %v2768, %v2716
      %v2779 = vmul.f32 %v2769, %v2716
      %v2780 = vmul.f32 %v2770, %v2716
      %v2781 = vmul.f32 %v2771, %v2716
      %v2782 = vmul.f32 %v2772, %v2720
      %v2783 = vmul.f32 %v2773, %v2720
      %v2784 = vmul.f32 %v2774, %v2720
      %v2785 = vmul.f32 %v2775, %v2720
      %v2786 = vmul.f32 %v2776, %v2720
      %v2787 = vlaneseq
      %v2788 = vshrl.u32 %v2787, 7
      %v2789 = vsub.s32 2, %v2788
      %v2790 = vrot.slane %v2429, %v2789
      %v2791 = vlaneseq
      %v2792 = vshrl.u32 %v2791, 7
      %v2793 = vsub.s32 2, %v2792
      %v2794 = vrot.slane %v2434, %v2793
      %v2795 = vmul.f32 %v2790, %v2721
      %v2796 = vmul.f32 %v2790, %v2722
      %v2797 = vmul.f32 %v2790, %v2723
      %v2798 = vmul.f32 %v2790, %v2724
      %v2799 = vmul.f32 %v2790, %v2725
      %v2800 = vmul.f32 %v2794, %v2726
      %v2801 = vmul.f32 %v2794, %v2727
      %v2802 = vmul.f32 %v2794, %v2728
      %v2803 = vmul.f32 %v2794, %v2729
      %v2804 = vmul.f32 %v2794, %v2730
      %v2805 = vsub.f32 %v2428, %v2795
      %v2806 = vsub.f32 %v2429, %v2796
      %v2807 = vsub.f32 %v2430, %v2797
      %v2808 = vsub.f32 %v2431, %v2798
      %v2809 = vsub.f32 %v2432, %v2799
      %v2810 = vsub.f32 %v2433, %v2800
      %v2811 = vsub.f32 %v2434, %v2801
      %v2812 = vsub.f32 %v2435, %v2802
      %v2813 = vsub.f32 %v2436, %v2803
      %v2814 = vsub.f32 %v2437, %v2804
      %v2815 = vlaneseq
      %v2816 = vshrl.u32 %v2815, 7
      %v2817 = vsub.s32 3, %v2816
      %v2818 = vrot.slane %v2429, %v2817
      %v2819 = vlaneseq
      %v2820 = vshrl.u32 %v2819, 7
      %v2821 = vsub.s32 3, %v2820
      %v2822 = vrot.slane %v2434, %v2821
      %v2823 = vmul.f32 %v2818, %v2777
      %v2824 = vmul.f32 %v2818, %v2778
      %v2825 = vmul.f32 %v2818, %v2779
      %v2826 = vmul.f32 %v2818, %v2780
      %v2827 = vmul.f32 %v2818, %v2781
      %v2828 = vmul.f32 %v2822, %v2782
      %v2829 = vmul.f32 %v2822, %v2783
      %v2830 = vmul.f32 %v2822, %v2784
      %v2831 = vmul.f32 %v2822, %v2785
      %v2832 = vmul.f32 %v2822, %v2786
      %v2833 = vsub.f32 %v2805, %v2823
      %v2834 = vsub.f32 %v2806, %v2824
      %v2835 = vsub.f32 %v2807, %v2825
      %v2836 = vsub.f32 %v2808, %v2826
      %v2837 = vsub.f32 %v2809, %v2827
      %v2838 = vsub.f32 %v2810, %v2828
      %v2839 = vsub.f32 %v2811, %v2829
      %v2840 = vsub.f32 %v2812, %v2830
      %v2841 = vsub.f32 %v2813, %v2831
      %v2842 = vsub.f32 %v2814, %v2832
      %v2843 = vsel %vm2445, %v2721, %v2833
      %v2844 = vsel %vm2445, %v2722, %v2834
      %v2845 = vsel %vm2445, %v2723, %v2835
      %v2846 = vsel %vm2445, %v2724, %v2836
      %v2847 = vsel %vm2445, %v2725, %v2837
      %v2848 = vsel %vm2445, %v2726, %v2838
      %v2849 = vsel %vm2445, %v2727, %v2839
      %v2850 = vsel %vm2445, %v2728, %v2840
      %v2851 = vsel %vm2445, %v2729, %v2841
      %v2852 = vsel %vm2445, %v2730, %v2842
      %v2853 = vsel %vm2461, %v2777, %v2843
      %v2854 = vsel %vm2461, %v2778, %v2844
      %v2855 = vsel %vm2461, %v2779, %v2845
      %v2856 = vsel %vm2461, %v2780, %v2846
      %v2857 = vsel %vm2461, %v2781, %v2847
      %v2858 = vsel %vm2461, %v2782, %v2848
      %v2859 = vsel %vm2461, %v2783, %v2849
      %v2860 = vsel %vm2461, %v2784, %v2850
      %v2861 = vsel %vm2461, %v2785, %v2851
      %v2862 = vsel %vm2461, %v2786, %v2852
      %vm2863 = vcmp.eq.s32.totalorder %v93, 12
      %vm2864 = vcmp.eq.s32.totalorder %v93, 13
      %v2865 = vsel %vm2863, 1, 0
      %v2866 = vlaneseq
      %v2867 = vshrl.u32 %v2866, 7
      %v2868 = vsub.s32 0, %v2867
      %v2869 = vrot.slane %v2865, %v2868
      %vm2870 = vcmp.eq.s32.totalorder %v2869, 1
      %v2871 = vsel %vm2870, %v2853, 0.0
      %v2872 = vsel %vm2870, %v2854, 0.0
      %v2873 = vsel %vm2870, %v2855, 0.0
      %v2874 = vsel %vm2870, %v2856, 0.0
      %v2875 = vsel %vm2870, %v2857, 0.0
      %v2876 = vsel %vm2870, %v2858, 0.0
      %v2877 = vsel %vm2870, %v2859, 0.0
      %v2878 = vsel %vm2870, %v2860, 0.0
      %v2879 = vsel %vm2870, %v2861, 0.0
      %v2880 = vsel %vm2870, %v2862, 0.0
      %v2881 = vsel %vm2864, 1, 0
      %v2882 = vlaneseq
      %v2883 = vshrl.u32 %v2882, 7
      %v2884 = vsub.s32 0, %v2883
      %v2885 = vrot.slane %v2881, %v2884
      %vm2886 = vcmp.eq.s32.totalorder %v2885, 1
      %v2887 = vsel %vm2886, %v2853, 0.0
      %v2888 = vsel %vm2886, %v2854, 0.0
      %v2889 = vsel %vm2886, %v2855, 0.0
      %v2890 = vsel %vm2886, %v2856, 0.0
      %v2891 = vsel %vm2886, %v2857, 0.0
      %v2892 = vsel %vm2886, %v2858, 0.0
      %v2893 = vsel %vm2886, %v2859, 0.0
      %v2894 = vsel %vm2886, %v2860, 0.0
      %v2895 = vsel %vm2886, %v2861, 0.0
      %v2896 = vsel %vm2886, %v2862, 0.0
      %2897 = vmatprep.subr.mxu0 0.0
      %2898 = vmatpush1.msra.mxu0 %v77
      %2899 = vmatprep.subr.mxu0 0.0
      %2900 = vmatpush1.msra.mxu0 %v78
      %2901 = vmatprep.subr.mxu0 0.0
      %2902 = vmatpush1.msra.mxu0 %v79
      %2903 = vmatprep.subr.mxu0 0.0
      %2904 = vmatpush1.msra.mxu0 %v80
      %2905 = vmatprep.subr.mxu0 0.0
      %2906 = vmatpush1.msra.mxu0 %v81
      %2907 = vmatprep.subr.mxu0 0.0
      %2908 = vmatpush1.msra.mxu0 %v82
      %2909 = vmatprep.subr.mxu0 0.0
      %2910 = vmatpush1.msra.mxu0 %v83
      %2911 = vmatprep.subr.mxu0 0.0
      %2912 = vmatpush1.msra.mxu0 %v84
      %2913 = vmatprep.subr.mxu0 0.0
      %2914 = vmatpush1.msra.mxu0 %v85
      %2915 = vmatprep.subr.mxu0 0.0
      %2916 = vmatpush1.msra.mxu0 %v86
      %2917 = vmatprep.subr.mxu0 0.0
      %2918 = vmatpush1.msra.mxu0 %v87
      %2919 = vmatprep.subr.mxu0 0.0
      %2920 = vmatpush1.msra.mxu0 %v88
      %2921 = vmatprep.subr.mxu0 0.0
      %2922 = vmatpush1.msra.mxu0 %v89
      %2923 = vmatprep.subr.mxu0 0.0
      %2924 = vmatpush1.msra.mxu0 %v90
      %2925 = vmatprep.subr.mxu0 0.0
      %2926 = vmatpush1.msra.mxu0 %v91
      %2927 = vmatprep.subr.mxu0 0.0
      %2928 = vmatpush1.msra.mxu0 %v92
      %2929 = vmatprep.subr.mxu0 0.0
      %2930 = vmatpush1.msra.mxu0 0.0
      %2931 = vmatprep.subr.mxu0 0.0
      %2932 = vmatpush1.msra.mxu0 0.0
      %2933 = vmatprep.subr.mxu0 0.0
      %2934 = vmatpush1.msra.mxu0 0.0
      %2935 = vmatprep.subr.mxu0 0.0
      %2936 = vmatpush1.msra.mxu0 0.0
      %2937 = vmatprep.subr.mxu0 0.0
      %2938 = vmatpush1.msra.mxu0 0.0
      %2939 = vmatprep.subr.mxu0 0.0
      %2940 = vmatpush1.msra.mxu0 0.0
      %2941 = vmatprep.subr.mxu0 0.0
      %2942 = vmatpush1.msra.mxu0 0.0
      %2943 = vmatprep.subr.mxu0 0.0
      %2944 = vmatpush1.msra.mxu0 0.0
      %2945 = vmatprep.subr.mxu0 0.0
      %2946 = vmatpush1.msra.mxu0 0.0
      %2947 = vmatprep.subr.mxu0 0.0
      %2948 = vmatpush1.msra.mxu0 0.0
      %2949 = vmatprep.subr.mxu0 0.0
      %2950 = vmatpush1.msra.mxu0 0.0
      %2951 = vmatprep.subr.mxu0 0.0
      %2952 = vmatpush1.msra.mxu0 0.0
      %2953 = vmatprep.subr.mxu0 0.0
      %2954 = vmatpush1.msra.mxu0 0.0
      %2955 = vmatprep.subr.mxu0 0.0
      %2956 = vmatpush1.msra.mxu0 0.0
      %2957 = vmatprep.subr.mxu0 0.0
      %2958 = vmatpush1.msra.mxu0 0.0
      %2959 = vmatprep.subr.mxu0 0.0
      %2960 = vmatpush1.msra.mxu0 0.0
      %2961 = vmatprep.mubr.f32.mxu0 0.0
      %2962 = vmatmul.mubr.f32.gmra.mrb[0].mxu0 %v2871
      %v2963 = vpop.f32.mrb[0].mxu0
      %v2964 = vadd.f32 0.0, %v2963
      %v2965 = vpop.f32.mrb[0].mxu0
      %2966 = vmatprep.mubr.f32.mxu0 0.0
      %2967 = vmatmul.mubr.f32.gmra.mrb[0].mxu0 %v2872
      %v2968 = vpop.f32.mrb[0].mxu0
      %v2969 = vadd.f32 0.0, %v2968
      %v2970 = vpop.f32.mrb[0].mxu0
      %2971 = vmatprep.mubr.f32.mxu0 0.0
      %2972 = vmatmul.mubr.f32.gmra.mrb[0].mxu0 %v2873
      %v2973 = vpop.f32.mrb[0].mxu0
      %v2974 = vadd.f32 0.0, %v2973
      %v2975 = vpop.f32.mrb[0].mxu0
      %2976 = vmatprep.mubr.f32.mxu0 0.0
      %2977 = vmatmul.mubr.f32.gmra.mrb[0].mxu0 %v2874
      %v2978 = vpop.f32.mrb[0].mxu0
      %v2979 = vadd.f32 0.0, %v2978
      %v2980 = vpop.f32.mrb[0].mxu0
      %2981 = vmatprep.mubr.f32.mxu0 0.0
      %2982 = vmatmul.mubr.f32.gmra.mrb[0].mxu0 %v2875
      %v2983 = vpop.f32.mrb[0].mxu0
      %v2984 = vadd.f32 0.0, %v2983
      %v2985 = vpop.f32.mrb[0].mxu0
      %2986 = vmatprep.mubr.f32.mxu0 0.0
      %2987 = vmatmul.mubr.f32.gmra.mrb[0].mxu0 %v2876
      %v2988 = vpop.f32.mrb[0].mxu0
      %v2989 = vadd.f32 0.0, %v2988
      %v2990 = vpop.f32.mrb[0].mxu0
      %2991 = vmatprep.mubr.f32.mxu0 0.0
      %2992 = vmatmul.mubr.f32.gmra.mrb[0].mxu0 %v2877
      %v2993 = vpop.f32.mrb[0].mxu0
      %v2994 = vadd.f32 0.0, %v2993
      %v2995 = vpop.f32.mrb[0].mxu0
      %2996 = vmatprep.mubr.f32.mxu0 0.0
      %2997 = vmatmul.mubr.f32.gmra.mrb[0].mxu0 %v2878
      %v2998 = vpop.f32.mrb[0].mxu0
      %v2999 = vadd.f32 0.0, %v2998
      %v3000 = vpop.f32.mrb[0].mxu0
      %3001 = vmatprep.mubr.f32.mxu0 0.0
      %3002 = vmatmul.mubr.f32.gmra.mrb[0].mxu0 %v2879
      %v3003 = vpop.f32.mrb[0].mxu0
      %v3004 = vadd.f32 0.0, %v3003
      %v3005 = vpop.f32.mrb[0].mxu0
      %3006 = vmatprep.mubr.f32.mxu0 0.0
      %3007 = vmatmul.mubr.f32.gmra.mrb[0].mxu0 %v2880
      %v3008 = vpop.f32.mrb[0].mxu0
      %v3009 = vadd.f32 0.0, %v3008
      %v3010 = vpop.f32.mrb[0].mxu0
      %3011 = vmatprep.mubr.f32.mxu0 0.0
      %3012 = vmatmul.mubr.f32.gmra.mrb[0].mxu0 %v2887
      %v3013 = vpop.f32.mrb[0].mxu0
      %v3014 = vadd.f32 0.0, %v3013
      %v3015 = vpop.f32.mrb[0].mxu0
      %3016 = vmatprep.mubr.f32.mxu0 0.0
      %3017 = vmatmul.mubr.f32.gmra.mrb[0].mxu0 %v2888
      %v3018 = vpop.f32.mrb[0].mxu0
      %v3019 = vadd.f32 0.0, %v3018
      %v3020 = vpop.f32.mrb[0].mxu0
      %3021 = vmatprep.mubr.f32.mxu0 0.0
      %3022 = vmatmul.mubr.f32.gmra.mrb[0].mxu0 %v2889
      %v3023 = vpop.f32.mrb[0].mxu0
      %v3024 = vadd.f32 0.0, %v3023
      %v3025 = vpop.f32.mrb[0].mxu0
      %3026 = vmatprep.mubr.f32.mxu0 0.0
      %3027 = vmatmul.mubr.f32.gmra.mrb[0].mxu0 %v2890
      %v3028 = vpop.f32.mrb[0].mxu0
      %v3029 = vadd.f32 0.0, %v3028
      %v3030 = vpop.f32.mrb[0].mxu0
      %3031 = vmatprep.mubr.f32.mxu0 0.0
      %3032 = vmatmul.mubr.f32.gmra.mrb[0].mxu0 %v2891
      %v3033 = vpop.f32.mrb[0].mxu0
      %v3034 = vadd.f32 0.0, %v3033
      %v3035 = vpop.f32.mrb[0].mxu0
      %3036 = vmatprep.mubr.f32.mxu0 0.0
      %3037 = vmatmul.mubr.f32.gmra.mrb[0].mxu0 %v2892
      %v3038 = vpop.f32.mrb[0].mxu0
      %v3039 = vadd.f32 0.0, %v3038
      %v3040 = vpop.f32.mrb[0].mxu0
      %3041 = vmatprep.mubr.f32.mxu0 0.0
      %3042 = vmatmul.mubr.f32.gmra.mrb[0].mxu0 %v2893
      %v3043 = vpop.f32.mrb[0].mxu0
      %v3044 = vadd.f32 0.0, %v3043
      %v3045 = vpop.f32.mrb[0].mxu0
      %3046 = vmatprep.mubr.f32.mxu0 0.0
      %3047 = vmatmul.mubr.f32.gmra.mrb[0].mxu0 %v2894
      %v3048 = vpop.f32.mrb[0].mxu0
      %v3049 = vadd.f32 0.0, %v3048
      %v3050 = vpop.f32.mrb[0].mxu0
      %3051 = vmatprep.mubr.f32.mxu0 0.0
      %3052 = vmatmul.mubr.f32.gmra.mrb[0].mxu0 %v2895
      %v3053 = vpop.f32.mrb[0].mxu0
      %v3054 = vadd.f32 0.0, %v3053
      %v3055 = vpop.f32.mrb[0].mxu0
      %3056 = vmatprep.mubr.f32.mxu0 0.0
      %3057 = vmatmul.mubr.f32.gmra.mrb[0].mxu0 %v2896
      %v3058 = vpop.f32.mrb[0].mxu0
      %v3059 = vadd.f32 0.0, %v3058
      %v3060 = vpop.f32.mrb[0].mxu0
      %3061 = vdwg.mxu0
      %v3064 = vrot.slane %v3019, 1
      %v3065 = vrot.slane %v3044, 1
      %v3068 = vmul.f32 %v2969, %v3064
      %v3069 = vmul.f32 %v2994, %v3065
      %v3070 = vrot.slane %v3019, 7
      %v3071 = vrot.slane %v3044, 7
      %v3074 = vmul.f32 %v2969, %v3070
      %v3075 = vmul.f32 %v2994, %v3071
      %v3078 = vrot.slane %v3074, 1
      %v3079 = vrot.slane %v3075, 1
      %v3082 = vsub.f32 %v3068, %v3078
      %v3083 = vsub.f32 %v3069, %v3079
      %v3084 = vrcp.pop %v3082
      %v3085 = vrcp.pop %v3083
      %v3086 = vmul.f32 %v3082, %v3084
      %v3087 = vmul.f32 %v3083, %v3085
      %v3088 = vsub.f32 2.0, %v3086
      %v3089 = vsub.f32 2.0, %v3087
      %v3090 = vmul.f32 %v3084, %v3088
      %v3091 = vmul.f32 %v3085, %v3089
      %v3092 = vlaneseq
      %v3093 = vshrl.u32 %v3092, 7
      %v3094 = vsub.s32 5, %v3093
      %v3095 = vrot.slane %v3019, %v3094
      %v3096 = vlaneseq
      %v3097 = vshrl.u32 %v3096, 7
      %v3098 = vsub.s32 5, %v3097
      %v3099 = vrot.slane %v3044, %v3098
      %v3100 = vmul.f32 %v3095, %v2964
      %v3101 = vmul.f32 %v3095, %v2969
      %v3102 = vmul.f32 %v3095, %v2974
      %v3103 = vmul.f32 %v3095, %v2979
      %v3104 = vmul.f32 %v3095, %v2984
      %v3105 = vmul.f32 %v3099, %v2989
      %v3106 = vmul.f32 %v3099, %v2994
      %v3107 = vmul.f32 %v3099, %v2999
      %v3108 = vmul.f32 %v3099, %v3004
      %v3109 = vmul.f32 %v3099, %v3009
      %v3110 = vlaneseq
      %v3111 = vshrl.u32 %v3110, 7
      %v3112 = vsub.s32 5, %v3111
      %v3113 = vrot.slane %v2969, %v3112
      %v3114 = vlaneseq
      %v3115 = vshrl.u32 %v3114, 7
      %v3116 = vsub.s32 5, %v3115
      %v3117 = vrot.slane %v2994, %v3116
      %v3118 = vmul.f32 %v3113, %v3014
      %v3119 = vmul.f32 %v3113, %v3019
      %v3120 = vmul.f32 %v3113, %v3024
      %v3121 = vmul.f32 %v3113, %v3029
      %v3122 = vmul.f32 %v3113, %v3034
      %v3123 = vmul.f32 %v3117, %v3039
      %v3124 = vmul.f32 %v3117, %v3044
      %v3125 = vmul.f32 %v3117, %v3049
      %v3126 = vmul.f32 %v3117, %v3054
      %v3127 = vmul.f32 %v3117, %v3059
      %v3128 = vsub.f32 %v3100, %v3118
      %v3129 = vsub.f32 %v3101, %v3119
      %v3130 = vsub.f32 %v3102, %v3120
      %v3131 = vsub.f32 %v3103, %v3121
      %v3132 = vsub.f32 %v3104, %v3122
      %v3133 = vsub.f32 %v3105, %v3123
      %v3134 = vsub.f32 %v3106, %v3124
      %v3135 = vsub.f32 %v3107, %v3125
      %v3136 = vsub.f32 %v3108, %v3126
      %v3137 = vsub.f32 %v3109, %v3127
      %v3138 = vlaneseq
      %v3139 = vshrl.u32 %v3138, 7
      %v3140 = vsub.s32 4, %v3139
      %v3141 = vrot.slane %v3090, %v3140
      %v3142 = vlaneseq
      %v3143 = vshrl.u32 %v3142, 7
      %v3144 = vsub.s32 4, %v3143
      %v3145 = vrot.slane %v3091, %v3144
      %v3146 = vmul.f32 %v3128, %v3141
      %v3147 = vmul.f32 %v3129, %v3141
      %v3148 = vmul.f32 %v3130, %v3141
      %v3149 = vmul.f32 %v3131, %v3141
      %v3150 = vmul.f32 %v3132, %v3141
      %v3151 = vmul.f32 %v3133, %v3145
      %v3152 = vmul.f32 %v3134, %v3145
      %v3153 = vmul.f32 %v3135, %v3145
      %v3154 = vmul.f32 %v3136, %v3145
      %v3155 = vmul.f32 %v3137, %v3145
      %v3156 = vlaneseq
      %v3157 = vshrl.u32 %v3156, 7
      %v3158 = vsub.s32 4, %v3157
      %v3159 = vrot.slane %v2969, %v3158
      %v3160 = vlaneseq
      %v3161 = vshrl.u32 %v3160, 7
      %v3162 = vsub.s32 4, %v3161
      %v3163 = vrot.slane %v2994, %v3162
      %v3164 = vmul.f32 %v3159, %v3014
      %v3165 = vmul.f32 %v3159, %v3019
      %v3166 = vmul.f32 %v3159, %v3024
      %v3167 = vmul.f32 %v3159, %v3029
      %v3168 = vmul.f32 %v3159, %v3034
      %v3169 = vmul.f32 %v3163, %v3039
      %v3170 = vmul.f32 %v3163, %v3044
      %v3171 = vmul.f32 %v3163, %v3049
      %v3172 = vmul.f32 %v3163, %v3054
      %v3173 = vmul.f32 %v3163, %v3059
      %v3174 = vlaneseq
      %v3175 = vshrl.u32 %v3174, 7
      %v3176 = vsub.s32 4, %v3175
      %v3177 = vrot.slane %v3019, %v3176
      %v3178 = vlaneseq
      %v3179 = vshrl.u32 %v3178, 7
      %v3180 = vsub.s32 4, %v3179
      %v3181 = vrot.slane %v3044, %v3180
      %v3182 = vmul.f32 %v3177, %v2964
      %v3183 = vmul.f32 %v3177, %v2969
      %v3184 = vmul.f32 %v3177, %v2974
      %v3185 = vmul.f32 %v3177, %v2979
      %v3186 = vmul.f32 %v3177, %v2984
      %v3187 = vmul.f32 %v3181, %v2989
      %v3188 = vmul.f32 %v3181, %v2994
      %v3189 = vmul.f32 %v3181, %v2999
      %v3190 = vmul.f32 %v3181, %v3004
      %v3191 = vmul.f32 %v3181, %v3009
      %v3192 = vsub.f32 %v3164, %v3182
      %v3193 = vsub.f32 %v3165, %v3183
      %v3194 = vsub.f32 %v3166, %v3184
      %v3195 = vsub.f32 %v3167, %v3185
      %v3196 = vsub.f32 %v3168, %v3186
      %v3197 = vsub.f32 %v3169, %v3187
      %v3198 = vsub.f32 %v3170, %v3188
      %v3199 = vsub.f32 %v3171, %v3189
      %v3200 = vsub.f32 %v3172, %v3190
      %v3201 = vsub.f32 %v3173, %v3191
      %v3202 = vmul.f32 %v3192, %v3141
      %v3203 = vmul.f32 %v3193, %v3141
      %v3204 = vmul.f32 %v3194, %v3141
      %v3205 = vmul.f32 %v3195, %v3141
      %v3206 = vmul.f32 %v3196, %v3141
      %v3207 = vmul.f32 %v3197, %v3145
      %v3208 = vmul.f32 %v3198, %v3145
      %v3209 = vmul.f32 %v3199, %v3145
      %v3210 = vmul.f32 %v3200, %v3145
      %v3211 = vmul.f32 %v3201, %v3145
      %v3212 = vlaneseq
      %v3213 = vshrl.u32 %v3212, 7
      %v3214 = vsub.s32 4, %v3213
      %v3215 = vrot.slane %v2854, %v3214
      %v3216 = vlaneseq
      %v3217 = vshrl.u32 %v3216, 7
      %v3218 = vsub.s32 4, %v3217
      %v3219 = vrot.slane %v2859, %v3218
      %v3220 = vmul.f32 %v3215, %v3146
      %v3221 = vmul.f32 %v3215, %v3147
      %v3222 = vmul.f32 %v3215, %v3148
      %v3223 = vmul.f32 %v3215, %v3149
      %v3224 = vmul.f32 %v3215, %v3150
      %v3225 = vmul.f32 %v3219, %v3151
      %v3226 = vmul.f32 %v3219, %v3152
      %v3227 = vmul.f32 %v3219, %v3153
      %v3228 = vmul.f32 %v3219, %v3154
      %v3229 = vmul.f32 %v3219, %v3155
      %v3230 = vsub.f32 %v2853, %v3220
      %v3231 = vsub.f32 %v2854, %v3221
      %v3232 = vsub.f32 %v2855, %v3222
      %v3233 = vsub.f32 %v2856, %v3223
      %v3234 = vsub.f32 %v2857, %v3224
      %v3235 = vsub.f32 %v2858, %v3225
      %v3236 = vsub.f32 %v2859, %v3226
      %v3237 = vsub.f32 %v2860, %v3227
      %v3238 = vsub.f32 %v2861, %v3228
      %v3239 = vsub.f32 %v2862, %v3229
      %v3240 = vlaneseq
      %v3241 = vshrl.u32 %v3240, 7
      %v3242 = vsub.s32 5, %v3241
      %v3243 = vrot.slane %v2854, %v3242
      %v3244 = vlaneseq
      %v3245 = vshrl.u32 %v3244, 7
      %v3246 = vsub.s32 5, %v3245
      %v3247 = vrot.slane %v2859, %v3246
      %v3248 = vmul.f32 %v3243, %v3202
      %v3249 = vmul.f32 %v3243, %v3203
      %v3250 = vmul.f32 %v3243, %v3204
      %v3251 = vmul.f32 %v3243, %v3205
      %v3252 = vmul.f32 %v3243, %v3206
      %v3253 = vmul.f32 %v3247, %v3207
      %v3254 = vmul.f32 %v3247, %v3208
      %v3255 = vmul.f32 %v3247, %v3209
      %v3256 = vmul.f32 %v3247, %v3210
      %v3257 = vmul.f32 %v3247, %v3211
      %v3258 = vsub.f32 %v3230, %v3248
      %v3259 = vsub.f32 %v3231, %v3249
      %v3260 = vsub.f32 %v3232, %v3250
      %v3261 = vsub.f32 %v3233, %v3251
      %v3262 = vsub.f32 %v3234, %v3252
      %v3263 = vsub.f32 %v3235, %v3253
      %v3264 = vsub.f32 %v3236, %v3254
      %v3265 = vsub.f32 %v3237, %v3255
      %v3266 = vsub.f32 %v3238, %v3256
      %v3267 = vsub.f32 %v3239, %v3257
      %v3268 = vsel %vm2870, %v3146, %v3258
      %v3269 = vsel %vm2870, %v3147, %v3259
      %v3270 = vsel %vm2870, %v3148, %v3260
      %v3271 = vsel %vm2870, %v3149, %v3261
      %v3272 = vsel %vm2870, %v3150, %v3262
      %v3273 = vsel %vm2870, %v3151, %v3263
      %v3274 = vsel %vm2870, %v3152, %v3264
      %v3275 = vsel %vm2870, %v3153, %v3265
      %v3276 = vsel %vm2870, %v3154, %v3266
      %v3277 = vsel %vm2870, %v3155, %v3267
      %v3278 = vsel %vm2886, %v3202, %v3268
      %v3279 = vsel %vm2886, %v3203, %v3269
      %v3280 = vsel %vm2886, %v3204, %v3270
      %v3281 = vsel %vm2886, %v3205, %v3271
      %v3282 = vsel %vm2886, %v3206, %v3272
      %v3283 = vsel %vm2886, %v3207, %v3273
      %v3284 = vsel %vm2886, %v3208, %v3274
      %v3285 = vsel %vm2886, %v3209, %v3275
      %v3286 = vsel %vm2886, %v3210, %v3276
      %v3287 = vsel %vm2886, %v3211, %v3277
      %vm3288 = vcmp.eq.s32.totalorder %v93, 14
      %vm3289 = vcmp.eq.s32.totalorder %v93, 15
      %v3290 = vsel %vm3288, 1, 0
      %v3291 = vlaneseq
      %v3292 = vshrl.u32 %v3291, 7
      %v3293 = vsub.s32 0, %v3292
      %v3294 = vrot.slane %v3290, %v3293
      %vm3295 = vcmp.eq.s32.totalorder %v3294, 1
      %v3296 = vsel %vm3295, %v3278, 0.0
      %v3297 = vsel %vm3295, %v3279, 0.0
      %v3298 = vsel %vm3295, %v3280, 0.0
      %v3299 = vsel %vm3295, %v3281, 0.0
      %v3300 = vsel %vm3295, %v3282, 0.0
      %v3301 = vsel %vm3295, %v3283, 0.0
      %v3302 = vsel %vm3295, %v3284, 0.0
      %v3303 = vsel %vm3295, %v3285, 0.0
      %v3304 = vsel %vm3295, %v3286, 0.0
      %v3305 = vsel %vm3295, %v3287, 0.0
      %v3306 = vsel %vm3289, 1, 0
      %v3307 = vlaneseq
      %v3308 = vshrl.u32 %v3307, 7
      %v3309 = vsub.s32 0, %v3308
      %v3310 = vrot.slane %v3306, %v3309
      %vm3311 = vcmp.eq.s32.totalorder %v3310, 1
      %v3312 = vsel %vm3311, %v3278, 0.0
      %v3313 = vsel %vm3311, %v3279, 0.0
      %v3314 = vsel %vm3311, %v3280, 0.0
      %v3315 = vsel %vm3311, %v3281, 0.0
      %v3316 = vsel %vm3311, %v3282, 0.0
      %v3317 = vsel %vm3311, %v3283, 0.0
      %v3318 = vsel %vm3311, %v3284, 0.0
      %v3319 = vsel %vm3311, %v3285, 0.0
      %v3320 = vsel %vm3311, %v3286, 0.0
      %v3321 = vsel %vm3311, %v3287, 0.0
      %3322 = vmatprep.subr.mxu0 0.0
      %3323 = vmatpush1.msra.mxu0 %v77
      %3324 = vmatprep.subr.mxu0 0.0
      %3325 = vmatpush1.msra.mxu0 %v78
      %3326 = vmatprep.subr.mxu0 0.0
      %3327 = vmatpush1.msra.mxu0 %v79
      %3328 = vmatprep.subr.mxu0 0.0
      %3329 = vmatpush1.msra.mxu0 %v80
      %3330 = vmatprep.subr.mxu0 0.0
      %3331 = vmatpush1.msra.mxu0 %v81
      %3332 = vmatprep.subr.mxu0 0.0
      %3333 = vmatpush1.msra.mxu0 %v82
      %3334 = vmatprep.subr.mxu0 0.0
      %3335 = vmatpush1.msra.mxu0 %v83
      %3336 = vmatprep.subr.mxu0 0.0
      %3337 = vmatpush1.msra.mxu0 %v84
      %3338 = vmatprep.subr.mxu0 0.0
      %3339 = vmatpush1.msra.mxu0 %v85
      %3340 = vmatprep.subr.mxu0 0.0
      %3341 = vmatpush1.msra.mxu0 %v86
      %3342 = vmatprep.subr.mxu0 0.0
      %3343 = vmatpush1.msra.mxu0 %v87
      %3344 = vmatprep.subr.mxu0 0.0
      %3345 = vmatpush1.msra.mxu0 %v88
      %3346 = vmatprep.subr.mxu0 0.0
      %3347 = vmatpush1.msra.mxu0 %v89
      %3348 = vmatprep.subr.mxu0 0.0
      %3349 = vmatpush1.msra.mxu0 %v90
      %3350 = vmatprep.subr.mxu0 0.0
      %3351 = vmatpush1.msra.mxu0 %v91
      %3352 = vmatprep.subr.mxu0 0.0
      %3353 = vmatpush1.msra.mxu0 %v92
      %3354 = vmatprep.subr.mxu0 0.0
      %3355 = vmatpush1.msra.mxu0 0.0
      %3356 = vmatprep.subr.mxu0 0.0
      %3357 = vmatpush1.msra.mxu0 0.0
      %3358 = vmatprep.subr.mxu0 0.0
      %3359 = vmatpush1.msra.mxu0 0.0
      %3360 = vmatprep.subr.mxu0 0.0
      %3361 = vmatpush1.msra.mxu0 0.0
      %3362 = vmatprep.subr.mxu0 0.0
      %3363 = vmatpush1.msra.mxu0 0.0
      %3364 = vmatprep.subr.mxu0 0.0
      %3365 = vmatpush1.msra.mxu0 0.0
      %3366 = vmatprep.subr.mxu0 0.0
      %3367 = vmatpush1.msra.mxu0 0.0
      %3368 = vmatprep.subr.mxu0 0.0
      %3369 = vmatpush1.msra.mxu0 0.0
      %3370 = vmatprep.subr.mxu0 0.0
      %3371 = vmatpush1.msra.mxu0 0.0
      %3372 = vmatprep.subr.mxu0 0.0
      %3373 = vmatpush1.msra.mxu0 0.0
      %3374 = vmatprep.subr.mxu0 0.0
      %3375 = vmatpush1.msra.mxu0 0.0
      %3376 = vmatprep.subr.mxu0 0.0
      %3377 = vmatpush1.msra.mxu0 0.0
      %3378 = vmatprep.subr.mxu0 0.0
      %3379 = vmatpush1.msra.mxu0 0.0
      %3380 = vmatprep.subr.mxu0 0.0
      %3381 = vmatpush1.msra.mxu0 0.0
      %3382 = vmatprep.subr.mxu0 0.0
      %3383 = vmatpush1.msra.mxu0 0.0
      %3384 = vmatprep.subr.mxu0 0.0
      %3385 = vmatpush1.msra.mxu0 0.0
      %3386 = vmatprep.mubr.f32.mxu0 0.0
      %3387 = vmatmul.mubr.f32.gmra.mrb[0].mxu0 %v3296
      %v3388 = vpop.f32.mrb[0].mxu0
      %v3389 = vadd.f32 0.0, %v3388
      %v3390 = vpop.f32.mrb[0].mxu0
      %3391 = vmatprep.mubr.f32.mxu0 0.0
      %3392 = vmatmul.mubr.f32.gmra.mrb[0].mxu0 %v3297
      %v3393 = vpop.f32.mrb[0].mxu0
      %v3394 = vadd.f32 0.0, %v3393
      %v3395 = vpop.f32.mrb[0].mxu0
      %3396 = vmatprep.mubr.f32.mxu0 0.0
      %3397 = vmatmul.mubr.f32.gmra.mrb[0].mxu0 %v3298
      %v3398 = vpop.f32.mrb[0].mxu0
      %v3399 = vadd.f32 0.0, %v3398
      %v3400 = vpop.f32.mrb[0].mxu0
      %3401 = vmatprep.mubr.f32.mxu0 0.0
      %3402 = vmatmul.mubr.f32.gmra.mrb[0].mxu0 %v3299
      %v3403 = vpop.f32.mrb[0].mxu0
      %v3404 = vadd.f32 0.0, %v3403
      %v3405 = vpop.f32.mrb[0].mxu0
      %3406 = vmatprep.mubr.f32.mxu0 0.0
      %3407 = vmatmul.mubr.f32.gmra.mrb[0].mxu0 %v3300
      %v3408 = vpop.f32.mrb[0].mxu0
      %v3409 = vadd.f32 0.0, %v3408
      %v3410 = vpop.f32.mrb[0].mxu0
      %3411 = vmatprep.mubr.f32.mxu0 0.0
      %3412 = vmatmul.mubr.f32.gmra.mrb[0].mxu0 %v3301
      %v3413 = vpop.f32.mrb[0].mxu0
      %v3414 = vadd.f32 0.0, %v3413
      %v3415 = vpop.f32.mrb[0].mxu0
      %3416 = vmatprep.mubr.f32.mxu0 0.0
      %3417 = vmatmul.mubr.f32.gmra.mrb[0].mxu0 %v3302
      %v3418 = vpop.f32.mrb[0].mxu0
      %v3419 = vadd.f32 0.0, %v3418
      %v3420 = vpop.f32.mrb[0].mxu0
      %3421 = vmatprep.mubr.f32.mxu0 0.0
      %3422 = vmatmul.mubr.f32.gmra.mrb[0].mxu0 %v3303
      %v3423 = vpop.f32.mrb[0].mxu0
      %v3424 = vadd.f32 0.0, %v3423
      %v3425 = vpop.f32.mrb[0].mxu0
      %3426 = vmatprep.mubr.f32.mxu0 0.0
      %3427 = vmatmul.mubr.f32.gmra.mrb[0].mxu0 %v3304
      %v3428 = vpop.f32.mrb[0].mxu0
      %v3429 = vadd.f32 0.0, %v3428
      %v3430 = vpop.f32.mrb[0].mxu0
      %3431 = vmatprep.mubr.f32.mxu0 0.0
      %3432 = vmatmul.mubr.f32.gmra.mrb[0].mxu0 %v3305
      %v3433 = vpop.f32.mrb[0].mxu0
      %v3434 = vadd.f32 0.0, %v3433
      %v3435 = vpop.f32.mrb[0].mxu0
      %3436 = vmatprep.mubr.f32.mxu0 0.0
      %3437 = vmatmul.mubr.f32.gmra.mrb[0].mxu0 %v3312
      %v3438 = vpop.f32.mrb[0].mxu0
      %v3439 = vadd.f32 0.0, %v3438
      %v3440 = vpop.f32.mrb[0].mxu0
      %3441 = vmatprep.mubr.f32.mxu0 0.0
      %3442 = vmatmul.mubr.f32.gmra.mrb[0].mxu0 %v3313
      %v3443 = vpop.f32.mrb[0].mxu0
      %v3444 = vadd.f32 0.0, %v3443
      %v3445 = vpop.f32.mrb[0].mxu0
      %3446 = vmatprep.mubr.f32.mxu0 0.0
      %3447 = vmatmul.mubr.f32.gmra.mrb[0].mxu0 %v3314
      %v3448 = vpop.f32.mrb[0].mxu0
      %v3449 = vadd.f32 0.0, %v3448
      %v3450 = vpop.f32.mrb[0].mxu0
      %3451 = vmatprep.mubr.f32.mxu0 0.0
      %3452 = vmatmul.mubr.f32.gmra.mrb[0].mxu0 %v3315
      %v3453 = vpop.f32.mrb[0].mxu0
      %v3454 = vadd.f32 0.0, %v3453
      %v3455 = vpop.f32.mrb[0].mxu0
      %3456 = vmatprep.mubr.f32.mxu0 0.0
      %3457 = vmatmul.mubr.f32.gmra.mrb[0].mxu0 %v3316
      %v3458 = vpop.f32.mrb[0].mxu0
      %v3459 = vadd.f32 0.0, %v3458
      %v3460 = vpop.f32.mrb[0].mxu0
      %3461 = vmatprep.mubr.f32.mxu0 0.0
      %3462 = vmatmul.mubr.f32.gmra.mrb[0].mxu0 %v3317
      %v3463 = vpop.f32.mrb[0].mxu0
      %v3464 = vadd.f32 0.0, %v3463
      %v3465 = vpop.f32.mrb[0].mxu0
      %3466 = vmatprep.mubr.f32.mxu0 0.0
      %3467 = vmatmul.mubr.f32.gmra.mrb[0].mxu0 %v3318
      %v3468 = vpop.f32.mrb[0].mxu0
      %v3469 = vadd.f32 0.0, %v3468
      %v3470 = vpop.f32.mrb[0].mxu0
      %3471 = vmatprep.mubr.f32.mxu0 0.0
      %3472 = vmatmul.mubr.f32.gmra.mrb[0].mxu0 %v3319
      %v3473 = vpop.f32.mrb[0].mxu0
      %v3474 = vadd.f32 0.0, %v3473
      %v3475 = vpop.f32.mrb[0].mxu0
      %3476 = vmatprep.mubr.f32.mxu0 0.0
      %3477 = vmatmul.mubr.f32.gmra.mrb[0].mxu0 %v3320
      %v3478 = vpop.f32.mrb[0].mxu0
      %v3479 = vadd.f32 0.0, %v3478
      %v3480 = vpop.f32.mrb[0].mxu0
      %3481 = vmatprep.mubr.f32.mxu0 0.0
      %3482 = vmatmul.mubr.f32.gmra.mrb[0].mxu0 %v3321
      %v3483 = vpop.f32.mrb[0].mxu0
      %v3484 = vadd.f32 0.0, %v3483
      %v3485 = vpop.f32.mrb[0].mxu0
      %3486 = vdwg.mxu0
      %v3489 = vrot.slane %v3444, 1
      %v3490 = vrot.slane %v3469, 1
      %v3493 = vmul.f32 %v3394, %v3489
      %v3494 = vmul.f32 %v3419, %v3490
      %v3495 = vrot.slane %v3444, 7
      %v3496 = vrot.slane %v3469, 7
      %v3499 = vmul.f32 %v3394, %v3495
      %v3500 = vmul.f32 %v3419, %v3496
      %v3503 = vrot.slane %v3499, 1
      %v3504 = vrot.slane %v3500, 1
      %v3507 = vsub.f32 %v3493, %v3503
      %v3508 = vsub.f32 %v3494, %v3504
      %v3509 = vrcp.pop %v3507
      %v3510 = vrcp.pop %v3508
      %v3511 = vmul.f32 %v3507, %v3509
      %v3512 = vmul.f32 %v3508, %v3510
      %v3513 = vsub.f32 2.0, %v3511
      %v3514 = vsub.f32 2.0, %v3512
      %v3515 = vmul.f32 %v3509, %v3513
      %v3516 = vmul.f32 %v3510, %v3514
      %v3517 = vlaneseq
      %v3518 = vshrl.u32 %v3517, 7
      %v3519 = vsub.s32 7, %v3518
      %v3520 = vrot.slane %v3444, %v3519
      %v3521 = vlaneseq
      %v3522 = vshrl.u32 %v3521, 7
      %v3523 = vsub.s32 7, %v3522
      %v3524 = vrot.slane %v3469, %v3523
      %v3525 = vmul.f32 %v3520, %v3389
      %v3526 = vmul.f32 %v3520, %v3394
      %v3527 = vmul.f32 %v3520, %v3399
      %v3528 = vmul.f32 %v3520, %v3404
      %v3529 = vmul.f32 %v3520, %v3409
      %v3530 = vmul.f32 %v3524, %v3414
      %v3531 = vmul.f32 %v3524, %v3419
      %v3532 = vmul.f32 %v3524, %v3424
      %v3533 = vmul.f32 %v3524, %v3429
      %v3534 = vmul.f32 %v3524, %v3434
      %v3535 = vlaneseq
      %v3536 = vshrl.u32 %v3535, 7
      %v3537 = vsub.s32 7, %v3536
      %v3538 = vrot.slane %v3394, %v3537
      %v3539 = vlaneseq
      %v3540 = vshrl.u32 %v3539, 7
      %v3541 = vsub.s32 7, %v3540
      %v3542 = vrot.slane %v3419, %v3541
      %v3543 = vmul.f32 %v3538, %v3439
      %v3544 = vmul.f32 %v3538, %v3444
      %v3545 = vmul.f32 %v3538, %v3449
      %v3546 = vmul.f32 %v3538, %v3454
      %v3547 = vmul.f32 %v3538, %v3459
      %v3548 = vmul.f32 %v3542, %v3464
      %v3549 = vmul.f32 %v3542, %v3469
      %v3550 = vmul.f32 %v3542, %v3474
      %v3551 = vmul.f32 %v3542, %v3479
      %v3552 = vmul.f32 %v3542, %v3484
      %v3553 = vsub.f32 %v3525, %v3543
      %v3554 = vsub.f32 %v3526, %v3544
      %v3555 = vsub.f32 %v3527, %v3545
      %v3556 = vsub.f32 %v3528, %v3546
      %v3557 = vsub.f32 %v3529, %v3547
      %v3558 = vsub.f32 %v3530, %v3548
      %v3559 = vsub.f32 %v3531, %v3549
      %v3560 = vsub.f32 %v3532, %v3550
      %v3561 = vsub.f32 %v3533, %v3551
      %v3562 = vsub.f32 %v3534, %v3552
      %v3563 = vlaneseq
      %v3564 = vshrl.u32 %v3563, 7
      %v3565 = vsub.s32 6, %v3564
      %v3566 = vrot.slane %v3515, %v3565
      %v3567 = vlaneseq
      %v3568 = vshrl.u32 %v3567, 7
      %v3569 = vsub.s32 6, %v3568
      %v3570 = vrot.slane %v3516, %v3569
      %v3571 = vmul.f32 %v3553, %v3566
      %v3572 = vmul.f32 %v3554, %v3566
      %v3573 = vmul.f32 %v3555, %v3566
      %v3574 = vmul.f32 %v3556, %v3566
      %v3575 = vmul.f32 %v3557, %v3566
      %v3576 = vmul.f32 %v3558, %v3570
      %v3577 = vmul.f32 %v3559, %v3570
      %v3578 = vmul.f32 %v3560, %v3570
      %v3579 = vmul.f32 %v3561, %v3570
      %v3580 = vmul.f32 %v3562, %v3570
      %v3581 = vlaneseq
      %v3582 = vshrl.u32 %v3581, 7
      %v3583 = vsub.s32 6, %v3582
      %v3584 = vrot.slane %v3394, %v3583
      %v3585 = vlaneseq
      %v3586 = vshrl.u32 %v3585, 7
      %v3587 = vsub.s32 6, %v3586
      %v3588 = vrot.slane %v3419, %v3587
      %v3589 = vmul.f32 %v3584, %v3439
      %v3590 = vmul.f32 %v3584, %v3444
      %v3591 = vmul.f32 %v3584, %v3449
      %v3592 = vmul.f32 %v3584, %v3454
      %v3593 = vmul.f32 %v3584, %v3459
      %v3594 = vmul.f32 %v3588, %v3464
      %v3595 = vmul.f32 %v3588, %v3469
      %v3596 = vmul.f32 %v3588, %v3474
      %v3597 = vmul.f32 %v3588, %v3479
      %v3598 = vmul.f32 %v3588, %v3484
      %v3599 = vlaneseq
      %v3600 = vshrl.u32 %v3599, 7
      %v3601 = vsub.s32 6, %v3600
      %v3602 = vrot.slane %v3444, %v3601
      %v3603 = vlaneseq
      %v3604 = vshrl.u32 %v3603, 7
      %v3605 = vsub.s32 6, %v3604
      %v3606 = vrot.slane %v3469, %v3605
      %v3607 = vmul.f32 %v3602, %v3389
      %v3608 = vmul.f32 %v3602, %v3394
      %v3609 = vmul.f32 %v3602, %v3399
      %v3610 = vmul.f32 %v3602, %v3404
      %v3611 = vmul.f32 %v3602, %v3409
      %v3612 = vmul.f32 %v3606, %v3414
      %v3613 = vmul.f32 %v3606, %v3419
      %v3614 = vmul.f32 %v3606, %v3424
      %v3615 = vmul.f32 %v3606, %v3429
      %v3616 = vmul.f32 %v3606, %v3434
      %v3617 = vsub.f32 %v3589, %v3607
      %v3618 = vsub.f32 %v3590, %v3608
      %v3619 = vsub.f32 %v3591, %v3609
      %v3620 = vsub.f32 %v3592, %v3610
      %v3621 = vsub.f32 %v3593, %v3611
      %v3622 = vsub.f32 %v3594, %v3612
      %v3623 = vsub.f32 %v3595, %v3613
      %v3624 = vsub.f32 %v3596, %v3614
      %v3625 = vsub.f32 %v3597, %v3615
      %v3626 = vsub.f32 %v3598, %v3616
      %v3627 = vmul.f32 %v3617, %v3566
      %v3628 = vmul.f32 %v3618, %v3566
      %v3629 = vmul.f32 %v3619, %v3566
      %v3630 = vmul.f32 %v3620, %v3566
      %v3631 = vmul.f32 %v3621, %v3566
      %v3632 = vmul.f32 %v3622, %v3570
      %v3633 = vmul.f32 %v3623, %v3570
      %v3634 = vmul.f32 %v3624, %v3570
      %v3635 = vmul.f32 %v3625, %v3570
      %v3636 = vmul.f32 %v3626, %v3570
      %v3637 = vlaneseq
      %v3638 = vshrl.u32 %v3637, 7
      %v3639 = vsub.s32 6, %v3638
      %v3640 = vrot.slane %v3279, %v3639
      %v3641 = vlaneseq
      %v3642 = vshrl.u32 %v3641, 7
      %v3643 = vsub.s32 6, %v3642
      %v3644 = vrot.slane %v3284, %v3643
      %v3645 = vmul.f32 %v3640, %v3571
      %v3646 = vmul.f32 %v3640, %v3572
      %v3647 = vmul.f32 %v3640, %v3573
      %v3648 = vmul.f32 %v3640, %v3574
      %v3649 = vmul.f32 %v3640, %v3575
      %v3650 = vmul.f32 %v3644, %v3576
      %v3651 = vmul.f32 %v3644, %v3577
      %v3652 = vmul.f32 %v3644, %v3578
      %v3653 = vmul.f32 %v3644, %v3579
      %v3654 = vmul.f32 %v3644, %v3580
      %v3655 = vsub.f32 %v3278, %v3645
      %v3656 = vsub.f32 %v3279, %v3646
      %v3657 = vsub.f32 %v3280, %v3647
      %v3658 = vsub.f32 %v3281, %v3648
      %v3659 = vsub.f32 %v3282, %v3649
      %v3660 = vsub.f32 %v3283, %v3650
      %v3661 = vsub.f32 %v3284, %v3651
      %v3662 = vsub.f32 %v3285, %v3652
      %v3663 = vsub.f32 %v3286, %v3653
      %v3664 = vsub.f32 %v3287, %v3654
      %v3665 = vlaneseq
      %v3666 = vshrl.u32 %v3665, 7
      %v3667 = vsub.s32 7, %v3666
      %v3668 = vrot.slane %v3279, %v3667
      %v3669 = vlaneseq
      %v3670 = vshrl.u32 %v3669, 7
      %v3671 = vsub.s32 7, %v3670
      %v3672 = vrot.slane %v3284, %v3671
      %v3673 = vmul.f32 %v3668, %v3627
      %v3674 = vmul.f32 %v3668, %v3628
      %v3675 = vmul.f32 %v3668, %v3629
      %v3676 = vmul.f32 %v3668, %v3630
      %v3677 = vmul.f32 %v3668, %v3631
      %v3678 = vmul.f32 %v3672, %v3632
      %v3679 = vmul.f32 %v3672, %v3633
      %v3680 = vmul.f32 %v3672, %v3634
      %v3681 = vmul.f32 %v3672, %v3635
      %v3682 = vmul.f32 %v3672, %v3636
      %v3683 = vsub.f32 %v3655, %v3673
      %v3684 = vsub.f32 %v3656, %v3674
      %v3685 = vsub.f32 %v3657, %v3675
      %v3686 = vsub.f32 %v3658, %v3676
      %v3687 = vsub.f32 %v3659, %v3677
      %v3688 = vsub.f32 %v3660, %v3678
      %v3689 = vsub.f32 %v3661, %v3679
      %v3690 = vsub.f32 %v3662, %v3680
      %v3691 = vsub.f32 %v3663, %v3681
      %v3692 = vsub.f32 %v3664, %v3682
      %v3693 = vsel %vm3295, %v3571, %v3683
      %v3694 = vsel %vm3295, %v3572, %v3684
      %v3695 = vsel %vm3295, %v3573, %v3685
      %v3696 = vsel %vm3295, %v3574, %v3686
      %v3697 = vsel %vm3295, %v3575, %v3687
      %v3698 = vsel %vm3295, %v3576, %v3688
      %v3699 = vsel %vm3295, %v3577, %v3689
      %v3700 = vsel %vm3295, %v3578, %v3690
      %v3701 = vsel %vm3295, %v3579, %v3691
      %v3702 = vsel %vm3295, %v3580, %v3692
      %v3703 = vsel %vm3311, %v3627, %v3693
      %v3704 = vsel %vm3311, %v3628, %v3694
      %v3705 = vsel %vm3311, %v3629, %v3695
      %v3706 = vsel %vm3311, %v3630, %v3696
      %v3707 = vsel %vm3311, %v3631, %v3697
      %v3708 = vsel %vm3311, %v3632, %v3698
      %v3709 = vsel %vm3311, %v3633, %v3699
      %v3710 = vsel %vm3311, %v3634, %v3700
      %v3711 = vsel %vm3311, %v3635, %v3701
      %v3712 = vsel %vm3311, %v3636, %v3702
      %vm3713 = vcmp.eq.s32.totalorder %v93, 16
      %vm3714 = vcmp.eq.s32.totalorder %v93, 17
      %v3715 = vsel %vm3713, 1, 0
      %v3716 = vlaneseq
      %v3717 = vshrl.u32 %v3716, 7
      %v3718 = vsub.s32 0, %v3717
      %v3719 = vrot.slane %v3715, %v3718
      %vm3720 = vcmp.eq.s32.totalorder %v3719, 1
      %v3721 = vsel %vm3720, %v3703, 0.0
      %v3722 = vsel %vm3720, %v3704, 0.0
      %v3723 = vsel %vm3720, %v3705, 0.0
      %v3724 = vsel %vm3720, %v3706, 0.0
      %v3725 = vsel %vm3720, %v3707, 0.0
      %v3726 = vsel %vm3720, %v3708, 0.0
      %v3727 = vsel %vm3720, %v3709, 0.0
      %v3728 = vsel %vm3720, %v3710, 0.0
      %v3729 = vsel %vm3720, %v3711, 0.0
      %v3730 = vsel %vm3720, %v3712, 0.0
      %v3731 = vsel %vm3714, 1, 0
      %v3732 = vlaneseq
      %v3733 = vshrl.u32 %v3732, 7
      %v3734 = vsub.s32 0, %v3733
      %v3735 = vrot.slane %v3731, %v3734
      %vm3736 = vcmp.eq.s32.totalorder %v3735, 1
      %v3737 = vsel %vm3736, %v3703, 0.0
      %v3738 = vsel %vm3736, %v3704, 0.0
      %v3739 = vsel %vm3736, %v3705, 0.0
      %v3740 = vsel %vm3736, %v3706, 0.0
      %v3741 = vsel %vm3736, %v3707, 0.0
      %v3742 = vsel %vm3736, %v3708, 0.0
      %v3743 = vsel %vm3736, %v3709, 0.0
      %v3744 = vsel %vm3736, %v3710, 0.0
      %v3745 = vsel %vm3736, %v3711, 0.0
      %v3746 = vsel %vm3736, %v3712, 0.0
      %3747 = vmatprep.subr.mxu0 0.0
      %3748 = vmatpush1.msra.mxu0 %v77
      %3749 = vmatprep.subr.mxu0 0.0
      %3750 = vmatpush1.msra.mxu0 %v78
      %3751 = vmatprep.subr.mxu0 0.0
      %3752 = vmatpush1.msra.mxu0 %v79
      %3753 = vmatprep.subr.mxu0 0.0
      %3754 = vmatpush1.msra.mxu0 %v80
      %3755 = vmatprep.subr.mxu0 0.0
      %3756 = vmatpush1.msra.mxu0 %v81
      %3757 = vmatprep.subr.mxu0 0.0
      %3758 = vmatpush1.msra.mxu0 %v82
      %3759 = vmatprep.subr.mxu0 0.0
      %3760 = vmatpush1.msra.mxu0 %v83
      %3761 = vmatprep.subr.mxu0 0.0
      %3762 = vmatpush1.msra.mxu0 %v84
      %3763 = vmatprep.subr.mxu0 0.0
      %3764 = vmatpush1.msra.mxu0 %v85
      %3765 = vmatprep.subr.mxu0 0.0
      %3766 = vmatpush1.msra.mxu0 %v86
      %3767 = vmatprep.subr.mxu0 0.0
      %3768 = vmatpush1.msra.mxu0 %v87
      %3769 = vmatprep.subr.mxu0 0.0
      %3770 = vmatpush1.msra.mxu0 %v88
      %3771 = vmatprep.subr.mxu0 0.0
      %3772 = vmatpush1.msra.mxu0 %v89
      %3773 = vmatprep.subr.mxu0 0.0
      %3774 = vmatpush1.msra.mxu0 %v90
      %3775 = vmatprep.subr.mxu0 0.0
      %3776 = vmatpush1.msra.mxu0 %v91
      %3777 = vmatprep.subr.mxu0 0.0
      %3778 = vmatpush1.msra.mxu0 %v92
      %3779 = vmatprep.subr.mxu0 0.0
      %3780 = vmatpush1.msra.mxu0 0.0
      %3781 = vmatprep.subr.mxu0 0.0
      %3782 = vmatpush1.msra.mxu0 0.0
      %3783 = vmatprep.subr.mxu0 0.0
      %3784 = vmatpush1.msra.mxu0 0.0
      %3785 = vmatprep.subr.mxu0 0.0
      %3786 = vmatpush1.msra.mxu0 0.0
      %3787 = vmatprep.subr.mxu0 0.0
      %3788 = vmatpush1.msra.mxu0 0.0
      %3789 = vmatprep.subr.mxu0 0.0
      %3790 = vmatpush1.msra.mxu0 0.0
      %3791 = vmatprep.subr.mxu0 0.0
      %3792 = vmatpush1.msra.mxu0 0.0
      %3793 = vmatprep.subr.mxu0 0.0
      %3794 = vmatpush1.msra.mxu0 0.0
      %3795 = vmatprep.subr.mxu0 0.0
      %3796 = vmatpush1.msra.mxu0 0.0
      %3797 = vmatprep.subr.mxu0 0.0
      %3798 = vmatpush1.msra.mxu0 0.0
      %3799 = vmatprep.subr.mxu0 0.0
      %3800 = vmatpush1.msra.mxu0 0.0
      %3801 = vmatprep.subr.mxu0 0.0
      %3802 = vmatpush1.msra.mxu0 0.0
      %3803 = vmatprep.subr.mxu0 0.0
      %3804 = vmatpush1.msra.mxu0 0.0
      %3805 = vmatprep.subr.mxu0 0.0
      %3806 = vmatpush1.msra.mxu0 0.0
      %3807 = vmatprep.subr.mxu0 0.0
      %3808 = vmatpush1.msra.mxu0 0.0
      %3809 = vmatprep.subr.mxu0 0.0
      %3810 = vmatpush1.msra.mxu0 0.0
      %3811 = vmatprep.mubr.f32.mxu0 0.0
      %3812 = vmatmul.mubr.f32.gmra.mrb[0].mxu0 %v3721
      %v3813 = vpop.f32.mrb[0].mxu0
      %v3814 = vadd.f32 0.0, %v3813
      %v3815 = vpop.f32.mrb[0].mxu0
      %3816 = vmatprep.mubr.f32.mxu0 0.0
      %3817 = vmatmul.mubr.f32.gmra.mrb[0].mxu0 %v3722
      %v3818 = vpop.f32.mrb[0].mxu0
      %v3819 = vadd.f32 0.0, %v3818
      %v3820 = vpop.f32.mrb[0].mxu0
      %3821 = vmatprep.mubr.f32.mxu0 0.0
      %3822 = vmatmul.mubr.f32.gmra.mrb[0].mxu0 %v3723
      %v3823 = vpop.f32.mrb[0].mxu0
      %v3824 = vadd.f32 0.0, %v3823
      %v3825 = vpop.f32.mrb[0].mxu0
      %3826 = vmatprep.mubr.f32.mxu0 0.0
      %3827 = vmatmul.mubr.f32.gmra.mrb[0].mxu0 %v3724
      %v3828 = vpop.f32.mrb[0].mxu0
      %v3829 = vadd.f32 0.0, %v3828
      %v3830 = vpop.f32.mrb[0].mxu0
      %3831 = vmatprep.mubr.f32.mxu0 0.0
      %3832 = vmatmul.mubr.f32.gmra.mrb[0].mxu0 %v3725
      %v3833 = vpop.f32.mrb[0].mxu0
      %v3834 = vadd.f32 0.0, %v3833
      %v3835 = vpop.f32.mrb[0].mxu0
      %3836 = vmatprep.mubr.f32.mxu0 0.0
      %3837 = vmatmul.mubr.f32.gmra.mrb[0].mxu0 %v3726
      %v3838 = vpop.f32.mrb[0].mxu0
      %v3839 = vadd.f32 0.0, %v3838
      %v3840 = vpop.f32.mrb[0].mxu0
      %3841 = vmatprep.mubr.f32.mxu0 0.0
      %3842 = vmatmul.mubr.f32.gmra.mrb[0].mxu0 %v3727
      %v3843 = vpop.f32.mrb[0].mxu0
      %v3844 = vadd.f32 0.0, %v3843
      %v3845 = vpop.f32.mrb[0].mxu0
      %3846 = vmatprep.mubr.f32.mxu0 0.0
      %3847 = vmatmul.mubr.f32.gmra.mrb[0].mxu0 %v3728
      %v3848 = vpop.f32.mrb[0].mxu0
      %v3849 = vadd.f32 0.0, %v3848
      %v3850 = vpop.f32.mrb[0].mxu0
      %3851 = vmatprep.mubr.f32.mxu0 0.0
      %3852 = vmatmul.mubr.f32.gmra.mrb[0].mxu0 %v3729
      %v3853 = vpop.f32.mrb[0].mxu0
      %v3854 = vadd.f32 0.0, %v3853
      %v3855 = vpop.f32.mrb[0].mxu0
      %3856 = vmatprep.mubr.f32.mxu0 0.0
      %3857 = vmatmul.mubr.f32.gmra.mrb[0].mxu0 %v3730
      %v3858 = vpop.f32.mrb[0].mxu0
      %v3859 = vadd.f32 0.0, %v3858
      %v3860 = vpop.f32.mrb[0].mxu0
      %3861 = vmatprep.mubr.f32.mxu0 0.0
      %3862 = vmatmul.mubr.f32.gmra.mrb[0].mxu0 %v3737
      %v3863 = vpop.f32.mrb[0].mxu0
      %v3864 = vadd.f32 0.0, %v3863
      %v3865 = vpop.f32.mrb[0].mxu0
      %3866 = vmatprep.mubr.f32.mxu0 0.0
      %3867 = vmatmul.mubr.f32.gmra.mrb[0].mxu0 %v3738
      %v3868 = vpop.f32.mrb[0].mxu0
      %v3869 = vadd.f32 0.0, %v3868
      %v3870 = vpop.f32.mrb[0].mxu0
      %3871 = vmatprep.mubr.f32.mxu0 0.0
      %3872 = vmatmul.mubr.f32.gmra.mrb[0].mxu0 %v3739
      %v3873 = vpop.f32.mrb[0].mxu0
      %v3874 = vadd.f32 0.0, %v3873
      %v3875 = vpop.f32.mrb[0].mxu0
      %3876 = vmatprep.mubr.f32.mxu0 0.0
      %3877 = vmatmul.mubr.f32.gmra.mrb[0].mxu0 %v3740
      %v3878 = vpop.f32.mrb[0].mxu0
      %v3879 = vadd.f32 0.0, %v3878
      %v3880 = vpop.f32.mrb[0].mxu0
      %3881 = vmatprep.mubr.f32.mxu0 0.0
      %3882 = vmatmul.mubr.f32.gmra.mrb[0].mxu0 %v3741
      %v3883 = vpop.f32.mrb[0].mxu0
      %v3884 = vadd.f32 0.0, %v3883
      %v3885 = vpop.f32.mrb[0].mxu0
      %3886 = vmatprep.mubr.f32.mxu0 0.0
      %3887 = vmatmul.mubr.f32.gmra.mrb[0].mxu0 %v3742
      %v3888 = vpop.f32.mrb[0].mxu0
      %v3889 = vadd.f32 0.0, %v3888
      %v3890 = vpop.f32.mrb[0].mxu0
      %3891 = vmatprep.mubr.f32.mxu0 0.0
      %3892 = vmatmul.mubr.f32.gmra.mrb[0].mxu0 %v3743
      %v3893 = vpop.f32.mrb[0].mxu0
      %v3894 = vadd.f32 0.0, %v3893
      %v3895 = vpop.f32.mrb[0].mxu0
      %3896 = vmatprep.mubr.f32.mxu0 0.0
      %3897 = vmatmul.mubr.f32.gmra.mrb[0].mxu0 %v3744
      %v3898 = vpop.f32.mrb[0].mxu0
      %v3899 = vadd.f32 0.0, %v3898
      %v3900 = vpop.f32.mrb[0].mxu0
      %3901 = vmatprep.mubr.f32.mxu0 0.0
      %3902 = vmatmul.mubr.f32.gmra.mrb[0].mxu0 %v3745
      %v3903 = vpop.f32.mrb[0].mxu0
      %v3904 = vadd.f32 0.0, %v3903
      %v3905 = vpop.f32.mrb[0].mxu0
      %3906 = vmatprep.mubr.f32.mxu0 0.0
      %3907 = vmatmul.mubr.f32.gmra.mrb[0].mxu0 %v3746
      %v3908 = vpop.f32.mrb[0].mxu0
      %v3909 = vadd.f32 0.0, %v3908
      %v3910 = vpop.f32.mrb[0].mxu0
      %3911 = vdwg.mxu0
      %v3914 = vrot.slane %v3874, 1
      %v3915 = vrot.slane %v3899, 1
      %v3918 = vmul.f32 %v3824, %v3914
      %v3919 = vmul.f32 %v3849, %v3915
      %v3920 = vrot.slane %v3874, 7
      %v3921 = vrot.slane %v3899, 7
      %v3924 = vmul.f32 %v3824, %v3920
      %v3925 = vmul.f32 %v3849, %v3921
      %v3928 = vrot.slane %v3924, 1
      %v3929 = vrot.slane %v3925, 1
      %v3932 = vsub.f32 %v3918, %v3928
      %v3933 = vsub.f32 %v3919, %v3929
      %v3934 = vrcp.pop %v3932
      %v3935 = vrcp.pop %v3933
      %v3936 = vmul.f32 %v3932, %v3934
      %v3937 = vmul.f32 %v3933, %v3935
      %v3938 = vsub.f32 2.0, %v3936
      %v3939 = vsub.f32 2.0, %v3937
      %v3940 = vmul.f32 %v3934, %v3938
      %v3941 = vmul.f32 %v3935, %v3939
      %v3942 = vlaneseq
      %v3943 = vshrl.u32 %v3942, 7
      %v3944 = vsub.s32 1, %v3943
      %v3945 = vrot.slane %v3874, %v3944
      %v3946 = vlaneseq
      %v3947 = vshrl.u32 %v3946, 7
      %v3948 = vsub.s32 1, %v3947
      %v3949 = vrot.slane %v3899, %v3948
      %v3950 = vmul.f32 %v3945, %v3814
      %v3951 = vmul.f32 %v3945, %v3819
      %v3952 = vmul.f32 %v3945, %v3824
      %v3953 = vmul.f32 %v3945, %v3829
      %v3954 = vmul.f32 %v3945, %v3834
      %v3955 = vmul.f32 %v3949, %v3839
      %v3956 = vmul.f32 %v3949, %v3844
      %v3957 = vmul.f32 %v3949, %v3849
      %v3958 = vmul.f32 %v3949, %v3854
      %v3959 = vmul.f32 %v3949, %v3859
      %v3960 = vlaneseq
      %v3961 = vshrl.u32 %v3960, 7
      %v3962 = vsub.s32 1, %v3961
      %v3963 = vrot.slane %v3824, %v3962
      %v3964 = vlaneseq
      %v3965 = vshrl.u32 %v3964, 7
      %v3966 = vsub.s32 1, %v3965
      %v3967 = vrot.slane %v3849, %v3966
      %v3968 = vmul.f32 %v3963, %v3864
      %v3969 = vmul.f32 %v3963, %v3869
      %v3970 = vmul.f32 %v3963, %v3874
      %v3971 = vmul.f32 %v3963, %v3879
      %v3972 = vmul.f32 %v3963, %v3884
      %v3973 = vmul.f32 %v3967, %v3889
      %v3974 = vmul.f32 %v3967, %v3894
      %v3975 = vmul.f32 %v3967, %v3899
      %v3976 = vmul.f32 %v3967, %v3904
      %v3977 = vmul.f32 %v3967, %v3909
      %v3978 = vsub.f32 %v3950, %v3968
      %v3979 = vsub.f32 %v3951, %v3969
      %v3980 = vsub.f32 %v3952, %v3970
      %v3981 = vsub.f32 %v3953, %v3971
      %v3982 = vsub.f32 %v3954, %v3972
      %v3983 = vsub.f32 %v3955, %v3973
      %v3984 = vsub.f32 %v3956, %v3974
      %v3985 = vsub.f32 %v3957, %v3975
      %v3986 = vsub.f32 %v3958, %v3976
      %v3987 = vsub.f32 %v3959, %v3977
      %v3988 = vlaneseq
      %v3989 = vshrl.u32 %v3988, 7
      %v3990 = vsub.s32 0, %v3989
      %v3991 = vrot.slane %v3940, %v3990
      %v3992 = vlaneseq
      %v3993 = vshrl.u32 %v3992, 7
      %v3994 = vsub.s32 0, %v3993
      %v3995 = vrot.slane %v3941, %v3994
      %v3996 = vmul.f32 %v3978, %v3991
      %v3997 = vmul.f32 %v3979, %v3991
      %v3998 = vmul.f32 %v3980, %v3991
      %v3999 = vmul.f32 %v3981, %v3991
      %v4000 = vmul.f32 %v3982, %v3991
      %v4001 = vmul.f32 %v3983, %v3995
      %v4002 = vmul.f32 %v3984, %v3995
      %v4003 = vmul.f32 %v3985, %v3995
      %v4004 = vmul.f32 %v3986, %v3995
      %v4005 = vmul.f32 %v3987, %v3995
      %v4006 = vlaneseq
      %v4007 = vshrl.u32 %v4006, 7
      %v4008 = vsub.s32 0, %v4007
      %v4009 = vrot.slane %v3824, %v4008
      %v4010 = vlaneseq
      %v4011 = vshrl.u32 %v4010, 7
      %v4012 = vsub.s32 0, %v4011
      %v4013 = vrot.slane %v3849, %v4012
      %v4014 = vmul.f32 %v4009, %v3864
      %v4015 = vmul.f32 %v4009, %v3869
      %v4016 = vmul.f32 %v4009, %v3874
      %v4017 = vmul.f32 %v4009, %v3879
      %v4018 = vmul.f32 %v4009, %v3884
      %v4019 = vmul.f32 %v4013, %v3889
      %v4020 = vmul.f32 %v4013, %v3894
      %v4021 = vmul.f32 %v4013, %v3899
      %v4022 = vmul.f32 %v4013, %v3904
      %v4023 = vmul.f32 %v4013, %v3909
      %v4024 = vlaneseq
      %v4025 = vshrl.u32 %v4024, 7
      %v4026 = vsub.s32 0, %v4025
      %v4027 = vrot.slane %v3874, %v4026
      %v4028 = vlaneseq
      %v4029 = vshrl.u32 %v4028, 7
      %v4030 = vsub.s32 0, %v4029
      %v4031 = vrot.slane %v3899, %v4030
      %v4032 = vmul.f32 %v4027, %v3814
      %v4033 = vmul.f32 %v4027, %v3819
      %v4034 = vmul.f32 %v4027, %v3824
      %v4035 = vmul.f32 %v4027, %v3829
      %v4036 = vmul.f32 %v4027, %v3834
      %v4037 = vmul.f32 %v4031, %v3839
      %v4038 = vmul.f32 %v4031, %v3844
      %v4039 = vmul.f32 %v4031, %v3849
      %v4040 = vmul.f32 %v4031, %v3854
      %v4041 = vmul.f32 %v4031, %v3859
      %v4042 = vsub.f32 %v4014, %v4032
      %v4043 = vsub.f32 %v4015, %v4033
      %v4044 = vsub.f32 %v4016, %v4034
      %v4045 = vsub.f32 %v4017, %v4035
      %v4046 = vsub.f32 %v4018, %v4036
      %v4047 = vsub.f32 %v4019, %v4037
      %v4048 = vsub.f32 %v4020, %v4038
      %v4049 = vsub.f32 %v4021, %v4039
      %v4050 = vsub.f32 %v4022, %v4040
      %v4051 = vsub.f32 %v4023, %v4041
      %v4052 = vmul.f32 %v4042, %v3991
      %v4053 = vmul.f32 %v4043, %v3991
      %v4054 = vmul.f32 %v4044, %v3991
      %v4055 = vmul.f32 %v4045, %v3991
      %v4056 = vmul.f32 %v4046, %v3991
      %v4057 = vmul.f32 %v4047, %v3995
      %v4058 = vmul.f32 %v4048, %v3995
      %v4059 = vmul.f32 %v4049, %v3995
      %v4060 = vmul.f32 %v4050, %v3995
      %v4061 = vmul.f32 %v4051, %v3995
      %v4062 = vlaneseq
      %v4063 = vshrl.u32 %v4062, 7
      %v4064 = vsub.s32 0, %v4063
      %v4065 = vrot.slane %v3705, %v4064
      %v4066 = vlaneseq
      %v4067 = vshrl.u32 %v4066, 7
      %v4068 = vsub.s32 0, %v4067
      %v4069 = vrot.slane %v3710, %v4068
      %v4070 = vmul.f32 %v4065, %v3996
      %v4071 = vmul.f32 %v4065, %v3997
      %v4072 = vmul.f32 %v4065, %v3998
      %v4073 = vmul.f32 %v4065, %v3999
      %v4074 = vmul.f32 %v4065, %v4000
      %v4075 = vmul.f32 %v4069, %v4001
      %v4076 = vmul.f32 %v4069, %v4002
      %v4077 = vmul.f32 %v4069, %v4003
      %v4078 = vmul.f32 %v4069, %v4004
      %v4079 = vmul.f32 %v4069, %v4005
      %v4080 = vsub.f32 %v3703, %v4070
      %v4081 = vsub.f32 %v3704, %v4071
      %v4082 = vsub.f32 %v3705, %v4072
      %v4083 = vsub.f32 %v3706, %v4073
      %v4084 = vsub.f32 %v3707, %v4074
      %v4085 = vsub.f32 %v3708, %v4075
      %v4086 = vsub.f32 %v3709, %v4076
      %v4087 = vsub.f32 %v3710, %v4077
      %v4088 = vsub.f32 %v3711, %v4078
      %v4089 = vsub.f32 %v3712, %v4079
      %v4090 = vlaneseq
      %v4091 = vshrl.u32 %v4090, 7
      %v4092 = vsub.s32 1, %v4091
      %v4093 = vrot.slane %v3705, %v4092
      %v4094 = vlaneseq
      %v4095 = vshrl.u32 %v4094, 7
      %v4096 = vsub.s32 1, %v4095
      %v4097 = vrot.slane %v3710, %v4096
      %v4098 = vmul.f32 %v4093, %v4052
      %v4099 = vmul.f32 %v4093, %v4053
      %v4100 = vmul.f32 %v4093, %v4054
      %v4101 = vmul.f32 %v4093, %v4055
      %v4102 = vmul.f32 %v4093, %v4056
      %v4103 = vmul.f32 %v4097, %v4057
      %v4104 = vmul.f32 %v4097, %v4058
      %v4105 = vmul.f32 %v4097, %v4059
      %v4106 = vmul.f32 %v4097, %v4060
      %v4107 = vmul.f32 %v4097, %v4061
      %v4108 = vsub.f32 %v4080, %v4098
      %v4109 = vsub.f32 %v4081, %v4099
      %v4110 = vsub.f32 %v4082, %v4100
      %v4111 = vsub.f32 %v4083, %v4101
      %v4112 = vsub.f32 %v4084, %v4102
      %v4113 = vsub.f32 %v4085, %v4103
      %v4114 = vsub.f32 %v4086, %v4104
      %v4115 = vsub.f32 %v4087, %v4105
      %v4116 = vsub.f32 %v4088, %v4106
      %v4117 = vsub.f32 %v4089, %v4107
      %v4118 = vsel %vm3720, %v3996, %v4108
      %v4119 = vsel %vm3720, %v3997, %v4109
      %v4120 = vsel %vm3720, %v3998, %v4110
      %v4121 = vsel %vm3720, %v3999, %v4111
      %v4122 = vsel %vm3720, %v4000, %v4112
      %v4123 = vsel %vm3720, %v4001, %v4113
      %v4124 = vsel %vm3720, %v4002, %v4114
      %v4125 = vsel %vm3720, %v4003, %v4115
      %v4126 = vsel %vm3720, %v4004, %v4116
      %v4127 = vsel %vm3720, %v4005, %v4117
      %v4128 = vsel %vm3736, %v4052, %v4118
      %v4129 = vsel %vm3736, %v4053, %v4119
      %v4130 = vsel %vm3736, %v4054, %v4120
      %v4131 = vsel %vm3736, %v4055, %v4121
      %v4132 = vsel %vm3736, %v4056, %v4122
      %v4133 = vsel %vm3736, %v4057, %v4123
      %v4134 = vsel %vm3736, %v4058, %v4124
      %v4135 = vsel %vm3736, %v4059, %v4125
      %v4136 = vsel %vm3736, %v4060, %v4126
      %v4137 = vsel %vm3736, %v4061, %v4127
      %vm4138 = vcmp.eq.s32.totalorder %v93, 18
      %vm4139 = vcmp.eq.s32.totalorder %v93, 19
      %v4140 = vsel %vm4138, 1, 0
      %v4141 = vlaneseq
      %v4142 = vshrl.u32 %v4141, 7
      %v4143 = vsub.s32 0, %v4142
      %v4144 = vrot.slane %v4140, %v4143
      %vm4145 = vcmp.eq.s32.totalorder %v4144, 1
      %v4146 = vsel %vm4145, %v4128, 0.0
      %v4147 = vsel %vm4145, %v4129, 0.0
      %v4148 = vsel %vm4145, %v4130, 0.0
      %v4149 = vsel %vm4145, %v4131, 0.0
      %v4150 = vsel %vm4145, %v4132, 0.0
      %v4151 = vsel %vm4145, %v4133, 0.0
      %v4152 = vsel %vm4145, %v4134, 0.0
      %v4153 = vsel %vm4145, %v4135, 0.0
      %v4154 = vsel %vm4145, %v4136, 0.0
      %v4155 = vsel %vm4145, %v4137, 0.0
      %v4156 = vsel %vm4139, 1, 0
      %v4157 = vlaneseq
      %v4158 = vshrl.u32 %v4157, 7
      %v4159 = vsub.s32 0, %v4158
      %v4160 = vrot.slane %v4156, %v4159
      %vm4161 = vcmp.eq.s32.totalorder %v4160, 1
      %v4162 = vsel %vm4161, %v4128, 0.0
      %v4163 = vsel %vm4161, %v4129, 0.0
      %v4164 = vsel %vm4161, %v4130, 0.0
      %v4165 = vsel %vm4161, %v4131, 0.0
      %v4166 = vsel %vm4161, %v4132, 0.0
      %v4167 = vsel %vm4161, %v4133, 0.0
      %v4168 = vsel %vm4161, %v4134, 0.0
      %v4169 = vsel %vm4161, %v4135, 0.0
      %v4170 = vsel %vm4161, %v4136, 0.0
      %v4171 = vsel %vm4161, %v4137, 0.0
      %4172 = vmatprep.subr.mxu0 0.0
      %4173 = vmatpush1.msra.mxu0 %v77
      %4174 = vmatprep.subr.mxu0 0.0
      %4175 = vmatpush1.msra.mxu0 %v78
      %4176 = vmatprep.subr.mxu0 0.0
      %4177 = vmatpush1.msra.mxu0 %v79
      %4178 = vmatprep.subr.mxu0 0.0
      %4179 = vmatpush1.msra.mxu0 %v80
      %4180 = vmatprep.subr.mxu0 0.0
      %4181 = vmatpush1.msra.mxu0 %v81
      %4182 = vmatprep.subr.mxu0 0.0
      %4183 = vmatpush1.msra.mxu0 %v82
      %4184 = vmatprep.subr.mxu0 0.0
      %4185 = vmatpush1.msra.mxu0 %v83
      %4186 = vmatprep.subr.mxu0 0.0
      %4187 = vmatpush1.msra.mxu0 %v84
      %4188 = vmatprep.subr.mxu0 0.0
      %4189 = vmatpush1.msra.mxu0 %v85
      %4190 = vmatprep.subr.mxu0 0.0
      %4191 = vmatpush1.msra.mxu0 %v86
      %4192 = vmatprep.subr.mxu0 0.0
      %4193 = vmatpush1.msra.mxu0 %v87
      %4194 = vmatprep.subr.mxu0 0.0
      %4195 = vmatpush1.msra.mxu0 %v88
      %4196 = vmatprep.subr.mxu0 0.0
      %4197 = vmatpush1.msra.mxu0 %v89
      %4198 = vmatprep.subr.mxu0 0.0
      %4199 = vmatpush1.msra.mxu0 %v90
      %4200 = vmatprep.subr.mxu0 0.0
      %4201 = vmatpush1.msra.mxu0 %v91
      %4202 = vmatprep.subr.mxu0 0.0
      %4203 = vmatpush1.msra.mxu0 %v92
      %4204 = vmatprep.subr.mxu0 0.0
      %4205 = vmatpush1.msra.mxu0 0.0
      %4206 = vmatprep.subr.mxu0 0.0
      %4207 = vmatpush1.msra.mxu0 0.0
      %4208 = vmatprep.subr.mxu0 0.0
      %4209 = vmatpush1.msra.mxu0 0.0
      %4210 = vmatprep.subr.mxu0 0.0
      %4211 = vmatpush1.msra.mxu0 0.0
      %4212 = vmatprep.subr.mxu0 0.0
      %4213 = vmatpush1.msra.mxu0 0.0
      %4214 = vmatprep.subr.mxu0 0.0
      %4215 = vmatpush1.msra.mxu0 0.0
      %4216 = vmatprep.subr.mxu0 0.0
      %4217 = vmatpush1.msra.mxu0 0.0
      %4218 = vmatprep.subr.mxu0 0.0
      %4219 = vmatpush1.msra.mxu0 0.0
      %4220 = vmatprep.subr.mxu0 0.0
      %4221 = vmatpush1.msra.mxu0 0.0
      %4222 = vmatprep.subr.mxu0 0.0
      %4223 = vmatpush1.msra.mxu0 0.0
      %4224 = vmatprep.subr.mxu0 0.0
      %4225 = vmatpush1.msra.mxu0 0.0
      %4226 = vmatprep.subr.mxu0 0.0
      %4227 = vmatpush1.msra.mxu0 0.0
      %4228 = vmatprep.subr.mxu0 0.0
      %4229 = vmatpush1.msra.mxu0 0.0
      %4230 = vmatprep.subr.mxu0 0.0
      %4231 = vmatpush1.msra.mxu0 0.0
      %4232 = vmatprep.subr.mxu0 0.0
      %4233 = vmatpush1.msra.mxu0 0.0
      %4234 = vmatprep.subr.mxu0 0.0
      %4235 = vmatpush1.msra.mxu0 0.0
      %4236 = vmatprep.mubr.f32.mxu0 0.0
      %4237 = vmatmul.mubr.f32.gmra.mrb[0].mxu0 %v4146
      %v4238 = vpop.f32.mrb[0].mxu0
      %v4239 = vadd.f32 0.0, %v4238
      %v4240 = vpop.f32.mrb[0].mxu0
      %4241 = vmatprep.mubr.f32.mxu0 0.0
      %4242 = vmatmul.mubr.f32.gmra.mrb[0].mxu0 %v4147
      %v4243 = vpop.f32.mrb[0].mxu0
      %v4244 = vadd.f32 0.0, %v4243
      %v4245 = vpop.f32.mrb[0].mxu0
      %4246 = vmatprep.mubr.f32.mxu0 0.0
      %4247 = vmatmul.mubr.f32.gmra.mrb[0].mxu0 %v4148
      %v4248 = vpop.f32.mrb[0].mxu0
      %v4249 = vadd.f32 0.0, %v4248
      %v4250 = vpop.f32.mrb[0].mxu0
      %4251 = vmatprep.mubr.f32.mxu0 0.0
      %4252 = vmatmul.mubr.f32.gmra.mrb[0].mxu0 %v4149
      %v4253 = vpop.f32.mrb[0].mxu0
      %v4254 = vadd.f32 0.0, %v4253
      %v4255 = vpop.f32.mrb[0].mxu0
      %4256 = vmatprep.mubr.f32.mxu0 0.0
      %4257 = vmatmul.mubr.f32.gmra.mrb[0].mxu0 %v4150
      %v4258 = vpop.f32.mrb[0].mxu0
      %v4259 = vadd.f32 0.0, %v4258
      %v4260 = vpop.f32.mrb[0].mxu0
      %4261 = vmatprep.mubr.f32.mxu0 0.0
      %4262 = vmatmul.mubr.f32.gmra.mrb[0].mxu0 %v4151
      %v4263 = vpop.f32.mrb[0].mxu0
      %v4264 = vadd.f32 0.0, %v4263
      %v4265 = vpop.f32.mrb[0].mxu0
      %4266 = vmatprep.mubr.f32.mxu0 0.0
      %4267 = vmatmul.mubr.f32.gmra.mrb[0].mxu0 %v4152
      %v4268 = vpop.f32.mrb[0].mxu0
      %v4269 = vadd.f32 0.0, %v4268
      %v4270 = vpop.f32.mrb[0].mxu0
      %4271 = vmatprep.mubr.f32.mxu0 0.0
      %4272 = vmatmul.mubr.f32.gmra.mrb[0].mxu0 %v4153
      %v4273 = vpop.f32.mrb[0].mxu0
      %v4274 = vadd.f32 0.0, %v4273
      %v4275 = vpop.f32.mrb[0].mxu0
      %4276 = vmatprep.mubr.f32.mxu0 0.0
      %4277 = vmatmul.mubr.f32.gmra.mrb[0].mxu0 %v4154
      %v4278 = vpop.f32.mrb[0].mxu0
      %v4279 = vadd.f32 0.0, %v4278
      %v4280 = vpop.f32.mrb[0].mxu0
      %4281 = vmatprep.mubr.f32.mxu0 0.0
      %4282 = vmatmul.mubr.f32.gmra.mrb[0].mxu0 %v4155
      %v4283 = vpop.f32.mrb[0].mxu0
      %v4284 = vadd.f32 0.0, %v4283
      %v4285 = vpop.f32.mrb[0].mxu0
      %4286 = vmatprep.mubr.f32.mxu0 0.0
      %4287 = vmatmul.mubr.f32.gmra.mrb[0].mxu0 %v4162
      %v4288 = vpop.f32.mrb[0].mxu0
      %v4289 = vadd.f32 0.0, %v4288
      %v4290 = vpop.f32.mrb[0].mxu0
      %4291 = vmatprep.mubr.f32.mxu0 0.0
      %4292 = vmatmul.mubr.f32.gmra.mrb[0].mxu0 %v4163
      %v4293 = vpop.f32.mrb[0].mxu0
      %v4294 = vadd.f32 0.0, %v4293
      %v4295 = vpop.f32.mrb[0].mxu0
      %4296 = vmatprep.mubr.f32.mxu0 0.0
      %4297 = vmatmul.mubr.f32.gmra.mrb[0].mxu0 %v4164
      %v4298 = vpop.f32.mrb[0].mxu0
      %v4299 = vadd.f32 0.0, %v4298
      %v4300 = vpop.f32.mrb[0].mxu0
      %4301 = vmatprep.mubr.f32.mxu0 0.0
      %4302 = vmatmul.mubr.f32.gmra.mrb[0].mxu0 %v4165
      %v4303 = vpop.f32.mrb[0].mxu0
      %v4304 = vadd.f32 0.0, %v4303
      %v4305 = vpop.f32.mrb[0].mxu0
      %4306 = vmatprep.mubr.f32.mxu0 0.0
      %4307 = vmatmul.mubr.f32.gmra.mrb[0].mxu0 %v4166
      %v4308 = vpop.f32.mrb[0].mxu0
      %v4309 = vadd.f32 0.0, %v4308
      %v4310 = vpop.f32.mrb[0].mxu0
      %4311 = vmatprep.mubr.f32.mxu0 0.0
      %4312 = vmatmul.mubr.f32.gmra.mrb[0].mxu0 %v4167
      %v4313 = vpop.f32.mrb[0].mxu0
      %v4314 = vadd.f32 0.0, %v4313
      %v4315 = vpop.f32.mrb[0].mxu0
      %4316 = vmatprep.mubr.f32.mxu0 0.0
      %4317 = vmatmul.mubr.f32.gmra.mrb[0].mxu0 %v4168
      %v4318 = vpop.f32.mrb[0].mxu0
      %v4319 = vadd.f32 0.0, %v4318
      %v4320 = vpop.f32.mrb[0].mxu0
      %4321 = vmatprep.mubr.f32.mxu0 0.0
      %4322 = vmatmul.mubr.f32.gmra.mrb[0].mxu0 %v4169
      %v4323 = vpop.f32.mrb[0].mxu0
      %v4324 = vadd.f32 0.0, %v4323
      %v4325 = vpop.f32.mrb[0].mxu0
      %4326 = vmatprep.mubr.f32.mxu0 0.0
      %4327 = vmatmul.mubr.f32.gmra.mrb[0].mxu0 %v4170
      %v4328 = vpop.f32.mrb[0].mxu0
      %v4329 = vadd.f32 0.0, %v4328
      %v4330 = vpop.f32.mrb[0].mxu0
      %4331 = vmatprep.mubr.f32.mxu0 0.0
      %4332 = vmatmul.mubr.f32.gmra.mrb[0].mxu0 %v4171
      %v4333 = vpop.f32.mrb[0].mxu0
      %v4334 = vadd.f32 0.0, %v4333
      %v4335 = vpop.f32.mrb[0].mxu0
      %4336 = vdwg.mxu0
      %v4339 = vrot.slane %v4299, 1
      %v4340 = vrot.slane %v4324, 1
      %v4343 = vmul.f32 %v4249, %v4339
      %v4344 = vmul.f32 %v4274, %v4340
      %v4345 = vrot.slane %v4299, 7
      %v4346 = vrot.slane %v4324, 7
      %v4349 = vmul.f32 %v4249, %v4345
      %v4350 = vmul.f32 %v4274, %v4346
      %v4353 = vrot.slane %v4349, 1
      %v4354 = vrot.slane %v4350, 1
      %v4357 = vsub.f32 %v4343, %v4353
      %v4358 = vsub.f32 %v4344, %v4354
      %v4359 = vrcp.pop %v4357
      %v4360 = vrcp.pop %v4358
      %v4361 = vmul.f32 %v4357, %v4359
      %v4362 = vmul.f32 %v4358, %v4360
      %v4363 = vsub.f32 2.0, %v4361
      %v4364 = vsub.f32 2.0, %v4362
      %v4365 = vmul.f32 %v4359, %v4363
      %v4366 = vmul.f32 %v4360, %v4364
      %v4367 = vlaneseq
      %v4368 = vshrl.u32 %v4367, 7
      %v4369 = vsub.s32 3, %v4368
      %v4370 = vrot.slane %v4299, %v4369
      %v4371 = vlaneseq
      %v4372 = vshrl.u32 %v4371, 7
      %v4373 = vsub.s32 3, %v4372
      %v4374 = vrot.slane %v4324, %v4373
      %v4375 = vmul.f32 %v4370, %v4239
      %v4376 = vmul.f32 %v4370, %v4244
      %v4377 = vmul.f32 %v4370, %v4249
      %v4378 = vmul.f32 %v4370, %v4254
      %v4379 = vmul.f32 %v4370, %v4259
      %v4380 = vmul.f32 %v4374, %v4264
      %v4381 = vmul.f32 %v4374, %v4269
      %v4382 = vmul.f32 %v4374, %v4274
      %v4383 = vmul.f32 %v4374, %v4279
      %v4384 = vmul.f32 %v4374, %v4284
      %v4385 = vlaneseq
      %v4386 = vshrl.u32 %v4385, 7
      %v4387 = vsub.s32 3, %v4386
      %v4388 = vrot.slane %v4249, %v4387
      %v4389 = vlaneseq
      %v4390 = vshrl.u32 %v4389, 7
      %v4391 = vsub.s32 3, %v4390
      %v4392 = vrot.slane %v4274, %v4391
      %v4393 = vmul.f32 %v4388, %v4289
      %v4394 = vmul.f32 %v4388, %v4294
      %v4395 = vmul.f32 %v4388, %v4299
      %v4396 = vmul.f32 %v4388, %v4304
      %v4397 = vmul.f32 %v4388, %v4309
      %v4398 = vmul.f32 %v4392, %v4314
      %v4399 = vmul.f32 %v4392, %v4319
      %v4400 = vmul.f32 %v4392, %v4324
      %v4401 = vmul.f32 %v4392, %v4329
      %v4402 = vmul.f32 %v4392, %v4334
      %v4403 = vsub.f32 %v4375, %v4393
      %v4404 = vsub.f32 %v4376, %v4394
      %v4405 = vsub.f32 %v4377, %v4395
      %v4406 = vsub.f32 %v4378, %v4396
      %v4407 = vsub.f32 %v4379, %v4397
      %v4408 = vsub.f32 %v4380, %v4398
      %v4409 = vsub.f32 %v4381, %v4399
      %v4410 = vsub.f32 %v4382, %v4400
      %v4411 = vsub.f32 %v4383, %v4401
      %v4412 = vsub.f32 %v4384, %v4402
      %v4413 = vlaneseq
      %v4414 = vshrl.u32 %v4413, 7
      %v4415 = vsub.s32 2, %v4414
      %v4416 = vrot.slane %v4365, %v4415
      %v4417 = vlaneseq
      %v4418 = vshrl.u32 %v4417, 7
      %v4419 = vsub.s32 2, %v4418
      %v4420 = vrot.slane %v4366, %v4419
      %v4421 = vmul.f32 %v4403, %v4416
      %v4422 = vmul.f32 %v4404, %v4416
      %v4423 = vmul.f32 %v4405, %v4416
      %v4424 = vmul.f32 %v4406, %v4416
      %v4425 = vmul.f32 %v4407, %v4416
      %v4426 = vmul.f32 %v4408, %v4420
      %v4427 = vmul.f32 %v4409, %v4420
      %v4428 = vmul.f32 %v4410, %v4420
      %v4429 = vmul.f32 %v4411, %v4420
      %v4430 = vmul.f32 %v4412, %v4420
      %v4431 = vlaneseq
      %v4432 = vshrl.u32 %v4431, 7
      %v4433 = vsub.s32 2, %v4432
      %v4434 = vrot.slane %v4249, %v4433
      %v4435 = vlaneseq
      %v4436 = vshrl.u32 %v4435, 7
      %v4437 = vsub.s32 2, %v4436
      %v4438 = vrot.slane %v4274, %v4437
      %v4439 = vmul.f32 %v4434, %v4289
      %v4440 = vmul.f32 %v4434, %v4294
      %v4441 = vmul.f32 %v4434, %v4299
      %v4442 = vmul.f32 %v4434, %v4304
      %v4443 = vmul.f32 %v4434, %v4309
      %v4444 = vmul.f32 %v4438, %v4314
      %v4445 = vmul.f32 %v4438, %v4319
      %v4446 = vmul.f32 %v4438, %v4324
      %v4447 = vmul.f32 %v4438, %v4329
      %v4448 = vmul.f32 %v4438, %v4334
      %v4449 = vlaneseq
      %v4450 = vshrl.u32 %v4449, 7
      %v4451 = vsub.s32 2, %v4450
      %v4452 = vrot.slane %v4299, %v4451
      %v4453 = vlaneseq
      %v4454 = vshrl.u32 %v4453, 7
      %v4455 = vsub.s32 2, %v4454
      %v4456 = vrot.slane %v4324, %v4455
      %v4457 = vmul.f32 %v4452, %v4239
      %v4458 = vmul.f32 %v4452, %v4244
      %v4459 = vmul.f32 %v4452, %v4249
      %v4460 = vmul.f32 %v4452, %v4254
      %v4461 = vmul.f32 %v4452, %v4259
      %v4462 = vmul.f32 %v4456, %v4264
      %v4463 = vmul.f32 %v4456, %v4269
      %v4464 = vmul.f32 %v4456, %v4274
      %v4465 = vmul.f32 %v4456, %v4279
      %v4466 = vmul.f32 %v4456, %v4284
      %v4467 = vsub.f32 %v4439, %v4457
      %v4468 = vsub.f32 %v4440, %v4458
      %v4469 = vsub.f32 %v4441, %v4459
      %v4470 = vsub.f32 %v4442, %v4460
      %v4471 = vsub.f32 %v4443, %v4461
      %v4472 = vsub.f32 %v4444, %v4462
      %v4473 = vsub.f32 %v4445, %v4463
      %v4474 = vsub.f32 %v4446, %v4464
      %v4475 = vsub.f32 %v4447, %v4465
      %v4476 = vsub.f32 %v4448, %v4466
      %v4477 = vmul.f32 %v4467, %v4416
      %v4478 = vmul.f32 %v4468, %v4416
      %v4479 = vmul.f32 %v4469, %v4416
      %v4480 = vmul.f32 %v4470, %v4416
      %v4481 = vmul.f32 %v4471, %v4416
      %v4482 = vmul.f32 %v4472, %v4420
      %v4483 = vmul.f32 %v4473, %v4420
      %v4484 = vmul.f32 %v4474, %v4420
      %v4485 = vmul.f32 %v4475, %v4420
      %v4486 = vmul.f32 %v4476, %v4420
      %v4487 = vlaneseq
      %v4488 = vshrl.u32 %v4487, 7
      %v4489 = vsub.s32 2, %v4488
      %v4490 = vrot.slane %v4130, %v4489
      %v4491 = vlaneseq
      %v4492 = vshrl.u32 %v4491, 7
      %v4493 = vsub.s32 2, %v4492
      %v4494 = vrot.slane %v4135, %v4493
      %v4495 = vmul.f32 %v4490, %v4421
      %v4496 = vmul.f32 %v4490, %v4422
      %v4497 = vmul.f32 %v4490, %v4423
      %v4498 = vmul.f32 %v4490, %v4424
      %v4499 = vmul.f32 %v4490, %v4425
      %v4500 = vmul.f32 %v4494, %v4426
      %v4501 = vmul.f32 %v4494, %v4427
      %v4502 = vmul.f32 %v4494, %v4428
      %v4503 = vmul.f32 %v4494, %v4429
      %v4504 = vmul.f32 %v4494, %v4430
      %v4505 = vsub.f32 %v4128, %v4495
      %v4506 = vsub.f32 %v4129, %v4496
      %v4507 = vsub.f32 %v4130, %v4497
      %v4508 = vsub.f32 %v4131, %v4498
      %v4509 = vsub.f32 %v4132, %v4499
      %v4510 = vsub.f32 %v4133, %v4500
      %v4511 = vsub.f32 %v4134, %v4501
      %v4512 = vsub.f32 %v4135, %v4502
      %v4513 = vsub.f32 %v4136, %v4503
      %v4514 = vsub.f32 %v4137, %v4504
      %v4515 = vlaneseq
      %v4516 = vshrl.u32 %v4515, 7
      %v4517 = vsub.s32 3, %v4516
      %v4518 = vrot.slane %v4130, %v4517
      %v4519 = vlaneseq
      %v4520 = vshrl.u32 %v4519, 7
      %v4521 = vsub.s32 3, %v4520
      %v4522 = vrot.slane %v4135, %v4521
      %v4523 = vmul.f32 %v4518, %v4477
      %v4524 = vmul.f32 %v4518, %v4478
      %v4525 = vmul.f32 %v4518, %v4479
      %v4526 = vmul.f32 %v4518, %v4480
      %v4527 = vmul.f32 %v4518, %v4481
      %v4528 = vmul.f32 %v4522, %v4482
      %v4529 = vmul.f32 %v4522, %v4483
      %v4530 = vmul.f32 %v4522, %v4484
      %v4531 = vmul.f32 %v4522, %v4485
      %v4532 = vmul.f32 %v4522, %v4486
      %v4533 = vsub.f32 %v4505, %v4523
      %v4534 = vsub.f32 %v4506, %v4524
      %v4535 = vsub.f32 %v4507, %v4525
      %v4536 = vsub.f32 %v4508, %v4526
      %v4537 = vsub.f32 %v4509, %v4527
      %v4538 = vsub.f32 %v4510, %v4528
      %v4539 = vsub.f32 %v4511, %v4529
      %v4540 = vsub.f32 %v4512, %v4530
      %v4541 = vsub.f32 %v4513, %v4531
      %v4542 = vsub.f32 %v4514, %v4532
      %v4543 = vsel %vm4145, %v4421, %v4533
      %v4544 = vsel %vm4145, %v4422, %v4534
      %v4545 = vsel %vm4145, %v4423, %v4535
      %v4546 = vsel %vm4145, %v4424, %v4536
      %v4547 = vsel %vm4145, %v4425, %v4537
      %v4548 = vsel %vm4145, %v4426, %v4538
      %v4549 = vsel %vm4145, %v4427, %v4539
      %v4550 = vsel %vm4145, %v4428, %v4540
      %v4551 = vsel %vm4145, %v4429, %v4541
      %v4552 = vsel %vm4145, %v4430, %v4542
      %v4553 = vsel %vm4161, %v4477, %v4543
      %v4554 = vsel %vm4161, %v4478, %v4544
      %v4555 = vsel %vm4161, %v4479, %v4545
      %v4556 = vsel %vm4161, %v4480, %v4546
      %v4557 = vsel %vm4161, %v4481, %v4547
      %v4558 = vsel %vm4161, %v4482, %v4548
      %v4559 = vsel %vm4161, %v4483, %v4549
      %v4560 = vsel %vm4161, %v4484, %v4550
      %v4561 = vsel %vm4161, %v4485, %v4551
      %v4562 = vsel %vm4161, %v4486, %v4552
      %vm4563 = vcmp.eq.s32.totalorder %v93, 20
      %vm4564 = vcmp.eq.s32.totalorder %v93, 21
      %v4565 = vsel %vm4563, 1, 0
      %v4566 = vlaneseq
      %v4567 = vshrl.u32 %v4566, 7
      %v4568 = vsub.s32 0, %v4567
      %v4569 = vrot.slane %v4565, %v4568
      %vm4570 = vcmp.eq.s32.totalorder %v4569, 1
      %v4571 = vsel %vm4570, %v4553, 0.0
      %v4572 = vsel %vm4570, %v4554, 0.0
      %v4573 = vsel %vm4570, %v4555, 0.0
      %v4574 = vsel %vm4570, %v4556, 0.0
      %v4575 = vsel %vm4570, %v4557, 0.0
      %v4576 = vsel %vm4570, %v4558, 0.0
      %v4577 = vsel %vm4570, %v4559, 0.0
      %v4578 = vsel %vm4570, %v4560, 0.0
      %v4579 = vsel %vm4570, %v4561, 0.0
      %v4580 = vsel %vm4570, %v4562, 0.0
      %v4581 = vsel %vm4564, 1, 0
      %v4582 = vlaneseq
      %v4583 = vshrl.u32 %v4582, 7
      %v4584 = vsub.s32 0, %v4583
      %v4585 = vrot.slane %v4581, %v4584
      %vm4586 = vcmp.eq.s32.totalorder %v4585, 1
      %v4587 = vsel %vm4586, %v4553, 0.0
      %v4588 = vsel %vm4586, %v4554, 0.0
      %v4589 = vsel %vm4586, %v4555, 0.0
      %v4590 = vsel %vm4586, %v4556, 0.0
      %v4591 = vsel %vm4586, %v4557, 0.0
      %v4592 = vsel %vm4586, %v4558, 0.0
      %v4593 = vsel %vm4586, %v4559, 0.0
      %v4594 = vsel %vm4586, %v4560, 0.0
      %v4595 = vsel %vm4586, %v4561, 0.0
      %v4596 = vsel %vm4586, %v4562, 0.0
      %4597 = vmatprep.subr.mxu0 0.0
      %4598 = vmatpush1.msra.mxu0 %v77
      %4599 = vmatprep.subr.mxu0 0.0
      %4600 = vmatpush1.msra.mxu0 %v78
      %4601 = vmatprep.subr.mxu0 0.0
      %4602 = vmatpush1.msra.mxu0 %v79
      %4603 = vmatprep.subr.mxu0 0.0
      %4604 = vmatpush1.msra.mxu0 %v80
      %4605 = vmatprep.subr.mxu0 0.0
      %4606 = vmatpush1.msra.mxu0 %v81
      %4607 = vmatprep.subr.mxu0 0.0
      %4608 = vmatpush1.msra.mxu0 %v82
      %4609 = vmatprep.subr.mxu0 0.0
      %4610 = vmatpush1.msra.mxu0 %v83
      %4611 = vmatprep.subr.mxu0 0.0
      %4612 = vmatpush1.msra.mxu0 %v84
      %4613 = vmatprep.subr.mxu0 0.0
      %4614 = vmatpush1.msra.mxu0 %v85
      %4615 = vmatprep.subr.mxu0 0.0
      %4616 = vmatpush1.msra.mxu0 %v86
      %4617 = vmatprep.subr.mxu0 0.0
      %4618 = vmatpush1.msra.mxu0 %v87
      %4619 = vmatprep.subr.mxu0 0.0
      %4620 = vmatpush1.msra.mxu0 %v88
      %4621 = vmatprep.subr.mxu0 0.0
      %4622 = vmatpush1.msra.mxu0 %v89
      %4623 = vmatprep.subr.mxu0 0.0
      %4624 = vmatpush1.msra.mxu0 %v90
      %4625 = vmatprep.subr.mxu0 0.0
      %4626 = vmatpush1.msra.mxu0 %v91
      %4627 = vmatprep.subr.mxu0 0.0
      %4628 = vmatpush1.msra.mxu0 %v92
      %4629 = vmatprep.subr.mxu0 0.0
      %4630 = vmatpush1.msra.mxu0 0.0
      %4631 = vmatprep.subr.mxu0 0.0
      %4632 = vmatpush1.msra.mxu0 0.0
      %4633 = vmatprep.subr.mxu0 0.0
      %4634 = vmatpush1.msra.mxu0 0.0
      %4635 = vmatprep.subr.mxu0 0.0
      %4636 = vmatpush1.msra.mxu0 0.0
      %4637 = vmatprep.subr.mxu0 0.0
      %4638 = vmatpush1.msra.mxu0 0.0
      %4639 = vmatprep.subr.mxu0 0.0
      %4640 = vmatpush1.msra.mxu0 0.0
      %4641 = vmatprep.subr.mxu0 0.0
      %4642 = vmatpush1.msra.mxu0 0.0
      %4643 = vmatprep.subr.mxu0 0.0
      %4644 = vmatpush1.msra.mxu0 0.0
      %4645 = vmatprep.subr.mxu0 0.0
      %4646 = vmatpush1.msra.mxu0 0.0
      %4647 = vmatprep.subr.mxu0 0.0
      %4648 = vmatpush1.msra.mxu0 0.0
      %4649 = vmatprep.subr.mxu0 0.0
      %4650 = vmatpush1.msra.mxu0 0.0
      %4651 = vmatprep.subr.mxu0 0.0
      %4652 = vmatpush1.msra.mxu0 0.0
      %4653 = vmatprep.subr.mxu0 0.0
      %4654 = vmatpush1.msra.mxu0 0.0
      %4655 = vmatprep.subr.mxu0 0.0
      %4656 = vmatpush1.msra.mxu0 0.0
      %4657 = vmatprep.subr.mxu0 0.0
      %4658 = vmatpush1.msra.mxu0 0.0
      %4659 = vmatprep.subr.mxu0 0.0
      %4660 = vmatpush1.msra.mxu0 0.0
      %4661 = vmatprep.mubr.f32.mxu0 0.0
      %4662 = vmatmul.mubr.f32.gmra.mrb[0].mxu0 %v4571
      %v4663 = vpop.f32.mrb[0].mxu0
      %v4664 = vadd.f32 0.0, %v4663
      %v4665 = vpop.f32.mrb[0].mxu0
      %4666 = vmatprep.mubr.f32.mxu0 0.0
      %4667 = vmatmul.mubr.f32.gmra.mrb[0].mxu0 %v4572
      %v4668 = vpop.f32.mrb[0].mxu0
      %v4669 = vadd.f32 0.0, %v4668
      %v4670 = vpop.f32.mrb[0].mxu0
      %4671 = vmatprep.mubr.f32.mxu0 0.0
      %4672 = vmatmul.mubr.f32.gmra.mrb[0].mxu0 %v4573
      %v4673 = vpop.f32.mrb[0].mxu0
      %v4674 = vadd.f32 0.0, %v4673
      %v4675 = vpop.f32.mrb[0].mxu0
      %4676 = vmatprep.mubr.f32.mxu0 0.0
      %4677 = vmatmul.mubr.f32.gmra.mrb[0].mxu0 %v4574
      %v4678 = vpop.f32.mrb[0].mxu0
      %v4679 = vadd.f32 0.0, %v4678
      %v4680 = vpop.f32.mrb[0].mxu0
      %4681 = vmatprep.mubr.f32.mxu0 0.0
      %4682 = vmatmul.mubr.f32.gmra.mrb[0].mxu0 %v4575
      %v4683 = vpop.f32.mrb[0].mxu0
      %v4684 = vadd.f32 0.0, %v4683
      %v4685 = vpop.f32.mrb[0].mxu0
      %4686 = vmatprep.mubr.f32.mxu0 0.0
      %4687 = vmatmul.mubr.f32.gmra.mrb[0].mxu0 %v4576
      %v4688 = vpop.f32.mrb[0].mxu0
      %v4689 = vadd.f32 0.0, %v4688
      %v4690 = vpop.f32.mrb[0].mxu0
      %4691 = vmatprep.mubr.f32.mxu0 0.0
      %4692 = vmatmul.mubr.f32.gmra.mrb[0].mxu0 %v4577
      %v4693 = vpop.f32.mrb[0].mxu0
      %v4694 = vadd.f32 0.0, %v4693
      %v4695 = vpop.f32.mrb[0].mxu0
      %4696 = vmatprep.mubr.f32.mxu0 0.0
      %4697 = vmatmul.mubr.f32.gmra.mrb[0].mxu0 %v4578
      %v4698 = vpop.f32.mrb[0].mxu0
      %v4699 = vadd.f32 0.0, %v4698
      %v4700 = vpop.f32.mrb[0].mxu0
      %4701 = vmatprep.mubr.f32.mxu0 0.0
      %4702 = vmatmul.mubr.f32.gmra.mrb[0].mxu0 %v4579
      %v4703 = vpop.f32.mrb[0].mxu0
      %v4704 = vadd.f32 0.0, %v4703
      %v4705 = vpop.f32.mrb[0].mxu0
      %4706 = vmatprep.mubr.f32.mxu0 0.0
      %4707 = vmatmul.mubr.f32.gmra.mrb[0].mxu0 %v4580
      %v4708 = vpop.f32.mrb[0].mxu0
      %v4709 = vadd.f32 0.0, %v4708
      %v4710 = vpop.f32.mrb[0].mxu0
      %4711 = vmatprep.mubr.f32.mxu0 0.0
      %4712 = vmatmul.mubr.f32.gmra.mrb[0].mxu0 %v4587
      %v4713 = vpop.f32.mrb[0].mxu0
      %v4714 = vadd.f32 0.0, %v4713
      %v4715 = vpop.f32.mrb[0].mxu0
      %4716 = vmatprep.mubr.f32.mxu0 0.0
      %4717 = vmatmul.mubr.f32.gmra.mrb[0].mxu0 %v4588
      %v4718 = vpop.f32.mrb[0].mxu0
      %v4719 = vadd.f32 0.0, %v4718
      %v4720 = vpop.f32.mrb[0].mxu0
      %4721 = vmatprep.mubr.f32.mxu0 0.0
      %4722 = vmatmul.mubr.f32.gmra.mrb[0].mxu0 %v4589
      %v4723 = vpop.f32.mrb[0].mxu0
      %v4724 = vadd.f32 0.0, %v4723
      %v4725 = vpop.f32.mrb[0].mxu0
      %4726 = vmatprep.mubr.f32.mxu0 0.0
      %4727 = vmatmul.mubr.f32.gmra.mrb[0].mxu0 %v4590
      %v4728 = vpop.f32.mrb[0].mxu0
      %v4729 = vadd.f32 0.0, %v4728
      %v4730 = vpop.f32.mrb[0].mxu0
      %4731 = vmatprep.mubr.f32.mxu0 0.0
      %4732 = vmatmul.mubr.f32.gmra.mrb[0].mxu0 %v4591
      %v4733 = vpop.f32.mrb[0].mxu0
      %v4734 = vadd.f32 0.0, %v4733
      %v4735 = vpop.f32.mrb[0].mxu0
      %4736 = vmatprep.mubr.f32.mxu0 0.0
      %4737 = vmatmul.mubr.f32.gmra.mrb[0].mxu0 %v4592
      %v4738 = vpop.f32.mrb[0].mxu0
      %v4739 = vadd.f32 0.0, %v4738
      %v4740 = vpop.f32.mrb[0].mxu0
      %4741 = vmatprep.mubr.f32.mxu0 0.0
      %4742 = vmatmul.mubr.f32.gmra.mrb[0].mxu0 %v4593
      %v4743 = vpop.f32.mrb[0].mxu0
      %v4744 = vadd.f32 0.0, %v4743
      %v4745 = vpop.f32.mrb[0].mxu0
      %4746 = vmatprep.mubr.f32.mxu0 0.0
      %4747 = vmatmul.mubr.f32.gmra.mrb[0].mxu0 %v4594
      %v4748 = vpop.f32.mrb[0].mxu0
      %v4749 = vadd.f32 0.0, %v4748
      %v4750 = vpop.f32.mrb[0].mxu0
      %4751 = vmatprep.mubr.f32.mxu0 0.0
      %4752 = vmatmul.mubr.f32.gmra.mrb[0].mxu0 %v4595
      %v4753 = vpop.f32.mrb[0].mxu0
      %v4754 = vadd.f32 0.0, %v4753
      %v4755 = vpop.f32.mrb[0].mxu0
      %4756 = vmatprep.mubr.f32.mxu0 0.0
      %4757 = vmatmul.mubr.f32.gmra.mrb[0].mxu0 %v4596
      %v4758 = vpop.f32.mrb[0].mxu0
      %v4759 = vadd.f32 0.0, %v4758
      %v4760 = vpop.f32.mrb[0].mxu0
      %4761 = vdwg.mxu0
      %v4764 = vrot.slane %v4724, 1
      %v4765 = vrot.slane %v4749, 1
      %v4768 = vmul.f32 %v4674, %v4764
      %v4769 = vmul.f32 %v4699, %v4765
      %v4770 = vrot.slane %v4724, 7
      %v4771 = vrot.slane %v4749, 7
      %v4774 = vmul.f32 %v4674, %v4770
      %v4775 = vmul.f32 %v4699, %v4771
      %v4778 = vrot.slane %v4774, 1
      %v4779 = vrot.slane %v4775, 1
      %v4782 = vsub.f32 %v4768, %v4778
      %v4783 = vsub.f32 %v4769, %v4779
      %v4784 = vrcp.pop %v4782
      %v4785 = vrcp.pop %v4783
      %v4786 = vmul.f32 %v4782, %v4784
      %v4787 = vmul.f32 %v4783, %v4785
      %v4788 = vsub.f32 2.0, %v4786
      %v4789 = vsub.f32 2.0, %v4787
      %v4790 = vmul.f32 %v4784, %v4788
      %v4791 = vmul.f32 %v4785, %v4789
      %v4792 = vlaneseq
      %v4793 = vshrl.u32 %v4792, 7
      %v4794 = vsub.s32 5, %v4793
      %v4795 = vrot.slane %v4724, %v4794
      %v4796 = vlaneseq
      %v4797 = vshrl.u32 %v4796, 7
      %v4798 = vsub.s32 5, %v4797
      %v4799 = vrot.slane %v4749, %v4798
      %v4800 = vmul.f32 %v4795, %v4664
      %v4801 = vmul.f32 %v4795, %v4669
      %v4802 = vmul.f32 %v4795, %v4674
      %v4803 = vmul.f32 %v4795, %v4679
      %v4804 = vmul.f32 %v4795, %v4684
      %v4805 = vmul.f32 %v4799, %v4689
      %v4806 = vmul.f32 %v4799, %v4694
      %v4807 = vmul.f32 %v4799, %v4699
      %v4808 = vmul.f32 %v4799, %v4704
      %v4809 = vmul.f32 %v4799, %v4709
      %v4810 = vlaneseq
      %v4811 = vshrl.u32 %v4810, 7
      %v4812 = vsub.s32 5, %v4811
      %v4813 = vrot.slane %v4674, %v4812
      %v4814 = vlaneseq
      %v4815 = vshrl.u32 %v4814, 7
      %v4816 = vsub.s32 5, %v4815
      %v4817 = vrot.slane %v4699, %v4816
      %v4818 = vmul.f32 %v4813, %v4714
      %v4819 = vmul.f32 %v4813, %v4719
      %v4820 = vmul.f32 %v4813, %v4724
      %v4821 = vmul.f32 %v4813, %v4729
      %v4822 = vmul.f32 %v4813, %v4734
      %v4823 = vmul.f32 %v4817, %v4739
      %v4824 = vmul.f32 %v4817, %v4744
      %v4825 = vmul.f32 %v4817, %v4749
      %v4826 = vmul.f32 %v4817, %v4754
      %v4827 = vmul.f32 %v4817, %v4759
      %v4828 = vsub.f32 %v4800, %v4818
      %v4829 = vsub.f32 %v4801, %v4819
      %v4830 = vsub.f32 %v4802, %v4820
      %v4831 = vsub.f32 %v4803, %v4821
      %v4832 = vsub.f32 %v4804, %v4822
      %v4833 = vsub.f32 %v4805, %v4823
      %v4834 = vsub.f32 %v4806, %v4824
      %v4835 = vsub.f32 %v4807, %v4825
      %v4836 = vsub.f32 %v4808, %v4826
      %v4837 = vsub.f32 %v4809, %v4827
      %v4838 = vlaneseq
      %v4839 = vshrl.u32 %v4838, 7
      %v4840 = vsub.s32 4, %v4839
      %v4841 = vrot.slane %v4790, %v4840
      %v4842 = vlaneseq
      %v4843 = vshrl.u32 %v4842, 7
      %v4844 = vsub.s32 4, %v4843
      %v4845 = vrot.slane %v4791, %v4844
      %v4846 = vmul.f32 %v4828, %v4841
      %v4847 = vmul.f32 %v4829, %v4841
      %v4848 = vmul.f32 %v4830, %v4841
      %v4849 = vmul.f32 %v4831, %v4841
      %v4850 = vmul.f32 %v4832, %v4841
      %v4851 = vmul.f32 %v4833, %v4845
      %v4852 = vmul.f32 %v4834, %v4845
      %v4853 = vmul.f32 %v4835, %v4845
      %v4854 = vmul.f32 %v4836, %v4845
      %v4855 = vmul.f32 %v4837, %v4845
      %v4856 = vlaneseq
      %v4857 = vshrl.u32 %v4856, 7
      %v4858 = vsub.s32 4, %v4857
      %v4859 = vrot.slane %v4674, %v4858
      %v4860 = vlaneseq
      %v4861 = vshrl.u32 %v4860, 7
      %v4862 = vsub.s32 4, %v4861
      %v4863 = vrot.slane %v4699, %v4862
      %v4864 = vmul.f32 %v4859, %v4714
      %v4865 = vmul.f32 %v4859, %v4719
      %v4866 = vmul.f32 %v4859, %v4724
      %v4867 = vmul.f32 %v4859, %v4729
      %v4868 = vmul.f32 %v4859, %v4734
      %v4869 = vmul.f32 %v4863, %v4739
      %v4870 = vmul.f32 %v4863, %v4744
      %v4871 = vmul.f32 %v4863, %v4749
      %v4872 = vmul.f32 %v4863, %v4754
      %v4873 = vmul.f32 %v4863, %v4759
      %v4874 = vlaneseq
      %v4875 = vshrl.u32 %v4874, 7
      %v4876 = vsub.s32 4, %v4875
      %v4877 = vrot.slane %v4724, %v4876
      %v4878 = vlaneseq
      %v4879 = vshrl.u32 %v4878, 7
      %v4880 = vsub.s32 4, %v4879
      %v4881 = vrot.slane %v4749, %v4880
      %v4882 = vmul.f32 %v4877, %v4664
      %v4883 = vmul.f32 %v4877, %v4669
      %v4884 = vmul.f32 %v4877, %v4674
      %v4885 = vmul.f32 %v4877, %v4679
      %v4886 = vmul.f32 %v4877, %v4684
      %v4887 = vmul.f32 %v4881, %v4689
      %v4888 = vmul.f32 %v4881, %v4694
      %v4889 = vmul.f32 %v4881, %v4699
      %v4890 = vmul.f32 %v4881, %v4704
      %v4891 = vmul.f32 %v4881, %v4709
      %v4892 = vsub.f32 %v4864, %v4882
      %v4893 = vsub.f32 %v4865, %v4883
      %v4894 = vsub.f32 %v4866, %v4884
      %v4895 = vsub.f32 %v4867, %v4885
      %v4896 = vsub.f32 %v4868, %v4886
      %v4897 = vsub.f32 %v4869, %v4887
      %v4898 = vsub.f32 %v4870, %v4888
      %v4899 = vsub.f32 %v4871, %v4889
      %v4900 = vsub.f32 %v4872, %v4890
      %v4901 = vsub.f32 %v4873, %v4891
      %v4902 = vmul.f32 %v4892, %v4841
      %v4903 = vmul.f32 %v4893, %v4841
      %v4904 = vmul.f32 %v4894, %v4841
      %v4905 = vmul.f32 %v4895, %v4841
      %v4906 = vmul.f32 %v4896, %v4841
      %v4907 = vmul.f32 %v4897, %v4845
      %v4908 = vmul.f32 %v4898, %v4845
      %v4909 = vmul.f32 %v4899, %v4845
      %v4910 = vmul.f32 %v4900, %v4845
      %v4911 = vmul.f32 %v4901, %v4845
      %v4912 = vlaneseq
      %v4913 = vshrl.u32 %v4912, 7
      %v4914 = vsub.s32 4, %v4913
      %v4915 = vrot.slane %v4555, %v4914
      %v4916 = vlaneseq
      %v4917 = vshrl.u32 %v4916, 7
      %v4918 = vsub.s32 4, %v4917
      %v4919 = vrot.slane %v4560, %v4918
      %v4920 = vmul.f32 %v4915, %v4846
      %v4921 = vmul.f32 %v4915, %v4847
      %v4922 = vmul.f32 %v4915, %v4848
      %v4923 = vmul.f32 %v4915, %v4849
      %v4924 = vmul.f32 %v4915, %v4850
      %v4925 = vmul.f32 %v4919, %v4851
      %v4926 = vmul.f32 %v4919, %v4852
      %v4927 = vmul.f32 %v4919, %v4853
      %v4928 = vmul.f32 %v4919, %v4854
      %v4929 = vmul.f32 %v4919, %v4855
      %v4930 = vsub.f32 %v4553, %v4920
      %v4931 = vsub.f32 %v4554, %v4921
      %v4932 = vsub.f32 %v4555, %v4922
      %v4933 = vsub.f32 %v4556, %v4923
      %v4934 = vsub.f32 %v4557, %v4924
      %v4935 = vsub.f32 %v4558, %v4925
      %v4936 = vsub.f32 %v4559, %v4926
      %v4937 = vsub.f32 %v4560, %v4927
      %v4938 = vsub.f32 %v4561, %v4928
      %v4939 = vsub.f32 %v4562, %v4929
      %v4940 = vlaneseq
      %v4941 = vshrl.u32 %v4940, 7
      %v4942 = vsub.s32 5, %v4941
      %v4943 = vrot.slane %v4555, %v4942
      %v4944 = vlaneseq
      %v4945 = vshrl.u32 %v4944, 7
      %v4946 = vsub.s32 5, %v4945
      %v4947 = vrot.slane %v4560, %v4946
      %v4948 = vmul.f32 %v4943, %v4902
      %v4949 = vmul.f32 %v4943, %v4903
      %v4950 = vmul.f32 %v4943, %v4904
      %v4951 = vmul.f32 %v4943, %v4905
      %v4952 = vmul.f32 %v4943, %v4906
      %v4953 = vmul.f32 %v4947, %v4907
      %v4954 = vmul.f32 %v4947, %v4908
      %v4955 = vmul.f32 %v4947, %v4909
      %v4956 = vmul.f32 %v4947, %v4910
      %v4957 = vmul.f32 %v4947, %v4911
      %v4958 = vsub.f32 %v4930, %v4948
      %v4959 = vsub.f32 %v4931, %v4949
      %v4960 = vsub.f32 %v4932, %v4950
      %v4961 = vsub.f32 %v4933, %v4951
      %v4962 = vsub.f32 %v4934, %v4952
      %v4963 = vsub.f32 %v4935, %v4953
      %v4964 = vsub.f32 %v4936, %v4954
      %v4965 = vsub.f32 %v4937, %v4955
      %v4966 = vsub.f32 %v4938, %v4956
      %v4967 = vsub.f32 %v4939, %v4957
      %v4968 = vsel %vm4570, %v4846, %v4958
      %v4969 = vsel %vm4570, %v4847, %v4959
      %v4970 = vsel %vm4570, %v4848, %v4960
      %v4971 = vsel %vm4570, %v4849, %v4961
      %v4972 = vsel %vm4570, %v4850, %v4962
      %v4973 = vsel %vm4570, %v4851, %v4963
      %v4974 = vsel %vm4570, %v4852, %v4964
      %v4975 = vsel %vm4570, %v4853, %v4965
      %v4976 = vsel %vm4570, %v4854, %v4966
      %v4977 = vsel %vm4570, %v4855, %v4967
      %v4978 = vsel %vm4586, %v4902, %v4968
      %v4979 = vsel %vm4586, %v4903, %v4969
      %v4980 = vsel %vm4586, %v4904, %v4970
      %v4981 = vsel %vm4586, %v4905, %v4971
      %v4982 = vsel %vm4586, %v4906, %v4972
      %v4983 = vsel %vm4586, %v4907, %v4973
      %v4984 = vsel %vm4586, %v4908, %v4974
      %v4985 = vsel %vm4586, %v4909, %v4975
      %v4986 = vsel %vm4586, %v4910, %v4976
      %v4987 = vsel %vm4586, %v4911, %v4977
      %vm4988 = vcmp.eq.s32.totalorder %v93, 22
      %vm4989 = vcmp.eq.s32.totalorder %v93, 23
      %v4990 = vsel %vm4988, 1, 0
      %v4991 = vlaneseq
      %v4992 = vshrl.u32 %v4991, 7
      %v4993 = vsub.s32 0, %v4992
      %v4994 = vrot.slane %v4990, %v4993
      %vm4995 = vcmp.eq.s32.totalorder %v4994, 1
      %v4996 = vsel %vm4995, %v4978, 0.0
      %v4997 = vsel %vm4995, %v4979, 0.0
      %v4998 = vsel %vm4995, %v4980, 0.0
      %v4999 = vsel %vm4995, %v4981, 0.0
      %v5000 = vsel %vm4995, %v4982, 0.0
      %v5001 = vsel %vm4995, %v4983, 0.0
      %v5002 = vsel %vm4995, %v4984, 0.0
      %v5003 = vsel %vm4995, %v4985, 0.0
      %v5004 = vsel %vm4995, %v4986, 0.0
      %v5005 = vsel %vm4995, %v4987, 0.0
      %v5006 = vsel %vm4989, 1, 0
      %v5007 = vlaneseq
      %v5008 = vshrl.u32 %v5007, 7
      %v5009 = vsub.s32 0, %v5008
      %v5010 = vrot.slane %v5006, %v5009
      %vm5011 = vcmp.eq.s32.totalorder %v5010, 1
      %v5012 = vsel %vm5011, %v4978, 0.0
      %v5013 = vsel %vm5011, %v4979, 0.0
      %v5014 = vsel %vm5011, %v4980, 0.0
      %v5015 = vsel %vm5011, %v4981, 0.0
      %v5016 = vsel %vm5011, %v4982, 0.0
      %v5017 = vsel %vm5011, %v4983, 0.0
      %v5018 = vsel %vm5011, %v4984, 0.0
      %v5019 = vsel %vm5011, %v4985, 0.0
      %v5020 = vsel %vm5011, %v4986, 0.0
      %v5021 = vsel %vm5011, %v4987, 0.0
      %5022 = vmatprep.subr.mxu0 0.0
      %5023 = vmatpush1.msra.mxu0 %v77
      %5024 = vmatprep.subr.mxu0 0.0
      %5025 = vmatpush1.msra.mxu0 %v78
      %5026 = vmatprep.subr.mxu0 0.0
      %5027 = vmatpush1.msra.mxu0 %v79
      %5028 = vmatprep.subr.mxu0 0.0
      %5029 = vmatpush1.msra.mxu0 %v80
      %5030 = vmatprep.subr.mxu0 0.0
      %5031 = vmatpush1.msra.mxu0 %v81
      %5032 = vmatprep.subr.mxu0 0.0
      %5033 = vmatpush1.msra.mxu0 %v82
      %5034 = vmatprep.subr.mxu0 0.0
      %5035 = vmatpush1.msra.mxu0 %v83
      %5036 = vmatprep.subr.mxu0 0.0
      %5037 = vmatpush1.msra.mxu0 %v84
      %5038 = vmatprep.subr.mxu0 0.0
      %5039 = vmatpush1.msra.mxu0 %v85
      %5040 = vmatprep.subr.mxu0 0.0
      %5041 = vmatpush1.msra.mxu0 %v86
      %5042 = vmatprep.subr.mxu0 0.0
      %5043 = vmatpush1.msra.mxu0 %v87
      %5044 = vmatprep.subr.mxu0 0.0
      %5045 = vmatpush1.msra.mxu0 %v88
      %5046 = vmatprep.subr.mxu0 0.0
      %5047 = vmatpush1.msra.mxu0 %v89
      %5048 = vmatprep.subr.mxu0 0.0
      %5049 = vmatpush1.msra.mxu0 %v90
      %5050 = vmatprep.subr.mxu0 0.0
      %5051 = vmatpush1.msra.mxu0 %v91
      %5052 = vmatprep.subr.mxu0 0.0
      %5053 = vmatpush1.msra.mxu0 %v92
      %5054 = vmatprep.subr.mxu0 0.0
      %5055 = vmatpush1.msra.mxu0 0.0
      %5056 = vmatprep.subr.mxu0 0.0
      %5057 = vmatpush1.msra.mxu0 0.0
      %5058 = vmatprep.subr.mxu0 0.0
      %5059 = vmatpush1.msra.mxu0 0.0
      %5060 = vmatprep.subr.mxu0 0.0
      %5061 = vmatpush1.msra.mxu0 0.0
      %5062 = vmatprep.subr.mxu0 0.0
      %5063 = vmatpush1.msra.mxu0 0.0
      %5064 = vmatprep.subr.mxu0 0.0
      %5065 = vmatpush1.msra.mxu0 0.0
      %5066 = vmatprep.subr.mxu0 0.0
      %5067 = vmatpush1.msra.mxu0 0.0
      %5068 = vmatprep.subr.mxu0 0.0
      %5069 = vmatpush1.msra.mxu0 0.0
      %5070 = vmatprep.subr.mxu0 0.0
      %5071 = vmatpush1.msra.mxu0 0.0
      %5072 = vmatprep.subr.mxu0 0.0
      %5073 = vmatpush1.msra.mxu0 0.0
      %5074 = vmatprep.subr.mxu0 0.0
      %5075 = vmatpush1.msra.mxu0 0.0
      %5076 = vmatprep.subr.mxu0 0.0
      %5077 = vmatpush1.msra.mxu0 0.0
      %5078 = vmatprep.subr.mxu0 0.0
      %5079 = vmatpush1.msra.mxu0 0.0
      %5080 = vmatprep.subr.mxu0 0.0
      %5081 = vmatpush1.msra.mxu0 0.0
      %5082 = vmatprep.subr.mxu0 0.0
      %5083 = vmatpush1.msra.mxu0 0.0
      %5084 = vmatprep.subr.mxu0 0.0
      %5085 = vmatpush1.msra.mxu0 0.0
      %5086 = vmatprep.mubr.f32.mxu0 0.0
      %5087 = vmatmul.mubr.f32.gmra.mrb[0].mxu0 %v4996
      %v5088 = vpop.f32.mrb[0].mxu0
      %v5089 = vadd.f32 0.0, %v5088
      %v5090 = vpop.f32.mrb[0].mxu0
      %5091 = vmatprep.mubr.f32.mxu0 0.0
      %5092 = vmatmul.mubr.f32.gmra.mrb[0].mxu0 %v4997
      %v5093 = vpop.f32.mrb[0].mxu0
      %v5094 = vadd.f32 0.0, %v5093
      %v5095 = vpop.f32.mrb[0].mxu0
      %5096 = vmatprep.mubr.f32.mxu0 0.0
      %5097 = vmatmul.mubr.f32.gmra.mrb[0].mxu0 %v4998
      %v5098 = vpop.f32.mrb[0].mxu0
      %v5099 = vadd.f32 0.0, %v5098
      %v5100 = vpop.f32.mrb[0].mxu0
      %5101 = vmatprep.mubr.f32.mxu0 0.0
      %5102 = vmatmul.mubr.f32.gmra.mrb[0].mxu0 %v4999
      %v5103 = vpop.f32.mrb[0].mxu0
      %v5104 = vadd.f32 0.0, %v5103
      %v5105 = vpop.f32.mrb[0].mxu0
      %5106 = vmatprep.mubr.f32.mxu0 0.0
      %5107 = vmatmul.mubr.f32.gmra.mrb[0].mxu0 %v5000
      %v5108 = vpop.f32.mrb[0].mxu0
      %v5109 = vadd.f32 0.0, %v5108
      %v5110 = vpop.f32.mrb[0].mxu0
      %5111 = vmatprep.mubr.f32.mxu0 0.0
      %5112 = vmatmul.mubr.f32.gmra.mrb[0].mxu0 %v5001
      %v5113 = vpop.f32.mrb[0].mxu0
      %v5114 = vadd.f32 0.0, %v5113
      %v5115 = vpop.f32.mrb[0].mxu0
      %5116 = vmatprep.mubr.f32.mxu0 0.0
      %5117 = vmatmul.mubr.f32.gmra.mrb[0].mxu0 %v5002
      %v5118 = vpop.f32.mrb[0].mxu0
      %v5119 = vadd.f32 0.0, %v5118
      %v5120 = vpop.f32.mrb[0].mxu0
      %5121 = vmatprep.mubr.f32.mxu0 0.0
      %5122 = vmatmul.mubr.f32.gmra.mrb[0].mxu0 %v5003
      %v5123 = vpop.f32.mrb[0].mxu0
      %v5124 = vadd.f32 0.0, %v5123
      %v5125 = vpop.f32.mrb[0].mxu0
      %5126 = vmatprep.mubr.f32.mxu0 0.0
      %5127 = vmatmul.mubr.f32.gmra.mrb[0].mxu0 %v5004
      %v5128 = vpop.f32.mrb[0].mxu0
      %v5129 = vadd.f32 0.0, %v5128
      %v5130 = vpop.f32.mrb[0].mxu0
      %5131 = vmatprep.mubr.f32.mxu0 0.0
      %5132 = vmatmul.mubr.f32.gmra.mrb[0].mxu0 %v5005
      %v5133 = vpop.f32.mrb[0].mxu0
      %v5134 = vadd.f32 0.0, %v5133
      %v5135 = vpop.f32.mrb[0].mxu0
      %5136 = vmatprep.mubr.f32.mxu0 0.0
      %5137 = vmatmul.mubr.f32.gmra.mrb[0].mxu0 %v5012
      %v5138 = vpop.f32.mrb[0].mxu0
      %v5139 = vadd.f32 0.0, %v5138
      %v5140 = vpop.f32.mrb[0].mxu0
      %5141 = vmatprep.mubr.f32.mxu0 0.0
      %5142 = vmatmul.mubr.f32.gmra.mrb[0].mxu0 %v5013
      %v5143 = vpop.f32.mrb[0].mxu0
      %v5144 = vadd.f32 0.0, %v5143
      %v5145 = vpop.f32.mrb[0].mxu0
      %5146 = vmatprep.mubr.f32.mxu0 0.0
      %5147 = vmatmul.mubr.f32.gmra.mrb[0].mxu0 %v5014
      %v5148 = vpop.f32.mrb[0].mxu0
      %v5149 = vadd.f32 0.0, %v5148
      %v5150 = vpop.f32.mrb[0].mxu0
      %5151 = vmatprep.mubr.f32.mxu0 0.0
      %5152 = vmatmul.mubr.f32.gmra.mrb[0].mxu0 %v5015
      %v5153 = vpop.f32.mrb[0].mxu0
      %v5154 = vadd.f32 0.0, %v5153
      %v5155 = vpop.f32.mrb[0].mxu0
      %5156 = vmatprep.mubr.f32.mxu0 0.0
      %5157 = vmatmul.mubr.f32.gmra.mrb[0].mxu0 %v5016
      %v5158 = vpop.f32.mrb[0].mxu0
      %v5159 = vadd.f32 0.0, %v5158
      %v5160 = vpop.f32.mrb[0].mxu0
      %5161 = vmatprep.mubr.f32.mxu0 0.0
      %5162 = vmatmul.mubr.f32.gmra.mrb[0].mxu0 %v5017
      %v5163 = vpop.f32.mrb[0].mxu0
      %v5164 = vadd.f32 0.0, %v5163
      %v5165 = vpop.f32.mrb[0].mxu0
      %5166 = vmatprep.mubr.f32.mxu0 0.0
      %5167 = vmatmul.mubr.f32.gmra.mrb[0].mxu0 %v5018
      %v5168 = vpop.f32.mrb[0].mxu0
      %v5169 = vadd.f32 0.0, %v5168
      %v5170 = vpop.f32.mrb[0].mxu0
      %5171 = vmatprep.mubr.f32.mxu0 0.0
      %5172 = vmatmul.mubr.f32.gmra.mrb[0].mxu0 %v5019
      %v5173 = vpop.f32.mrb[0].mxu0
      %v5174 = vadd.f32 0.0, %v5173
      %v5175 = vpop.f32.mrb[0].mxu0
      %5176 = vmatprep.mubr.f32.mxu0 0.0
      %5177 = vmatmul.mubr.f32.gmra.mrb[0].mxu0 %v5020
      %v5178 = vpop.f32.mrb[0].mxu0
      %v5179 = vadd.f32 0.0, %v5178
      %v5180 = vpop.f32.mrb[0].mxu0
      %5181 = vmatprep.mubr.f32.mxu0 0.0
      %5182 = vmatmul.mubr.f32.gmra.mrb[0].mxu0 %v5021
      %v5183 = vpop.f32.mrb[0].mxu0
      %v5184 = vadd.f32 0.0, %v5183
      %v5185 = vpop.f32.mrb[0].mxu0
      %5186 = vdwg.mxu0
      %v5189 = vrot.slane %v5149, 1
      %v5190 = vrot.slane %v5174, 1
      %v5193 = vmul.f32 %v5099, %v5189
      %v5194 = vmul.f32 %v5124, %v5190
      %v5195 = vrot.slane %v5149, 7
      %v5196 = vrot.slane %v5174, 7
      %v5199 = vmul.f32 %v5099, %v5195
      %v5200 = vmul.f32 %v5124, %v5196
      %v5203 = vrot.slane %v5199, 1
      %v5204 = vrot.slane %v5200, 1
      %v5207 = vsub.f32 %v5193, %v5203
      %v5208 = vsub.f32 %v5194, %v5204
      %v5209 = vrcp.pop %v5207
      %v5210 = vrcp.pop %v5208
      %v5211 = vmul.f32 %v5207, %v5209
      %v5212 = vmul.f32 %v5208, %v5210
      %v5213 = vsub.f32 2.0, %v5211
      %v5214 = vsub.f32 2.0, %v5212
      %v5215 = vmul.f32 %v5209, %v5213
      %v5216 = vmul.f32 %v5210, %v5214
      %v5217 = vlaneseq
      %v5218 = vshrl.u32 %v5217, 7
      %v5219 = vsub.s32 7, %v5218
      %v5220 = vrot.slane %v5149, %v5219
      %v5221 = vlaneseq
      %v5222 = vshrl.u32 %v5221, 7
      %v5223 = vsub.s32 7, %v5222
      %v5224 = vrot.slane %v5174, %v5223
      %v5225 = vmul.f32 %v5220, %v5089
      %v5226 = vmul.f32 %v5220, %v5094
      %v5227 = vmul.f32 %v5220, %v5099
      %v5228 = vmul.f32 %v5220, %v5104
      %v5229 = vmul.f32 %v5220, %v5109
      %v5230 = vmul.f32 %v5224, %v5114
      %v5231 = vmul.f32 %v5224, %v5119
      %v5232 = vmul.f32 %v5224, %v5124
      %v5233 = vmul.f32 %v5224, %v5129
      %v5234 = vmul.f32 %v5224, %v5134
      %v5235 = vlaneseq
      %v5236 = vshrl.u32 %v5235, 7
      %v5237 = vsub.s32 7, %v5236
      %v5238 = vrot.slane %v5099, %v5237
      %v5239 = vlaneseq
      %v5240 = vshrl.u32 %v5239, 7
      %v5241 = vsub.s32 7, %v5240
      %v5242 = vrot.slane %v5124, %v5241
      %v5243 = vmul.f32 %v5238, %v5139
      %v5244 = vmul.f32 %v5238, %v5144
      %v5245 = vmul.f32 %v5238, %v5149
      %v5246 = vmul.f32 %v5238, %v5154
      %v5247 = vmul.f32 %v5238, %v5159
      %v5248 = vmul.f32 %v5242, %v5164
      %v5249 = vmul.f32 %v5242, %v5169
      %v5250 = vmul.f32 %v5242, %v5174
      %v5251 = vmul.f32 %v5242, %v5179
      %v5252 = vmul.f32 %v5242, %v5184
      %v5253 = vsub.f32 %v5225, %v5243
      %v5254 = vsub.f32 %v5226, %v5244
      %v5255 = vsub.f32 %v5227, %v5245
      %v5256 = vsub.f32 %v5228, %v5246
      %v5257 = vsub.f32 %v5229, %v5247
      %v5258 = vsub.f32 %v5230, %v5248
      %v5259 = vsub.f32 %v5231, %v5249
      %v5260 = vsub.f32 %v5232, %v5250
      %v5261 = vsub.f32 %v5233, %v5251
      %v5262 = vsub.f32 %v5234, %v5252
      %v5263 = vlaneseq
      %v5264 = vshrl.u32 %v5263, 7
      %v5265 = vsub.s32 6, %v5264
      %v5266 = vrot.slane %v5215, %v5265
      %v5267 = vlaneseq
      %v5268 = vshrl.u32 %v5267, 7
      %v5269 = vsub.s32 6, %v5268
      %v5270 = vrot.slane %v5216, %v5269
      %v5271 = vmul.f32 %v5253, %v5266
      %v5272 = vmul.f32 %v5254, %v5266
      %v5273 = vmul.f32 %v5255, %v5266
      %v5274 = vmul.f32 %v5256, %v5266
      %v5275 = vmul.f32 %v5257, %v5266
      %v5276 = vmul.f32 %v5258, %v5270
      %v5277 = vmul.f32 %v5259, %v5270
      %v5278 = vmul.f32 %v5260, %v5270
      %v5279 = vmul.f32 %v5261, %v5270
      %v5280 = vmul.f32 %v5262, %v5270
      %v5281 = vlaneseq
      %v5282 = vshrl.u32 %v5281, 7
      %v5283 = vsub.s32 6, %v5282
      %v5284 = vrot.slane %v5099, %v5283
      %v5285 = vlaneseq
      %v5286 = vshrl.u32 %v5285, 7
      %v5287 = vsub.s32 6, %v5286
      %v5288 = vrot.slane %v5124, %v5287
      %v5289 = vmul.f32 %v5284, %v5139
      %v5290 = vmul.f32 %v5284, %v5144
      %v5291 = vmul.f32 %v5284, %v5149
      %v5292 = vmul.f32 %v5284, %v5154
      %v5293 = vmul.f32 %v5284, %v5159
      %v5294 = vmul.f32 %v5288, %v5164
      %v5295 = vmul.f32 %v5288, %v5169
      %v5296 = vmul.f32 %v5288, %v5174
      %v5297 = vmul.f32 %v5288, %v5179
      %v5298 = vmul.f32 %v5288, %v5184
      %v5299 = vlaneseq
      %v5300 = vshrl.u32 %v5299, 7
      %v5301 = vsub.s32 6, %v5300
      %v5302 = vrot.slane %v5149, %v5301
      %v5303 = vlaneseq
      %v5304 = vshrl.u32 %v5303, 7
      %v5305 = vsub.s32 6, %v5304
      %v5306 = vrot.slane %v5174, %v5305
      %v5307 = vmul.f32 %v5302, %v5089
      %v5308 = vmul.f32 %v5302, %v5094
      %v5309 = vmul.f32 %v5302, %v5099
      %v5310 = vmul.f32 %v5302, %v5104
      %v5311 = vmul.f32 %v5302, %v5109
      %v5312 = vmul.f32 %v5306, %v5114
      %v5313 = vmul.f32 %v5306, %v5119
      %v5314 = vmul.f32 %v5306, %v5124
      %v5315 = vmul.f32 %v5306, %v5129
      %v5316 = vmul.f32 %v5306, %v5134
      %v5317 = vsub.f32 %v5289, %v5307
      %v5318 = vsub.f32 %v5290, %v5308
      %v5319 = vsub.f32 %v5291, %v5309
      %v5320 = vsub.f32 %v5292, %v5310
      %v5321 = vsub.f32 %v5293, %v5311
      %v5322 = vsub.f32 %v5294, %v5312
      %v5323 = vsub.f32 %v5295, %v5313
      %v5324 = vsub.f32 %v5296, %v5314
      %v5325 = vsub.f32 %v5297, %v5315
      %v5326 = vsub.f32 %v5298, %v5316
      %v5327 = vmul.f32 %v5317, %v5266
      %v5328 = vmul.f32 %v5318, %v5266
      %v5329 = vmul.f32 %v5319, %v5266
      %v5330 = vmul.f32 %v5320, %v5266
      %v5331 = vmul.f32 %v5321, %v5266
      %v5332 = vmul.f32 %v5322, %v5270
      %v5333 = vmul.f32 %v5323, %v5270
      %v5334 = vmul.f32 %v5324, %v5270
      %v5335 = vmul.f32 %v5325, %v5270
      %v5336 = vmul.f32 %v5326, %v5270
      %v5337 = vlaneseq
      %v5338 = vshrl.u32 %v5337, 7
      %v5339 = vsub.s32 6, %v5338
      %v5340 = vrot.slane %v4980, %v5339
      %v5341 = vlaneseq
      %v5342 = vshrl.u32 %v5341, 7
      %v5343 = vsub.s32 6, %v5342
      %v5344 = vrot.slane %v4985, %v5343
      %v5345 = vmul.f32 %v5340, %v5271
      %v5346 = vmul.f32 %v5340, %v5272
      %v5347 = vmul.f32 %v5340, %v5273
      %v5348 = vmul.f32 %v5340, %v5274
      %v5349 = vmul.f32 %v5340, %v5275
      %v5350 = vmul.f32 %v5344, %v5276
      %v5351 = vmul.f32 %v5344, %v5277
      %v5352 = vmul.f32 %v5344, %v5278
      %v5353 = vmul.f32 %v5344, %v5279
      %v5354 = vmul.f32 %v5344, %v5280
      %v5355 = vsub.f32 %v4978, %v5345
      %v5356 = vsub.f32 %v4979, %v5346
      %v5357 = vsub.f32 %v4980, %v5347
      %v5358 = vsub.f32 %v4981, %v5348
      %v5359 = vsub.f32 %v4982, %v5349
      %v5360 = vsub.f32 %v4983, %v5350
      %v5361 = vsub.f32 %v4984, %v5351
      %v5362 = vsub.f32 %v4985, %v5352
      %v5363 = vsub.f32 %v4986, %v5353
      %v5364 = vsub.f32 %v4987, %v5354
      %v5365 = vlaneseq
      %v5366 = vshrl.u32 %v5365, 7
      %v5367 = vsub.s32 7, %v5366
      %v5368 = vrot.slane %v4980, %v5367
      %v5369 = vlaneseq
      %v5370 = vshrl.u32 %v5369, 7
      %v5371 = vsub.s32 7, %v5370
      %v5372 = vrot.slane %v4985, %v5371
      %v5373 = vmul.f32 %v5368, %v5327
      %v5374 = vmul.f32 %v5368, %v5328
      %v5375 = vmul.f32 %v5368, %v5329
      %v5376 = vmul.f32 %v5368, %v5330
      %v5377 = vmul.f32 %v5368, %v5331
      %v5378 = vmul.f32 %v5372, %v5332
      %v5379 = vmul.f32 %v5372, %v5333
      %v5380 = vmul.f32 %v5372, %v5334
      %v5381 = vmul.f32 %v5372, %v5335
      %v5382 = vmul.f32 %v5372, %v5336
      %v5383 = vsub.f32 %v5355, %v5373
      %v5384 = vsub.f32 %v5356, %v5374
      %v5385 = vsub.f32 %v5357, %v5375
      %v5386 = vsub.f32 %v5358, %v5376
      %v5387 = vsub.f32 %v5359, %v5377
      %v5388 = vsub.f32 %v5360, %v5378
      %v5389 = vsub.f32 %v5361, %v5379
      %v5390 = vsub.f32 %v5362, %v5380
      %v5391 = vsub.f32 %v5363, %v5381
      %v5392 = vsub.f32 %v5364, %v5382
      %v5393 = vsel %vm4995, %v5271, %v5383
      %v5394 = vsel %vm4995, %v5272, %v5384
      %v5395 = vsel %vm4995, %v5273, %v5385
      %v5396 = vsel %vm4995, %v5274, %v5386
      %v5397 = vsel %vm4995, %v5275, %v5387
      %v5398 = vsel %vm4995, %v5276, %v5388
      %v5399 = vsel %vm4995, %v5277, %v5389
      %v5400 = vsel %vm4995, %v5278, %v5390
      %v5401 = vsel %vm4995, %v5279, %v5391
      %v5402 = vsel %vm4995, %v5280, %v5392
      %v5403 = vsel %vm5011, %v5327, %v5393
      %v5404 = vsel %vm5011, %v5328, %v5394
      %v5405 = vsel %vm5011, %v5329, %v5395
      %v5406 = vsel %vm5011, %v5330, %v5396
      %v5407 = vsel %vm5011, %v5331, %v5397
      %v5408 = vsel %vm5011, %v5332, %v5398
      %v5409 = vsel %vm5011, %v5333, %v5399
      %v5410 = vsel %vm5011, %v5334, %v5400
      %v5411 = vsel %vm5011, %v5335, %v5401
      %v5412 = vsel %vm5011, %v5336, %v5402
      %vm5413 = vcmp.eq.s32.totalorder %v93, 24
      %vm5414 = vcmp.eq.s32.totalorder %v93, 25
      %v5415 = vsel %vm5413, 1, 0
      %v5416 = vlaneseq
      %v5417 = vshrl.u32 %v5416, 7
      %v5418 = vsub.s32 0, %v5417
      %v5419 = vrot.slane %v5415, %v5418
      %vm5420 = vcmp.eq.s32.totalorder %v5419, 1
      %v5421 = vsel %vm5420, %v5403, 0.0
      %v5422 = vsel %vm5420, %v5404, 0.0
      %v5423 = vsel %vm5420, %v5405, 0.0
      %v5424 = vsel %vm5420, %v5406, 0.0
      %v5425 = vsel %vm5420, %v5407, 0.0
      %v5426 = vsel %vm5420, %v5408, 0.0
      %v5427 = vsel %vm5420, %v5409, 0.0
      %v5428 = vsel %vm5420, %v5410, 0.0
      %v5429 = vsel %vm5420, %v5411, 0.0
      %v5430 = vsel %vm5420, %v5412, 0.0
      %v5431 = vsel %vm5414, 1, 0
      %v5432 = vlaneseq
      %v5433 = vshrl.u32 %v5432, 7
      %v5434 = vsub.s32 0, %v5433
      %v5435 = vrot.slane %v5431, %v5434
      %vm5436 = vcmp.eq.s32.totalorder %v5435, 1
      %v5437 = vsel %vm5436, %v5403, 0.0
      %v5438 = vsel %vm5436, %v5404, 0.0
      %v5439 = vsel %vm5436, %v5405, 0.0
      %v5440 = vsel %vm5436, %v5406, 0.0
      %v5441 = vsel %vm5436, %v5407, 0.0
      %v5442 = vsel %vm5436, %v5408, 0.0
      %v5443 = vsel %vm5436, %v5409, 0.0
      %v5444 = vsel %vm5436, %v5410, 0.0
      %v5445 = vsel %vm5436, %v5411, 0.0
      %v5446 = vsel %vm5436, %v5412, 0.0
      %5447 = vmatprep.subr.mxu0 0.0
      %5448 = vmatpush1.msra.mxu0 %v77
      %5449 = vmatprep.subr.mxu0 0.0
      %5450 = vmatpush1.msra.mxu0 %v78
      %5451 = vmatprep.subr.mxu0 0.0
      %5452 = vmatpush1.msra.mxu0 %v79
      %5453 = vmatprep.subr.mxu0 0.0
      %5454 = vmatpush1.msra.mxu0 %v80
      %5455 = vmatprep.subr.mxu0 0.0
      %5456 = vmatpush1.msra.mxu0 %v81
      %5457 = vmatprep.subr.mxu0 0.0
      %5458 = vmatpush1.msra.mxu0 %v82
      %5459 = vmatprep.subr.mxu0 0.0
      %5460 = vmatpush1.msra.mxu0 %v83
      %5461 = vmatprep.subr.mxu0 0.0
      %5462 = vmatpush1.msra.mxu0 %v84
      %5463 = vmatprep.subr.mxu0 0.0
      %5464 = vmatpush1.msra.mxu0 %v85
      %5465 = vmatprep.subr.mxu0 0.0
      %5466 = vmatpush1.msra.mxu0 %v86
      %5467 = vmatprep.subr.mxu0 0.0
      %5468 = vmatpush1.msra.mxu0 %v87
      %5469 = vmatprep.subr.mxu0 0.0
      %5470 = vmatpush1.msra.mxu0 %v88
      %5471 = vmatprep.subr.mxu0 0.0
      %5472 = vmatpush1.msra.mxu0 %v89
      %5473 = vmatprep.subr.mxu0 0.0
      %5474 = vmatpush1.msra.mxu0 %v90
      %5475 = vmatprep.subr.mxu0 0.0
      %5476 = vmatpush1.msra.mxu0 %v91
      %5477 = vmatprep.subr.mxu0 0.0
      %5478 = vmatpush1.msra.mxu0 %v92
      %5479 = vmatprep.subr.mxu0 0.0
      %5480 = vmatpush1.msra.mxu0 0.0
      %5481 = vmatprep.subr.mxu0 0.0
      %5482 = vmatpush1.msra.mxu0 0.0
      %5483 = vmatprep.subr.mxu0 0.0
      %5484 = vmatpush1.msra.mxu0 0.0
      %5485 = vmatprep.subr.mxu0 0.0
      %5486 = vmatpush1.msra.mxu0 0.0
      %5487 = vmatprep.subr.mxu0 0.0
      %5488 = vmatpush1.msra.mxu0 0.0
      %5489 = vmatprep.subr.mxu0 0.0
      %5490 = vmatpush1.msra.mxu0 0.0
      %5491 = vmatprep.subr.mxu0 0.0
      %5492 = vmatpush1.msra.mxu0 0.0
      %5493 = vmatprep.subr.mxu0 0.0
      %5494 = vmatpush1.msra.mxu0 0.0
      %5495 = vmatprep.subr.mxu0 0.0
      %5496 = vmatpush1.msra.mxu0 0.0
      %5497 = vmatprep.subr.mxu0 0.0
      %5498 = vmatpush1.msra.mxu0 0.0
      %5499 = vmatprep.subr.mxu0 0.0
      %5500 = vmatpush1.msra.mxu0 0.0
      %5501 = vmatprep.subr.mxu0 0.0
      %5502 = vmatpush1.msra.mxu0 0.0
      %5503 = vmatprep.subr.mxu0 0.0
      %5504 = vmatpush1.msra.mxu0 0.0
      %5505 = vmatprep.subr.mxu0 0.0
      %5506 = vmatpush1.msra.mxu0 0.0
      %5507 = vmatprep.subr.mxu0 0.0
      %5508 = vmatpush1.msra.mxu0 0.0
      %5509 = vmatprep.subr.mxu0 0.0
      %5510 = vmatpush1.msra.mxu0 0.0
      %5511 = vmatprep.mubr.f32.mxu0 0.0
      %5512 = vmatmul.mubr.f32.gmra.mrb[0].mxu0 %v5421
      %v5513 = vpop.f32.mrb[0].mxu0
      %v5514 = vadd.f32 0.0, %v5513
      %v5515 = vpop.f32.mrb[0].mxu0
      %5516 = vmatprep.mubr.f32.mxu0 0.0
      %5517 = vmatmul.mubr.f32.gmra.mrb[0].mxu0 %v5422
      %v5518 = vpop.f32.mrb[0].mxu0
      %v5519 = vadd.f32 0.0, %v5518
      %v5520 = vpop.f32.mrb[0].mxu0
      %5521 = vmatprep.mubr.f32.mxu0 0.0
      %5522 = vmatmul.mubr.f32.gmra.mrb[0].mxu0 %v5423
      %v5523 = vpop.f32.mrb[0].mxu0
      %v5524 = vadd.f32 0.0, %v5523
      %v5525 = vpop.f32.mrb[0].mxu0
      %5526 = vmatprep.mubr.f32.mxu0 0.0
      %5527 = vmatmul.mubr.f32.gmra.mrb[0].mxu0 %v5424
      %v5528 = vpop.f32.mrb[0].mxu0
      %v5529 = vadd.f32 0.0, %v5528
      %v5530 = vpop.f32.mrb[0].mxu0
      %5531 = vmatprep.mubr.f32.mxu0 0.0
      %5532 = vmatmul.mubr.f32.gmra.mrb[0].mxu0 %v5425
      %v5533 = vpop.f32.mrb[0].mxu0
      %v5534 = vadd.f32 0.0, %v5533
      %v5535 = vpop.f32.mrb[0].mxu0
      %5536 = vmatprep.mubr.f32.mxu0 0.0
      %5537 = vmatmul.mubr.f32.gmra.mrb[0].mxu0 %v5426
      %v5538 = vpop.f32.mrb[0].mxu0
      %v5539 = vadd.f32 0.0, %v5538
      %v5540 = vpop.f32.mrb[0].mxu0
      %5541 = vmatprep.mubr.f32.mxu0 0.0
      %5542 = vmatmul.mubr.f32.gmra.mrb[0].mxu0 %v5427
      %v5543 = vpop.f32.mrb[0].mxu0
      %v5544 = vadd.f32 0.0, %v5543
      %v5545 = vpop.f32.mrb[0].mxu0
      %5546 = vmatprep.mubr.f32.mxu0 0.0
      %5547 = vmatmul.mubr.f32.gmra.mrb[0].mxu0 %v5428
      %v5548 = vpop.f32.mrb[0].mxu0
      %v5549 = vadd.f32 0.0, %v5548
      %v5550 = vpop.f32.mrb[0].mxu0
      %5551 = vmatprep.mubr.f32.mxu0 0.0
      %5552 = vmatmul.mubr.f32.gmra.mrb[0].mxu0 %v5429
      %v5553 = vpop.f32.mrb[0].mxu0
      %v5554 = vadd.f32 0.0, %v5553
      %v5555 = vpop.f32.mrb[0].mxu0
      %5556 = vmatprep.mubr.f32.mxu0 0.0
      %5557 = vmatmul.mubr.f32.gmra.mrb[0].mxu0 %v5430
      %v5558 = vpop.f32.mrb[0].mxu0
      %v5559 = vadd.f32 0.0, %v5558
      %v5560 = vpop.f32.mrb[0].mxu0
      %5561 = vmatprep.mubr.f32.mxu0 0.0
      %5562 = vmatmul.mubr.f32.gmra.mrb[0].mxu0 %v5437
      %v5563 = vpop.f32.mrb[0].mxu0
      %v5564 = vadd.f32 0.0, %v5563
      %v5565 = vpop.f32.mrb[0].mxu0
      %5566 = vmatprep.mubr.f32.mxu0 0.0
      %5567 = vmatmul.mubr.f32.gmra.mrb[0].mxu0 %v5438
      %v5568 = vpop.f32.mrb[0].mxu0
      %v5569 = vadd.f32 0.0, %v5568
      %v5570 = vpop.f32.mrb[0].mxu0
      %5571 = vmatprep.mubr.f32.mxu0 0.0
      %5572 = vmatmul.mubr.f32.gmra.mrb[0].mxu0 %v5439
      %v5573 = vpop.f32.mrb[0].mxu0
      %v5574 = vadd.f32 0.0, %v5573
      %v5575 = vpop.f32.mrb[0].mxu0
      %5576 = vmatprep.mubr.f32.mxu0 0.0
      %5577 = vmatmul.mubr.f32.gmra.mrb[0].mxu0 %v5440
      %v5578 = vpop.f32.mrb[0].mxu0
      %v5579 = vadd.f32 0.0, %v5578
      %v5580 = vpop.f32.mrb[0].mxu0
      %5581 = vmatprep.mubr.f32.mxu0 0.0
      %5582 = vmatmul.mubr.f32.gmra.mrb[0].mxu0 %v5441
      %v5583 = vpop.f32.mrb[0].mxu0
      %v5584 = vadd.f32 0.0, %v5583
      %v5585 = vpop.f32.mrb[0].mxu0
      %5586 = vmatprep.mubr.f32.mxu0 0.0
      %5587 = vmatmul.mubr.f32.gmra.mrb[0].mxu0 %v5442
      %v5588 = vpop.f32.mrb[0].mxu0
      %v5589 = vadd.f32 0.0, %v5588
      %v5590 = vpop.f32.mrb[0].mxu0
      %5591 = vmatprep.mubr.f32.mxu0 0.0
      %5592 = vmatmul.mubr.f32.gmra.mrb[0].mxu0 %v5443
      %v5593 = vpop.f32.mrb[0].mxu0
      %v5594 = vadd.f32 0.0, %v5593
      %v5595 = vpop.f32.mrb[0].mxu0
      %5596 = vmatprep.mubr.f32.mxu0 0.0
      %5597 = vmatmul.mubr.f32.gmra.mrb[0].mxu0 %v5444
      %v5598 = vpop.f32.mrb[0].mxu0
      %v5599 = vadd.f32 0.0, %v5598
      %v5600 = vpop.f32.mrb[0].mxu0
      %5601 = vmatprep.mubr.f32.mxu0 0.0
      %5602 = vmatmul.mubr.f32.gmra.mrb[0].mxu0 %v5445
      %v5603 = vpop.f32.mrb[0].mxu0
      %v5604 = vadd.f32 0.0, %v5603
      %v5605 = vpop.f32.mrb[0].mxu0
      %5606 = vmatprep.mubr.f32.mxu0 0.0
      %5607 = vmatmul.mubr.f32.gmra.mrb[0].mxu0 %v5446
      %v5608 = vpop.f32.mrb[0].mxu0
      %v5609 = vadd.f32 0.0, %v5608
      %v5610 = vpop.f32.mrb[0].mxu0
      %5611 = vdwg.mxu0
      %v5614 = vrot.slane %v5579, 1
      %v5615 = vrot.slane %v5604, 1
      %v5618 = vmul.f32 %v5529, %v5614
      %v5619 = vmul.f32 %v5554, %v5615
      %v5620 = vrot.slane %v5579, 7
      %v5621 = vrot.slane %v5604, 7
      %v5624 = vmul.f32 %v5529, %v5620
      %v5625 = vmul.f32 %v5554, %v5621
      %v5628 = vrot.slane %v5624, 1
      %v5629 = vrot.slane %v5625, 1
      %v5632 = vsub.f32 %v5618, %v5628
      %v5633 = vsub.f32 %v5619, %v5629
      %v5634 = vrcp.pop %v5632
      %v5635 = vrcp.pop %v5633
      %v5636 = vmul.f32 %v5632, %v5634
      %v5637 = vmul.f32 %v5633, %v5635
      %v5638 = vsub.f32 2.0, %v5636
      %v5639 = vsub.f32 2.0, %v5637
      %v5640 = vmul.f32 %v5634, %v5638
      %v5641 = vmul.f32 %v5635, %v5639
      %v5642 = vlaneseq
      %v5643 = vshrl.u32 %v5642, 7
      %v5644 = vsub.s32 1, %v5643
      %v5645 = vrot.slane %v5579, %v5644
      %v5646 = vlaneseq
      %v5647 = vshrl.u32 %v5646, 7
      %v5648 = vsub.s32 1, %v5647
      %v5649 = vrot.slane %v5604, %v5648
      %v5650 = vmul.f32 %v5645, %v5514
      %v5651 = vmul.f32 %v5645, %v5519
      %v5652 = vmul.f32 %v5645, %v5524
      %v5653 = vmul.f32 %v5645, %v5529
      %v5654 = vmul.f32 %v5645, %v5534
      %v5655 = vmul.f32 %v5649, %v5539
      %v5656 = vmul.f32 %v5649, %v5544
      %v5657 = vmul.f32 %v5649, %v5549
      %v5658 = vmul.f32 %v5649, %v5554
      %v5659 = vmul.f32 %v5649, %v5559
      %v5660 = vlaneseq
      %v5661 = vshrl.u32 %v5660, 7
      %v5662 = vsub.s32 1, %v5661
      %v5663 = vrot.slane %v5529, %v5662
      %v5664 = vlaneseq
      %v5665 = vshrl.u32 %v5664, 7
      %v5666 = vsub.s32 1, %v5665
      %v5667 = vrot.slane %v5554, %v5666
      %v5668 = vmul.f32 %v5663, %v5564
      %v5669 = vmul.f32 %v5663, %v5569
      %v5670 = vmul.f32 %v5663, %v5574
      %v5671 = vmul.f32 %v5663, %v5579
      %v5672 = vmul.f32 %v5663, %v5584
      %v5673 = vmul.f32 %v5667, %v5589
      %v5674 = vmul.f32 %v5667, %v5594
      %v5675 = vmul.f32 %v5667, %v5599
      %v5676 = vmul.f32 %v5667, %v5604
      %v5677 = vmul.f32 %v5667, %v5609
      %v5678 = vsub.f32 %v5650, %v5668
      %v5679 = vsub.f32 %v5651, %v5669
      %v5680 = vsub.f32 %v5652, %v5670
      %v5681 = vsub.f32 %v5653, %v5671
      %v5682 = vsub.f32 %v5654, %v5672
      %v5683 = vsub.f32 %v5655, %v5673
      %v5684 = vsub.f32 %v5656, %v5674
      %v5685 = vsub.f32 %v5657, %v5675
      %v5686 = vsub.f32 %v5658, %v5676
      %v5687 = vsub.f32 %v5659, %v5677
      %v5688 = vlaneseq
      %v5689 = vshrl.u32 %v5688, 7
      %v5690 = vsub.s32 0, %v5689
      %v5691 = vrot.slane %v5640, %v5690
      %v5692 = vlaneseq
      %v5693 = vshrl.u32 %v5692, 7
      %v5694 = vsub.s32 0, %v5693
      %v5695 = vrot.slane %v5641, %v5694
      %v5696 = vmul.f32 %v5678, %v5691
      %v5697 = vmul.f32 %v5679, %v5691
      %v5698 = vmul.f32 %v5680, %v5691
      %v5699 = vmul.f32 %v5681, %v5691
      %v5700 = vmul.f32 %v5682, %v5691
      %v5701 = vmul.f32 %v5683, %v5695
      %v5702 = vmul.f32 %v5684, %v5695
      %v5703 = vmul.f32 %v5685, %v5695
      %v5704 = vmul.f32 %v5686, %v5695
      %v5705 = vmul.f32 %v5687, %v5695
      %v5706 = vlaneseq
      %v5707 = vshrl.u32 %v5706, 7
      %v5708 = vsub.s32 0, %v5707
      %v5709 = vrot.slane %v5529, %v5708
      %v5710 = vlaneseq
      %v5711 = vshrl.u32 %v5710, 7
      %v5712 = vsub.s32 0, %v5711
      %v5713 = vrot.slane %v5554, %v5712
      %v5714 = vmul.f32 %v5709, %v5564
      %v5715 = vmul.f32 %v5709, %v5569
      %v5716 = vmul.f32 %v5709, %v5574
      %v5717 = vmul.f32 %v5709, %v5579
      %v5718 = vmul.f32 %v5709, %v5584
      %v5719 = vmul.f32 %v5713, %v5589
      %v5720 = vmul.f32 %v5713, %v5594
      %v5721 = vmul.f32 %v5713, %v5599
      %v5722 = vmul.f32 %v5713, %v5604
      %v5723 = vmul.f32 %v5713, %v5609
      %v5724 = vlaneseq
      %v5725 = vshrl.u32 %v5724, 7
      %v5726 = vsub.s32 0, %v5725
      %v5727 = vrot.slane %v5579, %v5726
      %v5728 = vlaneseq
      %v5729 = vshrl.u32 %v5728, 7
      %v5730 = vsub.s32 0, %v5729
      %v5731 = vrot.slane %v5604, %v5730
      %v5732 = vmul.f32 %v5727, %v5514
      %v5733 = vmul.f32 %v5727, %v5519
      %v5734 = vmul.f32 %v5727, %v5524
      %v5735 = vmul.f32 %v5727, %v5529
      %v5736 = vmul.f32 %v5727, %v5534
      %v5737 = vmul.f32 %v5731, %v5539
      %v5738 = vmul.f32 %v5731, %v5544
      %v5739 = vmul.f32 %v5731, %v5549
      %v5740 = vmul.f32 %v5731, %v5554
      %v5741 = vmul.f32 %v5731, %v5559
      %v5742 = vsub.f32 %v5714, %v5732
      %v5743 = vsub.f32 %v5715, %v5733
      %v5744 = vsub.f32 %v5716, %v5734
      %v5745 = vsub.f32 %v5717, %v5735
      %v5746 = vsub.f32 %v5718, %v5736
      %v5747 = vsub.f32 %v5719, %v5737
      %v5748 = vsub.f32 %v5720, %v5738
      %v5749 = vsub.f32 %v5721, %v5739
      %v5750 = vsub.f32 %v5722, %v5740
      %v5751 = vsub.f32 %v5723, %v5741
      %v5752 = vmul.f32 %v5742, %v5691
      %v5753 = vmul.f32 %v5743, %v5691
      %v5754 = vmul.f32 %v5744, %v5691
      %v5755 = vmul.f32 %v5745, %v5691
      %v5756 = vmul.f32 %v5746, %v5691
      %v5757 = vmul.f32 %v5747, %v5695
      %v5758 = vmul.f32 %v5748, %v5695
      %v5759 = vmul.f32 %v5749, %v5695
      %v5760 = vmul.f32 %v5750, %v5695
      %v5761 = vmul.f32 %v5751, %v5695
      %v5762 = vlaneseq
      %v5763 = vshrl.u32 %v5762, 7
      %v5764 = vsub.s32 0, %v5763
      %v5765 = vrot.slane %v5406, %v5764
      %v5766 = vlaneseq
      %v5767 = vshrl.u32 %v5766, 7
      %v5768 = vsub.s32 0, %v5767
      %v5769 = vrot.slane %v5411, %v5768
      %v5770 = vmul.f32 %v5765, %v5696
      %v5771 = vmul.f32 %v5765, %v5697
      %v5772 = vmul.f32 %v5765, %v5698
      %v5773 = vmul.f32 %v5765, %v5699
      %v5774 = vmul.f32 %v5765, %v5700
      %v5775 = vmul.f32 %v5769, %v5701
      %v5776 = vmul.f32 %v5769, %v5702
      %v5777 = vmul.f32 %v5769, %v5703
      %v5778 = vmul.f32 %v5769, %v5704
      %v5779 = vmul.f32 %v5769, %v5705
      %v5780 = vsub.f32 %v5403, %v5770
      %v5781 = vsub.f32 %v5404, %v5771
      %v5782 = vsub.f32 %v5405, %v5772
      %v5783 = vsub.f32 %v5406, %v5773
      %v5784 = vsub.f32 %v5407, %v5774
      %v5785 = vsub.f32 %v5408, %v5775
      %v5786 = vsub.f32 %v5409, %v5776
      %v5787 = vsub.f32 %v5410, %v5777
      %v5788 = vsub.f32 %v5411, %v5778
      %v5789 = vsub.f32 %v5412, %v5779
      %v5790 = vlaneseq
      %v5791 = vshrl.u32 %v5790, 7
      %v5792 = vsub.s32 1, %v5791
      %v5793 = vrot.slane %v5406, %v5792
      %v5794 = vlaneseq
      %v5795 = vshrl.u32 %v5794, 7
      %v5796 = vsub.s32 1, %v5795
      %v5797 = vrot.slane %v5411, %v5796
      %v5798 = vmul.f32 %v5793, %v5752
      %v5799 = vmul.f32 %v5793, %v5753
      %v5800 = vmul.f32 %v5793, %v5754
      %v5801 = vmul.f32 %v5793, %v5755
      %v5802 = vmul.f32 %v5793, %v5756
      %v5803 = vmul.f32 %v5797, %v5757
      %v5804 = vmul.f32 %v5797, %v5758
      %v5805 = vmul.f32 %v5797, %v5759
      %v5806 = vmul.f32 %v5797, %v5760
      %v5807 = vmul.f32 %v5797, %v5761
      %v5808 = vsub.f32 %v5780, %v5798
      %v5809 = vsub.f32 %v5781, %v5799
      %v5810 = vsub.f32 %v5782, %v5800
      %v5811 = vsub.f32 %v5783, %v5801
      %v5812 = vsub.f32 %v5784, %v5802
      %v5813 = vsub.f32 %v5785, %v5803
      %v5814 = vsub.f32 %v5786, %v5804
      %v5815 = vsub.f32 %v5787, %v5805
      %v5816 = vsub.f32 %v5788, %v5806
      %v5817 = vsub.f32 %v5789, %v5807
      %v5818 = vsel %vm5420, %v5696, %v5808
      %v5819 = vsel %vm5420, %v5697, %v5809
      %v5820 = vsel %vm5420, %v5698, %v5810
      %v5821 = vsel %vm5420, %v5699, %v5811
      %v5822 = vsel %vm5420, %v5700, %v5812
      %v5823 = vsel %vm5420, %v5701, %v5813
      %v5824 = vsel %vm5420, %v5702, %v5814
      %v5825 = vsel %vm5420, %v5703, %v5815
      %v5826 = vsel %vm5420, %v5704, %v5816
      %v5827 = vsel %vm5420, %v5705, %v5817
      %v5828 = vsel %vm5436, %v5752, %v5818
      %v5829 = vsel %vm5436, %v5753, %v5819
      %v5830 = vsel %vm5436, %v5754, %v5820
      %v5831 = vsel %vm5436, %v5755, %v5821
      %v5832 = vsel %vm5436, %v5756, %v5822
      %v5833 = vsel %vm5436, %v5757, %v5823
      %v5834 = vsel %vm5436, %v5758, %v5824
      %v5835 = vsel %vm5436, %v5759, %v5825
      %v5836 = vsel %vm5436, %v5760, %v5826
      %v5837 = vsel %vm5436, %v5761, %v5827
      %vm5838 = vcmp.eq.s32.totalorder %v93, 26
      %vm5839 = vcmp.eq.s32.totalorder %v93, 27
      %v5840 = vsel %vm5838, 1, 0
      %v5841 = vlaneseq
      %v5842 = vshrl.u32 %v5841, 7
      %v5843 = vsub.s32 0, %v5842
      %v5844 = vrot.slane %v5840, %v5843
      %vm5845 = vcmp.eq.s32.totalorder %v5844, 1
      %v5846 = vsel %vm5845, %v5828, 0.0
      %v5847 = vsel %vm5845, %v5829, 0.0
      %v5848 = vsel %vm5845, %v5830, 0.0
      %v5849 = vsel %vm5845, %v5831, 0.0
      %v5850 = vsel %vm5845, %v5832, 0.0
      %v5851 = vsel %vm5845, %v5833, 0.0
      %v5852 = vsel %vm5845, %v5834, 0.0
      %v5853 = vsel %vm5845, %v5835, 0.0
      %v5854 = vsel %vm5845, %v5836, 0.0
      %v5855 = vsel %vm5845, %v5837, 0.0
      %v5856 = vsel %vm5839, 1, 0
      %v5857 = vlaneseq
      %v5858 = vshrl.u32 %v5857, 7
      %v5859 = vsub.s32 0, %v5858
      %v5860 = vrot.slane %v5856, %v5859
      %vm5861 = vcmp.eq.s32.totalorder %v5860, 1
      %v5862 = vsel %vm5861, %v5828, 0.0
      %v5863 = vsel %vm5861, %v5829, 0.0
      %v5864 = vsel %vm5861, %v5830, 0.0
      %v5865 = vsel %vm5861, %v5831, 0.0
      %v5866 = vsel %vm5861, %v5832, 0.0
      %v5867 = vsel %vm5861, %v5833, 0.0
      %v5868 = vsel %vm5861, %v5834, 0.0
      %v5869 = vsel %vm5861, %v5835, 0.0
      %v5870 = vsel %vm5861, %v5836, 0.0
      %v5871 = vsel %vm5861, %v5837, 0.0
      %5872 = vmatprep.subr.mxu0 0.0
      %5873 = vmatpush1.msra.mxu0 %v77
      %5874 = vmatprep.subr.mxu0 0.0
      %5875 = vmatpush1.msra.mxu0 %v78
      %5876 = vmatprep.subr.mxu0 0.0
      %5877 = vmatpush1.msra.mxu0 %v79
      %5878 = vmatprep.subr.mxu0 0.0
      %5879 = vmatpush1.msra.mxu0 %v80
      %5880 = vmatprep.subr.mxu0 0.0
      %5881 = vmatpush1.msra.mxu0 %v81
      %5882 = vmatprep.subr.mxu0 0.0
      %5883 = vmatpush1.msra.mxu0 %v82
      %5884 = vmatprep.subr.mxu0 0.0
      %5885 = vmatpush1.msra.mxu0 %v83
      %5886 = vmatprep.subr.mxu0 0.0
      %5887 = vmatpush1.msra.mxu0 %v84
      %5888 = vmatprep.subr.mxu0 0.0
      %5889 = vmatpush1.msra.mxu0 %v85
      %5890 = vmatprep.subr.mxu0 0.0
      %5891 = vmatpush1.msra.mxu0 %v86
      %5892 = vmatprep.subr.mxu0 0.0
      %5893 = vmatpush1.msra.mxu0 %v87
      %5894 = vmatprep.subr.mxu0 0.0
      %5895 = vmatpush1.msra.mxu0 %v88
      %5896 = vmatprep.subr.mxu0 0.0
      %5897 = vmatpush1.msra.mxu0 %v89
      %5898 = vmatprep.subr.mxu0 0.0
      %5899 = vmatpush1.msra.mxu0 %v90
      %5900 = vmatprep.subr.mxu0 0.0
      %5901 = vmatpush1.msra.mxu0 %v91
      %5902 = vmatprep.subr.mxu0 0.0
      %5903 = vmatpush1.msra.mxu0 %v92
      %5904 = vmatprep.subr.mxu0 0.0
      %5905 = vmatpush1.msra.mxu0 0.0
      %5906 = vmatprep.subr.mxu0 0.0
      %5907 = vmatpush1.msra.mxu0 0.0
      %5908 = vmatprep.subr.mxu0 0.0
      %5909 = vmatpush1.msra.mxu0 0.0
      %5910 = vmatprep.subr.mxu0 0.0
      %5911 = vmatpush1.msra.mxu0 0.0
      %5912 = vmatprep.subr.mxu0 0.0
      %5913 = vmatpush1.msra.mxu0 0.0
      %5914 = vmatprep.subr.mxu0 0.0
      %5915 = vmatpush1.msra.mxu0 0.0
      %5916 = vmatprep.subr.mxu0 0.0
      %5917 = vmatpush1.msra.mxu0 0.0
      %5918 = vmatprep.subr.mxu0 0.0
      %5919 = vmatpush1.msra.mxu0 0.0
      %5920 = vmatprep.subr.mxu0 0.0
      %5921 = vmatpush1.msra.mxu0 0.0
      %5922 = vmatprep.subr.mxu0 0.0
      %5923 = vmatpush1.msra.mxu0 0.0
      %5924 = vmatprep.subr.mxu0 0.0
      %5925 = vmatpush1.msra.mxu0 0.0
      %5926 = vmatprep.subr.mxu0 0.0
      %5927 = vmatpush1.msra.mxu0 0.0
      %5928 = vmatprep.subr.mxu0 0.0
      %5929 = vmatpush1.msra.mxu0 0.0
      %5930 = vmatprep.subr.mxu0 0.0
      %5931 = vmatpush1.msra.mxu0 0.0
      %5932 = vmatprep.subr.mxu0 0.0
      %5933 = vmatpush1.msra.mxu0 0.0
      %5934 = vmatprep.subr.mxu0 0.0
      %5935 = vmatpush1.msra.mxu0 0.0
      %5936 = vmatprep.mubr.f32.mxu0 0.0
      %5937 = vmatmul.mubr.f32.gmra.mrb[0].mxu0 %v5846
      %v5938 = vpop.f32.mrb[0].mxu0
      %v5939 = vadd.f32 0.0, %v5938
      %v5940 = vpop.f32.mrb[0].mxu0
      %5941 = vmatprep.mubr.f32.mxu0 0.0
      %5942 = vmatmul.mubr.f32.gmra.mrb[0].mxu0 %v5847
      %v5943 = vpop.f32.mrb[0].mxu0
      %v5944 = vadd.f32 0.0, %v5943
      %v5945 = vpop.f32.mrb[0].mxu0
      %5946 = vmatprep.mubr.f32.mxu0 0.0
      %5947 = vmatmul.mubr.f32.gmra.mrb[0].mxu0 %v5848
      %v5948 = vpop.f32.mrb[0].mxu0
      %v5949 = vadd.f32 0.0, %v5948
      %v5950 = vpop.f32.mrb[0].mxu0
      %5951 = vmatprep.mubr.f32.mxu0 0.0
      %5952 = vmatmul.mubr.f32.gmra.mrb[0].mxu0 %v5849
      %v5953 = vpop.f32.mrb[0].mxu0
      %v5954 = vadd.f32 0.0, %v5953
      %v5955 = vpop.f32.mrb[0].mxu0
      %5956 = vmatprep.mubr.f32.mxu0 0.0
      %5957 = vmatmul.mubr.f32.gmra.mrb[0].mxu0 %v5850
      %v5958 = vpop.f32.mrb[0].mxu0
      %v5959 = vadd.f32 0.0, %v5958
      %v5960 = vpop.f32.mrb[0].mxu0
      %5961 = vmatprep.mubr.f32.mxu0 0.0
      %5962 = vmatmul.mubr.f32.gmra.mrb[0].mxu0 %v5851
      %v5963 = vpop.f32.mrb[0].mxu0
      %v5964 = vadd.f32 0.0, %v5963
      %v5965 = vpop.f32.mrb[0].mxu0
      %5966 = vmatprep.mubr.f32.mxu0 0.0
      %5967 = vmatmul.mubr.f32.gmra.mrb[0].mxu0 %v5852
      %v5968 = vpop.f32.mrb[0].mxu0
      %v5969 = vadd.f32 0.0, %v5968
      %v5970 = vpop.f32.mrb[0].mxu0
      %5971 = vmatprep.mubr.f32.mxu0 0.0
      %5972 = vmatmul.mubr.f32.gmra.mrb[0].mxu0 %v5853
      %v5973 = vpop.f32.mrb[0].mxu0
      %v5974 = vadd.f32 0.0, %v5973
      %v5975 = vpop.f32.mrb[0].mxu0
      %5976 = vmatprep.mubr.f32.mxu0 0.0
      %5977 = vmatmul.mubr.f32.gmra.mrb[0].mxu0 %v5854
      %v5978 = vpop.f32.mrb[0].mxu0
      %v5979 = vadd.f32 0.0, %v5978
      %v5980 = vpop.f32.mrb[0].mxu0
      %5981 = vmatprep.mubr.f32.mxu0 0.0
      %5982 = vmatmul.mubr.f32.gmra.mrb[0].mxu0 %v5855
      %v5983 = vpop.f32.mrb[0].mxu0
      %v5984 = vadd.f32 0.0, %v5983
      %v5985 = vpop.f32.mrb[0].mxu0
      %5986 = vmatprep.mubr.f32.mxu0 0.0
      %5987 = vmatmul.mubr.f32.gmra.mrb[0].mxu0 %v5862
      %v5988 = vpop.f32.mrb[0].mxu0
      %v5989 = vadd.f32 0.0, %v5988
      %v5990 = vpop.f32.mrb[0].mxu0
      %5991 = vmatprep.mubr.f32.mxu0 0.0
      %5992 = vmatmul.mubr.f32.gmra.mrb[0].mxu0 %v5863
      %v5993 = vpop.f32.mrb[0].mxu0
      %v5994 = vadd.f32 0.0, %v5993
      %v5995 = vpop.f32.mrb[0].mxu0
      %5996 = vmatprep.mubr.f32.mxu0 0.0
      %5997 = vmatmul.mubr.f32.gmra.mrb[0].mxu0 %v5864
      %v5998 = vpop.f32.mrb[0].mxu0
      %v5999 = vadd.f32 0.0, %v5998
      %v6000 = vpop.f32.mrb[0].mxu0
      %6001 = vmatprep.mubr.f32.mxu0 0.0
      %6002 = vmatmul.mubr.f32.gmra.mrb[0].mxu0 %v5865
      %v6003 = vpop.f32.mrb[0].mxu0
      %v6004 = vadd.f32 0.0, %v6003
      %v6005 = vpop.f32.mrb[0].mxu0
      %6006 = vmatprep.mubr.f32.mxu0 0.0
      %6007 = vmatmul.mubr.f32.gmra.mrb[0].mxu0 %v5866
      %v6008 = vpop.f32.mrb[0].mxu0
      %v6009 = vadd.f32 0.0, %v6008
      %v6010 = vpop.f32.mrb[0].mxu0
      %6011 = vmatprep.mubr.f32.mxu0 0.0
      %6012 = vmatmul.mubr.f32.gmra.mrb[0].mxu0 %v5867
      %v6013 = vpop.f32.mrb[0].mxu0
      %v6014 = vadd.f32 0.0, %v6013
      %v6015 = vpop.f32.mrb[0].mxu0
      %6016 = vmatprep.mubr.f32.mxu0 0.0
      %6017 = vmatmul.mubr.f32.gmra.mrb[0].mxu0 %v5868
      %v6018 = vpop.f32.mrb[0].mxu0
      %v6019 = vadd.f32 0.0, %v6018
      %v6020 = vpop.f32.mrb[0].mxu0
      %6021 = vmatprep.mubr.f32.mxu0 0.0
      %6022 = vmatmul.mubr.f32.gmra.mrb[0].mxu0 %v5869
      %v6023 = vpop.f32.mrb[0].mxu0
      %v6024 = vadd.f32 0.0, %v6023
      %v6025 = vpop.f32.mrb[0].mxu0
      %6026 = vmatprep.mubr.f32.mxu0 0.0
      %6027 = vmatmul.mubr.f32.gmra.mrb[0].mxu0 %v5870
      %v6028 = vpop.f32.mrb[0].mxu0
      %v6029 = vadd.f32 0.0, %v6028
      %v6030 = vpop.f32.mrb[0].mxu0
      %6031 = vmatprep.mubr.f32.mxu0 0.0
      %6032 = vmatmul.mubr.f32.gmra.mrb[0].mxu0 %v5871
      %v6033 = vpop.f32.mrb[0].mxu0
      %v6034 = vadd.f32 0.0, %v6033
      %v6035 = vpop.f32.mrb[0].mxu0
      %6036 = vdwg.mxu0
      %v6039 = vrot.slane %v6004, 1
      %v6040 = vrot.slane %v6029, 1
      %v6043 = vmul.f32 %v5954, %v6039
      %v6044 = vmul.f32 %v5979, %v6040
      %v6045 = vrot.slane %v6004, 7
      %v6046 = vrot.slane %v6029, 7
      %v6049 = vmul.f32 %v5954, %v6045
      %v6050 = vmul.f32 %v5979, %v6046
      %v6053 = vrot.slane %v6049, 1
      %v6054 = vrot.slane %v6050, 1
      %v6057 = vsub.f32 %v6043, %v6053
      %v6058 = vsub.f32 %v6044, %v6054
      %v6059 = vrcp.pop %v6057
      %v6060 = vrcp.pop %v6058
      %v6061 = vmul.f32 %v6057, %v6059
      %v6062 = vmul.f32 %v6058, %v6060
      %v6063 = vsub.f32 2.0, %v6061
      %v6064 = vsub.f32 2.0, %v6062
      %v6065 = vmul.f32 %v6059, %v6063
      %v6066 = vmul.f32 %v6060, %v6064
      %v6067 = vlaneseq
      %v6068 = vshrl.u32 %v6067, 7
      %v6069 = vsub.s32 3, %v6068
      %v6070 = vrot.slane %v6004, %v6069
      %v6071 = vlaneseq
      %v6072 = vshrl.u32 %v6071, 7
      %v6073 = vsub.s32 3, %v6072
      %v6074 = vrot.slane %v6029, %v6073
      %v6075 = vmul.f32 %v6070, %v5939
      %v6076 = vmul.f32 %v6070, %v5944
      %v6077 = vmul.f32 %v6070, %v5949
      %v6078 = vmul.f32 %v6070, %v5954
      %v6079 = vmul.f32 %v6070, %v5959
      %v6080 = vmul.f32 %v6074, %v5964
      %v6081 = vmul.f32 %v6074, %v5969
      %v6082 = vmul.f32 %v6074, %v5974
      %v6083 = vmul.f32 %v6074, %v5979
      %v6084 = vmul.f32 %v6074, %v5984
      %v6085 = vlaneseq
      %v6086 = vshrl.u32 %v6085, 7
      %v6087 = vsub.s32 3, %v6086
      %v6088 = vrot.slane %v5954, %v6087
      %v6089 = vlaneseq
      %v6090 = vshrl.u32 %v6089, 7
      %v6091 = vsub.s32 3, %v6090
      %v6092 = vrot.slane %v5979, %v6091
      %v6093 = vmul.f32 %v6088, %v5989
      %v6094 = vmul.f32 %v6088, %v5994
      %v6095 = vmul.f32 %v6088, %v5999
      %v6096 = vmul.f32 %v6088, %v6004
      %v6097 = vmul.f32 %v6088, %v6009
      %v6098 = vmul.f32 %v6092, %v6014
      %v6099 = vmul.f32 %v6092, %v6019
      %v6100 = vmul.f32 %v6092, %v6024
      %v6101 = vmul.f32 %v6092, %v6029
      %v6102 = vmul.f32 %v6092, %v6034
      %v6103 = vsub.f32 %v6075, %v6093
      %v6104 = vsub.f32 %v6076, %v6094
      %v6105 = vsub.f32 %v6077, %v6095
      %v6106 = vsub.f32 %v6078, %v6096
      %v6107 = vsub.f32 %v6079, %v6097
      %v6108 = vsub.f32 %v6080, %v6098
      %v6109 = vsub.f32 %v6081, %v6099
      %v6110 = vsub.f32 %v6082, %v6100
      %v6111 = vsub.f32 %v6083, %v6101
      %v6112 = vsub.f32 %v6084, %v6102
      %v6113 = vlaneseq
      %v6114 = vshrl.u32 %v6113, 7
      %v6115 = vsub.s32 2, %v6114
      %v6116 = vrot.slane %v6065, %v6115
      %v6117 = vlaneseq
      %v6118 = vshrl.u32 %v6117, 7
      %v6119 = vsub.s32 2, %v6118
      %v6120 = vrot.slane %v6066, %v6119
      %v6121 = vmul.f32 %v6103, %v6116
      %v6122 = vmul.f32 %v6104, %v6116
      %v6123 = vmul.f32 %v6105, %v6116
      %v6124 = vmul.f32 %v6106, %v6116
      %v6125 = vmul.f32 %v6107, %v6116
      %v6126 = vmul.f32 %v6108, %v6120
      %v6127 = vmul.f32 %v6109, %v6120
      %v6128 = vmul.f32 %v6110, %v6120
      %v6129 = vmul.f32 %v6111, %v6120
      %v6130 = vmul.f32 %v6112, %v6120
      %v6131 = vlaneseq
      %v6132 = vshrl.u32 %v6131, 7
      %v6133 = vsub.s32 2, %v6132
      %v6134 = vrot.slane %v5954, %v6133
      %v6135 = vlaneseq
      %v6136 = vshrl.u32 %v6135, 7
      %v6137 = vsub.s32 2, %v6136
      %v6138 = vrot.slane %v5979, %v6137
      %v6139 = vmul.f32 %v6134, %v5989
      %v6140 = vmul.f32 %v6134, %v5994
      %v6141 = vmul.f32 %v6134, %v5999
      %v6142 = vmul.f32 %v6134, %v6004
      %v6143 = vmul.f32 %v6134, %v6009
      %v6144 = vmul.f32 %v6138, %v6014
      %v6145 = vmul.f32 %v6138, %v6019
      %v6146 = vmul.f32 %v6138, %v6024
      %v6147 = vmul.f32 %v6138, %v6029
      %v6148 = vmul.f32 %v6138, %v6034
      %v6149 = vlaneseq
      %v6150 = vshrl.u32 %v6149, 7
      %v6151 = vsub.s32 2, %v6150
      %v6152 = vrot.slane %v6004, %v6151
      %v6153 = vlaneseq
      %v6154 = vshrl.u32 %v6153, 7
      %v6155 = vsub.s32 2, %v6154
      %v6156 = vrot.slane %v6029, %v6155
      %v6157 = vmul.f32 %v6152, %v5939
      %v6158 = vmul.f32 %v6152, %v5944
      %v6159 = vmul.f32 %v6152, %v5949
      %v6160 = vmul.f32 %v6152, %v5954
      %v6161 = vmul.f32 %v6152, %v5959
      %v6162 = vmul.f32 %v6156, %v5964
      %v6163 = vmul.f32 %v6156, %v5969
      %v6164 = vmul.f32 %v6156, %v5974
      %v6165 = vmul.f32 %v6156, %v5979
      %v6166 = vmul.f32 %v6156, %v5984
      %v6167 = vsub.f32 %v6139, %v6157
      %v6168 = vsub.f32 %v6140, %v6158
      %v6169 = vsub.f32 %v6141, %v6159
      %v6170 = vsub.f32 %v6142, %v6160
      %v6171 = vsub.f32 %v6143, %v6161
      %v6172 = vsub.f32 %v6144, %v6162
      %v6173 = vsub.f32 %v6145, %v6163
      %v6174 = vsub.f32 %v6146, %v6164
      %v6175 = vsub.f32 %v6147, %v6165
      %v6176 = vsub.f32 %v6148, %v6166
      %v6177 = vmul.f32 %v6167, %v6116
      %v6178 = vmul.f32 %v6168, %v6116
      %v6179 = vmul.f32 %v6169, %v6116
      %v6180 = vmul.f32 %v6170, %v6116
      %v6181 = vmul.f32 %v6171, %v6116
      %v6182 = vmul.f32 %v6172, %v6120
      %v6183 = vmul.f32 %v6173, %v6120
      %v6184 = vmul.f32 %v6174, %v6120
      %v6185 = vmul.f32 %v6175, %v6120
      %v6186 = vmul.f32 %v6176, %v6120
      %v6187 = vlaneseq
      %v6188 = vshrl.u32 %v6187, 7
      %v6189 = vsub.s32 2, %v6188
      %v6190 = vrot.slane %v5831, %v6189
      %v6191 = vlaneseq
      %v6192 = vshrl.u32 %v6191, 7
      %v6193 = vsub.s32 2, %v6192
      %v6194 = vrot.slane %v5836, %v6193
      %v6195 = vmul.f32 %v6190, %v6121
      %v6196 = vmul.f32 %v6190, %v6122
      %v6197 = vmul.f32 %v6190, %v6123
      %v6198 = vmul.f32 %v6190, %v6124
      %v6199 = vmul.f32 %v6190, %v6125
      %v6200 = vmul.f32 %v6194, %v6126
      %v6201 = vmul.f32 %v6194, %v6127
      %v6202 = vmul.f32 %v6194, %v6128
      %v6203 = vmul.f32 %v6194, %v6129
      %v6204 = vmul.f32 %v6194, %v6130
      %v6205 = vsub.f32 %v5828, %v6195
      %v6206 = vsub.f32 %v5829, %v6196
      %v6207 = vsub.f32 %v5830, %v6197
      %v6208 = vsub.f32 %v5831, %v6198
      %v6209 = vsub.f32 %v5832, %v6199
      %v6210 = vsub.f32 %v5833, %v6200
      %v6211 = vsub.f32 %v5834, %v6201
      %v6212 = vsub.f32 %v5835, %v6202
      %v6213 = vsub.f32 %v5836, %v6203
      %v6214 = vsub.f32 %v5837, %v6204
      %v6215 = vlaneseq
      %v6216 = vshrl.u32 %v6215, 7
      %v6217 = vsub.s32 3, %v6216
      %v6218 = vrot.slane %v5831, %v6217
      %v6219 = vlaneseq
      %v6220 = vshrl.u32 %v6219, 7
      %v6221 = vsub.s32 3, %v6220
      %v6222 = vrot.slane %v5836, %v6221
      %v6223 = vmul.f32 %v6218, %v6177
      %v6224 = vmul.f32 %v6218, %v6178
      %v6225 = vmul.f32 %v6218, %v6179
      %v6226 = vmul.f32 %v6218, %v6180
      %v6227 = vmul.f32 %v6218, %v6181
      %v6228 = vmul.f32 %v6222, %v6182
      %v6229 = vmul.f32 %v6222, %v6183
      %v6230 = vmul.f32 %v6222, %v6184
      %v6231 = vmul.f32 %v6222, %v6185
      %v6232 = vmul.f32 %v6222, %v6186
      %v6233 = vsub.f32 %v6205, %v6223
      %v6234 = vsub.f32 %v6206, %v6224
      %v6235 = vsub.f32 %v6207, %v6225
      %v6236 = vsub.f32 %v6208, %v6226
      %v6237 = vsub.f32 %v6209, %v6227
      %v6238 = vsub.f32 %v6210, %v6228
      %v6239 = vsub.f32 %v6211, %v6229
      %v6240 = vsub.f32 %v6212, %v6230
      %v6241 = vsub.f32 %v6213, %v6231
      %v6242 = vsub.f32 %v6214, %v6232
      %v6243 = vsel %vm5845, %v6121, %v6233
      %v6244 = vsel %vm5845, %v6122, %v6234
      %v6245 = vsel %vm5845, %v6123, %v6235
      %v6246 = vsel %vm5845, %v6124, %v6236
      %v6247 = vsel %vm5845, %v6125, %v6237
      %v6248 = vsel %vm5845, %v6126, %v6238
      %v6249 = vsel %vm5845, %v6127, %v6239
      %v6250 = vsel %vm5845, %v6128, %v6240
      %v6251 = vsel %vm5845, %v6129, %v6241
      %v6252 = vsel %vm5845, %v6130, %v6242
      %v6253 = vsel %vm5861, %v6177, %v6243
      %v6254 = vsel %vm5861, %v6178, %v6244
      %v6255 = vsel %vm5861, %v6179, %v6245
      %v6256 = vsel %vm5861, %v6180, %v6246
      %v6257 = vsel %vm5861, %v6181, %v6247
      %v6258 = vsel %vm5861, %v6182, %v6248
      %v6259 = vsel %vm5861, %v6183, %v6249
      %v6260 = vsel %vm5861, %v6184, %v6250
      %v6261 = vsel %vm5861, %v6185, %v6251
      %v6262 = vsel %vm5861, %v6186, %v6252
      %vm6263 = vcmp.eq.s32.totalorder %v93, 28
      %vm6264 = vcmp.eq.s32.totalorder %v93, 29
      %v6265 = vsel %vm6263, 1, 0
      %v6266 = vlaneseq
      %v6267 = vshrl.u32 %v6266, 7
      %v6268 = vsub.s32 0, %v6267
      %v6269 = vrot.slane %v6265, %v6268
      %vm6270 = vcmp.eq.s32.totalorder %v6269, 1
      %v6271 = vsel %vm6270, %v6253, 0.0
      %v6272 = vsel %vm6270, %v6254, 0.0
      %v6273 = vsel %vm6270, %v6255, 0.0
      %v6274 = vsel %vm6270, %v6256, 0.0
      %v6275 = vsel %vm6270, %v6257, 0.0
      %v6276 = vsel %vm6270, %v6258, 0.0
      %v6277 = vsel %vm6270, %v6259, 0.0
      %v6278 = vsel %vm6270, %v6260, 0.0
      %v6279 = vsel %vm6270, %v6261, 0.0
      %v6280 = vsel %vm6270, %v6262, 0.0
      %v6281 = vsel %vm6264, 1, 0
      %v6282 = vlaneseq
      %v6283 = vshrl.u32 %v6282, 7
      %v6284 = vsub.s32 0, %v6283
      %v6285 = vrot.slane %v6281, %v6284
      %vm6286 = vcmp.eq.s32.totalorder %v6285, 1
      %v6287 = vsel %vm6286, %v6253, 0.0
      %v6288 = vsel %vm6286, %v6254, 0.0
      %v6289 = vsel %vm6286, %v6255, 0.0
      %v6290 = vsel %vm6286, %v6256, 0.0
      %v6291 = vsel %vm6286, %v6257, 0.0
      %v6292 = vsel %vm6286, %v6258, 0.0
      %v6293 = vsel %vm6286, %v6259, 0.0
      %v6294 = vsel %vm6286, %v6260, 0.0
      %v6295 = vsel %vm6286, %v6261, 0.0
      %v6296 = vsel %vm6286, %v6262, 0.0
      %6297 = vmatprep.subr.mxu0 0.0
      %6298 = vmatpush1.msra.mxu0 %v77
      %6299 = vmatprep.subr.mxu0 0.0
      %6300 = vmatpush1.msra.mxu0 %v78
      %6301 = vmatprep.subr.mxu0 0.0
      %6302 = vmatpush1.msra.mxu0 %v79
      %6303 = vmatprep.subr.mxu0 0.0
      %6304 = vmatpush1.msra.mxu0 %v80
      %6305 = vmatprep.subr.mxu0 0.0
      %6306 = vmatpush1.msra.mxu0 %v81
      %6307 = vmatprep.subr.mxu0 0.0
      %6308 = vmatpush1.msra.mxu0 %v82
      %6309 = vmatprep.subr.mxu0 0.0
      %6310 = vmatpush1.msra.mxu0 %v83
      %6311 = vmatprep.subr.mxu0 0.0
      %6312 = vmatpush1.msra.mxu0 %v84
      %6313 = vmatprep.subr.mxu0 0.0
      %6314 = vmatpush1.msra.mxu0 %v85
      %6315 = vmatprep.subr.mxu0 0.0
      %6316 = vmatpush1.msra.mxu0 %v86
      %6317 = vmatprep.subr.mxu0 0.0
      %6318 = vmatpush1.msra.mxu0 %v87
      %6319 = vmatprep.subr.mxu0 0.0
      %6320 = vmatpush1.msra.mxu0 %v88
      %6321 = vmatprep.subr.mxu0 0.0
      %6322 = vmatpush1.msra.mxu0 %v89
      %6323 = vmatprep.subr.mxu0 0.0
      %6324 = vmatpush1.msra.mxu0 %v90
      %6325 = vmatprep.subr.mxu0 0.0
      %6326 = vmatpush1.msra.mxu0 %v91
      %6327 = vmatprep.subr.mxu0 0.0
      %6328 = vmatpush1.msra.mxu0 %v92
      %6329 = vmatprep.subr.mxu0 0.0
      %6330 = vmatpush1.msra.mxu0 0.0
      %6331 = vmatprep.subr.mxu0 0.0
      %6332 = vmatpush1.msra.mxu0 0.0
      %6333 = vmatprep.subr.mxu0 0.0
      %6334 = vmatpush1.msra.mxu0 0.0
      %6335 = vmatprep.subr.mxu0 0.0
      %6336 = vmatpush1.msra.mxu0 0.0
      %6337 = vmatprep.subr.mxu0 0.0
      %6338 = vmatpush1.msra.mxu0 0.0
      %6339 = vmatprep.subr.mxu0 0.0
      %6340 = vmatpush1.msra.mxu0 0.0
      %6341 = vmatprep.subr.mxu0 0.0
      %6342 = vmatpush1.msra.mxu0 0.0
      %6343 = vmatprep.subr.mxu0 0.0
      %6344 = vmatpush1.msra.mxu0 0.0
      %6345 = vmatprep.subr.mxu0 0.0
      %6346 = vmatpush1.msra.mxu0 0.0
      %6347 = vmatprep.subr.mxu0 0.0
      %6348 = vmatpush1.msra.mxu0 0.0
      %6349 = vmatprep.subr.mxu0 0.0
      %6350 = vmatpush1.msra.mxu0 0.0
      %6351 = vmatprep.subr.mxu0 0.0
      %6352 = vmatpush1.msra.mxu0 0.0
      %6353 = vmatprep.subr.mxu0 0.0
      %6354 = vmatpush1.msra.mxu0 0.0
      %6355 = vmatprep.subr.mxu0 0.0
      %6356 = vmatpush1.msra.mxu0 0.0
      %6357 = vmatprep.subr.mxu0 0.0
      %6358 = vmatpush1.msra.mxu0 0.0
      %6359 = vmatprep.subr.mxu0 0.0
      %6360 = vmatpush1.msra.mxu0 0.0
      %6361 = vmatprep.mubr.f32.mxu0 0.0
      %6362 = vmatmul.mubr.f32.gmra.mrb[0].mxu0 %v6271
      %v6363 = vpop.f32.mrb[0].mxu0
      %v6364 = vadd.f32 0.0, %v6363
      %v6365 = vpop.f32.mrb[0].mxu0
      %6366 = vmatprep.mubr.f32.mxu0 0.0
      %6367 = vmatmul.mubr.f32.gmra.mrb[0].mxu0 %v6272
      %v6368 = vpop.f32.mrb[0].mxu0
      %v6369 = vadd.f32 0.0, %v6368
      %v6370 = vpop.f32.mrb[0].mxu0
      %6371 = vmatprep.mubr.f32.mxu0 0.0
      %6372 = vmatmul.mubr.f32.gmra.mrb[0].mxu0 %v6273
      %v6373 = vpop.f32.mrb[0].mxu0
      %v6374 = vadd.f32 0.0, %v6373
      %v6375 = vpop.f32.mrb[0].mxu0
      %6376 = vmatprep.mubr.f32.mxu0 0.0
      %6377 = vmatmul.mubr.f32.gmra.mrb[0].mxu0 %v6274
      %v6378 = vpop.f32.mrb[0].mxu0
      %v6379 = vadd.f32 0.0, %v6378
      %v6380 = vpop.f32.mrb[0].mxu0
      %6381 = vmatprep.mubr.f32.mxu0 0.0
      %6382 = vmatmul.mubr.f32.gmra.mrb[0].mxu0 %v6275
      %v6383 = vpop.f32.mrb[0].mxu0
      %v6384 = vadd.f32 0.0, %v6383
      %v6385 = vpop.f32.mrb[0].mxu0
      %6386 = vmatprep.mubr.f32.mxu0 0.0
      %6387 = vmatmul.mubr.f32.gmra.mrb[0].mxu0 %v6276
      %v6388 = vpop.f32.mrb[0].mxu0
      %v6389 = vadd.f32 0.0, %v6388
      %v6390 = vpop.f32.mrb[0].mxu0
      %6391 = vmatprep.mubr.f32.mxu0 0.0
      %6392 = vmatmul.mubr.f32.gmra.mrb[0].mxu0 %v6277
      %v6393 = vpop.f32.mrb[0].mxu0
      %v6394 = vadd.f32 0.0, %v6393
      %v6395 = vpop.f32.mrb[0].mxu0
      %6396 = vmatprep.mubr.f32.mxu0 0.0
      %6397 = vmatmul.mubr.f32.gmra.mrb[0].mxu0 %v6278
      %v6398 = vpop.f32.mrb[0].mxu0
      %v6399 = vadd.f32 0.0, %v6398
      %v6400 = vpop.f32.mrb[0].mxu0
      %6401 = vmatprep.mubr.f32.mxu0 0.0
      %6402 = vmatmul.mubr.f32.gmra.mrb[0].mxu0 %v6279
      %v6403 = vpop.f32.mrb[0].mxu0
      %v6404 = vadd.f32 0.0, %v6403
      %v6405 = vpop.f32.mrb[0].mxu0
      %6406 = vmatprep.mubr.f32.mxu0 0.0
      %6407 = vmatmul.mubr.f32.gmra.mrb[0].mxu0 %v6280
      %v6408 = vpop.f32.mrb[0].mxu0
      %v6409 = vadd.f32 0.0, %v6408
      %v6410 = vpop.f32.mrb[0].mxu0
      %6411 = vmatprep.mubr.f32.mxu0 0.0
      %6412 = vmatmul.mubr.f32.gmra.mrb[0].mxu0 %v6287
      %v6413 = vpop.f32.mrb[0].mxu0
      %v6414 = vadd.f32 0.0, %v6413
      %v6415 = vpop.f32.mrb[0].mxu0
      %6416 = vmatprep.mubr.f32.mxu0 0.0
      %6417 = vmatmul.mubr.f32.gmra.mrb[0].mxu0 %v6288
      %v6418 = vpop.f32.mrb[0].mxu0
      %v6419 = vadd.f32 0.0, %v6418
      %v6420 = vpop.f32.mrb[0].mxu0
      %6421 = vmatprep.mubr.f32.mxu0 0.0
      %6422 = vmatmul.mubr.f32.gmra.mrb[0].mxu0 %v6289
      %v6423 = vpop.f32.mrb[0].mxu0
      %v6424 = vadd.f32 0.0, %v6423
      %v6425 = vpop.f32.mrb[0].mxu0
      %6426 = vmatprep.mubr.f32.mxu0 0.0
      %6427 = vmatmul.mubr.f32.gmra.mrb[0].mxu0 %v6290
      %v6428 = vpop.f32.mrb[0].mxu0
      %v6429 = vadd.f32 0.0, %v6428
      %v6430 = vpop.f32.mrb[0].mxu0
      %6431 = vmatprep.mubr.f32.mxu0 0.0
      %6432 = vmatmul.mubr.f32.gmra.mrb[0].mxu0 %v6291
      %v6433 = vpop.f32.mrb[0].mxu0
      %v6434 = vadd.f32 0.0, %v6433
      %v6435 = vpop.f32.mrb[0].mxu0
      %6436 = vmatprep.mubr.f32.mxu0 0.0
      %6437 = vmatmul.mubr.f32.gmra.mrb[0].mxu0 %v6292
      %v6438 = vpop.f32.mrb[0].mxu0
      %v6439 = vadd.f32 0.0, %v6438
      %v6440 = vpop.f32.mrb[0].mxu0
      %6441 = vmatprep.mubr.f32.mxu0 0.0
      %6442 = vmatmul.mubr.f32.gmra.mrb[0].mxu0 %v6293
      %v6443 = vpop.f32.mrb[0].mxu0
      %v6444 = vadd.f32 0.0, %v6443
      %v6445 = vpop.f32.mrb[0].mxu0
      %6446 = vmatprep.mubr.f32.mxu0 0.0
      %6447 = vmatmul.mubr.f32.gmra.mrb[0].mxu0 %v6294
      %v6448 = vpop.f32.mrb[0].mxu0
      %v6449 = vadd.f32 0.0, %v6448
      %v6450 = vpop.f32.mrb[0].mxu0
      %6451 = vmatprep.mubr.f32.mxu0 0.0
      %6452 = vmatmul.mubr.f32.gmra.mrb[0].mxu0 %v6295
      %v6453 = vpop.f32.mrb[0].mxu0
      %v6454 = vadd.f32 0.0, %v6453
      %v6455 = vpop.f32.mrb[0].mxu0
      %6456 = vmatprep.mubr.f32.mxu0 0.0
      %6457 = vmatmul.mubr.f32.gmra.mrb[0].mxu0 %v6296
      %v6458 = vpop.f32.mrb[0].mxu0
      %v6459 = vadd.f32 0.0, %v6458
      %v6460 = vpop.f32.mrb[0].mxu0
      %6461 = vdwg.mxu0
      %v6464 = vrot.slane %v6429, 1
      %v6465 = vrot.slane %v6454, 1
      %v6468 = vmul.f32 %v6379, %v6464
      %v6469 = vmul.f32 %v6404, %v6465
      %v6470 = vrot.slane %v6429, 7
      %v6471 = vrot.slane %v6454, 7
      %v6474 = vmul.f32 %v6379, %v6470
      %v6475 = vmul.f32 %v6404, %v6471
      %v6478 = vrot.slane %v6474, 1
      %v6479 = vrot.slane %v6475, 1
      %v6482 = vsub.f32 %v6468, %v6478
      %v6483 = vsub.f32 %v6469, %v6479
      %v6484 = vrcp.pop %v6482
      %v6485 = vrcp.pop %v6483
      %v6486 = vmul.f32 %v6482, %v6484
      %v6487 = vmul.f32 %v6483, %v6485
      %v6488 = vsub.f32 2.0, %v6486
      %v6489 = vsub.f32 2.0, %v6487
      %v6490 = vmul.f32 %v6484, %v6488
      %v6491 = vmul.f32 %v6485, %v6489
      %v6492 = vlaneseq
      %v6493 = vshrl.u32 %v6492, 7
      %v6494 = vsub.s32 5, %v6493
      %v6495 = vrot.slane %v6429, %v6494
      %v6496 = vlaneseq
      %v6497 = vshrl.u32 %v6496, 7
      %v6498 = vsub.s32 5, %v6497
      %v6499 = vrot.slane %v6454, %v6498
      %v6500 = vmul.f32 %v6495, %v6364
      %v6501 = vmul.f32 %v6495, %v6369
      %v6502 = vmul.f32 %v6495, %v6374
      %v6503 = vmul.f32 %v6495, %v6379
      %v6504 = vmul.f32 %v6495, %v6384
      %v6505 = vmul.f32 %v6499, %v6389
      %v6506 = vmul.f32 %v6499, %v6394
      %v6507 = vmul.f32 %v6499, %v6399
      %v6508 = vmul.f32 %v6499, %v6404
      %v6509 = vmul.f32 %v6499, %v6409
      %v6510 = vlaneseq
      %v6511 = vshrl.u32 %v6510, 7
      %v6512 = vsub.s32 5, %v6511
      %v6513 = vrot.slane %v6379, %v6512
      %v6514 = vlaneseq
      %v6515 = vshrl.u32 %v6514, 7
      %v6516 = vsub.s32 5, %v6515
      %v6517 = vrot.slane %v6404, %v6516
      %v6518 = vmul.f32 %v6513, %v6414
      %v6519 = vmul.f32 %v6513, %v6419
      %v6520 = vmul.f32 %v6513, %v6424
      %v6521 = vmul.f32 %v6513, %v6429
      %v6522 = vmul.f32 %v6513, %v6434
      %v6523 = vmul.f32 %v6517, %v6439
      %v6524 = vmul.f32 %v6517, %v6444
      %v6525 = vmul.f32 %v6517, %v6449
      %v6526 = vmul.f32 %v6517, %v6454
      %v6527 = vmul.f32 %v6517, %v6459
      %v6528 = vsub.f32 %v6500, %v6518
      %v6529 = vsub.f32 %v6501, %v6519
      %v6530 = vsub.f32 %v6502, %v6520
      %v6531 = vsub.f32 %v6503, %v6521
      %v6532 = vsub.f32 %v6504, %v6522
      %v6533 = vsub.f32 %v6505, %v6523
      %v6534 = vsub.f32 %v6506, %v6524
      %v6535 = vsub.f32 %v6507, %v6525
      %v6536 = vsub.f32 %v6508, %v6526
      %v6537 = vsub.f32 %v6509, %v6527
      %v6538 = vlaneseq
      %v6539 = vshrl.u32 %v6538, 7
      %v6540 = vsub.s32 4, %v6539
      %v6541 = vrot.slane %v6490, %v6540
      %v6542 = vlaneseq
      %v6543 = vshrl.u32 %v6542, 7
      %v6544 = vsub.s32 4, %v6543
      %v6545 = vrot.slane %v6491, %v6544
      %v6546 = vmul.f32 %v6528, %v6541
      %v6547 = vmul.f32 %v6529, %v6541
      %v6548 = vmul.f32 %v6530, %v6541
      %v6549 = vmul.f32 %v6531, %v6541
      %v6550 = vmul.f32 %v6532, %v6541
      %v6551 = vmul.f32 %v6533, %v6545
      %v6552 = vmul.f32 %v6534, %v6545
      %v6553 = vmul.f32 %v6535, %v6545
      %v6554 = vmul.f32 %v6536, %v6545
      %v6555 = vmul.f32 %v6537, %v6545
      %v6556 = vlaneseq
      %v6557 = vshrl.u32 %v6556, 7
      %v6558 = vsub.s32 4, %v6557
      %v6559 = vrot.slane %v6379, %v6558
      %v6560 = vlaneseq
      %v6561 = vshrl.u32 %v6560, 7
      %v6562 = vsub.s32 4, %v6561
      %v6563 = vrot.slane %v6404, %v6562
      %v6564 = vmul.f32 %v6559, %v6414
      %v6565 = vmul.f32 %v6559, %v6419
      %v6566 = vmul.f32 %v6559, %v6424
      %v6567 = vmul.f32 %v6559, %v6429
      %v6568 = vmul.f32 %v6559, %v6434
      %v6569 = vmul.f32 %v6563, %v6439
      %v6570 = vmul.f32 %v6563, %v6444
      %v6571 = vmul.f32 %v6563, %v6449
      %v6572 = vmul.f32 %v6563, %v6454
      %v6573 = vmul.f32 %v6563, %v6459
      %v6574 = vlaneseq
      %v6575 = vshrl.u32 %v6574, 7
      %v6576 = vsub.s32 4, %v6575
      %v6577 = vrot.slane %v6429, %v6576
      %v6578 = vlaneseq
      %v6579 = vshrl.u32 %v6578, 7
      %v6580 = vsub.s32 4, %v6579
      %v6581 = vrot.slane %v6454, %v6580
      %v6582 = vmul.f32 %v6577, %v6364
      %v6583 = vmul.f32 %v6577, %v6369
      %v6584 = vmul.f32 %v6577, %v6374
      %v6585 = vmul.f32 %v6577, %v6379
      %v6586 = vmul.f32 %v6577, %v6384
      %v6587 = vmul.f32 %v6581, %v6389
      %v6588 = vmul.f32 %v6581, %v6394
      %v6589 = vmul.f32 %v6581, %v6399
      %v6590 = vmul.f32 %v6581, %v6404
      %v6591 = vmul.f32 %v6581, %v6409
      %v6592 = vsub.f32 %v6564, %v6582
      %v6593 = vsub.f32 %v6565, %v6583
      %v6594 = vsub.f32 %v6566, %v6584
      %v6595 = vsub.f32 %v6567, %v6585
      %v6596 = vsub.f32 %v6568, %v6586
      %v6597 = vsub.f32 %v6569, %v6587
      %v6598 = vsub.f32 %v6570, %v6588
      %v6599 = vsub.f32 %v6571, %v6589
      %v6600 = vsub.f32 %v6572, %v6590
      %v6601 = vsub.f32 %v6573, %v6591
      %v6602 = vmul.f32 %v6592, %v6541
      %v6603 = vmul.f32 %v6593, %v6541
      %v6604 = vmul.f32 %v6594, %v6541
      %v6605 = vmul.f32 %v6595, %v6541
      %v6606 = vmul.f32 %v6596, %v6541
      %v6607 = vmul.f32 %v6597, %v6545
      %v6608 = vmul.f32 %v6598, %v6545
      %v6609 = vmul.f32 %v6599, %v6545
      %v6610 = vmul.f32 %v6600, %v6545
      %v6611 = vmul.f32 %v6601, %v6545
      %v6612 = vlaneseq
      %v6613 = vshrl.u32 %v6612, 7
      %v6614 = vsub.s32 4, %v6613
      %v6615 = vrot.slane %v6256, %v6614
      %v6616 = vlaneseq
      %v6617 = vshrl.u32 %v6616, 7
      %v6618 = vsub.s32 4, %v6617
      %v6619 = vrot.slane %v6261, %v6618
      %v6620 = vmul.f32 %v6615, %v6546
      %v6621 = vmul.f32 %v6615, %v6547
      %v6622 = vmul.f32 %v6615, %v6548
      %v6623 = vmul.f32 %v6615, %v6549
      %v6624 = vmul.f32 %v6615, %v6550
      %v6625 = vmul.f32 %v6619, %v6551
      %v6626 = vmul.f32 %v6619, %v6552
      %v6627 = vmul.f32 %v6619, %v6553
      %v6628 = vmul.f32 %v6619, %v6554
      %v6629 = vmul.f32 %v6619, %v6555
      %v6630 = vsub.f32 %v6253, %v6620
      %v6631 = vsub.f32 %v6254, %v6621
      %v6632 = vsub.f32 %v6255, %v6622
      %v6633 = vsub.f32 %v6256, %v6623
      %v6634 = vsub.f32 %v6257, %v6624
      %v6635 = vsub.f32 %v6258, %v6625
      %v6636 = vsub.f32 %v6259, %v6626
      %v6637 = vsub.f32 %v6260, %v6627
      %v6638 = vsub.f32 %v6261, %v6628
      %v6639 = vsub.f32 %v6262, %v6629
      %v6640 = vlaneseq
      %v6641 = vshrl.u32 %v6640, 7
      %v6642 = vsub.s32 5, %v6641
      %v6643 = vrot.slane %v6256, %v6642
      %v6644 = vlaneseq
      %v6645 = vshrl.u32 %v6644, 7
      %v6646 = vsub.s32 5, %v6645
      %v6647 = vrot.slane %v6261, %v6646
      %v6648 = vmul.f32 %v6643, %v6602
      %v6649 = vmul.f32 %v6643, %v6603
      %v6650 = vmul.f32 %v6643, %v6604
      %v6651 = vmul.f32 %v6643, %v6605
      %v6652 = vmul.f32 %v6643, %v6606
      %v6653 = vmul.f32 %v6647, %v6607
      %v6654 = vmul.f32 %v6647, %v6608
      %v6655 = vmul.f32 %v6647, %v6609
      %v6656 = vmul.f32 %v6647, %v6610
      %v6657 = vmul.f32 %v6647, %v6611
      %v6658 = vsub.f32 %v6630, %v6648
      %v6659 = vsub.f32 %v6631, %v6649
      %v6660 = vsub.f32 %v6632, %v6650
      %v6661 = vsub.f32 %v6633, %v6651
      %v6662 = vsub.f32 %v6634, %v6652
      %v6663 = vsub.f32 %v6635, %v6653
      %v6664 = vsub.f32 %v6636, %v6654
      %v6665 = vsub.f32 %v6637, %v6655
      %v6666 = vsub.f32 %v6638, %v6656
      %v6667 = vsub.f32 %v6639, %v6657
      %v6668 = vsel %vm6270, %v6546, %v6658
      %v6669 = vsel %vm6270, %v6547, %v6659
      %v6670 = vsel %vm6270, %v6548, %v6660
      %v6671 = vsel %vm6270, %v6549, %v6661
      %v6672 = vsel %vm6270, %v6550, %v6662
      %v6673 = vsel %vm6270, %v6551, %v6663
      %v6674 = vsel %vm6270, %v6552, %v6664
      %v6675 = vsel %vm6270, %v6553, %v6665
      %v6676 = vsel %vm6270, %v6554, %v6666
      %v6677 = vsel %vm6270, %v6555, %v6667
      %v6678 = vsel %vm6286, %v6602, %v6668
      %v6679 = vsel %vm6286, %v6603, %v6669
      %v6680 = vsel %vm6286, %v6604, %v6670
      %v6681 = vsel %vm6286, %v6605, %v6671
      %v6682 = vsel %vm6286, %v6606, %v6672
      %v6683 = vsel %vm6286, %v6607, %v6673
      %v6684 = vsel %vm6286, %v6608, %v6674
      %v6685 = vsel %vm6286, %v6609, %v6675
      %v6686 = vsel %vm6286, %v6610, %v6676
      %v6687 = vsel %vm6286, %v6611, %v6677
      %vm6688 = vcmp.eq.s32.totalorder %v93, 30
      %vm6689 = vcmp.eq.s32.totalorder %v93, 31
      %v6690 = vsel %vm6688, 1, 0
      %v6691 = vlaneseq
      %v6692 = vshrl.u32 %v6691, 7
      %v6693 = vsub.s32 0, %v6692
      %v6694 = vrot.slane %v6690, %v6693
      %vm6695 = vcmp.eq.s32.totalorder %v6694, 1
      %v6696 = vsel %vm6695, %v6678, 0.0
      %v6697 = vsel %vm6695, %v6679, 0.0
      %v6698 = vsel %vm6695, %v6680, 0.0
      %v6699 = vsel %vm6695, %v6681, 0.0
      %v6700 = vsel %vm6695, %v6682, 0.0
      %v6701 = vsel %vm6695, %v6683, 0.0
      %v6702 = vsel %vm6695, %v6684, 0.0
      %v6703 = vsel %vm6695, %v6685, 0.0
      %v6704 = vsel %vm6695, %v6686, 0.0
      %v6705 = vsel %vm6695, %v6687, 0.0
      %v6706 = vsel %vm6689, 1, 0
      %v6707 = vlaneseq
      %v6708 = vshrl.u32 %v6707, 7
      %v6709 = vsub.s32 0, %v6708
      %v6710 = vrot.slane %v6706, %v6709
      %vm6711 = vcmp.eq.s32.totalorder %v6710, 1
      %v6712 = vsel %vm6711, %v6678, 0.0
      %v6713 = vsel %vm6711, %v6679, 0.0
      %v6714 = vsel %vm6711, %v6680, 0.0
      %v6715 = vsel %vm6711, %v6681, 0.0
      %v6716 = vsel %vm6711, %v6682, 0.0
      %v6717 = vsel %vm6711, %v6683, 0.0
      %v6718 = vsel %vm6711, %v6684, 0.0
      %v6719 = vsel %vm6711, %v6685, 0.0
      %v6720 = vsel %vm6711, %v6686, 0.0
      %v6721 = vsel %vm6711, %v6687, 0.0
      %6722 = vmatprep.subr.mxu0 0.0
      %6723 = vmatpush1.msra.mxu0 %v77
      %6724 = vmatprep.subr.mxu0 0.0
      %6725 = vmatpush1.msra.mxu0 %v78
      %6726 = vmatprep.subr.mxu0 0.0
      %6727 = vmatpush1.msra.mxu0 %v79
      %6728 = vmatprep.subr.mxu0 0.0
      %6729 = vmatpush1.msra.mxu0 %v80
      %6730 = vmatprep.subr.mxu0 0.0
      %6731 = vmatpush1.msra.mxu0 %v81
      %6732 = vmatprep.subr.mxu0 0.0
      %6733 = vmatpush1.msra.mxu0 %v82
      %6734 = vmatprep.subr.mxu0 0.0
      %6735 = vmatpush1.msra.mxu0 %v83
      %6736 = vmatprep.subr.mxu0 0.0
      %6737 = vmatpush1.msra.mxu0 %v84
      %6738 = vmatprep.subr.mxu0 0.0
      %6739 = vmatpush1.msra.mxu0 %v85
      %6740 = vmatprep.subr.mxu0 0.0
      %6741 = vmatpush1.msra.mxu0 %v86
      %6742 = vmatprep.subr.mxu0 0.0
      %6743 = vmatpush1.msra.mxu0 %v87
      %6744 = vmatprep.subr.mxu0 0.0
      %6745 = vmatpush1.msra.mxu0 %v88
      %6746 = vmatprep.subr.mxu0 0.0
      %6747 = vmatpush1.msra.mxu0 %v89
      %6748 = vmatprep.subr.mxu0 0.0
      %6749 = vmatpush1.msra.mxu0 %v90
      %6750 = vmatprep.subr.mxu0 0.0
      %6751 = vmatpush1.msra.mxu0 %v91
      %6752 = vmatprep.subr.mxu0 0.0
      %6753 = vmatpush1.msra.mxu0 %v92
      %6754 = vmatprep.subr.mxu0 0.0
      %6755 = vmatpush1.msra.mxu0 0.0
      %6756 = vmatprep.subr.mxu0 0.0
      %6757 = vmatpush1.msra.mxu0 0.0
      %6758 = vmatprep.subr.mxu0 0.0
      %6759 = vmatpush1.msra.mxu0 0.0
      %6760 = vmatprep.subr.mxu0 0.0
      %6761 = vmatpush1.msra.mxu0 0.0
      %6762 = vmatprep.subr.mxu0 0.0
      %6763 = vmatpush1.msra.mxu0 0.0
      %6764 = vmatprep.subr.mxu0 0.0
      %6765 = vmatpush1.msra.mxu0 0.0
      %6766 = vmatprep.subr.mxu0 0.0
      %6767 = vmatpush1.msra.mxu0 0.0
      %6768 = vmatprep.subr.mxu0 0.0
      %6769 = vmatpush1.msra.mxu0 0.0
      %6770 = vmatprep.subr.mxu0 0.0
      %6771 = vmatpush1.msra.mxu0 0.0
      %6772 = vmatprep.subr.mxu0 0.0
      %6773 = vmatpush1.msra.mxu0 0.0
      %6774 = vmatprep.subr.mxu0 0.0
      %6775 = vmatpush1.msra.mxu0 0.0
      %6776 = vmatprep.subr.mxu0 0.0
      %6777 = vmatpush1.msra.mxu0 0.0
      %6778 = vmatprep.subr.mxu0 0.0
      %6779 = vmatpush1.msra.mxu0 0.0
      %6780 = vmatprep.subr.mxu0 0.0
      %6781 = vmatpush1.msra.mxu0 0.0
      %6782 = vmatprep.subr.mxu0 0.0
      %6783 = vmatpush1.msra.mxu0 0.0
      %6784 = vmatprep.subr.mxu0 0.0
      %6785 = vmatpush1.msra.mxu0 0.0
      %6786 = vmatprep.mubr.f32.mxu0 0.0
      %6787 = vmatmul.mubr.f32.gmra.mrb[0].mxu0 %v6696
      %v6788 = vpop.f32.mrb[0].mxu0
      %v6789 = vpop.f32.mrb[0].mxu0
      %6790 = vmatprep.mubr.f32.mxu0 0.0
      %6791 = vmatmul.mubr.f32.gmra.mrb[0].mxu0 %v6697
      %v6792 = vpop.f32.mrb[0].mxu0
      %v6793 = vpop.f32.mrb[0].mxu0
      %6794 = vmatprep.mubr.f32.mxu0 0.0
      %6795 = vmatmul.mubr.f32.gmra.mrb[0].mxu0 %v6698
      %v6796 = vpop.f32.mrb[0].mxu0
      %v6797 = vpop.f32.mrb[0].mxu0
      %6798 = vmatprep.mubr.f32.mxu0 0.0
      %6799 = vmatmul.mubr.f32.gmra.mrb[0].mxu0 %v6699
      %v6800 = vpop.f32.mrb[0].mxu0
      %v6801 = vadd.f32 0.0, %v6800
      %v6802 = vpop.f32.mrb[0].mxu0
      %6803 = vmatprep.mubr.f32.mxu0 0.0
      %6804 = vmatmul.mubr.f32.gmra.mrb[0].mxu0 %v6700
      %v6805 = vpop.f32.mrb[0].mxu0
      %v6806 = vadd.f32 0.0, %v6805
      %v6807 = vpop.f32.mrb[0].mxu0
      %6808 = vmatprep.mubr.f32.mxu0 0.0
      %6809 = vmatmul.mubr.f32.gmra.mrb[0].mxu0 %v6701
      %v6810 = vpop.f32.mrb[0].mxu0
      %v6811 = vpop.f32.mrb[0].mxu0
      %6812 = vmatprep.mubr.f32.mxu0 0.0
      %6813 = vmatmul.mubr.f32.gmra.mrb[0].mxu0 %v6702
      %v6814 = vpop.f32.mrb[0].mxu0
      %v6815 = vpop.f32.mrb[0].mxu0
      %6816 = vmatprep.mubr.f32.mxu0 0.0
      %6817 = vmatmul.mubr.f32.gmra.mrb[0].mxu0 %v6703
      %v6818 = vpop.f32.mrb[0].mxu0
      %v6819 = vpop.f32.mrb[0].mxu0
      %6820 = vmatprep.mubr.f32.mxu0 0.0
      %6821 = vmatmul.mubr.f32.gmra.mrb[0].mxu0 %v6704
      %v6822 = vpop.f32.mrb[0].mxu0
      %v6823 = vadd.f32 0.0, %v6822
      %v6824 = vpop.f32.mrb[0].mxu0
      %6825 = vmatprep.mubr.f32.mxu0 0.0
      %6826 = vmatmul.mubr.f32.gmra.mrb[0].mxu0 %v6705
      %v6827 = vpop.f32.mrb[0].mxu0
      %v6828 = vadd.f32 0.0, %v6827
      %v6829 = vpop.f32.mrb[0].mxu0
      %6830 = vmatprep.mubr.f32.mxu0 0.0
      %6831 = vmatmul.mubr.f32.gmra.mrb[0].mxu0 %v6712
      %v6832 = vpop.f32.mrb[0].mxu0
      %v6833 = vpop.f32.mrb[0].mxu0
      %6834 = vmatprep.mubr.f32.mxu0 0.0
      %6835 = vmatmul.mubr.f32.gmra.mrb[0].mxu0 %v6713
      %v6836 = vpop.f32.mrb[0].mxu0
      %v6837 = vpop.f32.mrb[0].mxu0
      %6838 = vmatprep.mubr.f32.mxu0 0.0
      %6839 = vmatmul.mubr.f32.gmra.mrb[0].mxu0 %v6714
      %v6840 = vpop.f32.mrb[0].mxu0
      %v6841 = vpop.f32.mrb[0].mxu0
      %6842 = vmatprep.mubr.f32.mxu0 0.0
      %6843 = vmatmul.mubr.f32.gmra.mrb[0].mxu0 %v6715
      %v6844 = vpop.f32.mrb[0].mxu0
      %v6845 = vadd.f32 0.0, %v6844
      %v6846 = vpop.f32.mrb[0].mxu0
      %6847 = vmatprep.mubr.f32.mxu0 0.0
      %6848 = vmatmul.mubr.f32.gmra.mrb[0].mxu0 %v6716
      %v6849 = vpop.f32.mrb[0].mxu0
      %v6850 = vadd.f32 0.0, %v6849
      %v6851 = vpop.f32.mrb[0].mxu0
      %6852 = vmatprep.mubr.f32.mxu0 0.0
      %6853 = vmatmul.mubr.f32.gmra.mrb[0].mxu0 %v6717
      %v6854 = vpop.f32.mrb[0].mxu0
      %v6855 = vpop.f32.mrb[0].mxu0
      %6856 = vmatprep.mubr.f32.mxu0 0.0
      %6857 = vmatmul.mubr.f32.gmra.mrb[0].mxu0 %v6718
      %v6858 = vpop.f32.mrb[0].mxu0
      %v6859 = vpop.f32.mrb[0].mxu0
      %6860 = vmatprep.mubr.f32.mxu0 0.0
      %6861 = vmatmul.mubr.f32.gmra.mrb[0].mxu0 %v6719
      %v6862 = vpop.f32.mrb[0].mxu0
      %v6863 = vpop.f32.mrb[0].mxu0
      %6864 = vmatprep.mubr.f32.mxu0 0.0
      %6865 = vmatmul.mubr.f32.gmra.mrb[0].mxu0 %v6720
      %v6866 = vpop.f32.mrb[0].mxu0
      %v6867 = vadd.f32 0.0, %v6866
      %v6868 = vpop.f32.mrb[0].mxu0
      %6869 = vmatprep.mubr.f32.mxu0 0.0
      %6870 = vmatmul.mubr.f32.gmra.mrb[0].mxu0 %v6721
      %v6871 = vpop.f32.mrb[0].mxu0
      %v6872 = vadd.f32 0.0, %v6871
      %v6873 = vpop.f32.mrb[0].mxu0
      %6874 = vdwg.mxu0
      %v6877 = vrot.slane %v6845, 1
      %v6878 = vrot.slane %v6867, 1
      %v6881 = vmul.f32 %v6801, %v6877
      %v6882 = vmul.f32 %v6823, %v6878
      %v6883 = vrot.slane %v6845, 7
      %v6884 = vrot.slane %v6867, 7
      %v6887 = vmul.f32 %v6801, %v6883
      %v6888 = vmul.f32 %v6823, %v6884
      %v6891 = vrot.slane %v6887, 1
      %v6892 = vrot.slane %v6888, 1
      %v6895 = vsub.f32 %v6881, %v6891
      %v6896 = vsub.f32 %v6882, %v6892
      %v6897 = vrcp.pop %v6895
      %v6898 = vrcp.pop %v6896
      %v6899 = vmul.f32 %v6895, %v6897
      %v6900 = vmul.f32 %v6896, %v6898
      %v6901 = vsub.f32 2.0, %v6899
      %v6902 = vsub.f32 2.0, %v6900
      %v6903 = vmul.f32 %v6897, %v6901
      %v6904 = vmul.f32 %v6898, %v6902
      %v6905 = vlaneseq
      %v6906 = vshrl.u32 %v6905, 7
      %v6907 = vsub.s32 7, %v6906
      %v6908 = vrot.slane %v6845, %v6907
      %v6909 = vlaneseq
      %v6910 = vshrl.u32 %v6909, 7
      %v6911 = vsub.s32 7, %v6910
      %v6912 = vrot.slane %v6867, %v6911
      %v6913 = vmul.f32 %v6908, %v6806
      %v6914 = vmul.f32 %v6912, %v6828
      %v6915 = vlaneseq
      %v6916 = vshrl.u32 %v6915, 7
      %v6917 = vsub.s32 7, %v6916
      %v6918 = vrot.slane %v6801, %v6917
      %v6919 = vlaneseq
      %v6920 = vshrl.u32 %v6919, 7
      %v6921 = vsub.s32 7, %v6920
      %v6922 = vrot.slane %v6823, %v6921
      %v6923 = vmul.f32 %v6918, %v6850
      %v6924 = vmul.f32 %v6922, %v6872
      %v6925 = vsub.f32 %v6913, %v6923
      %v6926 = vsub.f32 %v6914, %v6924
      %v6927 = vlaneseq
      %v6928 = vshrl.u32 %v6927, 7
      %v6929 = vsub.s32 6, %v6928
      %v6930 = vrot.slane %v6903, %v6929
      %v6931 = vlaneseq
      %v6932 = vshrl.u32 %v6931, 7
      %v6933 = vsub.s32 6, %v6932
      %v6934 = vrot.slane %v6904, %v6933
      %v6935 = vmul.f32 %v6925, %v6930
      %v6936 = vmul.f32 %v6926, %v6934
      %v6937 = vlaneseq
      %v6938 = vshrl.u32 %v6937, 7
      %v6939 = vsub.s32 6, %v6938
      %v6940 = vrot.slane %v6801, %v6939
      %v6941 = vlaneseq
      %v6942 = vshrl.u32 %v6941, 7
      %v6943 = vsub.s32 6, %v6942
      %v6944 = vrot.slane %v6823, %v6943
      %v6945 = vmul.f32 %v6940, %v6850
      %v6946 = vmul.f32 %v6944, %v6872
      %v6947 = vlaneseq
      %v6948 = vshrl.u32 %v6947, 7
      %v6949 = vsub.s32 6, %v6948
      %v6950 = vrot.slane %v6845, %v6949
      %v6951 = vlaneseq
      %v6952 = vshrl.u32 %v6951, 7
      %v6953 = vsub.s32 6, %v6952
      %v6954 = vrot.slane %v6867, %v6953
      %v6955 = vmul.f32 %v6950, %v6806
      %v6956 = vmul.f32 %v6954, %v6828
      %v6957 = vsub.f32 %v6945, %v6955
      %v6958 = vsub.f32 %v6946, %v6956
      %v6959 = vmul.f32 %v6957, %v6930
      %v6960 = vmul.f32 %v6958, %v6934
      %v6961 = vlaneseq
      %v6962 = vshrl.u32 %v6961, 7
      %v6963 = vsub.s32 6, %v6962
      %v6964 = vrot.slane %v6681, %v6963
      %v6965 = vlaneseq
      %v6966 = vshrl.u32 %v6965, 7
      %v6967 = vsub.s32 6, %v6966
      %v6968 = vrot.slane %v6686, %v6967
      %v6969 = vmul.f32 %v6964, %v6935
      %v6970 = vmul.f32 %v6968, %v6936
      %v6971 = vsub.f32 %v6682, %v6969
      %v6972 = vsub.f32 %v6687, %v6970
      %v6973 = vlaneseq
      %v6974 = vshrl.u32 %v6973, 7
      %v6975 = vsub.s32 7, %v6974
      %v6976 = vrot.slane %v6681, %v6975
      %v6977 = vlaneseq
      %v6978 = vshrl.u32 %v6977, 7
      %v6979 = vsub.s32 7, %v6978
      %v6980 = vrot.slane %v6686, %v6979
      %v6981 = vmul.f32 %v6976, %v6959
      %v6982 = vmul.f32 %v6980, %v6960
      %v6983 = vsub.f32 %v6971, %v6981
      %v6984 = vsub.f32 %v6972, %v6982
      %v6985 = vsel %vm6695, %v6935, %v6983
      %v6986 = vsel %vm6695, %v6936, %v6984
      %v6987 = vsel %vm6711, %v6959, %v6985
      %v6988 = vsel %vm6711, %v6960, %v6986
      %v6989 = vlaneseq
      %v6990 = vshrl.u32 %v6989, 7
      %v6991 = vsub.s32 0, %v6990
      %v6992 = vrot.slane %v6987, %v6991
      %v6993 = vmul.f32 %v6992, %v102
      %v6994 = vlaneseq
      %v6995 = vshrl.u32 %v6994, 7
      %v6996 = vsub.s32 0, %v6995
      %v6997 = vrot.slane %v6988, %v6996
      %v6998 = vmul.f32 %v6997, %v103
      %v6999 = vadd.f32 %v6993, %v6998
      %7000 = vmatprep.subr.mxu0 0.0
      %7001 = vmatpush1.msra.mxu0 %v104
      %7002 = vmatprep.subr.mxu0 0.0
      %7003 = vmatpush1.msra.mxu0 %v105
      %7004 = vmatprep.subr.mxu0 0.0
      %7005 = vmatpush1.msra.mxu0 %v106
      %7006 = vmatprep.subr.mxu0 0.0
      %7007 = vmatpush1.msra.mxu0 %v107
      %7008 = vmatprep.subr.mxu0 0.0
      %7009 = vmatpush1.msra.mxu0 %v108
      %7010 = vmatprep.subr.mxu0 0.0
      %7011 = vmatpush1.msra.mxu0 %v109
      %7012 = vmatprep.subr.mxu0 0.0
      %7013 = vmatpush1.msra.mxu0 %v110
      %7014 = vmatprep.subr.mxu0 0.0
      %7015 = vmatpush1.msra.mxu0 %v111
      %7016 = vmatprep.subr.mxu0 0.0
      %7017 = vmatpush1.msra.mxu0 %v112
      %7018 = vmatprep.subr.mxu0 0.0
      %7019 = vmatpush1.msra.mxu0 %v113
      %7020 = vmatprep.subr.mxu0 0.0
      %7021 = vmatpush1.msra.mxu0 %v114
      %7022 = vmatprep.subr.mxu0 0.0
      %7023 = vmatpush1.msra.mxu0 %v115
      %7024 = vmatprep.subr.mxu0 0.0
      %7025 = vmatpush1.msra.mxu0 %v116
      %7026 = vmatprep.subr.mxu0 0.0
      %7027 = vmatpush1.msra.mxu0 %v117
      %7028 = vmatprep.subr.mxu0 0.0
      %7029 = vmatpush1.msra.mxu0 %v118
      %7030 = vmatprep.subr.mxu0 0.0
      %7031 = vmatpush1.msra.mxu0 %v119
      %7032 = vmatprep.subr.mxu0 0.0
      %7033 = vmatpush1.msra.mxu0 0.0
      %7034 = vmatprep.subr.mxu0 0.0
      %7035 = vmatpush1.msra.mxu0 0.0
      %7036 = vmatprep.subr.mxu0 0.0
      %7037 = vmatpush1.msra.mxu0 0.0
      %7038 = vmatprep.subr.mxu0 0.0
      %7039 = vmatpush1.msra.mxu0 0.0
      %7040 = vmatprep.subr.mxu0 0.0
      %7041 = vmatpush1.msra.mxu0 0.0
      %7042 = vmatprep.subr.mxu0 0.0
      %7043 = vmatpush1.msra.mxu0 0.0
      %7044 = vmatprep.subr.mxu0 0.0
      %7045 = vmatpush1.msra.mxu0 0.0
      %7046 = vmatprep.subr.mxu0 0.0
      %7047 = vmatpush1.msra.mxu0 0.0
      %7048 = vmatprep.subr.mxu0 0.0
      %7049 = vmatpush1.msra.mxu0 0.0
      %7050 = vmatprep.subr.mxu0 0.0
      %7051 = vmatpush1.msra.mxu0 0.0
      %7052 = vmatprep.subr.mxu0 0.0
      %7053 = vmatpush1.msra.mxu0 0.0
      %7054 = vmatprep.subr.mxu0 0.0
      %7055 = vmatpush1.msra.mxu0 0.0
      %7056 = vmatprep.subr.mxu0 0.0
      %7057 = vmatpush1.msra.mxu0 0.0
      %7058 = vmatprep.subr.mxu0 0.0
      %7059 = vmatpush1.msra.mxu0 0.0
      %7060 = vmatprep.subr.mxu0 0.0
      %7061 = vmatpush1.msra.mxu0 0.0
      %7062 = vmatprep.subr.mxu0 0.0
      %7063 = vmatpush1.msra.mxu0 0.0
      %7064 = vmatprep.mubr.f32.mxu0 0.0
      %7065 = vmatmul.mubr.f32.gmra.mrb[0].mxu0 %v6999
      %v7066 = vpop.f32.mrb[0].mxu0
      %v7067 = vadd.f32 0.0, %v7066
      %v7068 = vpop.f32.mrb[0].mxu0
      %7069 = vdwg.mxu0
      %v7070 = vsub.f32 %v210, %v7067
      %v7072 = vsel %vm122, %v7070, 0
      %7074 = vmatprep.subr.mxu0 0.0
      %7075 = vmatpush1.msra.mxu0 %v73
      %7076 = vmatprep.subr.mxu0 0.0
      %7077 = vmatpush1.msra.mxu0 %v74
      %7078 = vmatprep.subr.mxu0 0.0
      %7079 = vmatpush1.msra.mxu0 %v75
      %7080 = vmatprep.subr.mxu0 0.0
      %7081 = vmatpush1.msra.mxu0 %v76
      %7082 = vmatprep.subr.mxu0 0.0
      %7083 = vmatpush1.msra.mxu0 0.0
      %7084 = vmatprep.subr.mxu0 0.0
      %7085 = vmatpush1.msra.mxu0 0.0
      %7086 = vmatprep.subr.mxu0 0.0
      %7087 = vmatpush1.msra.mxu0 0.0
      %7088 = vmatprep.subr.mxu0 0.0
      %7089 = vmatpush1.msra.mxu0 0.0
      %7090 = vmatprep.subr.mxu0 0.0
      %7091 = vmatpush1.msra.mxu0 0.0
      %7092 = vmatprep.subr.mxu0 0.0
      %7093 = vmatpush1.msra.mxu0 0.0
      %7094 = vmatprep.subr.mxu0 0.0
      %7095 = vmatpush1.msra.mxu0 0.0
      %7096 = vmatprep.subr.mxu0 0.0
      %7097 = vmatpush1.msra.mxu0 0.0
      %7098 = vmatprep.subr.mxu0 0.0
      %7099 = vmatpush1.msra.mxu0 0.0
      %7100 = vmatprep.subr.mxu0 0.0
      %7101 = vmatpush1.msra.mxu0 0.0
      %7102 = vmatprep.subr.mxu0 0.0
      %7103 = vmatpush1.msra.mxu0 0.0
      %7104 = vmatprep.subr.mxu0 0.0
      %7105 = vmatpush1.msra.mxu0 0.0
      %7106 = vmatprep.subr.mxu0 0.0
      %7107 = vmatpush1.msra.mxu0 0.0
      %7108 = vmatprep.subr.mxu0 0.0
      %7109 = vmatpush1.msra.mxu0 0.0
      %7110 = vmatprep.subr.mxu0 0.0
      %7111 = vmatpush1.msra.mxu0 0.0
      %7112 = vmatprep.subr.mxu0 0.0
      %7113 = vmatpush1.msra.mxu0 0.0
      %7114 = vmatprep.subr.mxu0 0.0
      %7115 = vmatpush1.msra.mxu0 0.0
      %7116 = vmatprep.subr.mxu0 0.0
      %7117 = vmatpush1.msra.mxu0 0.0
      %7118 = vmatprep.subr.mxu0 0.0
      %7119 = vmatpush1.msra.mxu0 0.0
      %7120 = vmatprep.subr.mxu0 0.0
      %7121 = vmatpush1.msra.mxu0 0.0
      %7122 = vmatprep.subr.mxu0 0.0
      %7123 = vmatpush1.msra.mxu0 0.0
      %7124 = vmatprep.subr.mxu0 0.0
      %7125 = vmatpush1.msra.mxu0 0.0
      %7126 = vmatprep.subr.mxu0 0.0
      %7127 = vmatpush1.msra.mxu0 0.0
      %7128 = vmatprep.subr.mxu0 0.0
      %7129 = vmatpush1.msra.mxu0 0.0
      %7130 = vmatprep.subr.mxu0 0.0
      %7131 = vmatpush1.msra.mxu0 0.0
      %7132 = vmatprep.subr.mxu0 0.0
      %7133 = vmatpush1.msra.mxu0 0.0
      %7134 = vmatprep.subr.mxu0 0.0
      %7135 = vmatpush1.msra.mxu0 0.0
      %7136 = vmatprep.subr.mxu0 0.0
      %7137 = vmatpush1.msra.mxu0 0.0
      %7138 = vmatprep.mubr.f32.mxu0 0.0
      %7139 = vmatmul.mubr.f32.gmra.mrb[0].mxu0 %v7072
      %v7140 = vpop.f32.mrb[0].mxu0
      %v7141 = vadd.f32 %v72, %v7140
      %v7142 = vpop.f32.mrb[0].mxu0
      %7143 = vdwg.mxu0
      %v7144 = vtanh.pop %v7141
      %v7145 = vsub.f32 %v7070, %v7144
      %v7146 = vmul.f32 %v7145, %v7145
      %v7147 = vsel %vm122, %v7146, 0.0
      %7148 = vadd.xlane.f32.xlu0 %v7147
      %v7149 = vpop.xlane.xlu0 %7148
      %v7150 = vrot.slane %v7149, 4
      %v7151 = vadd.f32 %v7149, %v7150
      %v7152 = vrot.slane %v7151, 2
      %v7153 = vadd.f32 %v7151, %v7152
      %v7154 = vrot.slane %v7153, 1
      %v7155 = vadd.f32 %v7153, %v7154
      %s7156 = vtos %v7155
      %s7157 = sadd.s32 %s214, 1
    $region54: #{tpu_custom_call.1} parent=1 // loop_footer
      _
    $region55: #{tpu_custom_call.1} parent=1 // loop_footer_branch
      %209 = sbr.rel target = $region51
    $region56: #{tpu_custom_call.1} parent=1 // loop_exit
      _
    %7158 = vst.msk [vmem:[#allocation8] sm:$0xff] %vm122, %v211
    // Predicated region
    $region57: #{tpu_custom_call.1} parent=1 // pred_check
      _
    $region58: #{tpu_custom_call.1} parent=1 // pred_check_branch
      %7160 = sbr.rel (0) target = $region60
    $region59: #{tpu_custom_call.1} parent=1 // pred_region
      %s7162 = ssub.s32 128, 128
      %7163 = vsyncadd [#allocation4], %s7162
      %s7165 = sshll.u32 [#allocation8], 4
      %s7166 = int_to_ptr.vmem [resolvable:$true] %s7165
      %7168 = dma.vmem_to_hbm [thread:$0]  %s7166, 128, %s9, [#allocation4]
    $region60: #{tpu_custom_call.1} parent=1 // pred_fallthru
      _
    // Predicated region
    $region61: #{tpu_custom_call.1} parent=1 // pred_check
      _
    $region62: #{tpu_custom_call.1} parent=1 // pred_check_branch
      %7170 = sbr.rel (0) target = $region64
    $region63: #{tpu_custom_call.1} parent=1 // pred_region
      %7171 = dma.done [#allocation4], 128
    $region64: #{tpu_custom_call.1} parent=1 // pred_fallthru
      _
    %7172 = vsyncpa [#allocation3], 1
    %7173 = vsyncpa [#allocation6], 1
    %7174 = vsyncpa [#allocation4], 1

</llo_original>
